<compile_context>
chip_gen: v5e
topology: v5e:2x2
jax: 0.10.0
libtpu: 0.0.40
codegen_flags: <defaults>
</compile_context>

<pallas_src>
import functools
import math

import jax
import jax.numpy as jnp
from jax.experimental import pallas as pl
from jax.experimental.pallas import tpu as pltpu

NEG_SLOPE = 0.01  # nn.LeakyReLU() default negative_slope (as in the spec module)


def _round_up(x, m):
  return ((x + m - 1) // m) * m


def _pick_tile(total, unit, max_tile):
  """Largest multiple of `unit` that divides `total` and is <= max_tile."""
  n = total // unit
  best = 1
  for d in range(1, n + 1):
    if n % d == 0 and d * unit <= max_tile:
      best = d
  return best * unit


@functools.lru_cache(maxsize=1)
def _vmem_limit_bytes():
  """Per-generation VMEM budget (<= 3/4 of physical; v7x has only 64 MiB)."""
  cap = 64 * 1024 * 1024
  try:
    info = pltpu.get_tpu_info()
    cap = int(getattr(info, "vmem_capacity_bytes", cap))
  except Exception:
    pass
  return int(cap * 3 // 4)


def _gemm_bias_act_kernel(x_ref, w_ref, b_ref, o_ref, acc_ref, *, apply_lrelu):
  """(tm, tk)bf16 @ (tk, tn)bf16 -> f32 acc; fused bias + LeakyReLU epilogue."""
  @pl.when(pl.program_id(2) == 0)
  def _init():
    acc_ref[...] = jnp.zeros_like(acc_ref)

  acc_ref[...] += jnp.dot(x_ref[...], w_ref[...],
                          preferred_element_type=jnp.float32)

  @pl.when(pl.program_id(2) == pl.num_programs(2) - 1)
  def _finalize():
    y = acc_ref[...] + b_ref[...]            # f32 bias add (VPU)
    if apply_lrelu:
      y = jnp.where(y > 0, y, NEG_SLOPE * y)  # f32 LeakyReLU (VPU)
    o_ref[...] = y.astype(o_ref.dtype)


def conv2d_pallas(x_nhwc, w_hwio, bias, *, stride, padding, lrelu):
  """nn.Conv2d(stride, padding) (+ LeakyReLU) in NHWC via a fused Pallas GEMM."""
  B, H, W, Cin = x_nhwc.shape
  KH, KW, _, Cout = w_hwio.shape
  Hp, Wp = H + 2 * padding, W + 2 * padding
  Ho = (Hp - KH) // stride + 1
  Wo = (Wp - KW) // stride + 1

  # ---- glue: zero-pad + strided im2col (only strided output positions are
  # materialized), activations cast to bf16 for the MXU.
  xp = jnp.pad(x_nhwc.astype(jnp.bfloat16),
               ((0, 0), (padding, padding), (padding, padding), (0, 0)))
  taps = []
  for kh in range(KH):
    for kw in range(KW):
      taps.append(xp[:, kh:kh + (Ho - 1) * stride + 1:stride,
                     kw:kw + (Wo - 1) * stride + 1:stride, :])
  K = KH * KW * Cin
  M = B * Ho * Wo
  patches = jnp.concatenate(taps, axis=-1).reshape(M, K)   # (M, K) bf16

  # ---- padded GEMM dims + tile selection.
  Kp = _round_up(K, 128)
  Np = _round_up(Cout, 128)                 # lane-dense output (>=128 wide)
  tm = min(256, _round_up(M, 8))
  Mp = _round_up(M, tm)
  tk = _pick_tile(Kp, 128, 1536)            # deep-K MXU pushes
  tn = _pick_tile(Np, 128, 256)             # N tiling for the 512-wide layers

  patches = jnp.pad(patches, ((0, Mp - M), (0, Kp - K)))
  w2 = jnp.pad(w_hwio.reshape(K, Cout).astype(jnp.bfloat16),
               ((0, Kp - K), (0, Np - Cout)))
  b2 = jnp.pad(bias.reshape(1, Cout).astype(jnp.float32),
               ((0, 0), (0, Np - Cout)))

  grid = (Mp // tm, Np // tn, Kp // tk)
  kernel = functools.partial(_gemm_bias_act_kernel, apply_lrelu=lrelu)

  out = pl.pallas_call(
      kernel,
      out_shape=jax.ShapeDtypeStruct((Mp, Np), jnp.float32),
      grid=grid,
      in_specs=[
          pl.BlockSpec((tm, tk), lambda i, j, k: (i, k)),
          pl.BlockSpec((tk, tn), lambda i, j, k: (k, j)),
          pl.BlockSpec((1, tn), lambda i, j, k: (0, j)),
      ],
      out_specs=pl.BlockSpec((tm, tn), lambda i, j, k: (i, j)),
      scratch_shapes=[pltpu.VMEM((tm, tn), jnp.float32)],
      compiler_params=pltpu.CompilerParams(
          dimension_semantics=("parallel", "parallel", "arbitrary"),
          vmem_limit_bytes=_vmem_limit_bytes()),
  )(patches, w2, b2)

  # Drop M/N padding and restore NHWC (pure slicing/reshape glue).
  return out[:M, :Cout].reshape(B, Ho, Wo, Cout)


def init_conv_params(key, cin, cout, k):
  """PyTorch-default-style uniform init, deterministic. Weights in HWIO."""
  wkey, bkey = jax.random.split(key)
  bound = 1.0 / math.sqrt(cin * k * k)
  w = jax.random.uniform(wkey, (k, k, cin, cout), jnp.float32, -bound, bound)
  b = jax.random.uniform(bkey, (cout,), jnp.float32, -bound, bound)
  return w, b


def init_params(key):
  specs = {
      "conv1": (6, 64, 7),
      "conv2": (64, 128, 3),
      "conv3": (128, 256, 3),
      "conv4a": (256, 512, 3),
      "conv4b": (512, 512, 3),
      "conv5": (512, 2, 3),
  }
  params = {}
  for name, (cin, cout, k) in specs.items():
    key, sub = jax.random.split(key)
    params[name] = init_conv_params(sub, cin, cout, k)
  return params


def flownet_encoder_forward(params, inputs, *, rgb_max=255.0, div_flow=20.0,
                            training=False):
  """inputs: (B, 3, 2, H, W) float32, like the PyTorch module. Returns NCHW."""
  B, C, _F, H, W = inputs.shape
  # rgb_mean over the (frame, H, W) extent, per (batch, color channel).
  rgb_mean = inputs.reshape(B, C, -1).mean(axis=-1).reshape(B, C, 1, 1, 1)
  x = (inputs - rgb_mean) / rgb_max
  # concat the two frames along channels -> (B, 6, H, W), then NCHW -> NHWC.
  x = jnp.concatenate([x[:, :, 0], x[:, :, 1]], axis=1)
  x = jnp.transpose(x, (0, 2, 3, 1))

  x = conv2d_pallas(x, *params["conv1"], stride=2, padding=3, lrelu=True)
  x = conv2d_pallas(x, *params["conv2"], stride=2, padding=1, lrelu=True)
  x = conv2d_pallas(x, *params["conv3"], stride=2, padding=1, lrelu=True)
  x = conv2d_pallas(x, *params["conv4a"], stride=1, padding=1, lrelu=True)
  x = conv2d_pallas(x, *params["conv4b"], stride=2, padding=1, lrelu=True)
  x = conv2d_pallas(x, *params["conv5"], stride=1, padding=1, lrelu=False)

  # F.interpolate(scale_factor=16), default mode 'nearest': single
  # broadcast + reshape (no chained repeats / extra HBM intermediates).
  Bc, Hc, Wc, Cc = x.shape
  x = jnp.broadcast_to(x[:, :, None, :, None, :], (Bc, Hc, 16, Wc, 16, Cc))
  x = x.reshape(Bc, Hc * 16, Wc * 16, Cc)
  flow4 = jnp.transpose(x, (0, 3, 1, 2))  # back to NCHW like the PyTorch module

  if training:
    return flow4
  return flow4 * div_flow


if __name__ == "__main__":
  key = jax.random.PRNGKey(0)
  kparams, kx = jax.random.split(key)
  params = init_params(kparams)

  # small deterministic example: batch=2, 3 colors, 2 frames, 32x32 spatial
  inputs = jax.random.uniform(kx, (2, 3, 2, 32, 32), jnp.float32, 0.0, 255.0)

  fwd = jax.jit(functools.partial(flownet_encoder_forward, training=False))
  out = fwd(params, inputs)
  out = jax.block_until_ready(out)

  assert out.shape == (2, 2, 32, 32), out.shape
  assert out.dtype == jnp.float32
  assert bool(jnp.all(jnp.isfinite(out)))
  print("KERNEL_OK")
</pallas_src>

<mosaic_0001>
module attributes {stable_mosaic.version = 11 : i64} {
  func.func @_gemm_bias_act_kernel(%arg0: i32, %arg1: i32, %arg2: i32, %arg3: memref<256x384xbf16, #tpu.memory_space<vmem>>, %arg4: memref<384x128xbf16, #tpu.memory_space<vmem>>, %arg5: memref<1x128xf32, #tpu.memory_space<vmem>>, %arg6: memref<256x128xf32, #tpu.memory_space<vmem>>, %arg7: memref<256x128xf32, #tpu.memory_space<vmem>>) attributes {dimension_semantics = [#tpu.dimension_semantics<parallel>, #tpu.dimension_semantics<parallel>, #tpu.dimension_semantics<arbitrary>], iteration_bounds = array<i64: 2, 1, 1>, scalar_prefetch = 0 : i64, scratch_operands = 1 : i64, tpu.core_type = #tpu.core_type<tc>, window_params = [{transform_indices = @transform_0, window_bounds = array<i64: 256, 384>}, {transform_indices = @transform_1, window_bounds = array<i64: 384, 128>}, {transform_indices = @transform_2, window_bounds = array<i64: 1, 128>}, {transform_indices = @transform_3, window_bounds = array<i64: 256, 128>}]} {
    %c0_i32 = arith.constant 0 : i32
    %0 = arith.cmpi eq, %arg2, %c0_i32 : i32
    %1 = arith.extui %0 : i1 to i32
    %c0_i32_0 = arith.constant 0 : i32
    %2 = arith.cmpi ne, %1, %c0_i32_0 : i32
    scf.if %2 {
      %cst_10 = arith.constant 0.000000e+00 : f32
      %12 = vector.broadcast %cst_10 : f32 to vector<256x128xf32>
      %c0_11 = arith.constant 0 : index
      %c0_12 = arith.constant 0 : index
      %13 = vector.load %arg7[%c0_11, %c0_12] : memref<256x128xf32, #tpu.memory_space<vmem>>, vector<256x128xf32>
      tpu.vector_store %arg7[%c0_11, %c0_12], %12 {strides = array<i32>} : memref<256x128xf32, #tpu.memory_space<vmem>>, vector<256x128xf32>,
    } else {
    }
    %c0 = arith.constant 0 : index
    %c0_1 = arith.constant 0 : index
    %3 = vector.load %arg7[%c0, %c0_1] : memref<256x128xf32, #tpu.memory_space<vmem>>, vector<256x128xf32>
    %c0_2 = arith.constant 0 : index
    %c0_3 = arith.constant 0 : index
    %4 = vector.load %arg3[%c0_2, %c0_3] : memref<256x384xbf16, #tpu.memory_space<vmem>>, vector<256x384xbf16>
    %c0_4 = arith.constant 0 : index
    %c0_5 = arith.constant 0 : index
    %5 = vector.load %arg4[%c0_4, %c0_5] : memref<384x128xbf16, #tpu.memory_space<vmem>>, vector<384x128xbf16>
    %cst = arith.constant dense<0.000000e+00> : vector<256x128xf32>
    %6 = tpu.matmul %4, %5, %cst {dimension_numbers = #tpu.dot_dimension_numbers<[1], [0], [0], [1], [0, 0, 1, 1], [], []>} : vector<256x384xbf16>, vector<384x128xbf16>, vector<256x128xf32> -> vector<256x128xf32>
    %7 = arith.addf %3, %6 : vector<256x128xf32>
    %c0_6 = arith.constant 0 : index
    %c0_7 = arith.constant 0 : index
    %8 = vector.load %arg7[%c0_6, %c0_7] : memref<256x128xf32, #tpu.memory_space<vmem>>, vector<256x128xf32>
    tpu.vector_store %arg7[%c0_6, %c0_7], %7 {strides = array<i32>} : memref<256x128xf32, #tpu.memory_space<vmem>>, vector<256x128xf32>,
    %c0_i32_8 = arith.constant 0 : i32
    %9 = arith.cmpi eq, %arg2, %c0_i32_8 : i32
    %10 = arith.extui %9 : i1 to i32
    %c0_i32_9 = arith.constant 0 : i32
    %11 = arith.cmpi ne, %10, %c0_i32_9 : i32
    scf.if %11 {
      %c0_10 = arith.constant 0 : index
      %c0_11 = arith.constant 0 : index
      %12 = vector.load %arg7[%c0_10, %c0_11] : memref<256x128xf32, #tpu.memory_space<vmem>>, vector<256x128xf32>
      %c0_12 = arith.constant 0 : index
      %c0_13 = arith.constant 0 : index
      %13 = vector.load %arg5[%c0_12, %c0_13] : memref<1x128xf32, #tpu.memory_space<vmem>>, vector<1x128xf32>
      %14 = vector.broadcast %13 : vector<1x128xf32> to vector<256x128xf32>
      %15 = arith.addf %12, %14 : vector<256x128xf32>
      %cst_14 = arith.constant 0.000000e+00 : f32
      %16 = vector.broadcast %cst_14 : f32 to vector<256x128xf32>
      %17 = arith.cmpf ogt, %15, %16 : vector<256x128xf32>
      %cst_15 = arith.constant 0.00999999977 : f32
      %18 = vector.broadcast %cst_15 : f32 to vector<256x128xf32>
      %19 = arith.mulf %18, %15 : vector<256x128xf32>
      %20 = arith.select %17, %15, %19 : vector<256x128xi1>, vector<256x128xf32>
      %c0_16 = arith.constant 0 : index
      %c0_17 = arith.constant 0 : index
      %21 = vector.load %arg6[%c0_16, %c0_17] : memref<256x128xf32, #tpu.memory_space<vmem>>, vector<256x128xf32>
      tpu.vector_store %arg6[%c0_16, %c0_17], %20 {strides = array<i32>} : memref<256x128xf32, #tpu.memory_space<vmem>>, vector<256x128xf32>,
    } else {
    }
    return
  }
  func.func @transform_0(%arg0: i32, %arg1: i32, %arg2: i32) -> (i32, i32) {
    %c0_i32 = arith.constant 0 : i32
    return %arg0, %arg2 : i32, i32
  }
  func.func @transform_1(%arg0: i32, %arg1: i32, %arg2: i32) -> (i32, i32) {
    %c0_i32 = arith.constant 0 : i32
    return %arg2, %arg1 : i32, i32
  }
  func.func @transform_2(%arg0: i32, %arg1: i32, %arg2: i32) -> (i32, i32) {
    %c0_i32 = arith.constant 0 : i32
    %c0_i32_0 = arith.constant 0 : i32
    return %c0_i32, %arg1 : i32, i32
  }
  func.func @transform_3(%arg0: i32, %arg1: i32, %arg2: i32) -> (i32, i32) {
    %c0_i32 = arith.constant 0 : i32
    return %arg0, %arg1 : i32, i32
  }
}

module attributes {stable_mosaic.version = 11 : i64} {
  func.func @_gemm_bias_act_kernel(%arg0: i32, %arg1: i32, %arg2: i32, %arg3: memref<128x640xbf16, #tpu.memory_space<vmem>>, %arg4: memref<640x128xbf16, #tpu.memory_space<vmem>>, %arg5: memref<1x128xf32, #tpu.memory_space<vmem>>, %arg6: memref<128x128xf32, #tpu.memory_space<vmem>>, %arg7: memref<128x128xf32, #tpu.memory_space<vmem>>) attributes {dimension_semantics = [#tpu.dimension_semantics<parallel>, #tpu.dimension_semantics<parallel>, #tpu.dimension_semantics<arbitrary>], iteration_bounds = array<i64: 1, 1, 1>, scalar_prefetch = 0 : i64, scratch_operands = 1 : i64, tpu.core_type = #tpu.core_type<tc>, window_params = [{transform_indices = @transform_0, window_bounds = array<i64: 128, 640>}, {transform_indices = @transform_1, window_bounds = array<i64: 640, 128>}, {transform_indices = @transform_2, window_bounds = array<i64: 1, 128>}, {transform_indices = @transform_3, window_bounds = array<i64: 128, 128>}]} {
    %c0_i32 = arith.constant 0 : i32
    %0 = arith.cmpi eq, %arg2, %c0_i32 : i32
    %1 = arith.extui %0 : i1 to i32
    %c0_i32_0 = arith.constant 0 : i32
    %2 = arith.cmpi ne, %1, %c0_i32_0 : i32
    scf.if %2 {
      %cst_10 = arith.constant 0.000000e+00 : f32
      %12 = vector.broadcast %cst_10 : f32 to vector<128x128xf32>
      %c0_11 = arith.constant 0 : index
      %c0_12 = arith.constant 0 : index
      %13 = vector.load %arg7[%c0_11, %c0_12] : memref<128x128xf32, #tpu.memory_space<vmem>>, vector<128x128xf32>
      tpu.vector_store %arg7[%c0_11, %c0_12], %12 {strides = array<i32>} : memref<128x128xf32, #tpu.memory_space<vmem>>, vector<128x128xf32>,
    } else {
    }
    %c0 = arith.constant 0 : index
    %c0_1 = arith.constant 0 : index
    %3 = vector.load %arg7[%c0, %c0_1] : memref<128x128xf32, #tpu.memory_space<vmem>>, vector<128x128xf32>
    %c0_2 = arith.constant 0 : index
    %c0_3 = arith.constant 0 : index
    %4 = vector.load %arg3[%c0_2, %c0_3] : memref<128x640xbf16, #tpu.memory_space<vmem>>, vector<128x640xbf16>
    %c0_4 = arith.constant 0 : index
    %c0_5 = arith.constant 0 : index
    %5 = vector.load %arg4[%c0_4, %c0_5] : memref<640x128xbf16, #tpu.memory_space<vmem>>, vector<640x128xbf16>
    %cst = arith.constant dense<0.000000e+00> : vector<128x128xf32>
    %6 = tpu.matmul %4, %5, %cst {dimension_numbers = #tpu.dot_dimension_numbers<[1], [0], [0], [1], [0, 0, 1, 1], [], []>} : vector<128x640xbf16>, vector<640x128xbf16>, vector<128x128xf32> -> vector<128x128xf32>
    %7 = arith.addf %3, %6 : vector<128x128xf32>
    %c0_6 = arith.constant 0 : index
    %c0_7 = arith.constant 0 : index
    %8 = vector.load %arg7[%c0_6, %c0_7] : memref<128x128xf32, #tpu.memory_space<vmem>>, vector<128x128xf32>
    tpu.vector_store %arg7[%c0_6, %c0_7], %7 {strides = array<i32>} : memref<128x128xf32, #tpu.memory_space<vmem>>, vector<128x128xf32>,
    %c0_i32_8 = arith.constant 0 : i32
    %9 = arith.cmpi eq, %arg2, %c0_i32_8 : i32
    %10 = arith.extui %9 : i1 to i32
    %c0_i32_9 = arith.constant 0 : i32
    %11 = arith.cmpi ne, %10, %c0_i32_9 : i32
    scf.if %11 {
      %c0_10 = arith.constant 0 : index
      %c0_11 = arith.constant 0 : index
      %12 = vector.load %arg7[%c0_10, %c0_11] : memref<128x128xf32, #tpu.memory_space<vmem>>, vector<128x128xf32>
      %c0_12 = arith.constant 0 : index
      %c0_13 = arith.constant 0 : index
      %13 = vector.load %arg5[%c0_12, %c0_13] : memref<1x128xf32, #tpu.memory_space<vmem>>, vector<1x128xf32>
      %14 = vector.broadcast %13 : vector<1x128xf32> to vector<128x128xf32>
      %15 = arith.addf %12, %14 : vector<128x128xf32>
      %cst_14 = arith.constant 0.000000e+00 : f32
      %16 = vector.broadcast %cst_14 : f32 to vector<128x128xf32>
      %17 = arith.cmpf ogt, %15, %16 : vector<128x128xf32>
      %cst_15 = arith.constant 0.00999999977 : f32
      %18 = vector.broadcast %cst_15 : f32 to vector<128x128xf32>
      %19 = arith.mulf %18, %15 : vector<128x128xf32>
      %20 = arith.select %17, %15, %19 : vector<128x128xi1>, vector<128x128xf32>
      %c0_16 = arith.constant 0 : index
      %c0_17 = arith.constant 0 : index
      %21 = vector.load %arg6[%c0_16, %c0_17] : memref<128x128xf32, #tpu.memory_space<vmem>>, vector<128x128xf32>
      tpu.vector_store %arg6[%c0_16, %c0_17], %20 {strides = array<i32>} : memref<128x128xf32, #tpu.memory_space<vmem>>, vector<128x128xf32>,
    } else {
    }
    return
  }
  func.func @transform_0(%arg0: i32, %arg1: i32, %arg2: i32) -> (i32, i32) {
    %c0_i32 = arith.constant 0 : i32
    return %arg0, %arg2 : i32, i32
  }
  func.func @transform_1(%arg0: i32, %arg1: i32, %arg2: i32) -> (i32, i32) {
    %c0_i32 = arith.constant 0 : i32
    return %arg2, %arg1 : i32, i32
  }
  func.func @transform_2(%arg0: i32, %arg1: i32, %arg2: i32) -> (i32, i32) {
    %c0_i32 = arith.constant 0 : i32
    %c0_i32_0 = arith.constant 0 : i32
    return %c0_i32, %arg1 : i32, i32
  }
  func.func @transform_3(%arg0: i32, %arg1: i32, %arg2: i32) -> (i32, i32) {
    %c0_i32 = arith.constant 0 : i32
    return %arg0, %arg1 : i32, i32
  }
}

module attributes {stable_mosaic.version = 11 : i64} {
  func.func @_gemm_bias_act_kernel(%arg0: i32, %arg1: i32, %arg2: i32, %arg3: memref<32x1152xbf16, #tpu.memory_space<vmem>>, %arg4: memref<1152x256xbf16, #tpu.memory_space<vmem>>, %arg5: memref<1x256xf32, #tpu.memory_space<vmem>>, %arg6: memref<32x256xf32, #tpu.memory_space<vmem>>, %arg7: memref<32x256xf32, #tpu.memory_space<vmem>>) attributes {dimension_semantics = [#tpu.dimension_semantics<parallel>, #tpu.dimension_semantics<parallel>, #tpu.dimension_semantics<arbitrary>], iteration_bounds = array<i64: 1, 1, 1>, scalar_prefetch = 0 : i64, scratch_operands = 1 : i64, tpu.core_type = #tpu.core_type<tc>, window_params = [{transform_indices = @transform_0, window_bounds = array<i64: 32, 1152>}, {transform_indices = @transform_1, window_bounds = array<i64: 1152, 256>}, {transform_indices = @transform_2, window_bounds = array<i64: 1, 256>}, {transform_indices = @transform_3, window_bounds = array<i64: 32, 256>}]} {
    %c0_i32 = arith.constant 0 : i32
    %0 = arith.cmpi eq, %arg2, %c0_i32 : i32
    %1 = arith.extui %0 : i1 to i32
    %c0_i32_0 = arith.constant 0 : i32
    %2 = arith.cmpi ne, %1, %c0_i32_0 : i32
    scf.if %2 {
      %cst_10 = arith.constant 0.000000e+00 : f32
      %12 = vector.broadcast %cst_10 : f32 to vector<32x256xf32>
      %c0_11 = arith.constant 0 : index
      %c0_12 = arith.constant 0 : index
      %13 = vector.load %arg7[%c0_11, %c0_12] : memref<32x256xf32, #tpu.memory_space<vmem>>, vector<32x256xf32>
      tpu.vector_store %arg7[%c0_11, %c0_12], %12 {strides = array<i32>} : memref<32x256xf32, #tpu.memory_space<vmem>>, vector<32x256xf32>,
    } else {
    }
    %c0 = arith.constant 0 : index
    %c0_1 = arith.constant 0 : index
    %3 = vector.load %arg7[%c0, %c0_1] : memref<32x256xf32, #tpu.memory_space<vmem>>, vector<32x256xf32>
    %c0_2 = arith.constant 0 : index
    %c0_3 = arith.constant 0 : index
    %4 = vector.load %arg3[%c0_2, %c0_3] : memref<32x1152xbf16, #tpu.memory_space<vmem>>, vector<32x1152xbf16>
    %c0_4 = arith.constant 0 : index
    %c0_5 = arith.constant 0 : index
    %5 = vector.load %arg4[%c0_4, %c0_5] : memref<1152x256xbf16, #tpu.memory_space<vmem>>, vector<1152x256xbf16>
    %cst = arith.constant dense<0.000000e+00> : vector<32x256xf32>
    %6 = tpu.matmul %4, %5, %cst {dimension_numbers = #tpu.dot_dimension_numbers<[1], [0], [0], [1], [0, 0, 1, 1], [], []>} : vector<32x1152xbf16>, vector<1152x256xbf16>, vector<32x256xf32> -> vector<32x256xf32>
    %7 = arith.addf %3, %6 : vector<32x256xf32>
    %c0_6 = arith.constant 0 : index
    %c0_7 = arith.constant 0 : index
    %8 = vector.load %arg7[%c0_6, %c0_7] : memref<32x256xf32, #tpu.memory_space<vmem>>, vector<32x256xf32>
    tpu.vector_store %arg7[%c0_6, %c0_7], %7 {strides = array<i32>} : memref<32x256xf32, #tpu.memory_space<vmem>>, vector<32x256xf32>,
    %c0_i32_8 = arith.constant 0 : i32
    %9 = arith.cmpi eq, %arg2, %c0_i32_8 : i32
    %10 = arith.extui %9 : i1 to i32
    %c0_i32_9 = arith.constant 0 : i32
    %11 = arith.cmpi ne, %10, %c0_i32_9 : i32
    scf.if %11 {
      %c0_10 = arith.constant 0 : index
      %c0_11 = arith.constant 0 : index
      %12 = vector.load %arg7[%c0_10, %c0_11] : memref<32x256xf32, #tpu.memory_space<vmem>>, vector<32x256xf32>
      %c0_12 = arith.constant 0 : index
      %c0_13 = arith.constant 0 : index
      %13 = vector.load %arg5[%c0_12, %c0_13] : memref<1x256xf32, #tpu.memory_space<vmem>>, vector<1x256xf32>
      %14 = vector.broadcast %13 : vector<1x256xf32> to vector<32x256xf32>
      %15 = arith.addf %12, %14 : vector<32x256xf32>
      %cst_14 = arith.constant 0.000000e+00 : f32
      %16 = vector.broadcast %cst_14 : f32 to vector<32x256xf32>
      %17 = arith.cmpf ogt, %15, %16 : vector<32x256xf32>
      %cst_15 = arith.constant 0.00999999977 : f32
      %18 = vector.broadcast %cst_15 : f32 to vector<32x256xf32>
      %19 = arith.mulf %18, %15 : vector<32x256xf32>
      %20 = arith.select %17, %15, %19 : vector<32x256xi1>, vector<32x256xf32>
      %c0_16 = arith.constant 0 : index
      %c0_17 = arith.constant 0 : index
      %21 = vector.load %arg6[%c0_16, %c0_17] : memref<32x256xf32, #tpu.memory_space<vmem>>, vector<32x256xf32>
      tpu.vector_store %arg6[%c0_16, %c0_17], %20 {strides = array<i32>} : memref<32x256xf32, #tpu.memory_space<vmem>>, vector<32x256xf32>,
    } else {
    }
    return
  }
  func.func @transform_0(%arg0: i32, %arg1: i32, %arg2: i32) -> (i32, i32) {
    %c0_i32 = arith.constant 0 : i32
    return %arg0, %arg2 : i32, i32
  }
  func.func @transform_1(%arg0: i32, %arg1: i32, %arg2: i32) -> (i32, i32) {
    %c0_i32 = arith.constant 0 : i32
    return %arg2, %arg1 : i32, i32
  }
  func.func @transform_2(%arg0: i32, %arg1: i32, %arg2: i32) -> (i32, i32) {
    %c0_i32 = arith.constant 0 : i32
    %c0_i32_0 = arith.constant 0 : i32
    return %c0_i32, %arg1 : i32, i32
  }
  func.func @transform_3(%arg0: i32, %arg1: i32, %arg2: i32) -> (i32, i32) {
    %c0_i32 = arith.constant 0 : i32
    return %arg0, %arg1 : i32, i32
  }
}

module attributes {stable_mosaic.version = 11 : i64} {
  func.func @_gemm_bias_act_kernel(%arg0: i32, %arg1: i32, %arg2: i32, %arg3: memref<32x1152xbf16, #tpu.memory_space<vmem>>, %arg4: memref<1152x256xbf16, #tpu.memory_space<vmem>>, %arg5: memref<1x256xf32, #tpu.memory_space<vmem>>, %arg6: memref<32x256xf32, #tpu.memory_space<vmem>>, %arg7: memref<32x256xf32, #tpu.memory_space<vmem>>) attributes {dimension_semantics = [#tpu.dimension_semantics<parallel>, #tpu.dimension_semantics<parallel>, #tpu.dimension_semantics<arbitrary>], iteration_bounds = array<i64: 1, 2, 2>, scalar_prefetch = 0 : i64, scratch_operands = 1 : i64, tpu.core_type = #tpu.core_type<tc>, window_params = [{transform_indices = @transform_0, window_bounds = array<i64: 32, 1152>}, {transform_indices = @transform_1, window_bounds = array<i64: 1152, 256>}, {transform_indices = @transform_2, window_bounds = array<i64: 1, 256>}, {transform_indices = @transform_3, window_bounds = array<i64: 32, 256>}]} {
    %c0_i32 = arith.constant 0 : i32
    %0 = arith.cmpi eq, %arg2, %c0_i32 : i32
    %1 = arith.extui %0 : i1 to i32
    %c0_i32_0 = arith.constant 0 : i32
    %2 = arith.cmpi ne, %1, %c0_i32_0 : i32
    scf.if %2 {
      %cst_9 = arith.constant 0.000000e+00 : f32
      %12 = vector.broadcast %cst_9 : f32 to vector<32x256xf32>
      %c0_10 = arith.constant 0 : index
      %c0_11 = arith.constant 0 : index
      %13 = vector.load %arg7[%c0_10, %c0_11] : memref<32x256xf32, #tpu.memory_space<vmem>>, vector<32x256xf32>
      tpu.vector_store %arg7[%c0_10, %c0_11], %12 {strides = array<i32>} : memref<32x256xf32, #tpu.memory_space<vmem>>, vector<32x256xf32>,
    } else {
    }
    %c0 = arith.constant 0 : index
    %c0_1 = arith.constant 0 : index
    %3 = vector.load %arg7[%c0, %c0_1] : memref<32x256xf32, #tpu.memory_space<vmem>>, vector<32x256xf32>
    %c0_2 = arith.constant 0 : index
    %c0_3 = arith.constant 0 : index
    %4 = vector.load %arg3[%c0_2, %c0_3] : memref<32x1152xbf16, #tpu.memory_space<vmem>>, vector<32x1152xbf16>
    %c0_4 = arith.constant 0 : index
    %c0_5 = arith.constant 0 : index
    %5 = vector.load %arg4[%c0_4, %c0_5] : memref<1152x256xbf16, #tpu.memory_space<vmem>>, vector<1152x256xbf16>
    %cst = arith.constant dense<0.000000e+00> : vector<32x256xf32>
    %6 = tpu.matmul %4, %5, %cst {dimension_numbers = #tpu.dot_dimension_numbers<[1], [0], [0], [1], [0, 0, 1, 1], [], []>} : vector<32x1152xbf16>, vector<1152x256xbf16>, vector<32x256xf32> -> vector<32x256xf32>
    %7 = arith.addf %3, %6 : vector<32x256xf32>
    %c0_6 = arith.constant 0 : index
    %c0_7 = arith.constant 0 : index
    %8 = vector.load %arg7[%c0_6, %c0_7] : memref<32x256xf32, #tpu.memory_space<vmem>>, vector<32x256xf32>
    tpu.vector_store %arg7[%c0_6, %c0_7], %7 {strides = array<i32>} : memref<32x256xf32, #tpu.memory_space<vmem>>, vector<32x256xf32>,
    %c1_i32 = arith.constant 1 : i32
    %9 = arith.cmpi eq, %arg2, %c1_i32 : i32
    %10 = arith.extui %9 : i1 to i32
    %c0_i32_8 = arith.constant 0 : i32
    %11 = arith.cmpi ne, %10, %c0_i32_8 : i32
    scf.if %11 {
      %c0_9 = arith.constant 0 : index
      %c0_10 = arith.constant 0 : index
      %12 = vector.load %arg7[%c0_9, %c0_10] : memref<32x256xf32, #tpu.memory_space<vmem>>, vector<32x256xf32>
      %c0_11 = arith.constant 0 : index
      %c0_12 = arith.constant 0 : index
      %13 = vector.load %arg5[%c0_11, %c0_12] : memref<1x256xf32, #tpu.memory_space<vmem>>, vector<1x256xf32>
      %14 = vector.broadcast %13 : vector<1x256xf32> to vector<32x256xf32>
      %15 = arith.addf %12, %14 : vector<32x256xf32>
      %cst_13 = arith.constant 0.000000e+00 : f32
      %16 = vector.broadcast %cst_13 : f32 to vector<32x256xf32>
      %17 = arith.cmpf ogt, %15, %16 : vector<32x256xf32>
      %cst_14 = arith.constant 0.00999999977 : f32
      %18 = vector.broadcast %cst_14 : f32 to vector<32x256xf32>
      %19 = arith.mulf %18, %15 : vector<32x256xf32>
      %20 = arith.select %17, %15, %19 : vector<32x256xi1>, vector<32x256xf32>
      %c0_15 = arith.constant 0 : index
      %c0_16 = arith.constant 0 : index
      %21 = vector.load %arg6[%c0_15, %c0_16] : memref<32x256xf32, #tpu.memory_space<vmem>>, vector<32x256xf32>
      tpu.vector_store %arg6[%c0_15, %c0_16], %20 {strides = array<i32>} : memref<32x256xf32, #tpu.memory_space<vmem>>, vector<32x256xf32>,
    } else {
    }
    return
  }
  func.func @transform_0(%arg0: i32, %arg1: i32, %arg2: i32) -> (i32, i32) {
    %c0_i32 = arith.constant 0 : i32
    return %arg0, %arg2 : i32, i32
  }
  func.func @transform_1(%arg0: i32, %arg1: i32, %arg2: i32) -> (i32, i32) {
    %c0_i32 = arith.constant 0 : i32
    return %arg2, %arg1 : i32, i32
  }
  func.func @transform_2(%arg0: i32, %arg1: i32, %arg2: i32) -> (i32, i32) {
    %c0_i32 = arith.constant 0 : i32
    %c0_i32_0 = arith.constant 0 : i32
    return %c0_i32, %arg1 : i32, i32
  }
  func.func @transform_3(%arg0: i32, %arg1: i32, %arg2: i32) -> (i32, i32) {
    %c0_i32 = arith.constant 0 : i32
    return %arg0, %arg1 : i32, i32
  }
}

module attributes {stable_mosaic.version = 11 : i64} {
  func.func @_gemm_bias_act_kernel(%arg0: i32, %arg1: i32, %arg2: i32, %arg3: memref<8x1536xbf16, #tpu.memory_space<vmem>>, %arg4: memref<1536x256xbf16, #tpu.memory_space<vmem>>, %arg5: memref<1x256xf32, #tpu.memory_space<vmem>>, %arg6: memref<8x256xf32, #tpu.memory_space<vmem>>, %arg7: memref<8x256xf32, #tpu.memory_space<vmem>>) attributes {dimension_semantics = [#tpu.dimension_semantics<parallel>, #tpu.dimension_semantics<parallel>, #tpu.dimension_semantics<arbitrary>], iteration_bounds = array<i64: 1, 2, 3>, scalar_prefetch = 0 : i64, scratch_operands = 1 : i64, tpu.core_type = #tpu.core_type<tc>, window_params = [{transform_indices = @transform_0, window_bounds = array<i64: 8, 1536>}, {transform_indices = @transform_1, window_bounds = array<i64: 1536, 256>}, {transform_indices = @transform_2, window_bounds = array<i64: 1, 256>}, {transform_indices = @transform_3, window_bounds = array<i64: 8, 256>}]} {
    %c0_i32 = arith.constant 0 : i32
    %0 = arith.cmpi eq, %arg2, %c0_i32 : i32
    %1 = arith.extui %0 : i1 to i32
    %c0_i32_0 = arith.constant 0 : i32
    %2 = arith.cmpi ne, %1, %c0_i32_0 : i32
    scf.if %2 {
      %cst_9 = arith.constant 0.000000e+00 : f32
      %12 = vector.broadcast %cst_9 : f32 to vector<8x256xf32>
      %c0_10 = arith.constant 0 : index
      %c0_11 = arith.constant 0 : index
      %13 = vector.load %arg7[%c0_10, %c0_11] : memref<8x256xf32, #tpu.memory_space<vmem>>, vector<8x256xf32>
      tpu.vector_store %arg7[%c0_10, %c0_11], %12 {strides = array<i32>} : memref<8x256xf32, #tpu.memory_space<vmem>>, vector<8x256xf32>,
    } else {
    }
    %c0 = arith.constant 0 : index
    %c0_1 = arith.constant 0 : index
    %3 = vector.load %arg7[%c0, %c0_1] : memref<8x256xf32, #tpu.memory_space<vmem>>, vector<8x256xf32>
    %c0_2 = arith.constant 0 : index
    %c0_3 = arith.constant 0 : index
    %4 = vector.load %arg3[%c0_2, %c0_3] : memref<8x1536xbf16, #tpu.memory_space<vmem>>, vector<8x1536xbf16>
    %c0_4 = arith.constant 0 : index
    %c0_5 = arith.constant 0 : index
    %5 = vector.load %arg4[%c0_4, %c0_5] : memref<1536x256xbf16, #tpu.memory_space<vmem>>, vector<1536x256xbf16>
    %cst = arith.constant dense<0.000000e+00> : vector<8x256xf32>
    %6 = tpu.matmul %4, %5, %cst {dimension_numbers = #tpu.dot_dimension_numbers<[1], [0], [0], [1], [0, 0, 1, 1], [], []>} : vector<8x1536xbf16>, vector<1536x256xbf16>, vector<8x256xf32> -> vector<8x256xf32>
    %7 = arith.addf %3, %6 : vector<8x256xf32>
    %c0_6 = arith.constant 0 : index
    %c0_7 = arith.constant 0 : index
    %8 = vector.load %arg7[%c0_6, %c0_7] : memref<8x256xf32, #tpu.memory_space<vmem>>, vector<8x256xf32>
    tpu.vector_store %arg7[%c0_6, %c0_7], %7 {strides = array<i32>} : memref<8x256xf32, #tpu.memory_space<vmem>>, vector<8x256xf32>,
    %c2_i32 = arith.constant 2 : i32
    %9 = arith.cmpi eq, %arg2, %c2_i32 : i32
    %10 = arith.extui %9 : i1 to i32
    %c0_i32_8 = arith.constant 0 : i32
    %11 = arith.cmpi ne, %10, %c0_i32_8 : i32
    scf.if %11 {
      %c0_9 = arith.constant 0 : index
      %c0_10 = arith.constant 0 : index
      %12 = vector.load %arg7[%c0_9, %c0_10] : memref<8x256xf32, #tpu.memory_space<vmem>>, vector<8x256xf32>
      %c0_11 = arith.constant 0 : index
      %c0_12 = arith.constant 0 : index
      %13 = vector.load %arg5[%c0_11, %c0_12] : memref<1x256xf32, #tpu.memory_space<vmem>>, vector<1x256xf32>
      %14 = vector.broadcast %13 : vector<1x256xf32> to vector<8x256xf32>
      %15 = arith.addf %12, %14 : vector<8x256xf32>
      %cst_13 = arith.constant 0.000000e+00 : f32
      %16 = vector.broadcast %cst_13 : f32 to vector<8x256xf32>
      %17 = arith.cmpf ogt, %15, %16 : vector<8x256xf32>
      %cst_14 = arith.constant 0.00999999977 : f32
      %18 = vector.broadcast %cst_14 : f32 to vector<8x256xf32>
      %19 = arith.mulf %18, %15 : vector<8x256xf32>
      %20 = arith.select %17, %15, %19 : vector<8x256xi1>, vector<8x256xf32>
      %c0_15 = arith.constant 0 : index
      %c0_16 = arith.constant 0 : index
      %21 = vector.load %arg6[%c0_15, %c0_16] : memref<8x256xf32, #tpu.memory_space<vmem>>, vector<8x256xf32>
      tpu.vector_store %arg6[%c0_15, %c0_16], %20 {strides = array<i32>} : memref<8x256xf32, #tpu.memory_space<vmem>>, vector<8x256xf32>,
    } else {
    }
    return
  }
  func.func @transform_0(%arg0: i32, %arg1: i32, %arg2: i32) -> (i32, i32) {
    %c0_i32 = arith.constant 0 : i32
    return %arg0, %arg2 : i32, i32
  }
  func.func @transform_1(%arg0: i32, %arg1: i32, %arg2: i32) -> (i32, i32) {
    %c0_i32 = arith.constant 0 : i32
    return %arg2, %arg1 : i32, i32
  }
  func.func @transform_2(%arg0: i32, %arg1: i32, %arg2: i32) -> (i32, i32) {
    %c0_i32 = arith.constant 0 : i32
    %c0_i32_0 = arith.constant 0 : i32
    return %c0_i32, %arg1 : i32, i32
  }
  func.func @transform_3(%arg0: i32, %arg1: i32, %arg2: i32) -> (i32, i32) {
    %c0_i32 = arith.constant 0 : i32
    return %arg0, %arg1 : i32, i32
  }
}

module attributes {stable_mosaic.version = 11 : i64} {
  func.func @_gemm_bias_act_kernel(%arg0: i32, %arg1: i32, %arg2: i32, %arg3: memref<8x1536xbf16, #tpu.memory_space<vmem>>, %arg4: memref<1536x128xbf16, #tpu.memory_space<vmem>>, %arg5: memref<1x128xf32, #tpu.memory_space<vmem>>, %arg6: memref<8x128xf32, #tpu.memory_space<vmem>>, %arg7: memref<8x128xf32, #tpu.memory_space<vmem>>) attributes {dimension_semantics = [#tpu.dimension_semantics<parallel>, #tpu.dimension_semantics<parallel>, #tpu.dimension_semantics<arbitrary>], iteration_bounds = array<i64: 1, 1, 3>, scalar_prefetch = 0 : i64, scratch_operands = 1 : i64, tpu.core_type = #tpu.core_type<tc>, window_params = [{transform_indices = @transform_0, window_bounds = array<i64: 8, 1536>}, {transform_indices = @transform_1, window_bounds = array<i64: 1536, 128>}, {transform_indices = @transform_2, window_bounds = array<i64: 1, 128>}, {transform_indices = @transform_3, window_bounds = array<i64: 8, 128>}]} {
    %c0_i32 = arith.constant 0 : i32
    %0 = arith.cmpi eq, %arg2, %c0_i32 : i32
    %1 = arith.extui %0 : i1 to i32
    %c0_i32_0 = arith.constant 0 : i32
    %2 = arith.cmpi ne, %1, %c0_i32_0 : i32
    scf.if %2 {
      %cst_9 = arith.constant 0.000000e+00 : f32
      %12 = vector.broadcast %cst_9 : f32 to vector<8x128xf32>
      %c0_10 = arith.constant 0 : index
      %c0_11 = arith.constant 0 : index
      %13 = vector.load %arg7[%c0_10, %c0_11] : memref<8x128xf32, #tpu.memory_space<vmem>>, vector<8x128xf32>
      tpu.vector_store %arg7[%c0_10, %c0_11], %12 {strides = array<i32>} : memref<8x128xf32, #tpu.memory_space<vmem>>, vector<8x128xf32>,
    } else {
    }
    %c0 = arith.constant 0 : index
    %c0_1 = arith.constant 0 : index
    %3 = vector.load %arg7[%c0, %c0_1] : memref<8x128xf32, #tpu.memory_space<vmem>>, vector<8x128xf32>
    %c0_2 = arith.constant 0 : index
    %c0_3 = arith.constant 0 : index
    %4 = vector.load %arg3[%c0_2, %c0_3] : memref<8x1536xbf16, #tpu.memory_space<vmem>>, vector<8x1536xbf16>
    %c0_4 = arith.constant 0 : index
    %c0_5 = arith.constant 0 : index
    %5 = vector.load %arg4[%c0_4, %c0_5] : memref<1536x128xbf16, #tpu.memory_space<vmem>>, vector<1536x128xbf16>
    %cst = arith.constant dense<0.000000e+00> : vector<8x128xf32>
    %6 = tpu.matmul %4, %5, %cst {dimension_numbers = #tpu.dot_dimension_numbers<[1], [0], [0], [1], [0, 0, 1, 1], [], []>} : vector<8x1536xbf16>, vector<1536x128xbf16>, vector<8x128xf32> -> vector<8x128xf32>
    %7 = arith.addf %3, %6 : vector<8x128xf32>
    %c0_6 = arith.constant 0 : index
    %c0_7 = arith.constant 0 : index
    %8 = vector.load %arg7[%c0_6, %c0_7] : memref<8x128xf32, #tpu.memory_space<vmem>>, vector<8x128xf32>
    tpu.vector_store %arg7[%c0_6, %c0_7], %7 {strides = array<i32>} : memref<8x128xf32, #tpu.memory_space<vmem>>, vector<8x128xf32>,
    %c2_i32 = arith.constant 2 : i32
    %9 = arith.cmpi eq, %arg2, %c2_i32 : i32
    %10 = arith.extui %9 : i1 to i32
    %c0_i32_8 = arith.constant 0 : i32
    %11 = arith.cmpi ne, %10, %c0_i32_8 : i32
    scf.if %11 {
      %c0_9 = arith.constant 0 : index
      %c0_10 = arith.constant 0 : index
      %12 = vector.load %arg7[%c0_9, %c0_10] : memref<8x128xf32, #tpu.memory_space<vmem>>, vector<8x128xf32>
      %c0_11 = arith.constant 0 : index
      %c0_12 = arith.constant 0 : index
      %13 = vector.load %arg5[%c0_11, %c0_12] : memref<1x128xf32, #tpu.memory_space<vmem>>, vector<1x128xf32>
      %14 = vector.broadcast %13 : vector<1x128xf32> to vector<8x128xf32>
      %15 = arith.addf %12, %14 : vector<8x128xf32>
      %c0_13 = arith.constant 0 : index
      %c0_14 = arith.constant 0 : index
      %16 = vector.load %arg6[%c0_13, %c0_14] : memref<8x128xf32, #tpu.memory_space<vmem>>, vector<8x128xf32>
      tpu.vector_store %arg6[%c0_13, %c0_14], %15 {strides = array<i32>} : memref<8x128xf32, #tpu.memory_space<vmem>>, vector<8x128xf32>,
    } else {
    }
    return
  }
  func.func @transform_0(%arg0: i32, %arg1: i32, %arg2: i32) -> (i32, i32) {
    %c0_i32 = arith.constant 0 : i32
    return %arg0, %arg2 : i32, i32
  }
  func.func @transform_1(%arg0: i32, %arg1: i32, %arg2: i32) -> (i32, i32) {
    %c0_i32 = arith.constant 0 : i32
    return %arg2, %arg1 : i32, i32
  }
  func.func @transform_2(%arg0: i32, %arg1: i32, %arg2: i32) -> (i32, i32) {
    %c0_i32 = arith.constant 0 : i32
    %c0_i32_0 = arith.constant 0 : i32
    return %c0_i32, %arg1 : i32, i32
  }
  func.func @transform_3(%arg0: i32, %arg1: i32, %arg2: i32) -> (i32, i32) {
    %c0_i32 = arith.constant 0 : i32
    return %arg0, %arg1 : i32, i32
  }
}

</mosaic_0001>

<llo_original>
// kernel: flownet_encoder_forward.6
$region0: #{flownet_encoder_forward.6}
  #allocation0 [shape = 'u32[]', space=smem, size = 0x4, offset = 0x4, fixed_abs, tag = 'smem constant byte address 0x4 - core index']
  #allocation1 [shape = 'u32[72,128]{1,0:T(1,128)}', space=vmem, size = 0x9000, scoped, tag = 'internal scratch']
  #allocation2 [shape = 'f32[256,128]{1,0:T(8,128)}', space=vmem, size = 0x20000, scoped, tag = 'scratch operand']
  %s0 = inlined_call_operand.vmem [shape: bf16[512,384], index: 0, kind: input, shape index: {}]
  %s1 = inlined_call_operand.vmem [shape: bf16[384,128], index: 1, kind: input, shape index: {}]
  %s2 = inlined_call_operand.vmem [shape: f32[1,128], index: 2, kind: input, shape index: {}]
  %s3 = inlined_call_operand.vmem [shape: f32[512,128], index: 3, kind: output, shape index: {}]
  %s4 = sld [smem:[#allocation0]]
  $region53: #{flownet_encoder_forward.6} parent=0
    _
  %s6 = ssub.s32 1, %s4
  %s7 = scalar_select 0, %s6, %s4
  loop: start=0, step=1, limit=4
  $region2: #{flownet_encoder_forward.6} parent=0 // loop_pre_header
    _
  $region3: #{flownet_encoder_forward.6} parent=0 // loop_header
    %s9 = sphi 0, %s13
    %p10 = scmp.ge.s32.totalorder %s9, 4
    %s16 = sphi 0, %s35
    %s17 = sphi 0, %s31
    %s18 = sphi 0, %s27
    %s19 = sphi 0, %s16
    %s20 = sphi 0, %s17
    %s21 = sphi 0, %s18
    %s22 = sphi 0, %s19
    %s23 = sphi 0, %s20
    %s24 = sphi 0, %s21
    %s40 = sphi 0, %s42
    %s43 = sphi 0, %s40
    %s44 = sphi 0, %s43
    %s60 = sphi 0, %s44
    %s68 = sphi 0, %s70
    %s71 = sphi 0, %s68
    %s72 = sphi 0, %s71
    %s88 = sphi 0, %s72
    %s94 = sphi 0, %s96
    %s97 = sphi 0, %s94
    %s98 = sphi 0, %s97
    %s114 = sphi 0, %s98
    %s122 = sphi 0, %s124
    %s125 = sphi 0, %s122
    %s126 = sphi 0, %s125
    %s142 = sphi 0, %s126
  $region4: #{flownet_encoder_forward.6} parent=0 // loop_header_branch
    %12 = sbr.rel (%p10) target = $region8
  $region5: #{flownet_encoder_forward.6} parent=0 // loop_body
    %s14 = ssub.s32 %s9, 1
    %s15 = ssub.s32 %s9, 2
    %s25 = sadd.s32 1, %s18
    %p26 = scmp.ge.s32.totalorder %s25, 1
    %s27 = scalar_select %p26, 0, %s25
    %s28 = sadd.s32 1, %s17
    %s29 = scalar_select %p26, %s28, %s17
    %p30 = scmp.ge.s32.totalorder %s29, 1
    %s31 = scalar_select %p30, 0, %s29
    %s32 = sadd.s32 1, %s16
    %s33 = scalar_select %p30, %s32, %s16
    %p34 = scmp.ge.s32.totalorder %s33, 2
    %s35 = scalar_select %p34, 0, %s33
    %s36 = ssub.s32 %s16, %s35
    %s37 = ssub.s32 %s18, %s27
    %s38 = sor.u32 %s36, %s37
    %p39 = scmp.eq.s32.totalorder %s38, 0
    %s41 = sadd.s32 %s40, 1
    %s42 = scalar_select %p39, %s40, %s41
    %p45 = pneg %p39
    %p46 = scmp.eq.s32.totalorder %s9, 1
    %p47 = por %p45, %p46
    %p48 = scmp.ne.s32.totalorder %s40, %s43
    %p49 = scmp.eq.s32.totalorder %s9, 0
    %p50 = por %p48, %p49
    %p51 = scmp.ne.s32.totalorder %s40, %s43
    %p52 = scmp.eq.s32.totalorder %s14, 1
    %p53 = por %p51, %p52
    %p54 = scmp.ne.s32.totalorder %s43, %s44
    %p55 = scmp.eq.s32.totalorder %s14, 0
    %p56 = por %p54, %p55
    %p57 = scmp.ne.s32.totalorder %s43, %s44
    %p58 = scmp.eq.s32.totalorder %s15, 1
    %p59 = por %p57, %p58
    %p61 = scmp.ne.s32.totalorder %s44, %s60
    %p62 = scmp.eq.s32.totalorder %s15, 0
    %p63 = por %p61, %p62
    %s64 = ssub.s32 %s18, %s27
    %s65 = ssub.s32 %s17, %s31
    %s66 = sor.u32 %s64, %s65
    %p67 = scmp.eq.s32.totalorder %s66, 0
    %s69 = sadd.s32 %s68, 1
    %s70 = scalar_select %p67, %s68, %s69
    %p73 = pneg %p67
    %p74 = scmp.eq.s32.totalorder %s9, 1
    %p75 = por %p73, %p74
    %p76 = scmp.ne.s32.totalorder %s68, %s71
    %p77 = scmp.eq.s32.totalorder %s9, 0
    %p78 = por %p76, %p77
    %p79 = scmp.ne.s32.totalorder %s68, %s71
    %p80 = scmp.eq.s32.totalorder %s14, 1
    %p81 = por %p79, %p80
    %p82 = scmp.ne.s32.totalorder %s71, %s72
    %p83 = scmp.eq.s32.totalorder %s14, 0
    %p84 = por %p82, %p83
    %p85 = scmp.ne.s32.totalorder %s71, %s72
    %p86 = scmp.eq.s32.totalorder %s15, 1
    %p87 = por %p85, %p86
    %p89 = scmp.ne.s32.totalorder %s72, %s88
    %p90 = scmp.eq.s32.totalorder %s15, 0
    %p91 = por %p89, %p90
    %s92 = ssub.s32 %s17, %s31
    %p93 = scmp.eq.s32.totalorder %s92, 0
    %s95 = sadd.s32 %s94, 1
    %s96 = scalar_select %p93, %s94, %s95
    %p99 = pneg %p93
    %p100 = scmp.eq.s32.totalorder %s9, 1
    %p101 = por %p99, %p100
    %p102 = scmp.ne.s32.totalorder %s94, %s97
    %p103 = scmp.eq.s32.totalorder %s9, 0
    %p104 = por %p102, %p103
    %p105 = scmp.ne.s32.totalorder %s94, %s97
    %p106 = scmp.eq.s32.totalorder %s14, 1
    %p107 = por %p105, %p106
    %p108 = scmp.ne.s32.totalorder %s97, %s98
    %p109 = scmp.eq.s32.totalorder %s14, 0
    %p110 = por %p108, %p109
    %p111 = scmp.ne.s32.totalorder %s97, %s98
    %p112 = scmp.eq.s32.totalorder %s15, 1
    %p113 = por %p111, %p112
    %p115 = scmp.ne.s32.totalorder %s98, %s114
    %p116 = scmp.eq.s32.totalorder %s15, 0
    %p117 = por %p115, %p116
    %s118 = ssub.s32 %s16, %s35
    %s119 = ssub.s32 %s17, %s31
    %s120 = sor.u32 %s118, %s119
    %p121 = scmp.eq.s32.totalorder %s120, 0
    %s123 = sadd.s32 %s122, 1
    %s124 = scalar_select %p121, %s122, %s123
    %p127 = pneg %p121
    %p128 = scmp.eq.s32.totalorder %s9, 1
    %p129 = por %p127, %p128
    %p130 = scmp.ne.s32.totalorder %s122, %s125
    %p131 = scmp.eq.s32.totalorder %s9, 0
    %p132 = por %p130, %p131
    %p133 = scmp.ne.s32.totalorder %s122, %s125
    %p134 = scmp.eq.s32.totalorder %s14, 1
    %p135 = por %p133, %p134
    %p136 = scmp.ne.s32.totalorder %s125, %s126
    %p137 = scmp.eq.s32.totalorder %s14, 0
    %p138 = por %p136, %p137
    %p139 = scmp.ne.s32.totalorder %s125, %s126
    %p140 = scmp.eq.s32.totalorder %s15, 1
    %p141 = por %p139, %p140
    %p143 = scmp.ne.s32.totalorder %s126, %s142
    %p144 = scmp.eq.s32.totalorder %s15, 0
    %p145 = por %p143, %p144
    %p146 = scmp.le.s32.totalorder 1, %s9
    %p147 = scmp.lt.s32.totalorder %s9, 3
    %p148 = pnand %p146, %p147
    %p149 = pneg %p148
    // Predicated region
    $region9: #{flownet_encoder_forward.6} parent=5 // pred_check
      _
    $region10: #{flownet_encoder_forward.6} parent=5 // pred_check_branch
      %151 = sbr.rel (%p148) target = $region12
    $region11: #{flownet_encoder_forward.6} parent=5 // pred_region
      %s152 = ssub.s32 %s9, 1
      // Predicated region
      $region13: #{flownet_encoder_forward.6} parent=11 // pred_check
        %p153 = pneg %p84
      $region14: #{flownet_encoder_forward.6} parent=11 // pred_check_branch
        %155 = sbr.rel (%p153) target = $region16
      $region15: #{flownet_encoder_forward.6} parent=11 // pred_region
        %s156 = smul.u32 48, %s21
        %p157 = scmp.lt.s32.totalorder %s156, 47
        %s158 = scalar_select %p157, %s156, 47
        %p159 = scmp.lt.s32.totalorder %s20, 0
        %s160 = scalar_select %p159, %s20, 0
        %s161 = sadd.s32 %s160, %s158
        %s162 = smul.addr %s161, 4
        %s163 = scalar_lea.vmem %s1, %s162
        %s164 = smul.u32 48, %s21
      $region16: #{flownet_encoder_forward.6} parent=11 // pred_fallthru
        _
      // Predicated region
      $region17: #{flownet_encoder_forward.6} parent=11 // pred_check
        %p165 = pneg %p110
      $region18: #{flownet_encoder_forward.6} parent=11 // pred_check_branch
        %167 = sbr.rel (%p165) target = $region20
      $region19: #{flownet_encoder_forward.6} parent=11 // pred_region
        %p168 = scmp.lt.s32.totalorder %s20, 0
        %s169 = scalar_select %p168, %s20, 0
        %s170 = scalar_lea.vmem %s2, %s169
      $region20: #{flownet_encoder_forward.6} parent=11 // pred_fallthru
        _
    $region12: #{flownet_encoder_forward.6} parent=5 // pred_fallthru
      _
    %p171 = scmp.lt.s32.totalorder %s9, 2
    // Predicated region
    $region21: #{flownet_encoder_forward.6} parent=5 // pred_check
      %p172 = pneg %p171
    $region22: #{flownet_encoder_forward.6} parent=5 // pred_check_branch
      %174 = sbr.rel (%p172) target = $region24
    $region23: #{flownet_encoder_forward.6} parent=5 // pred_region
      // Predicated region
      $region25: #{flownet_encoder_forward.6} parent=23 // pred_check
        %p175 = pneg %p50
      $region26: #{flownet_encoder_forward.6} parent=23 // pred_check_branch
        %177 = sbr.rel (%p175) target = $region28
      $region27: #{flownet_encoder_forward.6} parent=23 // pred_region
        %s178 = smul.u32 32, %s16
        %s179 = smul.u32 3, %s18
        %p180 = scmp.lt.s32.totalorder %s178, 63
        %s181 = scalar_select %p180, %s178, 63
        %p182 = scmp.lt.s32.totalorder %s179, 2
        %s183 = scalar_select %p182, %s179, 2
        %s184 = smul.addr %s181, 3
        %s185 = sadd.s32 %s183, %s184
        %s186 = smul.addr %s185, 4
        %s187 = scalar_lea.vmem %s0, %s186
        %s188 = smul.u32 32, %s16
        %s189 = smul.u32 3, %s18
      $region28: #{flownet_encoder_forward.6} parent=23 // pred_fallthru
        _
    $region24: #{flownet_encoder_forward.6} parent=5 // pred_fallthru
      _
    %p190 = scmp.le.s32.totalorder 1, %s9
    %p191 = scmp.lt.s32.totalorder %s9, 3
    %p192 = pnand %p190, %p191
    %p193 = pneg %p192
    // Predicated region
    $region29: #{flownet_encoder_forward.6} parent=5 // pred_check
      _
    $region30: #{flownet_encoder_forward.6} parent=5 // pred_check_branch
      %195 = sbr.rel (%p192) target = $region32
    $region31: #{flownet_encoder_forward.6} parent=5 // pred_region
      %s196 = ssub.s32 %s9, 1
      %s197 = smul.u32 32, %s19
      %s198 = smul.u32 3, %s21
      %p199 = scmp.lt.s32.totalorder %s197, 63
      %s200 = scalar_select %p199, %s197, 63
      %p201 = scmp.lt.s32.totalorder %s198, 2
      %s202 = scalar_select %p201, %s198, 2
      %s203 = smul.addr %s200, 3
      %s204 = sadd.s32 %s202, %s203
      %s205 = smul.addr %s204, 4
      %s206 = scalar_lea.vmem %s0, %s205
      %p207 = pneg %p56
      %p208 = pneg %p53
      %s209 = smul.u32 48, %s21
      %p210 = scmp.lt.s32.totalorder %s209, 47
      %s211 = scalar_select %p210, %s209, 47
      %p212 = scmp.lt.s32.totalorder %s20, 0
      %s213 = scalar_select %p212, %s20, 0
      %s214 = sadd.s32 %s213, %s211
      %s215 = smul.addr %s214, 4
      %s216 = scalar_lea.vmem %s1, %s215
      %p217 = pneg %p84
      %p218 = pneg %p81
      %p219 = scmp.lt.s32.totalorder %s20, 0
      %s220 = scalar_select %p219, %s20, 0
      %s221 = scalar_lea.vmem %s2, %s220
      %p222 = pneg %p110
      %p223 = pneg %p107
      %p224 = pneg %p138
      %p225 = pneg %p135
      %s226 = smul.u32 32, %s19
      %p227 = scmp.lt.s32.totalorder %s226, 63
      %s228 = scalar_select %p227, %s226, 63
      %p229 = scmp.lt.s32.totalorder %s20, 0
      %s230 = scalar_select %p229, %s20, 0
      %s231 = sadd.s32 %s230, %s228
      %s232 = smul.addr %s231, 8
      %s233 = scalar_lea.vmem %s3, %s232
      %s234 = smul.u32 32, %s19
      %s235 = smul.u32 3, %s21
      %p236 = scmp.lt.s32.totalorder %s234, 63
      %s237 = scalar_select %p236, %s234, 63
      %p238 = scmp.lt.s32.totalorder %s235, 2
      %s239 = scalar_select %p238, %s235, 2
      %s240 = smul.addr %s237, 3
      %s241 = sadd.s32 %s239, %s240
      %s242 = smul.addr %s241, 4
      %s243 = scalar_lea.vmem %s0, %s242
      %s244 = smul.u32 32, %s19
      %s245 = smul.u32 3, %s21
      %s246 = smul.u32 48, %s21
      %p247 = scmp.lt.s32.totalorder %s246, 47
      %s248 = scalar_select %p247, %s246, 47
      %p249 = scmp.lt.s32.totalorder %s20, 0
      %s250 = scalar_select %p249, %s20, 0
      %s251 = sadd.s32 %s250, %s248
      %s252 = smul.addr %s251, 4
      %s253 = scalar_lea.vmem %s1, %s252
      %s254 = smul.u32 48, %s21
      %p255 = scmp.lt.s32.totalorder %s20, 0
      %s256 = scalar_select %p255, %s20, 0
      %s257 = scalar_lea.vmem %s2, %s256
      %s258 = smul.u32 32, %s19
      %p259 = scmp.lt.s32.totalorder %s258, 63
      %s260 = scalar_select %p259, %s258, 63
      %p261 = scmp.lt.s32.totalorder %s20, 0
      %s262 = scalar_select %p261, %s20, 0
      %s263 = sadd.s32 %s262, %s260
      %s264 = smul.addr %s263, 8
      %s265 = scalar_lea.vmem %s3, %s264
      %s266 = smul.u32 32, %s19
      %p267 = scmp.eq.s32.totalorder %s21, 0
      // Predicated region
      $region33: #{flownet_encoder_forward.6} parent=31 // pred_check
        %p268 = pneg %p267
      $region34: #{flownet_encoder_forward.6} parent=31 // pred_check_branch
        %270 = sbr.rel (%p268) target = $region36
      $region35: #{flownet_encoder_forward.6} parent=31 // pred_region
        %271 = vst [vmem:[#allocation2] sm:$0xff] 0.0
        %272 = vst [vmem:[#allocation2 + $0x8] sm:$0xff] 0.0
        %273 = vst [vmem:[#allocation2 + $0x10] sm:$0xff] 0.0
        %274 = vst [vmem:[#allocation2 + $0x18] sm:$0xff] 0.0
        %275 = vst [vmem:[#allocation2 + $0x20] sm:$0xff] 0.0
        %276 = vst [vmem:[#allocation2 + $0x28] sm:$0xff] 0.0
        %277 = vst [vmem:[#allocation2 + $0x30] sm:$0xff] 0.0
        %278 = vst [vmem:[#allocation2 + $0x38] sm:$0xff] 0.0
        %279 = vst [vmem:[#allocation2 + $0x40] sm:$0xff] 0.0
        %280 = vst [vmem:[#allocation2 + $0x48] sm:$0xff] 0.0
        %281 = vst [vmem:[#allocation2 + $0x50] sm:$0xff] 0.0
        %282 = vst [vmem:[#allocation2 + $0x58] sm:$0xff] 0.0
        %283 = vst [vmem:[#allocation2 + $0x60] sm:$0xff] 0.0
        %284 = vst [vmem:[#allocation2 + $0x68] sm:$0xff] 0.0
        %285 = vst [vmem:[#allocation2 + $0x70] sm:$0xff] 0.0
        %286 = vst [vmem:[#allocation2 + $0x78] sm:$0xff] 0.0
        %287 = vst [vmem:[#allocation2 + $0x80] sm:$0xff] 0.0
        %288 = vst [vmem:[#allocation2 + $0x88] sm:$0xff] 0.0
        %289 = vst [vmem:[#allocation2 + $0x90] sm:$0xff] 0.0
        %290 = vst [vmem:[#allocation2 + $0x98] sm:$0xff] 0.0
        %291 = vst [vmem:[#allocation2 + $0xa0] sm:$0xff] 0.0
        %292 = vst [vmem:[#allocation2 + $0xa8] sm:$0xff] 0.0
        %293 = vst [vmem:[#allocation2 + $0xb0] sm:$0xff] 0.0
        %294 = vst [vmem:[#allocation2 + $0xb8] sm:$0xff] 0.0
        %295 = vst [vmem:[#allocation2 + $0xc0] sm:$0xff] 0.0
        %296 = vst [vmem:[#allocation2 + $0xc8] sm:$0xff] 0.0
        %297 = vst [vmem:[#allocation2 + $0xd0] sm:$0xff] 0.0
        %298 = vst [vmem:[#allocation2 + $0xd8] sm:$0xff] 0.0
        %299 = vst [vmem:[#allocation2 + $0xe0] sm:$0xff] 0.0
        %300 = vst [vmem:[#allocation2 + $0xe8] sm:$0xff] 0.0
        %301 = vst [vmem:[#allocation2 + $0xf0] sm:$0xff] 0.0
        %302 = vst [vmem:[#allocation2 + $0xf8] sm:$0xff] 0.0
      $region36: #{flownet_encoder_forward.6} parent=31 // pred_fallthru
        _
      %v303 = vld [vmem:[#allocation2] sm:$0xff]
      %v304 = vld [vmem:[#allocation2 + $0x8] sm:$0xff]
      %v305 = vld [vmem:[#allocation2 + $0x10] sm:$0xff]
      %v306 = vld [vmem:[#allocation2 + $0x18] sm:$0xff]
      %v307 = vld [vmem:[#allocation2 + $0x20] sm:$0xff]
      %v308 = vld [vmem:[#allocation2 + $0x28] sm:$0xff]
      %v309 = vld [vmem:[#allocation2 + $0x30] sm:$0xff]
      %v310 = vld [vmem:[#allocation2 + $0x38] sm:$0xff]
      %v311 = vld [vmem:[#allocation2 + $0x40] sm:$0xff]
      %v312 = vld [vmem:[#allocation2 + $0x48] sm:$0xff]
      %v313 = vld [vmem:[#allocation2 + $0x50] sm:$0xff]
      %v314 = vld [vmem:[#allocation2 + $0x58] sm:$0xff]
      %v315 = vld [vmem:[#allocation2 + $0x60] sm:$0xff]
      %v316 = vld [vmem:[#allocation2 + $0x68] sm:$0xff]
      %v317 = vld [vmem:[#allocation2 + $0x70] sm:$0xff]
      %v318 = vld [vmem:[#allocation2 + $0x78] sm:$0xff]
      %v319 = vld [vmem:[#allocation2 + $0x80] sm:$0xff]
      %v320 = vld [vmem:[#allocation2 + $0x88] sm:$0xff]
      %v321 = vld [vmem:[#allocation2 + $0x90] sm:$0xff]
      %v322 = vld [vmem:[#allocation2 + $0x98] sm:$0xff]
      %v323 = vld [vmem:[#allocation2 + $0xa0] sm:$0xff]
      %v324 = vld [vmem:[#allocation2 + $0xa8] sm:$0xff]
      %v325 = vld [vmem:[#allocation2 + $0xb0] sm:$0xff]
      %v326 = vld [vmem:[#allocation2 + $0xb8] sm:$0xff]
      %v327 = vld [vmem:[#allocation2 + $0xc0] sm:$0xff]
      %v328 = vld [vmem:[#allocation2 + $0xc8] sm:$0xff]
      %v329 = vld [vmem:[#allocation2 + $0xd0] sm:$0xff]
      %v330 = vld [vmem:[#allocation2 + $0xd8] sm:$0xff]
      %v331 = vld [vmem:[#allocation2 + $0xe0] sm:$0xff]
      %v332 = vld [vmem:[#allocation2 + $0xe8] sm:$0xff]
      %v333 = vld [vmem:[#allocation2 + $0xf0] sm:$0xff]
      %v334 = vld [vmem:[#allocation2 + $0xf8] sm:$0xff]
      %v335 = vld [vmem:[%s243] sm:$0xff]
      %v336 = vld [vmem:[%s243 + $0x8] sm:$0xf]
      %v337 = vld [vmem:[%s243 + $0xc] sm:$0xff]
      %v338 = vld [vmem:[%s243 + $0x14] sm:$0xf]
      %v339 = vld [vmem:[%s243 + $0x18] sm:$0xff]
      %v340 = vld [vmem:[%s243 + $0x20] sm:$0xf]
      %v341 = vld [vmem:[%s243 + $0x24] sm:$0xff]
      %v342 = vld [vmem:[%s243 + $0x2c] sm:$0xf]
      %v343 = vld [vmem:[%s243 + $0x30] sm:$0xff]
      %v344 = vld [vmem:[%s243 + $0x38] sm:$0xf]
      %v345 = vld [vmem:[%s243 + $0x3c] sm:$0xff]
      %v346 = vld [vmem:[%s243 + $0x44] sm:$0xf]
      %v347 = vld [vmem:[%s243 + $0x48] sm:$0xff]
      %v348 = vld [vmem:[%s243 + $0x50] sm:$0xf]
      %v349 = vld [vmem:[%s243 + $0x54] sm:$0xff]
      %v350 = vld [vmem:[%s243 + $0x5c] sm:$0xf]
      %v351 = vld [vmem:[%s243 + $0x60] sm:$0xff]
      %v352 = vld [vmem:[%s243 + $0x68] sm:$0xf]
      %v353 = vld [vmem:[%s243 + $0x6c] sm:$0xff]
      %v354 = vld [vmem:[%s243 + $0x74] sm:$0xf]
      %v355 = vld [vmem:[%s243 + $0x78] sm:$0xff]
      %v356 = vld [vmem:[%s243 + $0x80] sm:$0xf]
      %v357 = vld [vmem:[%s243 + $0x84] sm:$0xff]
      %v358 = vld [vmem:[%s243 + $0x8c] sm:$0xf]
      %v359 = vld [vmem:[%s243 + $0x90] sm:$0xff]
      %v360 = vld [vmem:[%s243 + $0x98] sm:$0xf]
      %v361 = vld [vmem:[%s243 + $0x9c] sm:$0xff]
      %v362 = vld [vmem:[%s243 + $0xa4] sm:$0xf]
      %v363 = vld [vmem:[%s243 + $0xa8] sm:$0xff]
      %v364 = vld [vmem:[%s243 + $0xb0] sm:$0xf]
      %v365 = vld [vmem:[%s243 + $0xb4] sm:$0xff]
      %v366 = vld [vmem:[%s243 + $0xbc] sm:$0xf]
      %v367 = vld [vmem:[%s243 + $0xc0] sm:$0xff]
      %v368 = vld [vmem:[%s243 + $0xc8] sm:$0xf]
      %v369 = vld [vmem:[%s243 + $0xcc] sm:$0xff]
      %v370 = vld [vmem:[%s243 + $0xd4] sm:$0xf]
      %v371 = vld [vmem:[%s243 + $0xd8] sm:$0xff]
      %v372 = vld [vmem:[%s243 + $0xe0] sm:$0xf]
      %v373 = vld [vmem:[%s243 + $0xe4] sm:$0xff]
      %v374 = vld [vmem:[%s243 + $0xec] sm:$0xf]
      %v375 = vld [vmem:[%s243 + $0xf0] sm:$0xff]
      %v376 = vld [vmem:[%s243 + $0xf8] sm:$0xf]
      %v377 = vld [vmem:[%s243 + $0xfc] sm:$0xff]
      %v378 = vld [vmem:[%s243 + $0x104] sm:$0xf]
      %v379 = vld [vmem:[%s243 + $0x108] sm:$0xff]
      %v380 = vld [vmem:[%s243 + $0x110] sm:$0xf]
      %v381 = vld [vmem:[%s243 + $0x114] sm:$0xff]
      %v382 = vld [vmem:[%s243 + $0x11c] sm:$0xf]
      %v383 = vld [vmem:[%s243 + $0x120] sm:$0xff]
      %v384 = vld [vmem:[%s243 + $0x128] sm:$0xf]
      %v385 = vld [vmem:[%s243 + $0x12c] sm:$0xff]
      %v386 = vld [vmem:[%s243 + $0x134] sm:$0xf]
      %v387 = vld [vmem:[%s243 + $0x138] sm:$0xff]
      %v388 = vld [vmem:[%s243 + $0x140] sm:$0xf]
      %v389 = vld [vmem:[%s243 + $0x144] sm:$0xff]
      %v390 = vld [vmem:[%s243 + $0x14c] sm:$0xf]
      %v391 = vld [vmem:[%s243 + $0x150] sm:$0xff]
      %v392 = vld [vmem:[%s243 + $0x158] sm:$0xf]
      %v393 = vld [vmem:[%s243 + $0x15c] sm:$0xff]
      %v394 = vld [vmem:[%s243 + $0x164] sm:$0xf]
      %v395 = vld [vmem:[%s243 + $0x168] sm:$0xff]
      %v396 = vld [vmem:[%s243 + $0x170] sm:$0xf]
      %v397 = vld [vmem:[%s243 + $0x174] sm:$0xff]
      %v398 = vld [vmem:[%s243 + $0x17c] sm:$0xf]
      %v399 = vld [vmem:[%s253] sm:$0xf]
      %v400 = vld [vmem:[%s253 + $0x4] sm:$0xf]
      %v401 = vld [vmem:[%s253 + $0x8] sm:$0xf]
      %v402 = vld [vmem:[%s253 + $0xc] sm:$0xf]
      %v403 = vld [vmem:[%s253 + $0x10] sm:$0xf]
      %v404 = vld [vmem:[%s253 + $0x14] sm:$0xf]
      %v405 = vld [vmem:[%s253 + $0x18] sm:$0xf]
      %v406 = vld [vmem:[%s253 + $0x1c] sm:$0xf]
      %v407 = vld [vmem:[%s253 + $0x20] sm:$0xf]
      %v408 = vld [vmem:[%s253 + $0x24] sm:$0xf]
      %v409 = vld [vmem:[%s253 + $0x28] sm:$0xf]
      %v410 = vld [vmem:[%s253 + $0x2c] sm:$0xf]
      %v411 = vld [vmem:[%s253 + $0x30] sm:$0xf]
      %v412 = vld [vmem:[%s253 + $0x34] sm:$0xf]
      %v413 = vld [vmem:[%s253 + $0x38] sm:$0xf]
      %v414 = vld [vmem:[%s253 + $0x3c] sm:$0xf]
      %v415 = vld [vmem:[%s253 + $0x40] sm:$0xf]
      %v416 = vld [vmem:[%s253 + $0x44] sm:$0xf]
      %v417 = vld [vmem:[%s253 + $0x48] sm:$0xf]
      %v418 = vld [vmem:[%s253 + $0x4c] sm:$0xf]
      %v419 = vld [vmem:[%s253 + $0x50] sm:$0xf]
      %v420 = vld [vmem:[%s253 + $0x54] sm:$0xf]
      %v421 = vld [vmem:[%s253 + $0x58] sm:$0xf]
      %v422 = vld [vmem:[%s253 + $0x5c] sm:$0xf]
      %v423 = vld [vmem:[%s253 + $0x60] sm:$0xf]
      %v424 = vld [vmem:[%s253 + $0x64] sm:$0xf]
      %v425 = vld [vmem:[%s253 + $0x68] sm:$0xf]
      %v426 = vld [vmem:[%s253 + $0x6c] sm:$0xf]
      %v427 = vld [vmem:[%s253 + $0x70] sm:$0xf]
      %v428 = vld [vmem:[%s253 + $0x74] sm:$0xf]
      %v429 = vld [vmem:[%s253 + $0x78] sm:$0xf]
      %v430 = vld [vmem:[%s253 + $0x7c] sm:$0xf]
      %v431 = vld [vmem:[%s253 + $0x80] sm:$0xf]
      %v432 = vld [vmem:[%s253 + $0x84] sm:$0xf]
      %v433 = vld [vmem:[%s253 + $0x88] sm:$0xf]
      %v434 = vld [vmem:[%s253 + $0x8c] sm:$0xf]
      %v435 = vld [vmem:[%s253 + $0x90] sm:$0xf]
      %v436 = vld [vmem:[%s253 + $0x94] sm:$0xf]
      %v437 = vld [vmem:[%s253 + $0x98] sm:$0xf]
      %v438 = vld [vmem:[%s253 + $0x9c] sm:$0xf]
      %v439 = vld [vmem:[%s253 + $0xa0] sm:$0xf]
      %v440 = vld [vmem:[%s253 + $0xa4] sm:$0xf]
      %v441 = vld [vmem:[%s253 + $0xa8] sm:$0xf]
      %v442 = vld [vmem:[%s253 + $0xac] sm:$0xf]
      %v443 = vld [vmem:[%s253 + $0xb0] sm:$0xf]
      %v444 = vld [vmem:[%s253 + $0xb4] sm:$0xf]
      %v445 = vld [vmem:[%s253 + $0xb8] sm:$0xf]
      %v446 = vld [vmem:[%s253 + $0xbc] sm:$0xf]
      %v511 = vunpack.c.l.b16 %v335
      %v512 = vunpack.c.h.b16 %v335
      %v513 = vunpack.c.l.b16 %v336
      %v514 = vunpack.c.l.b16 %v337
      %v515 = vunpack.c.h.b16 %v337
      %v516 = vunpack.c.l.b16 %v338
      %v517 = vunpack.c.l.b16 %v339
      %v518 = vunpack.c.h.b16 %v339
      %v519 = vunpack.c.l.b16 %v340
      %v520 = vunpack.c.l.b16 %v341
      %v521 = vunpack.c.h.b16 %v341
      %v522 = vunpack.c.l.b16 %v342
      %v523 = vunpack.c.l.b16 %v343
      %v524 = vunpack.c.h.b16 %v343
      %v525 = vunpack.c.l.b16 %v344
      %v526 = vunpack.c.l.b16 %v345
      %v527 = vunpack.c.h.b16 %v345
      %v528 = vunpack.c.l.b16 %v346
      %v529 = vunpack.c.l.b16 %v347
      %v530 = vunpack.c.h.b16 %v347
      %v531 = vunpack.c.l.b16 %v348
      %v532 = vunpack.c.l.b16 %v349
      %v533 = vunpack.c.h.b16 %v349
      %v534 = vunpack.c.l.b16 %v350
      %v535 = vunpack.c.l.b16 %v351
      %v536 = vunpack.c.h.b16 %v351
      %v537 = vunpack.c.l.b16 %v352
      %v538 = vunpack.c.l.b16 %v353
      %v539 = vunpack.c.h.b16 %v353
      %v540 = vunpack.c.l.b16 %v354
      %v541 = vunpack.c.l.b16 %v355
      %v542 = vunpack.c.h.b16 %v355
      %v543 = vunpack.c.l.b16 %v356
      %v544 = vunpack.c.l.b16 %v357
      %v545 = vunpack.c.h.b16 %v357
      %v546 = vunpack.c.l.b16 %v358
      %v547 = vunpack.c.l.b16 %v359
      %v548 = vunpack.c.h.b16 %v359
      %v549 = vunpack.c.l.b16 %v360
      %v550 = vunpack.c.l.b16 %v361
      %v551 = vunpack.c.h.b16 %v361
      %v552 = vunpack.c.l.b16 %v362
      %v553 = vunpack.c.l.b16 %v363
      %v554 = vunpack.c.h.b16 %v363
      %v555 = vunpack.c.l.b16 %v364
      %v556 = vunpack.c.l.b16 %v365
      %v557 = vunpack.c.h.b16 %v365
      %v558 = vunpack.c.l.b16 %v366
      %v559 = vunpack.c.l.b16 %v367
      %v560 = vunpack.c.h.b16 %v367
      %v561 = vunpack.c.l.b16 %v368
      %v562 = vunpack.c.l.b16 %v369
      %v563 = vunpack.c.h.b16 %v369
      %v564 = vunpack.c.l.b16 %v370
      %v565 = vunpack.c.l.b16 %v371
      %v566 = vunpack.c.h.b16 %v371
      %v567 = vunpack.c.l.b16 %v372
      %v568 = vunpack.c.l.b16 %v373
      %v569 = vunpack.c.h.b16 %v373
      %v570 = vunpack.c.l.b16 %v374
      %v571 = vunpack.c.l.b16 %v375
      %v572 = vunpack.c.h.b16 %v375
      %v573 = vunpack.c.l.b16 %v376
      %v574 = vunpack.c.l.b16 %v377
      %v575 = vunpack.c.h.b16 %v377
      %v576 = vunpack.c.l.b16 %v378
      %v577 = vunpack.c.l.b16 %v379
      %v578 = vunpack.c.h.b16 %v379
      %v579 = vunpack.c.l.b16 %v380
      %v580 = vunpack.c.l.b16 %v381
      %v581 = vunpack.c.h.b16 %v381
      %v582 = vunpack.c.l.b16 %v382
      %v583 = vunpack.c.l.b16 %v383
      %v584 = vunpack.c.h.b16 %v383
      %v585 = vunpack.c.l.b16 %v384
      %v586 = vunpack.c.l.b16 %v385
      %v587 = vunpack.c.h.b16 %v385
      %v588 = vunpack.c.l.b16 %v386
      %v589 = vunpack.c.l.b16 %v387
      %v590 = vunpack.c.h.b16 %v387
      %v591 = vunpack.c.l.b16 %v388
      %v592 = vunpack.c.l.b16 %v389
      %v593 = vunpack.c.h.b16 %v389
      %v594 = vunpack.c.l.b16 %v390
      %v595 = vunpack.c.l.b16 %v391
      %v596 = vunpack.c.h.b16 %v391
      %v597 = vunpack.c.l.b16 %v392
      %v598 = vunpack.c.l.b16 %v393
      %v599 = vunpack.c.h.b16 %v393
      %v600 = vunpack.c.l.b16 %v394
      %v601 = vunpack.c.l.b16 %v395
      %v602 = vunpack.c.h.b16 %v395
      %v603 = vunpack.c.l.b16 %v396
      %v604 = vunpack.c.l.b16 %v397
      %v605 = vunpack.c.h.b16 %v397
      %v606 = vunpack.c.l.b16 %v398
      %v607 = vpack.c.b16 %v514, %v511
      %v608 = vpack.c.b16 %v515, %v512
      %v609 = vpack.c.b16 %v516, %v513
      %v610 = vpack.c.b16 %v520, %v517
      %v611 = vpack.c.b16 %v521, %v518
      %v612 = vpack.c.b16 %v522, %v519
      %v613 = vpack.c.b16 %v526, %v523
      %v614 = vpack.c.b16 %v527, %v524
      %v615 = vpack.c.b16 %v528, %v525
      %v616 = vpack.c.b16 %v532, %v529
      %v617 = vpack.c.b16 %v533, %v530
      %v618 = vpack.c.b16 %v534, %v531
      %v619 = vpack.c.b16 %v538, %v535
      %v620 = vpack.c.b16 %v539, %v536
      %v621 = vpack.c.b16 %v540, %v537
      %v622 = vpack.c.b16 %v544, %v541
      %v623 = vpack.c.b16 %v545, %v542
      %v624 = vpack.c.b16 %v546, %v543
      %v625 = vpack.c.b16 %v550, %v547
      %v626 = vpack.c.b16 %v551, %v548
      %v627 = vpack.c.b16 %v552, %v549
      %v628 = vpack.c.b16 %v556, %v553
      %v629 = vpack.c.b16 %v557, %v554
      %v630 = vpack.c.b16 %v558, %v555
      %v631 = vpack.c.b16 %v562, %v559
      %v632 = vpack.c.b16 %v563, %v560
      %v633 = vpack.c.b16 %v564, %v561
      %v634 = vpack.c.b16 %v568, %v565
      %v635 = vpack.c.b16 %v569, %v566
      %v636 = vpack.c.b16 %v570, %v567
      %v637 = vpack.c.b16 %v574, %v571
      %v638 = vpack.c.b16 %v575, %v572
      %v639 = vpack.c.b16 %v576, %v573
      %v640 = vpack.c.b16 %v580, %v577
      %v641 = vpack.c.b16 %v581, %v578
      %v642 = vpack.c.b16 %v582, %v579
      %v643 = vpack.c.b16 %v586, %v583
      %v644 = vpack.c.b16 %v587, %v584
      %v645 = vpack.c.b16 %v588, %v585
      %v646 = vpack.c.b16 %v592, %v589
      %v647 = vpack.c.b16 %v593, %v590
      %v648 = vpack.c.b16 %v594, %v591
      %v649 = vpack.c.b16 %v598, %v595
      %v650 = vpack.c.b16 %v599, %v596
      %v651 = vpack.c.b16 %v600, %v597
      %v652 = vpack.c.b16 %v604, %v601
      %v653 = vpack.c.b16 %v605, %v602
      %v654 = vpack.c.b16 %v606, %v603
      %v751 = vunpack.c.l.b16 %v399
      %v752 = vunpack.c.l.b16 %v400
      %v753 = vunpack.c.l.b16 %v401
      %v754 = vunpack.c.l.b16 %v402
      %v755 = vunpack.c.l.b16 %v403
      %v756 = vunpack.c.l.b16 %v404
      %v757 = vunpack.c.l.b16 %v405
      %v758 = vunpack.c.l.b16 %v406
      %v759 = vunpack.c.l.b16 %v407
      %v760 = vunpack.c.l.b16 %v408
      %v761 = vunpack.c.l.b16 %v409
      %v762 = vunpack.c.l.b16 %v410
      %v763 = vunpack.c.l.b16 %v411
      %v764 = vunpack.c.l.b16 %v412
      %v765 = vunpack.c.l.b16 %v413
      %v766 = vunpack.c.l.b16 %v414
      %v767 = vunpack.c.l.b16 %v415
      %v768 = vunpack.c.l.b16 %v416
      %v769 = vunpack.c.l.b16 %v417
      %v770 = vunpack.c.l.b16 %v418
      %v771 = vunpack.c.l.b16 %v419
      %v772 = vunpack.c.l.b16 %v420
      %v773 = vunpack.c.l.b16 %v421
      %v774 = vunpack.c.l.b16 %v422
      %v775 = vunpack.c.l.b16 %v423
      %v776 = vunpack.c.l.b16 %v424
      %v777 = vunpack.c.l.b16 %v425
      %v778 = vunpack.c.l.b16 %v426
      %v779 = vunpack.c.l.b16 %v427
      %v780 = vunpack.c.l.b16 %v428
      %v781 = vunpack.c.l.b16 %v429
      %v782 = vunpack.c.l.b16 %v430
      %v783 = vunpack.c.l.b16 %v431
      %v784 = vunpack.c.l.b16 %v432
      %v785 = vunpack.c.l.b16 %v433
      %v786 = vunpack.c.l.b16 %v434
      %v787 = vunpack.c.l.b16 %v435
      %v788 = vunpack.c.l.b16 %v436
      %v789 = vunpack.c.l.b16 %v437
      %v790 = vunpack.c.l.b16 %v438
      %v791 = vunpack.c.l.b16 %v439
      %v792 = vunpack.c.l.b16 %v440
      %v793 = vunpack.c.l.b16 %v441
      %v794 = vunpack.c.l.b16 %v442
      %v795 = vunpack.c.l.b16 %v443
      %v796 = vunpack.c.l.b16 %v444
      %v797 = vunpack.c.l.b16 %v445
      %v798 = vunpack.c.l.b16 %v446
      %v799 = vpack.c.b16 %v752, %v751
      %v800 = vpack.c.b16 %v754, %v753
      %v801 = vpack.c.b16 %v756, %v755
      %v802 = vpack.c.b16 %v758, %v757
      %v803 = vpack.c.b16 %v760, %v759
      %v804 = vpack.c.b16 %v762, %v761
      %v805 = vpack.c.b16 %v764, %v763
      %v806 = vpack.c.b16 %v766, %v765
      %v807 = vpack.c.b16 %v768, %v767
      %v808 = vpack.c.b16 %v770, %v769
      %v809 = vpack.c.b16 %v772, %v771
      %v810 = vpack.c.b16 %v774, %v773
      %v811 = vpack.c.b16 %v776, %v775
      %v812 = vpack.c.b16 %v778, %v777
      %v813 = vpack.c.b16 %v780, %v779
      %v814 = vpack.c.b16 %v782, %v781
      %v815 = vpack.c.b16 %v784, %v783
      %v816 = vpack.c.b16 %v786, %v785
      %v817 = vpack.c.b16 %v788, %v787
      %v818 = vpack.c.b16 %v790, %v789
      %v819 = vpack.c.b16 %v792, %v791
      %v820 = vpack.c.b16 %v794, %v793
      %v821 = vpack.c.b16 %v796, %v795
      %v822 = vpack.c.b16 %v798, %v797
      %847 = vmatpush.bf16.msra.mxu0 %v806
      %848 = vmatpush.bf16.msra.mxu0 %v805
      %849 = vmatpush.bf16.msra.mxu0 %v804
      %850 = vmatpush.bf16.msra.mxu0 %v803
      %851 = vmatpush.bf16.msra.mxu0 %v802
      %852 = vmatpush.bf16.msra.mxu0 %v801
      %853 = vmatpush.bf16.msra.mxu0 %v800
      %854 = vmatpush.bf16.msra.mxu0 %v799
      %855 = vmatmul.bf16.gmra.mxu0 %v607
      %v856 = vpop.f32.mrf.mxu0
      %v857 = vadd.f32 0.0, %v856
      %v858 = vpop.f32.mrf.mxu0
      %v859 = vadd.f32 0.0, %v858
      %860 = vmatmul.bf16.gmra.mxu0 %v610
      %v861 = vpop.f32.mrf.mxu0
      %v862 = vadd.f32 0.0, %v861
      %v863 = vpop.f32.mrf.mxu0
      %v864 = vadd.f32 0.0, %v863
      %865 = vmatmul.bf16.gmra.mxu0 %v613
      %v866 = vpop.f32.mrf.mxu0
      %v867 = vadd.f32 0.0, %v866
      %v868 = vpop.f32.mrf.mxu0
      %v869 = vadd.f32 0.0, %v868
      %870 = vmatmul.bf16.gmra.mxu0 %v616
      %v871 = vpop.f32.mrf.mxu0
      %v872 = vadd.f32 0.0, %v871
      %v873 = vpop.f32.mrf.mxu0
      %v874 = vadd.f32 0.0, %v873
      %875 = vmatmul.bf16.gmra.mxu0 %v619
      %v876 = vpop.f32.mrf.mxu0
      %v877 = vadd.f32 0.0, %v876
      %v878 = vpop.f32.mrf.mxu0
      %v879 = vadd.f32 0.0, %v878
      %880 = vmatmul.bf16.gmra.mxu0 %v622
      %v881 = vpop.f32.mrf.mxu0
      %v882 = vadd.f32 0.0, %v881
      %v883 = vpop.f32.mrf.mxu0
      %v884 = vadd.f32 0.0, %v883
      %885 = vmatmul.bf16.gmra.mxu0 %v625
      %v886 = vpop.f32.mrf.mxu0
      %v887 = vadd.f32 0.0, %v886
      %v888 = vpop.f32.mrf.mxu0
      %v889 = vadd.f32 0.0, %v888
      %890 = vmatmul.bf16.gmra.mxu0 %v628
      %v891 = vpop.f32.mrf.mxu0
      %v892 = vadd.f32 0.0, %v891
      %v893 = vpop.f32.mrf.mxu0
      %v894 = vadd.f32 0.0, %v893
      %895 = vmatmul.bf16.gmra.mxu0 %v631
      %v896 = vpop.f32.mrf.mxu0
      %v897 = vadd.f32 0.0, %v896
      %v898 = vpop.f32.mrf.mxu0
      %v899 = vadd.f32 0.0, %v898
      %900 = vmatmul.bf16.gmra.mxu0 %v634
      %v901 = vpop.f32.mrf.mxu0
      %v902 = vadd.f32 0.0, %v901
      %v903 = vpop.f32.mrf.mxu0
      %v904 = vadd.f32 0.0, %v903
      %905 = vmatmul.bf16.gmra.mxu0 %v637
      %v906 = vpop.f32.mrf.mxu0
      %v907 = vadd.f32 0.0, %v906
      %v908 = vpop.f32.mrf.mxu0
      %v909 = vadd.f32 0.0, %v908
      %910 = vmatmul.bf16.gmra.mxu0 %v640
      %v911 = vpop.f32.mrf.mxu0
      %v912 = vadd.f32 0.0, %v911
      %v913 = vpop.f32.mrf.mxu0
      %v914 = vadd.f32 0.0, %v913
      %915 = vmatmul.bf16.gmra.mxu0 %v643
      %v916 = vpop.f32.mrf.mxu0
      %v917 = vadd.f32 0.0, %v916
      %v918 = vpop.f32.mrf.mxu0
      %v919 = vadd.f32 0.0, %v918
      %920 = vmatmul.bf16.gmra.mxu0 %v646
      %v921 = vpop.f32.mrf.mxu0
      %v922 = vadd.f32 0.0, %v921
      %v923 = vpop.f32.mrf.mxu0
      %v924 = vadd.f32 0.0, %v923
      %925 = vmatmul.bf16.gmra.mxu0 %v649
      %v926 = vpop.f32.mrf.mxu0
      %v927 = vadd.f32 0.0, %v926
      %v928 = vpop.f32.mrf.mxu0
      %v929 = vadd.f32 0.0, %v928
      %930 = vmatmul.bf16.gmra.mxu0 %v652
      %v931 = vpop.f32.mrf.mxu0
      %v932 = vadd.f32 0.0, %v931
      %v933 = vpop.f32.mrf.mxu0
      %v934 = vadd.f32 0.0, %v933
      %935 = vdwg.mxu0
      %936 = vmatpush.bf16.msra.mxu0 %v814
      %937 = vmatpush.bf16.msra.mxu0 %v813
      %938 = vmatpush.bf16.msra.mxu0 %v812
      %939 = vmatpush.bf16.msra.mxu0 %v811
      %940 = vmatpush.bf16.msra.mxu0 %v810
      %941 = vmatpush.bf16.msra.mxu0 %v809
      %942 = vmatpush.bf16.msra.mxu0 %v808
      %943 = vmatpush.bf16.msra.mxu0 %v807
      %944 = vmatmul.bf16.gmra.mxu0 %v608
      %v945 = vpop.f32.mrf.mxu0
      %v946 = vadd.f32 %v857, %v945
      %v947 = vpop.f32.mrf.mxu0
      %v948 = vadd.f32 %v859, %v947
      %949 = vmatmul.bf16.gmra.mxu0 %v611
      %v950 = vpop.f32.mrf.mxu0
      %v951 = vadd.f32 %v862, %v950
      %v952 = vpop.f32.mrf.mxu0
      %v953 = vadd.f32 %v864, %v952
      %954 = vmatmul.bf16.gmra.mxu0 %v614
      %v955 = vpop.f32.mrf.mxu0
      %v956 = vadd.f32 %v867, %v955
      %v957 = vpop.f32.mrf.mxu0
      %v958 = vadd.f32 %v869, %v957
      %959 = vmatmul.bf16.gmra.mxu0 %v617
      %v960 = vpop.f32.mrf.mxu0
      %v961 = vadd.f32 %v872, %v960
      %v962 = vpop.f32.mrf.mxu0
      %v963 = vadd.f32 %v874, %v962
      %964 = vmatmul.bf16.gmra.mxu0 %v620
      %v965 = vpop.f32.mrf.mxu0
      %v966 = vadd.f32 %v877, %v965
      %v967 = vpop.f32.mrf.mxu0
      %v968 = vadd.f32 %v879, %v967
      %969 = vmatmul.bf16.gmra.mxu0 %v623
      %v970 = vpop.f32.mrf.mxu0
      %v971 = vadd.f32 %v882, %v970
      %v972 = vpop.f32.mrf.mxu0
      %v973 = vadd.f32 %v884, %v972
      %974 = vmatmul.bf16.gmra.mxu0 %v626
      %v975 = vpop.f32.mrf.mxu0
      %v976 = vadd.f32 %v887, %v975
      %v977 = vpop.f32.mrf.mxu0
      %v978 = vadd.f32 %v889, %v977
      %979 = vmatmul.bf16.gmra.mxu0 %v629
      %v980 = vpop.f32.mrf.mxu0
      %v981 = vadd.f32 %v892, %v980
      %v982 = vpop.f32.mrf.mxu0
      %v983 = vadd.f32 %v894, %v982
      %984 = vmatmul.bf16.gmra.mxu0 %v632
      %v985 = vpop.f32.mrf.mxu0
      %v986 = vadd.f32 %v897, %v985
      %v987 = vpop.f32.mrf.mxu0
      %v988 = vadd.f32 %v899, %v987
      %989 = vmatmul.bf16.gmra.mxu0 %v635
      %v990 = vpop.f32.mrf.mxu0
      %v991 = vadd.f32 %v902, %v990
      %v992 = vpop.f32.mrf.mxu0
      %v993 = vadd.f32 %v904, %v992
      %994 = vmatmul.bf16.gmra.mxu0 %v638
      %v995 = vpop.f32.mrf.mxu0
      %v996 = vadd.f32 %v907, %v995
      %v997 = vpop.f32.mrf.mxu0
      %v998 = vadd.f32 %v909, %v997
      %999 = vmatmul.bf16.gmra.mxu0 %v641
      %v1000 = vpop.f32.mrf.mxu0
      %v1001 = vadd.f32 %v912, %v1000
      %v1002 = vpop.f32.mrf.mxu0
      %v1003 = vadd.f32 %v914, %v1002
      %1004 = vmatmul.bf16.gmra.mxu0 %v644
      %v1005 = vpop.f32.mrf.mxu0
      %v1006 = vadd.f32 %v917, %v1005
      %v1007 = vpop.f32.mrf.mxu0
      %v1008 = vadd.f32 %v919, %v1007
      %1009 = vmatmul.bf16.gmra.mxu0 %v647
      %v1010 = vpop.f32.mrf.mxu0
      %v1011 = vadd.f32 %v922, %v1010
      %v1012 = vpop.f32.mrf.mxu0
      %v1013 = vadd.f32 %v924, %v1012
      %1014 = vmatmul.bf16.gmra.mxu0 %v650
      %v1015 = vpop.f32.mrf.mxu0
      %v1016 = vadd.f32 %v927, %v1015
      %v1017 = vpop.f32.mrf.mxu0
      %v1018 = vadd.f32 %v929, %v1017
      %1019 = vmatmul.bf16.gmra.mxu0 %v653
      %v1020 = vpop.f32.mrf.mxu0
      %v1021 = vadd.f32 %v932, %v1020
      %v1022 = vpop.f32.mrf.mxu0
      %v1023 = vadd.f32 %v934, %v1022
      %1024 = vdwg.mxu0
      %1025 = vmatpush.bf16.msra.mxu0 %v822
      %1026 = vmatpush.bf16.msra.mxu0 %v821
      %1027 = vmatpush.bf16.msra.mxu0 %v820
      %1028 = vmatpush.bf16.msra.mxu0 %v819
      %1029 = vmatpush.bf16.msra.mxu0 %v818
      %1030 = vmatpush.bf16.msra.mxu0 %v817
      %1031 = vmatpush.bf16.msra.mxu0 %v816
      %1032 = vmatpush.bf16.msra.mxu0 %v815
      %1033 = vmatmul.bf16.gmra.mxu0 %v609
      %v1034 = vpop.f32.mrf.mxu0
      %v1035 = vadd.f32 %v946, %v1034
      %v1036 = vpop.f32.mrf.mxu0
      %v1037 = vadd.f32 %v948, %v1036
      %1038 = vmatmul.bf16.gmra.mxu0 %v612
      %v1039 = vpop.f32.mrf.mxu0
      %v1040 = vadd.f32 %v951, %v1039
      %v1041 = vpop.f32.mrf.mxu0
      %v1042 = vadd.f32 %v953, %v1041
      %1043 = vmatmul.bf16.gmra.mxu0 %v615
      %v1044 = vpop.f32.mrf.mxu0
      %v1045 = vadd.f32 %v956, %v1044
      %v1046 = vpop.f32.mrf.mxu0
      %v1047 = vadd.f32 %v958, %v1046
      %1048 = vmatmul.bf16.gmra.mxu0 %v618
      %v1049 = vpop.f32.mrf.mxu0
      %v1050 = vadd.f32 %v961, %v1049
      %v1051 = vpop.f32.mrf.mxu0
      %v1052 = vadd.f32 %v963, %v1051
      %1053 = vmatmul.bf16.gmra.mxu0 %v621
      %v1054 = vpop.f32.mrf.mxu0
      %v1055 = vadd.f32 %v966, %v1054
      %v1056 = vpop.f32.mrf.mxu0
      %v1057 = vadd.f32 %v968, %v1056
      %1058 = vmatmul.bf16.gmra.mxu0 %v624
      %v1059 = vpop.f32.mrf.mxu0
      %v1060 = vadd.f32 %v971, %v1059
      %v1061 = vpop.f32.mrf.mxu0
      %v1062 = vadd.f32 %v973, %v1061
      %1063 = vmatmul.bf16.gmra.mxu0 %v627
      %v1064 = vpop.f32.mrf.mxu0
      %v1065 = vadd.f32 %v976, %v1064
      %v1066 = vpop.f32.mrf.mxu0
      %v1067 = vadd.f32 %v978, %v1066
      %1068 = vmatmul.bf16.gmra.mxu0 %v630
      %v1069 = vpop.f32.mrf.mxu0
      %v1070 = vadd.f32 %v981, %v1069
      %v1071 = vpop.f32.mrf.mxu0
      %v1072 = vadd.f32 %v983, %v1071
      %1073 = vmatmul.bf16.gmra.mxu0 %v633
      %v1074 = vpop.f32.mrf.mxu0
      %v1075 = vadd.f32 %v986, %v1074
      %v1076 = vpop.f32.mrf.mxu0
      %v1077 = vadd.f32 %v988, %v1076
      %1078 = vmatmul.bf16.gmra.mxu0 %v636
      %v1079 = vpop.f32.mrf.mxu0
      %v1080 = vadd.f32 %v991, %v1079
      %v1081 = vpop.f32.mrf.mxu0
      %v1082 = vadd.f32 %v993, %v1081
      %1083 = vmatmul.bf16.gmra.mxu0 %v639
      %v1084 = vpop.f32.mrf.mxu0
      %v1085 = vadd.f32 %v996, %v1084
      %v1086 = vpop.f32.mrf.mxu0
      %v1087 = vadd.f32 %v998, %v1086
      %1088 = vmatmul.bf16.gmra.mxu0 %v642
      %v1089 = vpop.f32.mrf.mxu0
      %v1090 = vadd.f32 %v1001, %v1089
      %v1091 = vpop.f32.mrf.mxu0
      %v1092 = vadd.f32 %v1003, %v1091
      %1093 = vmatmul.bf16.gmra.mxu0 %v645
      %v1094 = vpop.f32.mrf.mxu0
      %v1095 = vadd.f32 %v1006, %v1094
      %v1096 = vpop.f32.mrf.mxu0
      %v1097 = vadd.f32 %v1008, %v1096
      %1098 = vmatmul.bf16.gmra.mxu0 %v648
      %v1099 = vpop.f32.mrf.mxu0
      %v1100 = vadd.f32 %v1011, %v1099
      %v1101 = vpop.f32.mrf.mxu0
      %v1102 = vadd.f32 %v1013, %v1101
      %1103 = vmatmul.bf16.gmra.mxu0 %v651
      %v1104 = vpop.f32.mrf.mxu0
      %v1105 = vadd.f32 %v1016, %v1104
      %v1106 = vpop.f32.mrf.mxu0
      %v1107 = vadd.f32 %v1018, %v1106
      %1108 = vmatmul.bf16.gmra.mxu0 %v654
      %v1109 = vpop.f32.mrf.mxu0
      %v1110 = vadd.f32 %v1021, %v1109
      %v1111 = vpop.f32.mrf.mxu0
      %v1112 = vadd.f32 %v1023, %v1111
      %1113 = vdwg.mxu0
      %v1114 = vadd.f32 %v303, %v1035
      %v1115 = vadd.f32 %v304, %v1037
      %v1116 = vadd.f32 %v305, %v1040
      %v1117 = vadd.f32 %v306, %v1042
      %v1118 = vadd.f32 %v307, %v1045
      %v1119 = vadd.f32 %v308, %v1047
      %v1120 = vadd.f32 %v309, %v1050
      %v1121 = vadd.f32 %v310, %v1052
      %v1122 = vadd.f32 %v311, %v1055
      %v1123 = vadd.f32 %v312, %v1057
      %v1124 = vadd.f32 %v313, %v1060
      %v1125 = vadd.f32 %v314, %v1062
      %v1126 = vadd.f32 %v315, %v1065
      %v1127 = vadd.f32 %v316, %v1067
      %v1128 = vadd.f32 %v317, %v1070
      %v1129 = vadd.f32 %v318, %v1072
      %v1130 = vadd.f32 %v319, %v1075
      %v1131 = vadd.f32 %v320, %v1077
      %v1132 = vadd.f32 %v321, %v1080
      %v1133 = vadd.f32 %v322, %v1082
      %v1134 = vadd.f32 %v323, %v1085
      %v1135 = vadd.f32 %v324, %v1087
      %v1136 = vadd.f32 %v325, %v1090
      %v1137 = vadd.f32 %v326, %v1092
      %v1138 = vadd.f32 %v327, %v1095
      %v1139 = vadd.f32 %v328, %v1097
      %v1140 = vadd.f32 %v329, %v1100
      %v1141 = vadd.f32 %v330, %v1102
      %v1142 = vadd.f32 %v331, %v1105
      %v1143 = vadd.f32 %v332, %v1107
      %v1144 = vadd.f32 %v333, %v1110
      %v1145 = vadd.f32 %v334, %v1112
      %1146 = vst [vmem:[#allocation2] sm:$0xff] %v1114
      %1147 = vst [vmem:[#allocation2 + $0x8] sm:$0xff] %v1115
      %1148 = vst [vmem:[#allocation2 + $0x10] sm:$0xff] %v1116
      %1149 = vst [vmem:[#allocation2 + $0x18] sm:$0xff] %v1117
      %1150 = vst [vmem:[#allocation2 + $0x20] sm:$0xff] %v1118
      %1151 = vst [vmem:[#allocation2 + $0x28] sm:$0xff] %v1119
      %1152 = vst [vmem:[#allocation2 + $0x30] sm:$0xff] %v1120
      %1153 = vst [vmem:[#allocation2 + $0x38] sm:$0xff] %v1121
      %1154 = vst [vmem:[#allocation2 + $0x40] sm:$0xff] %v1122
      %1155 = vst [vmem:[#allocation2 + $0x48] sm:$0xff] %v1123
      %1156 = vst [vmem:[#allocation2 + $0x50] sm:$0xff] %v1124
      %1157 = vst [vmem:[#allocation2 + $0x58] sm:$0xff] %v1125
      %1158 = vst [vmem:[#allocation2 + $0x60] sm:$0xff] %v1126
      %1159 = vst [vmem:[#allocation2 + $0x68] sm:$0xff] %v1127
      %1160 = vst [vmem:[#allocation2 + $0x70] sm:$0xff] %v1128
      %1161 = vst [vmem:[#allocation2 + $0x78] sm:$0xff] %v1129
      %1162 = vst [vmem:[#allocation2 + $0x80] sm:$0xff] %v1130
      %1163 = vst [vmem:[#allocation2 + $0x88] sm:$0xff] %v1131
      %1164 = vst [vmem:[#allocation2 + $0x90] sm:$0xff] %v1132
      %1165 = vst [vmem:[#allocation2 + $0x98] sm:$0xff] %v1133
      %1166 = vst [vmem:[#allocation2 + $0xa0] sm:$0xff] %v1134
      %1167 = vst [vmem:[#allocation2 + $0xa8] sm:$0xff] %v1135
      %1168 = vst [vmem:[#allocation2 + $0xb0] sm:$0xff] %v1136
      %1169 = vst [vmem:[#allocation2 + $0xb8] sm:$0xff] %v1137
      %1170 = vst [vmem:[#allocation2 + $0xc0] sm:$0xff] %v1138
      %1171 = vst [vmem:[#allocation2 + $0xc8] sm:$0xff] %v1139
      %1172 = vst [vmem:[#allocation2 + $0xd0] sm:$0xff] %v1140
      %1173 = vst [vmem:[#allocation2 + $0xd8] sm:$0xff] %v1141
      %1174 = vst [vmem:[#allocation2 + $0xe0] sm:$0xff] %v1142
      %1175 = vst [vmem:[#allocation2 + $0xe8] sm:$0xff] %v1143
      %1176 = vst [vmem:[#allocation2 + $0xf0] sm:$0xff] %v1144
      %1177 = vst [vmem:[#allocation2 + $0xf8] sm:$0xff] %v1145
      // Predicated region
      $region37: #{flownet_encoder_forward.6} parent=31 // pred_check
        %p1178 = pneg %p267
      $region38: #{flownet_encoder_forward.6} parent=31 // pred_check_branch
        %1180 = sbr.rel (%p1178) target = $region40
      $region39: #{flownet_encoder_forward.6} parent=31 // pred_region
        %v1181 = vld [vmem:[#allocation2] sm:$0xff]
        %v1182 = vld [vmem:[#allocation2 + $0x8] sm:$0xff]
        %v1183 = vld [vmem:[#allocation2 + $0x10] sm:$0xff]
        %v1184 = vld [vmem:[#allocation2 + $0x18] sm:$0xff]
        %v1185 = vld [vmem:[#allocation2 + $0x20] sm:$0xff]
        %v1186 = vld [vmem:[#allocation2 + $0x28] sm:$0xff]
        %v1187 = vld [vmem:[#allocation2 + $0x30] sm:$0xff]
        %v1188 = vld [vmem:[#allocation2 + $0x38] sm:$0xff]
        %v1189 = vld [vmem:[#allocation2 + $0x40] sm:$0xff]
        %v1190 = vld [vmem:[#allocation2 + $0x48] sm:$0xff]
        %v1191 = vld [vmem:[#allocation2 + $0x50] sm:$0xff]
        %v1192 = vld [vmem:[#allocation2 + $0x58] sm:$0xff]
        %v1193 = vld [vmem:[#allocation2 + $0x60] sm:$0xff]
        %v1194 = vld [vmem:[#allocation2 + $0x68] sm:$0xff]
        %v1195 = vld [vmem:[#allocation2 + $0x70] sm:$0xff]
        %v1196 = vld [vmem:[#allocation2 + $0x78] sm:$0xff]
        %v1197 = vld [vmem:[#allocation2 + $0x80] sm:$0xff]
        %v1198 = vld [vmem:[#allocation2 + $0x88] sm:$0xff]
        %v1199 = vld [vmem:[#allocation2 + $0x90] sm:$0xff]
        %v1200 = vld [vmem:[#allocation2 + $0x98] sm:$0xff]
        %v1201 = vld [vmem:[#allocation2 + $0xa0] sm:$0xff]
        %v1202 = vld [vmem:[#allocation2 + $0xa8] sm:$0xff]
        %v1203 = vld [vmem:[#allocation2 + $0xb0] sm:$0xff]
        %v1204 = vld [vmem:[#allocation2 + $0xb8] sm:$0xff]
        %v1205 = vld [vmem:[#allocation2 + $0xc0] sm:$0xff]
        %v1206 = vld [vmem:[#allocation2 + $0xc8] sm:$0xff]
        %v1207 = vld [vmem:[#allocation2 + $0xd0] sm:$0xff]
        %v1208 = vld [vmem:[#allocation2 + $0xd8] sm:$0xff]
        %v1209 = vld [vmem:[#allocation2 + $0xe0] sm:$0xff]
        %v1210 = vld [vmem:[#allocation2 + $0xe8] sm:$0xff]
        %v1211 = vld [vmem:[#allocation2 + $0xf0] sm:$0xff]
        %v1212 = vld [vmem:[#allocation2 + $0xf8] sm:$0xff]
        %v1213 = vld [vmem:[%s257] sm:$0x1]
        %v1215 = vperm.slane %v1213, 0
        %v1217 = vadd.f32 %v1181, %v1215
        %v1218 = vadd.f32 %v1182, %v1215
        %v1219 = vadd.f32 %v1183, %v1215
        %v1220 = vadd.f32 %v1184, %v1215
        %v1221 = vadd.f32 %v1185, %v1215
        %v1222 = vadd.f32 %v1186, %v1215
        %v1223 = vadd.f32 %v1187, %v1215
        %v1224 = vadd.f32 %v1188, %v1215
        %v1225 = vadd.f32 %v1189, %v1215
        %v1226 = vadd.f32 %v1190, %v1215
        %v1227 = vadd.f32 %v1191, %v1215
        %v1228 = vadd.f32 %v1192, %v1215
        %v1229 = vadd.f32 %v1193, %v1215
        %v1230 = vadd.f32 %v1194, %v1215
        %v1231 = vadd.f32 %v1195, %v1215
        %v1232 = vadd.f32 %v1196, %v1215
        %v1233 = vadd.f32 %v1197, %v1215
        %v1234 = vadd.f32 %v1198, %v1215
        %v1235 = vadd.f32 %v1199, %v1215
        %v1236 = vadd.f32 %v1200, %v1215
        %v1237 = vadd.f32 %v1201, %v1215
        %v1238 = vadd.f32 %v1202, %v1215
        %v1239 = vadd.f32 %v1203, %v1215
        %v1240 = vadd.f32 %v1204, %v1215
        %v1241 = vadd.f32 %v1205, %v1215
        %v1242 = vadd.f32 %v1206, %v1215
        %v1243 = vadd.f32 %v1207, %v1215
        %v1244 = vadd.f32 %v1208, %v1215
        %v1245 = vadd.f32 %v1209, %v1215
        %v1246 = vadd.f32 %v1210, %v1215
        %v1247 = vadd.f32 %v1211, %v1215
        %v1248 = vadd.f32 %v1212, %v1215
        %vm1249 = vcmp.gt.f32.partialorder %v1217, 0.0
        %vm1250 = vcmp.gt.f32.partialorder %v1218, 0.0
        %vm1251 = vcmp.gt.f32.partialorder %v1219, 0.0
        %vm1252 = vcmp.gt.f32.partialorder %v1220, 0.0
        %vm1253 = vcmp.gt.f32.partialorder %v1221, 0.0
        %vm1254 = vcmp.gt.f32.partialorder %v1222, 0.0
        %vm1255 = vcmp.gt.f32.partialorder %v1223, 0.0
        %vm1256 = vcmp.gt.f32.partialorder %v1224, 0.0
        %vm1257 = vcmp.gt.f32.partialorder %v1225, 0.0
        %vm1258 = vcmp.gt.f32.partialorder %v1226, 0.0
        %vm1259 = vcmp.gt.f32.partialorder %v1227, 0.0
        %vm1260 = vcmp.gt.f32.partialorder %v1228, 0.0
        %vm1261 = vcmp.gt.f32.partialorder %v1229, 0.0
        %vm1262 = vcmp.gt.f32.partialorder %v1230, 0.0
        %vm1263 = vcmp.gt.f32.partialorder %v1231, 0.0
        %vm1264 = vcmp.gt.f32.partialorder %v1232, 0.0
        %vm1265 = vcmp.gt.f32.partialorder %v1233, 0.0
        %vm1266 = vcmp.gt.f32.partialorder %v1234, 0.0
        %vm1267 = vcmp.gt.f32.partialorder %v1235, 0.0
        %vm1268 = vcmp.gt.f32.partialorder %v1236, 0.0
        %vm1269 = vcmp.gt.f32.partialorder %v1237, 0.0
        %vm1270 = vcmp.gt.f32.partialorder %v1238, 0.0
        %vm1271 = vcmp.gt.f32.partialorder %v1239, 0.0
        %vm1272 = vcmp.gt.f32.partialorder %v1240, 0.0
        %vm1273 = vcmp.gt.f32.partialorder %v1241, 0.0
        %vm1274 = vcmp.gt.f32.partialorder %v1242, 0.0
        %vm1275 = vcmp.gt.f32.partialorder %v1243, 0.0
        %vm1276 = vcmp.gt.f32.partialorder %v1244, 0.0
        %vm1277 = vcmp.gt.f32.partialorder %v1245, 0.0
        %vm1278 = vcmp.gt.f32.partialorder %v1246, 0.0
        %vm1279 = vcmp.gt.f32.partialorder %v1247, 0.0
        %vm1280 = vcmp.gt.f32.partialorder %v1248, 0.0
        %v1281 = vmul.f32 %v1217, 0.01
        %v1282 = vmul.f32 %v1218, 0.01
        %v1283 = vmul.f32 %v1219, 0.01
        %v1284 = vmul.f32 %v1220, 0.01
        %v1285 = vmul.f32 %v1221, 0.01
        %v1286 = vmul.f32 %v1222, 0.01
        %v1287 = vmul.f32 %v1223, 0.01
        %v1288 = vmul.f32 %v1224, 0.01
        %v1289 = vmul.f32 %v1225, 0.01
        %v1290 = vmul.f32 %v1226, 0.01
        %v1291 = vmul.f32 %v1227, 0.01
        %v1292 = vmul.f32 %v1228, 0.01
        %v1293 = vmul.f32 %v1229, 0.01
        %v1294 = vmul.f32 %v1230, 0.01
        %v1295 = vmul.f32 %v1231, 0.01
        %v1296 = vmul.f32 %v1232, 0.01
        %v1297 = vmul.f32 %v1233, 0.01
        %v1298 = vmul.f32 %v1234, 0.01
        %v1299 = vmul.f32 %v1235, 0.01
        %v1300 = vmul.f32 %v1236, 0.01
        %v1301 = vmul.f32 %v1237, 0.01
        %v1302 = vmul.f32 %v1238, 0.01
        %v1303 = vmul.f32 %v1239, 0.01
        %v1304 = vmul.f32 %v1240, 0.01
        %v1305 = vmul.f32 %v1241, 0.01
        %v1306 = vmul.f32 %v1242, 0.01
        %v1307 = vmul.f32 %v1243, 0.01
        %v1308 = vmul.f32 %v1244, 0.01
        %v1309 = vmul.f32 %v1245, 0.01
        %v1310 = vmul.f32 %v1246, 0.01
        %v1311 = vmul.f32 %v1247, 0.01
        %v1312 = vmul.f32 %v1248, 0.01
        %v1313 = vsel %vm1249, %v1217, %v1281
        %v1314 = vsel %vm1250, %v1218, %v1282
        %v1315 = vsel %vm1251, %v1219, %v1283
        %v1316 = vsel %vm1252, %v1220, %v1284
        %v1317 = vsel %vm1253, %v1221, %v1285
        %v1318 = vsel %vm1254, %v1222, %v1286
        %v1319 = vsel %vm1255, %v1223, %v1287
        %v1320 = vsel %vm1256, %v1224, %v1288
        %v1321 = vsel %vm1257, %v1225, %v1289
        %v1322 = vsel %vm1258, %v1226, %v1290
        %v1323 = vsel %vm1259, %v1227, %v1291
        %v1324 = vsel %vm1260, %v1228, %v1292
        %v1325 = vsel %vm1261, %v1229, %v1293
        %v1326 = vsel %vm1262, %v1230, %v1294
        %v1327 = vsel %vm1263, %v1231, %v1295
        %v1328 = vsel %vm1264, %v1232, %v1296
        %v1329 = vsel %vm1265, %v1233, %v1297
        %v1330 = vsel %vm1266, %v1234, %v1298
        %v1331 = vsel %vm1267, %v1235, %v1299
        %v1332 = vsel %vm1268, %v1236, %v1300
        %v1333 = vsel %vm1269, %v1237, %v1301
        %v1334 = vsel %vm1270, %v1238, %v1302
        %v1335 = vsel %vm1271, %v1239, %v1303
        %v1336 = vsel %vm1272, %v1240, %v1304
        %v1337 = vsel %vm1273, %v1241, %v1305
        %v1338 = vsel %vm1274, %v1242, %v1306
        %v1339 = vsel %vm1275, %v1243, %v1307
        %v1340 = vsel %vm1276, %v1244, %v1308
        %v1341 = vsel %vm1277, %v1245, %v1309
        %v1342 = vsel %vm1278, %v1246, %v1310
        %v1343 = vsel %vm1279, %v1247, %v1311
        %v1344 = vsel %vm1280, %v1248, %v1312
        %1345 = vst [vmem:[%s265] sm:$0xff] %v1313
        %1346 = vst [vmem:[%s265 + $0x8] sm:$0xff] %v1314
        %1347 = vst [vmem:[%s265 + $0x10] sm:$0xff] %v1315
        %1348 = vst [vmem:[%s265 + $0x18] sm:$0xff] %v1316
        %1349 = vst [vmem:[%s265 + $0x20] sm:$0xff] %v1317
        %1350 = vst [vmem:[%s265 + $0x28] sm:$0xff] %v1318
        %1351 = vst [vmem:[%s265 + $0x30] sm:$0xff] %v1319
        %1352 = vst [vmem:[%s265 + $0x38] sm:$0xff] %v1320
        %1353 = vst [vmem:[%s265 + $0x40] sm:$0xff] %v1321
        %1354 = vst [vmem:[%s265 + $0x48] sm:$0xff] %v1322
        %1355 = vst [vmem:[%s265 + $0x50] sm:$0xff] %v1323
        %1356 = vst [vmem:[%s265 + $0x58] sm:$0xff] %v1324
        %1357 = vst [vmem:[%s265 + $0x60] sm:$0xff] %v1325
        %1358 = vst [vmem:[%s265 + $0x68] sm:$0xff] %v1326
        %1359 = vst [vmem:[%s265 + $0x70] sm:$0xff] %v1327
        %1360 = vst [vmem:[%s265 + $0x78] sm:$0xff] %v1328
        %1361 = vst [vmem:[%s265 + $0x80] sm:$0xff] %v1329
        %1362 = vst [vmem:[%s265 + $0x88] sm:$0xff] %v1330
        %1363 = vst [vmem:[%s265 + $0x90] sm:$0xff] %v1331
        %1364 = vst [vmem:[%s265 + $0x98] sm:$0xff] %v1332
        %1365 = vst [vmem:[%s265 + $0xa0] sm:$0xff] %v1333
        %1366 = vst [vmem:[%s265 + $0xa8] sm:$0xff] %v1334
        %1367 = vst [vmem:[%s265 + $0xb0] sm:$0xff] %v1335
        %1368 = vst [vmem:[%s265 + $0xb8] sm:$0xff] %v1336
        %1369 = vst [vmem:[%s265 + $0xc0] sm:$0xff] %v1337
        %1370 = vst [vmem:[%s265 + $0xc8] sm:$0xff] %v1338
        %1371 = vst [vmem:[%s265 + $0xd0] sm:$0xff] %v1339
        %1372 = vst [vmem:[%s265 + $0xd8] sm:$0xff] %v1340
        %1373 = vst [vmem:[%s265 + $0xe0] sm:$0xff] %v1341
        %1374 = vst [vmem:[%s265 + $0xe8] sm:$0xff] %v1342
        %1375 = vst [vmem:[%s265 + $0xf0] sm:$0xff] %v1343
        %1376 = vst [vmem:[%s265 + $0xf8] sm:$0xff] %v1344
      $region40: #{flownet_encoder_forward.6} parent=31 // pred_fallthru
        _
      %s1377 = smul.u32 32, %s19
      %p1378 = scmp.lt.s32.totalorder %s1377, 63
      %s1379 = scalar_select %p1378, %s1377, 63
      %p1380 = scmp.lt.s32.totalorder %s20, 0
      %s1381 = scalar_select %p1380, %s20, 0
      %s1382 = sadd.s32 %s1381, %s1379
      %s1383 = smul.addr %s1382, 8
      %s1384 = scalar_lea.vmem %s3, %s1383
      // Predicated region
      $region41: #{flownet_encoder_forward.6} parent=31 // pred_check
        %p1385 = pneg %p135
      $region42: #{flownet_encoder_forward.6} parent=31 // pred_check_branch
        %1387 = sbr.rel (%p1385) target = $region44
      $region43: #{flownet_encoder_forward.6} parent=31 // pred_region
        %s1388 = smul.u32 32, %s19
      $region44: #{flownet_encoder_forward.6} parent=31 // pred_fallthru
        _
    $region32: #{flownet_encoder_forward.6} parent=5 // pred_fallthru
      _
    %p1389 = scmp.le.s32.totalorder 2, %s9
    // Predicated region
    $region45: #{flownet_encoder_forward.6} parent=5 // pred_check
      %p1390 = pneg %p1389
    $region46: #{flownet_encoder_forward.6} parent=5 // pred_check_branch
      %1392 = sbr.rel (%p1390) target = $region48
    $region47: #{flownet_encoder_forward.6} parent=5 // pred_region
      %s1393 = ssub.s32 %s9, 2
      // Predicated region
      $region49: #{flownet_encoder_forward.6} parent=47 // pred_check
        %p1394 = pneg %p141
      $region50: #{flownet_encoder_forward.6} parent=47 // pred_check_branch
        %1396 = sbr.rel (%p1394) target = $region52
      $region51: #{flownet_encoder_forward.6} parent=47 // pred_region
        %s1397 = smul.u32 32, %s22
        %p1398 = scmp.lt.s32.totalorder %s1397, 63
        %s1399 = scalar_select %p1398, %s1397, 63
        %p1400 = scmp.lt.s32.totalorder %s23, 0
        %s1401 = scalar_select %p1400, %s23, 0
        %s1402 = sadd.s32 %s1401, %s1399
        %s1403 = smul.addr %s1402, 8
        %s1404 = scalar_lea.vmem %s3, %s1403
      $region52: #{flownet_encoder_forward.6} parent=47 // pred_fallthru
        _
    $region48: #{flownet_encoder_forward.6} parent=5 // pred_fallthru
      _
  $region6: #{flownet_encoder_forward.6} parent=0 // loop_footer
    %s13 = sadd.s32 1, %s9
  $region7: #{flownet_encoder_forward.6} parent=0 // loop_footer_branch
    %8 = sbr.rel target = $region3
  $region8: #{flownet_encoder_forward.6} parent=0 // loop_exit
    _

// kernel: flownet_encoder_forward.7
$region0: #{flownet_encoder_forward.7}
  #allocation0 [shape = 'u32[]', space=smem, size = 0x4, offset = 0x4, fixed_abs, tag = 'smem constant byte address 0x4 - core index']
  #allocation1 [shape = 'u32[72,128]{1,0:T(1,128)}', space=vmem, size = 0x9000, scoped, tag = 'internal scratch']
  #allocation2 [shape = 'f32[128,128]{1,0:T(8,128)}', space=vmem, size = 0x10000, scoped, tag = 'scratch operand']
  %s0 = inlined_call_operand.vmem [shape: bf16[128,640], index: 0, kind: input, shape index: {}]
  %s1 = inlined_call_operand.vmem [shape: bf16[640,128], index: 1, kind: input, shape index: {}]
  %s2 = inlined_call_operand.vmem [shape: f32[1,128], index: 2, kind: input, shape index: {}]
  %s3 = inlined_call_operand.vmem [shape: f32[128,128], index: 3, kind: output, shape index: {}]
  %s4 = sld [smem:[#allocation0]]
  $region30: #{flownet_encoder_forward.7} parent=0
    _
  %s6 = ssub.s32 1, %s4
  %s7 = scalar_select 0, %s6, %s4
  // Predicated region
  $region2: #{flownet_encoder_forward.7} parent=0 // pred_check
    _
  $region3: #{flownet_encoder_forward.7} parent=0 // pred_check_branch
    %9 = sbr.rel (0) target = $region5
  $region4: #{flownet_encoder_forward.7} parent=0 // pred_region
    _
  $region5: #{flownet_encoder_forward.7} parent=0 // pred_fallthru
    _
  // Predicated region
  $region6: #{flownet_encoder_forward.7} parent=0 // pred_check
    _
  $region7: #{flownet_encoder_forward.7} parent=0 // pred_check_branch
    %11 = sbr.rel (0) target = $region9
  $region8: #{flownet_encoder_forward.7} parent=0 // pred_region
    _
  $region9: #{flownet_encoder_forward.7} parent=0 // pred_fallthru
    _
  // Predicated region
  $region10: #{flownet_encoder_forward.7} parent=0 // pred_check
    _
  $region11: #{flownet_encoder_forward.7} parent=0 // pred_check_branch
    %13 = sbr.rel (0) target = $region13
  $region12: #{flownet_encoder_forward.7} parent=0 // pred_region
    _
  $region13: #{flownet_encoder_forward.7} parent=0 // pred_fallthru
    _
  %p14 = scmp.eq.s32.totalorder 0, 0
  // Predicated region
  $region14: #{flownet_encoder_forward.7} parent=0 // pred_check
    %p15 = pneg %p14
  $region15: #{flownet_encoder_forward.7} parent=0 // pred_check_branch
    %17 = sbr.rel (%p15) target = $region17
  $region16: #{flownet_encoder_forward.7} parent=0 // pred_region
    %18 = vst [vmem:[#allocation2] sm:$0xff] 0.0
    %19 = vst [vmem:[#allocation2 + $0x8] sm:$0xff] 0.0
    %20 = vst [vmem:[#allocation2 + $0x10] sm:$0xff] 0.0
    %21 = vst [vmem:[#allocation2 + $0x18] sm:$0xff] 0.0
    %22 = vst [vmem:[#allocation2 + $0x20] sm:$0xff] 0.0
    %23 = vst [vmem:[#allocation2 + $0x28] sm:$0xff] 0.0
    %24 = vst [vmem:[#allocation2 + $0x30] sm:$0xff] 0.0
    %25 = vst [vmem:[#allocation2 + $0x38] sm:$0xff] 0.0
    %26 = vst [vmem:[#allocation2 + $0x40] sm:$0xff] 0.0
    %27 = vst [vmem:[#allocation2 + $0x48] sm:$0xff] 0.0
    %28 = vst [vmem:[#allocation2 + $0x50] sm:$0xff] 0.0
    %29 = vst [vmem:[#allocation2 + $0x58] sm:$0xff] 0.0
    %30 = vst [vmem:[#allocation2 + $0x60] sm:$0xff] 0.0
    %31 = vst [vmem:[#allocation2 + $0x68] sm:$0xff] 0.0
    %32 = vst [vmem:[#allocation2 + $0x70] sm:$0xff] 0.0
    %33 = vst [vmem:[#allocation2 + $0x78] sm:$0xff] 0.0
  $region17: #{flownet_encoder_forward.7} parent=0 // pred_fallthru
    _
  %v34 = vld [vmem:[#allocation2] sm:$0xff]
  %v35 = vld [vmem:[#allocation2 + $0x8] sm:$0xff]
  %v36 = vld [vmem:[#allocation2 + $0x10] sm:$0xff]
  %v37 = vld [vmem:[#allocation2 + $0x18] sm:$0xff]
  %v38 = vld [vmem:[#allocation2 + $0x20] sm:$0xff]
  %v39 = vld [vmem:[#allocation2 + $0x28] sm:$0xff]
  %v40 = vld [vmem:[#allocation2 + $0x30] sm:$0xff]
  %v41 = vld [vmem:[#allocation2 + $0x38] sm:$0xff]
  %v42 = vld [vmem:[#allocation2 + $0x40] sm:$0xff]
  %v43 = vld [vmem:[#allocation2 + $0x48] sm:$0xff]
  %v44 = vld [vmem:[#allocation2 + $0x50] sm:$0xff]
  %v45 = vld [vmem:[#allocation2 + $0x58] sm:$0xff]
  %v46 = vld [vmem:[#allocation2 + $0x60] sm:$0xff]
  %v47 = vld [vmem:[#allocation2 + $0x68] sm:$0xff]
  %v48 = vld [vmem:[#allocation2 + $0x70] sm:$0xff]
  %v49 = vld [vmem:[#allocation2 + $0x78] sm:$0xff]
  %v50 = vld [vmem:[%s0] sm:$0xff]
  %v51 = vld [vmem:[%s0 + $0x8] sm:$0xff]
  %v52 = vld [vmem:[%s0 + $0x10] sm:$0xf]
  %v53 = vld [vmem:[%s0 + $0x14] sm:$0xff]
  %v54 = vld [vmem:[%s0 + $0x1c] sm:$0xff]
  %v55 = vld [vmem:[%s0 + $0x24] sm:$0xf]
  %v56 = vld [vmem:[%s0 + $0x28] sm:$0xff]
  %v57 = vld [vmem:[%s0 + $0x30] sm:$0xff]
  %v58 = vld [vmem:[%s0 + $0x38] sm:$0xf]
  %v59 = vld [vmem:[%s0 + $0x3c] sm:$0xff]
  %v60 = vld [vmem:[%s0 + $0x44] sm:$0xff]
  %v61 = vld [vmem:[%s0 + $0x4c] sm:$0xf]
  %v62 = vld [vmem:[%s0 + $0x50] sm:$0xff]
  %v63 = vld [vmem:[%s0 + $0x58] sm:$0xff]
  %v64 = vld [vmem:[%s0 + $0x60] sm:$0xf]
  %v65 = vld [vmem:[%s0 + $0x64] sm:$0xff]
  %v66 = vld [vmem:[%s0 + $0x6c] sm:$0xff]
  %v67 = vld [vmem:[%s0 + $0x74] sm:$0xf]
  %v68 = vld [vmem:[%s0 + $0x78] sm:$0xff]
  %v69 = vld [vmem:[%s0 + $0x80] sm:$0xff]
  %v70 = vld [vmem:[%s0 + $0x88] sm:$0xf]
  %v71 = vld [vmem:[%s0 + $0x8c] sm:$0xff]
  %v72 = vld [vmem:[%s0 + $0x94] sm:$0xff]
  %v73 = vld [vmem:[%s0 + $0x9c] sm:$0xf]
  %v74 = vld [vmem:[%s0 + $0xa0] sm:$0xff]
  %v75 = vld [vmem:[%s0 + $0xa8] sm:$0xff]
  %v76 = vld [vmem:[%s0 + $0xb0] sm:$0xf]
  %v77 = vld [vmem:[%s0 + $0xb4] sm:$0xff]
  %v78 = vld [vmem:[%s0 + $0xbc] sm:$0xff]
  %v79 = vld [vmem:[%s0 + $0xc4] sm:$0xf]
  %v80 = vld [vmem:[%s0 + $0xc8] sm:$0xff]
  %v81 = vld [vmem:[%s0 + $0xd0] sm:$0xff]
  %v82 = vld [vmem:[%s0 + $0xd8] sm:$0xf]
  %v83 = vld [vmem:[%s0 + $0xdc] sm:$0xff]
  %v84 = vld [vmem:[%s0 + $0xe4] sm:$0xff]
  %v85 = vld [vmem:[%s0 + $0xec] sm:$0xf]
  %v86 = vld [vmem:[%s0 + $0xf0] sm:$0xff]
  %v87 = vld [vmem:[%s0 + $0xf8] sm:$0xff]
  %v88 = vld [vmem:[%s0 + $0x100] sm:$0xf]
  %v89 = vld [vmem:[%s0 + $0x104] sm:$0xff]
  %v90 = vld [vmem:[%s0 + $0x10c] sm:$0xff]
  %v91 = vld [vmem:[%s0 + $0x114] sm:$0xf]
  %v92 = vld [vmem:[%s0 + $0x118] sm:$0xff]
  %v93 = vld [vmem:[%s0 + $0x120] sm:$0xff]
  %v94 = vld [vmem:[%s0 + $0x128] sm:$0xf]
  %v95 = vld [vmem:[%s0 + $0x12c] sm:$0xff]
  %v96 = vld [vmem:[%s0 + $0x134] sm:$0xff]
  %v97 = vld [vmem:[%s0 + $0x13c] sm:$0xf]
  %v98 = vld [vmem:[%s1] sm:$0xf]
  %v99 = vld [vmem:[%s1 + $0x4] sm:$0xf]
  %v100 = vld [vmem:[%s1 + $0x8] sm:$0xf]
  %v101 = vld [vmem:[%s1 + $0xc] sm:$0xf]
  %v102 = vld [vmem:[%s1 + $0x10] sm:$0xf]
  %v103 = vld [vmem:[%s1 + $0x14] sm:$0xf]
  %v104 = vld [vmem:[%s1 + $0x18] sm:$0xf]
  %v105 = vld [vmem:[%s1 + $0x1c] sm:$0xf]
  %v106 = vld [vmem:[%s1 + $0x20] sm:$0xf]
  %v107 = vld [vmem:[%s1 + $0x24] sm:$0xf]
  %v108 = vld [vmem:[%s1 + $0x28] sm:$0xf]
  %v109 = vld [vmem:[%s1 + $0x2c] sm:$0xf]
  %v110 = vld [vmem:[%s1 + $0x30] sm:$0xf]
  %v111 = vld [vmem:[%s1 + $0x34] sm:$0xf]
  %v112 = vld [vmem:[%s1 + $0x38] sm:$0xf]
  %v113 = vld [vmem:[%s1 + $0x3c] sm:$0xf]
  %v114 = vld [vmem:[%s1 + $0x40] sm:$0xf]
  %v115 = vld [vmem:[%s1 + $0x44] sm:$0xf]
  %v116 = vld [vmem:[%s1 + $0x48] sm:$0xf]
  %v117 = vld [vmem:[%s1 + $0x4c] sm:$0xf]
  %v118 = vld [vmem:[%s1 + $0x50] sm:$0xf]
  %v119 = vld [vmem:[%s1 + $0x54] sm:$0xf]
  %v120 = vld [vmem:[%s1 + $0x58] sm:$0xf]
  %v121 = vld [vmem:[%s1 + $0x5c] sm:$0xf]
  %v122 = vld [vmem:[%s1 + $0x60] sm:$0xf]
  %v123 = vld [vmem:[%s1 + $0x64] sm:$0xf]
  %v124 = vld [vmem:[%s1 + $0x68] sm:$0xf]
  %v125 = vld [vmem:[%s1 + $0x6c] sm:$0xf]
  %v126 = vld [vmem:[%s1 + $0x70] sm:$0xf]
  %v127 = vld [vmem:[%s1 + $0x74] sm:$0xf]
  %v128 = vld [vmem:[%s1 + $0x78] sm:$0xf]
  %v129 = vld [vmem:[%s1 + $0x7c] sm:$0xf]
  %v130 = vld [vmem:[%s1 + $0x80] sm:$0xf]
  %v131 = vld [vmem:[%s1 + $0x84] sm:$0xf]
  %v132 = vld [vmem:[%s1 + $0x88] sm:$0xf]
  %v133 = vld [vmem:[%s1 + $0x8c] sm:$0xf]
  %v134 = vld [vmem:[%s1 + $0x90] sm:$0xf]
  %v135 = vld [vmem:[%s1 + $0x94] sm:$0xf]
  %v136 = vld [vmem:[%s1 + $0x98] sm:$0xf]
  %v137 = vld [vmem:[%s1 + $0x9c] sm:$0xf]
  %v138 = vld [vmem:[%s1 + $0xa0] sm:$0xf]
  %v139 = vld [vmem:[%s1 + $0xa4] sm:$0xf]
  %v140 = vld [vmem:[%s1 + $0xa8] sm:$0xf]
  %v141 = vld [vmem:[%s1 + $0xac] sm:$0xf]
  %v142 = vld [vmem:[%s1 + $0xb0] sm:$0xf]
  %v143 = vld [vmem:[%s1 + $0xb4] sm:$0xf]
  %v144 = vld [vmem:[%s1 + $0xb8] sm:$0xf]
  %v145 = vld [vmem:[%s1 + $0xbc] sm:$0xf]
  %v146 = vld [vmem:[%s1 + $0xc0] sm:$0xf]
  %v147 = vld [vmem:[%s1 + $0xc4] sm:$0xf]
  %v148 = vld [vmem:[%s1 + $0xc8] sm:$0xf]
  %v149 = vld [vmem:[%s1 + $0xcc] sm:$0xf]
  %v150 = vld [vmem:[%s1 + $0xd0] sm:$0xf]
  %v151 = vld [vmem:[%s1 + $0xd4] sm:$0xf]
  %v152 = vld [vmem:[%s1 + $0xd8] sm:$0xf]
  %v153 = vld [vmem:[%s1 + $0xdc] sm:$0xf]
  %v154 = vld [vmem:[%s1 + $0xe0] sm:$0xf]
  %v155 = vld [vmem:[%s1 + $0xe4] sm:$0xf]
  %v156 = vld [vmem:[%s1 + $0xe8] sm:$0xf]
  %v157 = vld [vmem:[%s1 + $0xec] sm:$0xf]
  %v158 = vld [vmem:[%s1 + $0xf0] sm:$0xf]
  %v159 = vld [vmem:[%s1 + $0xf4] sm:$0xf]
  %v160 = vld [vmem:[%s1 + $0xf8] sm:$0xf]
  %v161 = vld [vmem:[%s1 + $0xfc] sm:$0xf]
  %v162 = vld [vmem:[%s1 + $0x100] sm:$0xf]
  %v163 = vld [vmem:[%s1 + $0x104] sm:$0xf]
  %v164 = vld [vmem:[%s1 + $0x108] sm:$0xf]
  %v165 = vld [vmem:[%s1 + $0x10c] sm:$0xf]
  %v166 = vld [vmem:[%s1 + $0x110] sm:$0xf]
  %v167 = vld [vmem:[%s1 + $0x114] sm:$0xf]
  %v168 = vld [vmem:[%s1 + $0x118] sm:$0xf]
  %v169 = vld [vmem:[%s1 + $0x11c] sm:$0xf]
  %v170 = vld [vmem:[%s1 + $0x120] sm:$0xf]
  %v171 = vld [vmem:[%s1 + $0x124] sm:$0xf]
  %v172 = vld [vmem:[%s1 + $0x128] sm:$0xf]
  %v173 = vld [vmem:[%s1 + $0x12c] sm:$0xf]
  %v174 = vld [vmem:[%s1 + $0x130] sm:$0xf]
  %v175 = vld [vmem:[%s1 + $0x134] sm:$0xf]
  %v176 = vld [vmem:[%s1 + $0x138] sm:$0xf]
  %v177 = vld [vmem:[%s1 + $0x13c] sm:$0xf]
  %v226 = vunpack.c.l.b16 %v50
  %v227 = vunpack.c.h.b16 %v50
  %v228 = vunpack.c.l.b16 %v51
  %v229 = vunpack.c.h.b16 %v51
  %v230 = vunpack.c.l.b16 %v52
  %v231 = vunpack.c.l.b16 %v53
  %v232 = vunpack.c.h.b16 %v53
  %v233 = vunpack.c.l.b16 %v54
  %v234 = vunpack.c.h.b16 %v54
  %v235 = vunpack.c.l.b16 %v55
  %v236 = vunpack.c.l.b16 %v56
  %v237 = vunpack.c.h.b16 %v56
  %v238 = vunpack.c.l.b16 %v57
  %v239 = vunpack.c.h.b16 %v57
  %v240 = vunpack.c.l.b16 %v58
  %v241 = vunpack.c.l.b16 %v59
  %v242 = vunpack.c.h.b16 %v59
  %v243 = vunpack.c.l.b16 %v60
  %v244 = vunpack.c.h.b16 %v60
  %v245 = vunpack.c.l.b16 %v61
  %v246 = vunpack.c.l.b16 %v62
  %v247 = vunpack.c.h.b16 %v62
  %v248 = vunpack.c.l.b16 %v63
  %v249 = vunpack.c.h.b16 %v63
  %v250 = vunpack.c.l.b16 %v64
  %v251 = vunpack.c.l.b16 %v65
  %v252 = vunpack.c.h.b16 %v65
  %v253 = vunpack.c.l.b16 %v66
  %v254 = vunpack.c.h.b16 %v66
  %v255 = vunpack.c.l.b16 %v67
  %v256 = vunpack.c.l.b16 %v68
  %v257 = vunpack.c.h.b16 %v68
  %v258 = vunpack.c.l.b16 %v69
  %v259 = vunpack.c.h.b16 %v69
  %v260 = vunpack.c.l.b16 %v70
  %v261 = vunpack.c.l.b16 %v71
  %v262 = vunpack.c.h.b16 %v71
  %v263 = vunpack.c.l.b16 %v72
  %v264 = vunpack.c.h.b16 %v72
  %v265 = vunpack.c.l.b16 %v73
  %v266 = vunpack.c.l.b16 %v74
  %v267 = vunpack.c.h.b16 %v74
  %v268 = vunpack.c.l.b16 %v75
  %v269 = vunpack.c.h.b16 %v75
  %v270 = vunpack.c.l.b16 %v76
  %v271 = vunpack.c.l.b16 %v77
  %v272 = vunpack.c.h.b16 %v77
  %v273 = vunpack.c.l.b16 %v78
  %v274 = vunpack.c.h.b16 %v78
  %v275 = vunpack.c.l.b16 %v79
  %v276 = vunpack.c.l.b16 %v80
  %v277 = vunpack.c.h.b16 %v80
  %v278 = vunpack.c.l.b16 %v81
  %v279 = vunpack.c.h.b16 %v81
  %v280 = vunpack.c.l.b16 %v82
  %v281 = vunpack.c.l.b16 %v83
  %v282 = vunpack.c.h.b16 %v83
  %v283 = vunpack.c.l.b16 %v84
  %v284 = vunpack.c.h.b16 %v84
  %v285 = vunpack.c.l.b16 %v85
  %v286 = vunpack.c.l.b16 %v86
  %v287 = vunpack.c.h.b16 %v86
  %v288 = vunpack.c.l.b16 %v87
  %v289 = vunpack.c.h.b16 %v87
  %v290 = vunpack.c.l.b16 %v88
  %v291 = vunpack.c.l.b16 %v89
  %v292 = vunpack.c.h.b16 %v89
  %v293 = vunpack.c.l.b16 %v90
  %v294 = vunpack.c.h.b16 %v90
  %v295 = vunpack.c.l.b16 %v91
  %v296 = vunpack.c.l.b16 %v92
  %v297 = vunpack.c.h.b16 %v92
  %v298 = vunpack.c.l.b16 %v93
  %v299 = vunpack.c.h.b16 %v93
  %v300 = vunpack.c.l.b16 %v94
  %v301 = vunpack.c.l.b16 %v95
  %v302 = vunpack.c.h.b16 %v95
  %v303 = vunpack.c.l.b16 %v96
  %v304 = vunpack.c.h.b16 %v96
  %v305 = vunpack.c.l.b16 %v97
  %v306 = vpack.c.b16 %v231, %v226
  %v307 = vpack.c.b16 %v232, %v227
  %v308 = vpack.c.b16 %v233, %v228
  %v309 = vpack.c.b16 %v234, %v229
  %v310 = vpack.c.b16 %v235, %v230
  %v311 = vpack.c.b16 %v241, %v236
  %v312 = vpack.c.b16 %v242, %v237
  %v313 = vpack.c.b16 %v243, %v238
  %v314 = vpack.c.b16 %v244, %v239
  %v315 = vpack.c.b16 %v245, %v240
  %v316 = vpack.c.b16 %v251, %v246
  %v317 = vpack.c.b16 %v252, %v247
  %v318 = vpack.c.b16 %v253, %v248
  %v319 = vpack.c.b16 %v254, %v249
  %v320 = vpack.c.b16 %v255, %v250
  %v321 = vpack.c.b16 %v261, %v256
  %v322 = vpack.c.b16 %v262, %v257
  %v323 = vpack.c.b16 %v263, %v258
  %v324 = vpack.c.b16 %v264, %v259
  %v325 = vpack.c.b16 %v265, %v260
  %v326 = vpack.c.b16 %v271, %v266
  %v327 = vpack.c.b16 %v272, %v267
  %v328 = vpack.c.b16 %v273, %v268
  %v329 = vpack.c.b16 %v274, %v269
  %v330 = vpack.c.b16 %v275, %v270
  %v331 = vpack.c.b16 %v281, %v276
  %v332 = vpack.c.b16 %v282, %v277
  %v333 = vpack.c.b16 %v283, %v278
  %v334 = vpack.c.b16 %v284, %v279
  %v335 = vpack.c.b16 %v285, %v280
  %v336 = vpack.c.b16 %v291, %v286
  %v337 = vpack.c.b16 %v292, %v287
  %v338 = vpack.c.b16 %v293, %v288
  %v339 = vpack.c.b16 %v294, %v289
  %v340 = vpack.c.b16 %v295, %v290
  %v341 = vpack.c.b16 %v301, %v296
  %v342 = vpack.c.b16 %v302, %v297
  %v343 = vpack.c.b16 %v303, %v298
  %v344 = vpack.c.b16 %v304, %v299
  %v345 = vpack.c.b16 %v305, %v300
  %v466 = vunpack.c.l.b16 %v98
  %v467 = vunpack.c.l.b16 %v99
  %v468 = vunpack.c.l.b16 %v100
  %v469 = vunpack.c.l.b16 %v101
  %v470 = vunpack.c.l.b16 %v102
  %v471 = vunpack.c.l.b16 %v103
  %v472 = vunpack.c.l.b16 %v104
  %v473 = vunpack.c.l.b16 %v105
  %v474 = vunpack.c.l.b16 %v106
  %v475 = vunpack.c.l.b16 %v107
  %v476 = vunpack.c.l.b16 %v108
  %v477 = vunpack.c.l.b16 %v109
  %v478 = vunpack.c.l.b16 %v110
  %v479 = vunpack.c.l.b16 %v111
  %v480 = vunpack.c.l.b16 %v112
  %v481 = vunpack.c.l.b16 %v113
  %v482 = vunpack.c.l.b16 %v114
  %v483 = vunpack.c.l.b16 %v115
  %v484 = vunpack.c.l.b16 %v116
  %v485 = vunpack.c.l.b16 %v117
  %v486 = vunpack.c.l.b16 %v118
  %v487 = vunpack.c.l.b16 %v119
  %v488 = vunpack.c.l.b16 %v120
  %v489 = vunpack.c.l.b16 %v121
  %v490 = vunpack.c.l.b16 %v122
  %v491 = vunpack.c.l.b16 %v123
  %v492 = vunpack.c.l.b16 %v124
  %v493 = vunpack.c.l.b16 %v125
  %v494 = vunpack.c.l.b16 %v126
  %v495 = vunpack.c.l.b16 %v127
  %v496 = vunpack.c.l.b16 %v128
  %v497 = vunpack.c.l.b16 %v129
  %v498 = vunpack.c.l.b16 %v130
  %v499 = vunpack.c.l.b16 %v131
  %v500 = vunpack.c.l.b16 %v132
  %v501 = vunpack.c.l.b16 %v133
  %v502 = vunpack.c.l.b16 %v134
  %v503 = vunpack.c.l.b16 %v135
  %v504 = vunpack.c.l.b16 %v136
  %v505 = vunpack.c.l.b16 %v137
  %v506 = vunpack.c.l.b16 %v138
  %v507 = vunpack.c.l.b16 %v139
  %v508 = vunpack.c.l.b16 %v140
  %v509 = vunpack.c.l.b16 %v141
  %v510 = vunpack.c.l.b16 %v142
  %v511 = vunpack.c.l.b16 %v143
  %v512 = vunpack.c.l.b16 %v144
  %v513 = vunpack.c.l.b16 %v145
  %v514 = vunpack.c.l.b16 %v146
  %v515 = vunpack.c.l.b16 %v147
  %v516 = vunpack.c.l.b16 %v148
  %v517 = vunpack.c.l.b16 %v149
  %v518 = vunpack.c.l.b16 %v150
  %v519 = vunpack.c.l.b16 %v151
  %v520 = vunpack.c.l.b16 %v152
  %v521 = vunpack.c.l.b16 %v153
  %v522 = vunpack.c.l.b16 %v154
  %v523 = vunpack.c.l.b16 %v155
  %v524 = vunpack.c.l.b16 %v156
  %v525 = vunpack.c.l.b16 %v157
  %v526 = vunpack.c.l.b16 %v158
  %v527 = vunpack.c.l.b16 %v159
  %v528 = vunpack.c.l.b16 %v160
  %v529 = vunpack.c.l.b16 %v161
  %v530 = vunpack.c.l.b16 %v162
  %v531 = vunpack.c.l.b16 %v163
  %v532 = vunpack.c.l.b16 %v164
  %v533 = vunpack.c.l.b16 %v165
  %v534 = vunpack.c.l.b16 %v166
  %v535 = vunpack.c.l.b16 %v167
  %v536 = vunpack.c.l.b16 %v168
  %v537 = vunpack.c.l.b16 %v169
  %v538 = vunpack.c.l.b16 %v170
  %v539 = vunpack.c.l.b16 %v171
  %v540 = vunpack.c.l.b16 %v172
  %v541 = vunpack.c.l.b16 %v173
  %v542 = vunpack.c.l.b16 %v174
  %v543 = vunpack.c.l.b16 %v175
  %v544 = vunpack.c.l.b16 %v176
  %v545 = vunpack.c.l.b16 %v177
  %v546 = vpack.c.b16 %v467, %v466
  %v547 = vpack.c.b16 %v469, %v468
  %v548 = vpack.c.b16 %v471, %v470
  %v549 = vpack.c.b16 %v473, %v472
  %v550 = vpack.c.b16 %v475, %v474
  %v551 = vpack.c.b16 %v477, %v476
  %v552 = vpack.c.b16 %v479, %v478
  %v553 = vpack.c.b16 %v481, %v480
  %v554 = vpack.c.b16 %v483, %v482
  %v555 = vpack.c.b16 %v485, %v484
  %v556 = vpack.c.b16 %v487, %v486
  %v557 = vpack.c.b16 %v489, %v488
  %v558 = vpack.c.b16 %v491, %v490
  %v559 = vpack.c.b16 %v493, %v492
  %v560 = vpack.c.b16 %v495, %v494
  %v561 = vpack.c.b16 %v497, %v496
  %v562 = vpack.c.b16 %v499, %v498
  %v563 = vpack.c.b16 %v501, %v500
  %v564 = vpack.c.b16 %v503, %v502
  %v565 = vpack.c.b16 %v505, %v504
  %v566 = vpack.c.b16 %v507, %v506
  %v567 = vpack.c.b16 %v509, %v508
  %v568 = vpack.c.b16 %v511, %v510
  %v569 = vpack.c.b16 %v513, %v512
  %v570 = vpack.c.b16 %v515, %v514
  %v571 = vpack.c.b16 %v517, %v516
  %v572 = vpack.c.b16 %v519, %v518
  %v573 = vpack.c.b16 %v521, %v520
  %v574 = vpack.c.b16 %v523, %v522
  %v575 = vpack.c.b16 %v525, %v524
  %v576 = vpack.c.b16 %v527, %v526
  %v577 = vpack.c.b16 %v529, %v528
  %v578 = vpack.c.b16 %v531, %v530
  %v579 = vpack.c.b16 %v533, %v532
  %v580 = vpack.c.b16 %v535, %v534
  %v581 = vpack.c.b16 %v537, %v536
  %v582 = vpack.c.b16 %v539, %v538
  %v583 = vpack.c.b16 %v541, %v540
  %v584 = vpack.c.b16 %v543, %v542
  %v585 = vpack.c.b16 %v545, %v544
  %626 = vmatpush.bf16.msra.mxu0 %v553
  %627 = vmatpush.bf16.msra.mxu0 %v552
  %628 = vmatpush.bf16.msra.mxu0 %v551
  %629 = vmatpush.bf16.msra.mxu0 %v550
  %630 = vmatpush.bf16.msra.mxu0 %v549
  %631 = vmatpush.bf16.msra.mxu0 %v548
  %632 = vmatpush.bf16.msra.mxu0 %v547
  %633 = vmatpush.bf16.msra.mxu0 %v546
  %634 = vmatmul.bf16.gmra.mxu0 %v306
  %v635 = vpop.f32.mrf.mxu0
  %v636 = vadd.f32 0.0, %v635
  %v637 = vpop.f32.mrf.mxu0
  %v638 = vadd.f32 0.0, %v637
  %639 = vmatmul.bf16.gmra.mxu0 %v311
  %v640 = vpop.f32.mrf.mxu0
  %v641 = vadd.f32 0.0, %v640
  %v642 = vpop.f32.mrf.mxu0
  %v643 = vadd.f32 0.0, %v642
  %644 = vmatmul.bf16.gmra.mxu0 %v316
  %v645 = vpop.f32.mrf.mxu0
  %v646 = vadd.f32 0.0, %v645
  %v647 = vpop.f32.mrf.mxu0
  %v648 = vadd.f32 0.0, %v647
  %649 = vmatmul.bf16.gmra.mxu0 %v321
  %v650 = vpop.f32.mrf.mxu0
  %v651 = vadd.f32 0.0, %v650
  %v652 = vpop.f32.mrf.mxu0
  %v653 = vadd.f32 0.0, %v652
  %654 = vmatmul.bf16.gmra.mxu0 %v326
  %v655 = vpop.f32.mrf.mxu0
  %v656 = vadd.f32 0.0, %v655
  %v657 = vpop.f32.mrf.mxu0
  %v658 = vadd.f32 0.0, %v657
  %659 = vmatmul.bf16.gmra.mxu0 %v331
  %v660 = vpop.f32.mrf.mxu0
  %v661 = vadd.f32 0.0, %v660
  %v662 = vpop.f32.mrf.mxu0
  %v663 = vadd.f32 0.0, %v662
  %664 = vmatmul.bf16.gmra.mxu0 %v336
  %v665 = vpop.f32.mrf.mxu0
  %v666 = vadd.f32 0.0, %v665
  %v667 = vpop.f32.mrf.mxu0
  %v668 = vadd.f32 0.0, %v667
  %669 = vmatmul.bf16.gmra.mxu0 %v341
  %v670 = vpop.f32.mrf.mxu0
  %v671 = vadd.f32 0.0, %v670
  %v672 = vpop.f32.mrf.mxu0
  %v673 = vadd.f32 0.0, %v672
  %674 = vdwg.mxu0
  %675 = vmatpush.bf16.msra.mxu0 %v561
  %676 = vmatpush.bf16.msra.mxu0 %v560
  %677 = vmatpush.bf16.msra.mxu0 %v559
  %678 = vmatpush.bf16.msra.mxu0 %v558
  %679 = vmatpush.bf16.msra.mxu0 %v557
  %680 = vmatpush.bf16.msra.mxu0 %v556
  %681 = vmatpush.bf16.msra.mxu0 %v555
  %682 = vmatpush.bf16.msra.mxu0 %v554
  %683 = vmatmul.bf16.gmra.mxu0 %v307
  %v684 = vpop.f32.mrf.mxu0
  %v685 = vadd.f32 %v636, %v684
  %v686 = vpop.f32.mrf.mxu0
  %v687 = vadd.f32 %v638, %v686
  %688 = vmatmul.bf16.gmra.mxu0 %v312
  %v689 = vpop.f32.mrf.mxu0
  %v690 = vadd.f32 %v641, %v689
  %v691 = vpop.f32.mrf.mxu0
  %v692 = vadd.f32 %v643, %v691
  %693 = vmatmul.bf16.gmra.mxu0 %v317
  %v694 = vpop.f32.mrf.mxu0
  %v695 = vadd.f32 %v646, %v694
  %v696 = vpop.f32.mrf.mxu0
  %v697 = vadd.f32 %v648, %v696
  %698 = vmatmul.bf16.gmra.mxu0 %v322
  %v699 = vpop.f32.mrf.mxu0
  %v700 = vadd.f32 %v651, %v699
  %v701 = vpop.f32.mrf.mxu0
  %v702 = vadd.f32 %v653, %v701
  %703 = vmatmul.bf16.gmra.mxu0 %v327
  %v704 = vpop.f32.mrf.mxu0
  %v705 = vadd.f32 %v656, %v704
  %v706 = vpop.f32.mrf.mxu0
  %v707 = vadd.f32 %v658, %v706
  %708 = vmatmul.bf16.gmra.mxu0 %v332
  %v709 = vpop.f32.mrf.mxu0
  %v710 = vadd.f32 %v661, %v709
  %v711 = vpop.f32.mrf.mxu0
  %v712 = vadd.f32 %v663, %v711
  %713 = vmatmul.bf16.gmra.mxu0 %v337
  %v714 = vpop.f32.mrf.mxu0
  %v715 = vadd.f32 %v666, %v714
  %v716 = vpop.f32.mrf.mxu0
  %v717 = vadd.f32 %v668, %v716
  %718 = vmatmul.bf16.gmra.mxu0 %v342
  %v719 = vpop.f32.mrf.mxu0
  %v720 = vadd.f32 %v671, %v719
  %v721 = vpop.f32.mrf.mxu0
  %v722 = vadd.f32 %v673, %v721
  %723 = vdwg.mxu0
  %724 = vmatpush.bf16.msra.mxu0 %v569
  %725 = vmatpush.bf16.msra.mxu0 %v568
  %726 = vmatpush.bf16.msra.mxu0 %v567
  %727 = vmatpush.bf16.msra.mxu0 %v566
  %728 = vmatpush.bf16.msra.mxu0 %v565
  %729 = vmatpush.bf16.msra.mxu0 %v564
  %730 = vmatpush.bf16.msra.mxu0 %v563
  %731 = vmatpush.bf16.msra.mxu0 %v562
  %732 = vmatmul.bf16.gmra.mxu0 %v308
  %v733 = vpop.f32.mrf.mxu0
  %v734 = vadd.f32 %v685, %v733
  %v735 = vpop.f32.mrf.mxu0
  %v736 = vadd.f32 %v687, %v735
  %737 = vmatmul.bf16.gmra.mxu0 %v313
  %v738 = vpop.f32.mrf.mxu0
  %v739 = vadd.f32 %v690, %v738
  %v740 = vpop.f32.mrf.mxu0
  %v741 = vadd.f32 %v692, %v740
  %742 = vmatmul.bf16.gmra.mxu0 %v318
  %v743 = vpop.f32.mrf.mxu0
  %v744 = vadd.f32 %v695, %v743
  %v745 = vpop.f32.mrf.mxu0
  %v746 = vadd.f32 %v697, %v745
  %747 = vmatmul.bf16.gmra.mxu0 %v323
  %v748 = vpop.f32.mrf.mxu0
  %v749 = vadd.f32 %v700, %v748
  %v750 = vpop.f32.mrf.mxu0
  %v751 = vadd.f32 %v702, %v750
  %752 = vmatmul.bf16.gmra.mxu0 %v328
  %v753 = vpop.f32.mrf.mxu0
  %v754 = vadd.f32 %v705, %v753
  %v755 = vpop.f32.mrf.mxu0
  %v756 = vadd.f32 %v707, %v755
  %757 = vmatmul.bf16.gmra.mxu0 %v333
  %v758 = vpop.f32.mrf.mxu0
  %v759 = vadd.f32 %v710, %v758
  %v760 = vpop.f32.mrf.mxu0
  %v761 = vadd.f32 %v712, %v760
  %762 = vmatmul.bf16.gmra.mxu0 %v338
  %v763 = vpop.f32.mrf.mxu0
  %v764 = vadd.f32 %v715, %v763
  %v765 = vpop.f32.mrf.mxu0
  %v766 = vadd.f32 %v717, %v765
  %767 = vmatmul.bf16.gmra.mxu0 %v343
  %v768 = vpop.f32.mrf.mxu0
  %v769 = vadd.f32 %v720, %v768
  %v770 = vpop.f32.mrf.mxu0
  %v771 = vadd.f32 %v722, %v770
  %772 = vdwg.mxu0
  %773 = vmatpush.bf16.msra.mxu0 %v577
  %774 = vmatpush.bf16.msra.mxu0 %v576
  %775 = vmatpush.bf16.msra.mxu0 %v575
  %776 = vmatpush.bf16.msra.mxu0 %v574
  %777 = vmatpush.bf16.msra.mxu0 %v573
  %778 = vmatpush.bf16.msra.mxu0 %v572
  %779 = vmatpush.bf16.msra.mxu0 %v571
  %780 = vmatpush.bf16.msra.mxu0 %v570
  %781 = vmatmul.bf16.gmra.mxu0 %v309
  %v782 = vpop.f32.mrf.mxu0
  %v783 = vadd.f32 %v734, %v782
  %v784 = vpop.f32.mrf.mxu0
  %v785 = vadd.f32 %v736, %v784
  %786 = vmatmul.bf16.gmra.mxu0 %v314
  %v787 = vpop.f32.mrf.mxu0
  %v788 = vadd.f32 %v739, %v787
  %v789 = vpop.f32.mrf.mxu0
  %v790 = vadd.f32 %v741, %v789
  %791 = vmatmul.bf16.gmra.mxu0 %v319
  %v792 = vpop.f32.mrf.mxu0
  %v793 = vadd.f32 %v744, %v792
  %v794 = vpop.f32.mrf.mxu0
  %v795 = vadd.f32 %v746, %v794
  %796 = vmatmul.bf16.gmra.mxu0 %v324
  %v797 = vpop.f32.mrf.mxu0
  %v798 = vadd.f32 %v749, %v797
  %v799 = vpop.f32.mrf.mxu0
  %v800 = vadd.f32 %v751, %v799
  %801 = vmatmul.bf16.gmra.mxu0 %v329
  %v802 = vpop.f32.mrf.mxu0
  %v803 = vadd.f32 %v754, %v802
  %v804 = vpop.f32.mrf.mxu0
  %v805 = vadd.f32 %v756, %v804
  %806 = vmatmul.bf16.gmra.mxu0 %v334
  %v807 = vpop.f32.mrf.mxu0
  %v808 = vadd.f32 %v759, %v807
  %v809 = vpop.f32.mrf.mxu0
  %v810 = vadd.f32 %v761, %v809
  %811 = vmatmul.bf16.gmra.mxu0 %v339
  %v812 = vpop.f32.mrf.mxu0
  %v813 = vadd.f32 %v764, %v812
  %v814 = vpop.f32.mrf.mxu0
  %v815 = vadd.f32 %v766, %v814
  %816 = vmatmul.bf16.gmra.mxu0 %v344
  %v817 = vpop.f32.mrf.mxu0
  %v818 = vadd.f32 %v769, %v817
  %v819 = vpop.f32.mrf.mxu0
  %v820 = vadd.f32 %v771, %v819
  %821 = vdwg.mxu0
  %822 = vmatpush.bf16.msra.mxu0 %v585
  %823 = vmatpush.bf16.msra.mxu0 %v584
  %824 = vmatpush.bf16.msra.mxu0 %v583
  %825 = vmatpush.bf16.msra.mxu0 %v582
  %826 = vmatpush.bf16.msra.mxu0 %v581
  %827 = vmatpush.bf16.msra.mxu0 %v580
  %828 = vmatpush.bf16.msra.mxu0 %v579
  %829 = vmatpush.bf16.msra.mxu0 %v578
  %830 = vmatmul.bf16.gmra.mxu0 %v310
  %v831 = vpop.f32.mrf.mxu0
  %v832 = vadd.f32 %v783, %v831
  %v833 = vpop.f32.mrf.mxu0
  %v834 = vadd.f32 %v785, %v833
  %835 = vmatmul.bf16.gmra.mxu0 %v315
  %v836 = vpop.f32.mrf.mxu0
  %v837 = vadd.f32 %v788, %v836
  %v838 = vpop.f32.mrf.mxu0
  %v839 = vadd.f32 %v790, %v838
  %840 = vmatmul.bf16.gmra.mxu0 %v320
  %v841 = vpop.f32.mrf.mxu0
  %v842 = vadd.f32 %v793, %v841
  %v843 = vpop.f32.mrf.mxu0
  %v844 = vadd.f32 %v795, %v843
  %845 = vmatmul.bf16.gmra.mxu0 %v325
  %v846 = vpop.f32.mrf.mxu0
  %v847 = vadd.f32 %v798, %v846
  %v848 = vpop.f32.mrf.mxu0
  %v849 = vadd.f32 %v800, %v848
  %850 = vmatmul.bf16.gmra.mxu0 %v330
  %v851 = vpop.f32.mrf.mxu0
  %v852 = vadd.f32 %v803, %v851
  %v853 = vpop.f32.mrf.mxu0
  %v854 = vadd.f32 %v805, %v853
  %855 = vmatmul.bf16.gmra.mxu0 %v335
  %v856 = vpop.f32.mrf.mxu0
  %v857 = vadd.f32 %v808, %v856
  %v858 = vpop.f32.mrf.mxu0
  %v859 = vadd.f32 %v810, %v858
  %860 = vmatmul.bf16.gmra.mxu0 %v340
  %v861 = vpop.f32.mrf.mxu0
  %v862 = vadd.f32 %v813, %v861
  %v863 = vpop.f32.mrf.mxu0
  %v864 = vadd.f32 %v815, %v863
  %865 = vmatmul.bf16.gmra.mxu0 %v345
  %v866 = vpop.f32.mrf.mxu0
  %v867 = vadd.f32 %v818, %v866
  %v868 = vpop.f32.mrf.mxu0
  %v869 = vadd.f32 %v820, %v868
  %870 = vdwg.mxu0
  %v871 = vadd.f32 %v34, %v832
  %v872 = vadd.f32 %v35, %v834
  %v873 = vadd.f32 %v36, %v837
  %v874 = vadd.f32 %v37, %v839
  %v875 = vadd.f32 %v38, %v842
  %v876 = vadd.f32 %v39, %v844
  %v877 = vadd.f32 %v40, %v847
  %v878 = vadd.f32 %v41, %v849
  %v879 = vadd.f32 %v42, %v852
  %v880 = vadd.f32 %v43, %v854
  %v881 = vadd.f32 %v44, %v857
  %v882 = vadd.f32 %v45, %v859
  %v883 = vadd.f32 %v46, %v862
  %v884 = vadd.f32 %v47, %v864
  %v885 = vadd.f32 %v48, %v867
  %v886 = vadd.f32 %v49, %v869
  %887 = vst [vmem:[#allocation2] sm:$0xff] %v871
  %888 = vst [vmem:[#allocation2 + $0x8] sm:$0xff] %v872
  %889 = vst [vmem:[#allocation2 + $0x10] sm:$0xff] %v873
  %890 = vst [vmem:[#allocation2 + $0x18] sm:$0xff] %v874
  %891 = vst [vmem:[#allocation2 + $0x20] sm:$0xff] %v875
  %892 = vst [vmem:[#allocation2 + $0x28] sm:$0xff] %v876
  %893 = vst [vmem:[#allocation2 + $0x30] sm:$0xff] %v877
  %894 = vst [vmem:[#allocation2 + $0x38] sm:$0xff] %v878
  %895 = vst [vmem:[#allocation2 + $0x40] sm:$0xff] %v879
  %896 = vst [vmem:[#allocation2 + $0x48] sm:$0xff] %v880
  %897 = vst [vmem:[#allocation2 + $0x50] sm:$0xff] %v881
  %898 = vst [vmem:[#allocation2 + $0x58] sm:$0xff] %v882
  %899 = vst [vmem:[#allocation2 + $0x60] sm:$0xff] %v883
  %900 = vst [vmem:[#allocation2 + $0x68] sm:$0xff] %v884
  %901 = vst [vmem:[#allocation2 + $0x70] sm:$0xff] %v885
  %902 = vst [vmem:[#allocation2 + $0x78] sm:$0xff] %v886
  // Predicated region
  $region18: #{flownet_encoder_forward.7} parent=0 // pred_check
    %p903 = pneg %p14
  $region19: #{flownet_encoder_forward.7} parent=0 // pred_check_branch
    %905 = sbr.rel (%p903) target = $region21
  $region20: #{flownet_encoder_forward.7} parent=0 // pred_region
    %v906 = vld [vmem:[#allocation2] sm:$0xff]
    %v907 = vld [vmem:[#allocation2 + $0x8] sm:$0xff]
    %v908 = vld [vmem:[#allocation2 + $0x10] sm:$0xff]
    %v909 = vld [vmem:[#allocation2 + $0x18] sm:$0xff]
    %v910 = vld [vmem:[#allocation2 + $0x20] sm:$0xff]
    %v911 = vld [vmem:[#allocation2 + $0x28] sm:$0xff]
    %v912 = vld [vmem:[#allocation2 + $0x30] sm:$0xff]
    %v913 = vld [vmem:[#allocation2 + $0x38] sm:$0xff]
    %v914 = vld [vmem:[#allocation2 + $0x40] sm:$0xff]
    %v915 = vld [vmem:[#allocation2 + $0x48] sm:$0xff]
    %v916 = vld [vmem:[#allocation2 + $0x50] sm:$0xff]
    %v917 = vld [vmem:[#allocation2 + $0x58] sm:$0xff]
    %v918 = vld [vmem:[#allocation2 + $0x60] sm:$0xff]
    %v919 = vld [vmem:[#allocation2 + $0x68] sm:$0xff]
    %v920 = vld [vmem:[#allocation2 + $0x70] sm:$0xff]
    %v921 = vld [vmem:[#allocation2 + $0x78] sm:$0xff]
    %v922 = vld [vmem:[%s2] sm:$0x1]
    %v924 = vperm.slane %v922, 0
    %v926 = vadd.f32 %v906, %v924
    %v927 = vadd.f32 %v907, %v924
    %v928 = vadd.f32 %v908, %v924
    %v929 = vadd.f32 %v909, %v924
    %v930 = vadd.f32 %v910, %v924
    %v931 = vadd.f32 %v911, %v924
    %v932 = vadd.f32 %v912, %v924
    %v933 = vadd.f32 %v913, %v924
    %v934 = vadd.f32 %v914, %v924
    %v935 = vadd.f32 %v915, %v924
    %v936 = vadd.f32 %v916, %v924
    %v937 = vadd.f32 %v917, %v924
    %v938 = vadd.f32 %v918, %v924
    %v939 = vadd.f32 %v919, %v924
    %v940 = vadd.f32 %v920, %v924
    %v941 = vadd.f32 %v921, %v924
    %vm942 = vcmp.gt.f32.partialorder %v926, 0.0
    %vm943 = vcmp.gt.f32.partialorder %v927, 0.0
    %vm944 = vcmp.gt.f32.partialorder %v928, 0.0
    %vm945 = vcmp.gt.f32.partialorder %v929, 0.0
    %vm946 = vcmp.gt.f32.partialorder %v930, 0.0
    %vm947 = vcmp.gt.f32.partialorder %v931, 0.0
    %vm948 = vcmp.gt.f32.partialorder %v932, 0.0
    %vm949 = vcmp.gt.f32.partialorder %v933, 0.0
    %vm950 = vcmp.gt.f32.partialorder %v934, 0.0
    %vm951 = vcmp.gt.f32.partialorder %v935, 0.0
    %vm952 = vcmp.gt.f32.partialorder %v936, 0.0
    %vm953 = vcmp.gt.f32.partialorder %v937, 0.0
    %vm954 = vcmp.gt.f32.partialorder %v938, 0.0
    %vm955 = vcmp.gt.f32.partialorder %v939, 0.0
    %vm956 = vcmp.gt.f32.partialorder %v940, 0.0
    %vm957 = vcmp.gt.f32.partialorder %v941, 0.0
    %v958 = vmul.f32 %v926, 0.01
    %v959 = vmul.f32 %v927, 0.01
    %v960 = vmul.f32 %v928, 0.01
    %v961 = vmul.f32 %v929, 0.01
    %v962 = vmul.f32 %v930, 0.01
    %v963 = vmul.f32 %v931, 0.01
    %v964 = vmul.f32 %v932, 0.01
    %v965 = vmul.f32 %v933, 0.01
    %v966 = vmul.f32 %v934, 0.01
    %v967 = vmul.f32 %v935, 0.01
    %v968 = vmul.f32 %v936, 0.01
    %v969 = vmul.f32 %v937, 0.01
    %v970 = vmul.f32 %v938, 0.01
    %v971 = vmul.f32 %v939, 0.01
    %v972 = vmul.f32 %v940, 0.01
    %v973 = vmul.f32 %v941, 0.01
    %v974 = vsel %vm942, %v926, %v958
    %v975 = vsel %vm943, %v927, %v959
    %v976 = vsel %vm944, %v928, %v960
    %v977 = vsel %vm945, %v929, %v961
    %v978 = vsel %vm946, %v930, %v962
    %v979 = vsel %vm947, %v931, %v963
    %v980 = vsel %vm948, %v932, %v964
    %v981 = vsel %vm949, %v933, %v965
    %v982 = vsel %vm950, %v934, %v966
    %v983 = vsel %vm951, %v935, %v967
    %v984 = vsel %vm952, %v936, %v968
    %v985 = vsel %vm953, %v937, %v969
    %v986 = vsel %vm954, %v938, %v970
    %v987 = vsel %vm955, %v939, %v971
    %v988 = vsel %vm956, %v940, %v972
    %v989 = vsel %vm957, %v941, %v973
    %990 = vst [vmem:[%s3] sm:$0xff] %v974
    %991 = vst [vmem:[%s3 + $0x8] sm:$0xff] %v975
    %992 = vst [vmem:[%s3 + $0x10] sm:$0xff] %v976
    %993 = vst [vmem:[%s3 + $0x18] sm:$0xff] %v977
    %994 = vst [vmem:[%s3 + $0x20] sm:$0xff] %v978
    %995 = vst [vmem:[%s3 + $0x28] sm:$0xff] %v979
    %996 = vst [vmem:[%s3 + $0x30] sm:$0xff] %v980
    %997 = vst [vmem:[%s3 + $0x38] sm:$0xff] %v981
    %998 = vst [vmem:[%s3 + $0x40] sm:$0xff] %v982
    %999 = vst [vmem:[%s3 + $0x48] sm:$0xff] %v983
    %1000 = vst [vmem:[%s3 + $0x50] sm:$0xff] %v984
    %1001 = vst [vmem:[%s3 + $0x58] sm:$0xff] %v985
    %1002 = vst [vmem:[%s3 + $0x60] sm:$0xff] %v986
    %1003 = vst [vmem:[%s3 + $0x68] sm:$0xff] %v987
    %1004 = vst [vmem:[%s3 + $0x70] sm:$0xff] %v988
    %1005 = vst [vmem:[%s3 + $0x78] sm:$0xff] %v989
  $region21: #{flownet_encoder_forward.7} parent=0 // pred_fallthru
    _
  // Predicated region
  $region22: #{flownet_encoder_forward.7} parent=0 // pred_check
    _
  $region23: #{flownet_encoder_forward.7} parent=0 // pred_check_branch
    %1007 = sbr.rel (0) target = $region25
  $region24: #{flownet_encoder_forward.7} parent=0 // pred_region
    _
  $region25: #{flownet_encoder_forward.7} parent=0 // pred_fallthru
    _
  // Predicated region
  $region26: #{flownet_encoder_forward.7} parent=0 // pred_check
    _
  $region27: #{flownet_encoder_forward.7} parent=0 // pred_check_branch
    %1009 = sbr.rel (0) target = $region29
  $region28: #{flownet_encoder_forward.7} parent=0 // pred_region
    _
  $region29: #{flownet_encoder_forward.7} parent=0 // pred_fallthru
    _

// kernel: flownet_encoder_forward.8
$region0: #{flownet_encoder_forward.8}
  #allocation0 [shape = 'u32[]', space=smem, size = 0x4, offset = 0x4, fixed_abs, tag = 'smem constant byte address 0x4 - core index']
  #allocation1 [shape = 'u32[72,128]{1,0:T(1,128)}', space=vmem, size = 0x9000, scoped, tag = 'internal scratch']
  #allocation2 [shape = 'f32[32,256]{1,0:T(8,128)}', space=vmem, size = 0x8000, scoped, tag = 'scratch operand']
  %s0 = inlined_call_operand.vmem [shape: bf16[32,1152], index: 0, kind: input, shape index: {}]
  %s1 = inlined_call_operand.vmem [shape: bf16[1152,256], index: 1, kind: input, shape index: {}]
  %s2 = inlined_call_operand.vmem [shape: f32[1,256], index: 2, kind: input, shape index: {}]
  %s3 = inlined_call_operand.vmem [shape: f32[32,256], index: 3, kind: output, shape index: {}]
  %s4 = sld [smem:[#allocation0]]
  $region30: #{flownet_encoder_forward.8} parent=0
    _
  %s6 = ssub.s32 1, %s4
  %s7 = scalar_select 0, %s6, %s4
  // Predicated region
  $region2: #{flownet_encoder_forward.8} parent=0 // pred_check
    _
  $region3: #{flownet_encoder_forward.8} parent=0 // pred_check_branch
    %9 = sbr.rel (0) target = $region5
  $region4: #{flownet_encoder_forward.8} parent=0 // pred_region
    _
  $region5: #{flownet_encoder_forward.8} parent=0 // pred_fallthru
    _
  // Predicated region
  $region6: #{flownet_encoder_forward.8} parent=0 // pred_check
    _
  $region7: #{flownet_encoder_forward.8} parent=0 // pred_check_branch
    %11 = sbr.rel (0) target = $region9
  $region8: #{flownet_encoder_forward.8} parent=0 // pred_region
    _
  $region9: #{flownet_encoder_forward.8} parent=0 // pred_fallthru
    _
  // Predicated region
  $region10: #{flownet_encoder_forward.8} parent=0 // pred_check
    _
  $region11: #{flownet_encoder_forward.8} parent=0 // pred_check_branch
    %13 = sbr.rel (0) target = $region13
  $region12: #{flownet_encoder_forward.8} parent=0 // pred_region
    _
  $region13: #{flownet_encoder_forward.8} parent=0 // pred_fallthru
    _
  %p14 = scmp.eq.s32.totalorder 0, 0
  // Predicated region
  $region14: #{flownet_encoder_forward.8} parent=0 // pred_check
    %p15 = pneg %p14
  $region15: #{flownet_encoder_forward.8} parent=0 // pred_check_branch
    %17 = sbr.rel (%p15) target = $region17
  $region16: #{flownet_encoder_forward.8} parent=0 // pred_region
    %18 = vst [vmem:[#allocation2] sm:$0xff] 0.0
    %19 = vst [vmem:[#allocation2 + $0x8] sm:$0xff] 0.0
    %20 = vst [vmem:[#allocation2 + $0x10] sm:$0xff] 0.0
    %21 = vst [vmem:[#allocation2 + $0x18] sm:$0xff] 0.0
    %22 = vst [vmem:[#allocation2 + $0x20] sm:$0xff] 0.0
    %23 = vst [vmem:[#allocation2 + $0x28] sm:$0xff] 0.0
    %24 = vst [vmem:[#allocation2 + $0x30] sm:$0xff] 0.0
    %25 = vst [vmem:[#allocation2 + $0x38] sm:$0xff] 0.0
  $region17: #{flownet_encoder_forward.8} parent=0 // pred_fallthru
    _
  %v26 = vld [vmem:[#allocation2] sm:$0xff]
  %v27 = vld [vmem:[#allocation2 + $0x8] sm:$0xff]
  %v28 = vld [vmem:[#allocation2 + $0x10] sm:$0xff]
  %v29 = vld [vmem:[#allocation2 + $0x18] sm:$0xff]
  %v30 = vld [vmem:[#allocation2 + $0x20] sm:$0xff]
  %v31 = vld [vmem:[#allocation2 + $0x28] sm:$0xff]
  %v32 = vld [vmem:[#allocation2 + $0x30] sm:$0xff]
  %v33 = vld [vmem:[#allocation2 + $0x38] sm:$0xff]
  %v34 = vld [vmem:[%s0] sm:$0xff]
  %v35 = vld [vmem:[%s0 + $0x8] sm:$0xff]
  %v36 = vld [vmem:[%s0 + $0x10] sm:$0xff]
  %v37 = vld [vmem:[%s0 + $0x18] sm:$0xff]
  %v38 = vld [vmem:[%s0 + $0x20] sm:$0xf]
  %v39 = vld [vmem:[%s0 + $0x24] sm:$0xff]
  %v40 = vld [vmem:[%s0 + $0x2c] sm:$0xff]
  %v41 = vld [vmem:[%s0 + $0x34] sm:$0xff]
  %v42 = vld [vmem:[%s0 + $0x3c] sm:$0xff]
  %v43 = vld [vmem:[%s0 + $0x44] sm:$0xf]
  %v44 = vld [vmem:[%s0 + $0x48] sm:$0xff]
  %v45 = vld [vmem:[%s0 + $0x50] sm:$0xff]
  %v46 = vld [vmem:[%s0 + $0x58] sm:$0xff]
  %v47 = vld [vmem:[%s0 + $0x60] sm:$0xff]
  %v48 = vld [vmem:[%s0 + $0x68] sm:$0xf]
  %v49 = vld [vmem:[%s0 + $0x6c] sm:$0xff]
  %v50 = vld [vmem:[%s0 + $0x74] sm:$0xff]
  %v51 = vld [vmem:[%s0 + $0x7c] sm:$0xff]
  %v52 = vld [vmem:[%s0 + $0x84] sm:$0xff]
  %v53 = vld [vmem:[%s0 + $0x8c] sm:$0xf]
  %v54 = vld [vmem:[%s1] sm:$0xff]
  %v55 = vld [vmem:[%s1 + $0x8] sm:$0xff]
  %v56 = vld [vmem:[%s1 + $0x10] sm:$0xff]
  %v57 = vld [vmem:[%s1 + $0x18] sm:$0xff]
  %v58 = vld [vmem:[%s1 + $0x20] sm:$0xff]
  %v59 = vld [vmem:[%s1 + $0x28] sm:$0xff]
  %v60 = vld [vmem:[%s1 + $0x30] sm:$0xff]
  %v61 = vld [vmem:[%s1 + $0x38] sm:$0xff]
  %v62 = vld [vmem:[%s1 + $0x40] sm:$0xff]
  %v63 = vld [vmem:[%s1 + $0x48] sm:$0xff]
  %v64 = vld [vmem:[%s1 + $0x50] sm:$0xff]
  %v65 = vld [vmem:[%s1 + $0x58] sm:$0xff]
  %v66 = vld [vmem:[%s1 + $0x60] sm:$0xff]
  %v67 = vld [vmem:[%s1 + $0x68] sm:$0xff]
  %v68 = vld [vmem:[%s1 + $0x70] sm:$0xff]
  %v69 = vld [vmem:[%s1 + $0x78] sm:$0xff]
  %v70 = vld [vmem:[%s1 + $0x80] sm:$0xff]
  %v71 = vld [vmem:[%s1 + $0x88] sm:$0xff]
  %v72 = vld [vmem:[%s1 + $0x90] sm:$0xff]
  %v73 = vld [vmem:[%s1 + $0x98] sm:$0xff]
  %v74 = vld [vmem:[%s1 + $0xa0] sm:$0xff]
  %v75 = vld [vmem:[%s1 + $0xa8] sm:$0xff]
  %v76 = vld [vmem:[%s1 + $0xb0] sm:$0xff]
  %v77 = vld [vmem:[%s1 + $0xb8] sm:$0xff]
  %v78 = vld [vmem:[%s1 + $0xc0] sm:$0xff]
  %v79 = vld [vmem:[%s1 + $0xc8] sm:$0xff]
  %v80 = vld [vmem:[%s1 + $0xd0] sm:$0xff]
  %v81 = vld [vmem:[%s1 + $0xd8] sm:$0xff]
  %v82 = vld [vmem:[%s1 + $0xe0] sm:$0xff]
  %v83 = vld [vmem:[%s1 + $0xe8] sm:$0xff]
  %v84 = vld [vmem:[%s1 + $0xf0] sm:$0xff]
  %v85 = vld [vmem:[%s1 + $0xf8] sm:$0xff]
  %v86 = vld [vmem:[%s1 + $0x100] sm:$0xff]
  %v87 = vld [vmem:[%s1 + $0x108] sm:$0xff]
  %v88 = vld [vmem:[%s1 + $0x110] sm:$0xff]
  %v89 = vld [vmem:[%s1 + $0x118] sm:$0xff]
  %v90 = vld [vmem:[%s1 + $0x120] sm:$0xff]
  %v91 = vld [vmem:[%s1 + $0x128] sm:$0xff]
  %v92 = vld [vmem:[%s1 + $0x130] sm:$0xff]
  %v93 = vld [vmem:[%s1 + $0x138] sm:$0xff]
  %v94 = vld [vmem:[%s1 + $0x140] sm:$0xff]
  %v95 = vld [vmem:[%s1 + $0x148] sm:$0xff]
  %v96 = vld [vmem:[%s1 + $0x150] sm:$0xff]
  %v97 = vld [vmem:[%s1 + $0x158] sm:$0xff]
  %v98 = vld [vmem:[%s1 + $0x160] sm:$0xff]
  %v99 = vld [vmem:[%s1 + $0x168] sm:$0xff]
  %v100 = vld [vmem:[%s1 + $0x170] sm:$0xff]
  %v101 = vld [vmem:[%s1 + $0x178] sm:$0xff]
  %v102 = vld [vmem:[%s1 + $0x180] sm:$0xff]
  %v103 = vld [vmem:[%s1 + $0x188] sm:$0xff]
  %v104 = vld [vmem:[%s1 + $0x190] sm:$0xff]
  %v105 = vld [vmem:[%s1 + $0x198] sm:$0xff]
  %v106 = vld [vmem:[%s1 + $0x1a0] sm:$0xff]
  %v107 = vld [vmem:[%s1 + $0x1a8] sm:$0xff]
  %v108 = vld [vmem:[%s1 + $0x1b0] sm:$0xff]
  %v109 = vld [vmem:[%s1 + $0x1b8] sm:$0xff]
  %v110 = vld [vmem:[%s1 + $0x1c0] sm:$0xff]
  %v111 = vld [vmem:[%s1 + $0x1c8] sm:$0xff]
  %v112 = vld [vmem:[%s1 + $0x1d0] sm:$0xff]
  %v113 = vld [vmem:[%s1 + $0x1d8] sm:$0xff]
  %v114 = vld [vmem:[%s1 + $0x1e0] sm:$0xff]
  %v115 = vld [vmem:[%s1 + $0x1e8] sm:$0xff]
  %v116 = vld [vmem:[%s1 + $0x1f0] sm:$0xff]
  %v117 = vld [vmem:[%s1 + $0x1f8] sm:$0xff]
  %v118 = vld [vmem:[%s1 + $0x200] sm:$0xff]
  %v119 = vld [vmem:[%s1 + $0x208] sm:$0xff]
  %v120 = vld [vmem:[%s1 + $0x210] sm:$0xff]
  %v121 = vld [vmem:[%s1 + $0x218] sm:$0xff]
  %v122 = vld [vmem:[%s1 + $0x220] sm:$0xff]
  %v123 = vld [vmem:[%s1 + $0x228] sm:$0xff]
  %v124 = vld [vmem:[%s1 + $0x230] sm:$0xff]
  %v125 = vld [vmem:[%s1 + $0x238] sm:$0xff]
  %v126 = vld [vmem:[%s1 + $0x240] sm:$0xff]
  %v127 = vld [vmem:[%s1 + $0x248] sm:$0xff]
  %v128 = vld [vmem:[%s1 + $0x250] sm:$0xff]
  %v129 = vld [vmem:[%s1 + $0x258] sm:$0xff]
  %v130 = vld [vmem:[%s1 + $0x260] sm:$0xff]
  %v131 = vld [vmem:[%s1 + $0x268] sm:$0xff]
  %v132 = vld [vmem:[%s1 + $0x270] sm:$0xff]
  %v133 = vld [vmem:[%s1 + $0x278] sm:$0xff]
  %v134 = vld [vmem:[%s1 + $0x280] sm:$0xff]
  %v135 = vld [vmem:[%s1 + $0x288] sm:$0xff]
  %v136 = vld [vmem:[%s1 + $0x290] sm:$0xff]
  %v137 = vld [vmem:[%s1 + $0x298] sm:$0xff]
  %v138 = vld [vmem:[%s1 + $0x2a0] sm:$0xff]
  %v139 = vld [vmem:[%s1 + $0x2a8] sm:$0xff]
  %v140 = vld [vmem:[%s1 + $0x2b0] sm:$0xff]
  %v141 = vld [vmem:[%s1 + $0x2b8] sm:$0xff]
  %v142 = vld [vmem:[%s1 + $0x2c0] sm:$0xff]
  %v143 = vld [vmem:[%s1 + $0x2c8] sm:$0xff]
  %v144 = vld [vmem:[%s1 + $0x2d0] sm:$0xff]
  %v145 = vld [vmem:[%s1 + $0x2d8] sm:$0xff]
  %v146 = vld [vmem:[%s1 + $0x2e0] sm:$0xff]
  %v147 = vld [vmem:[%s1 + $0x2e8] sm:$0xff]
  %v148 = vld [vmem:[%s1 + $0x2f0] sm:$0xff]
  %v149 = vld [vmem:[%s1 + $0x2f8] sm:$0xff]
  %v150 = vld [vmem:[%s1 + $0x300] sm:$0xff]
  %v151 = vld [vmem:[%s1 + $0x308] sm:$0xff]
  %v152 = vld [vmem:[%s1 + $0x310] sm:$0xff]
  %v153 = vld [vmem:[%s1 + $0x318] sm:$0xff]
  %v154 = vld [vmem:[%s1 + $0x320] sm:$0xff]
  %v155 = vld [vmem:[%s1 + $0x328] sm:$0xff]
  %v156 = vld [vmem:[%s1 + $0x330] sm:$0xff]
  %v157 = vld [vmem:[%s1 + $0x338] sm:$0xff]
  %v158 = vld [vmem:[%s1 + $0x340] sm:$0xff]
  %v159 = vld [vmem:[%s1 + $0x348] sm:$0xff]
  %v160 = vld [vmem:[%s1 + $0x350] sm:$0xff]
  %v161 = vld [vmem:[%s1 + $0x358] sm:$0xff]
  %v162 = vld [vmem:[%s1 + $0x360] sm:$0xff]
  %v163 = vld [vmem:[%s1 + $0x368] sm:$0xff]
  %v164 = vld [vmem:[%s1 + $0x370] sm:$0xff]
  %v165 = vld [vmem:[%s1 + $0x378] sm:$0xff]
  %v166 = vld [vmem:[%s1 + $0x380] sm:$0xff]
  %v167 = vld [vmem:[%s1 + $0x388] sm:$0xff]
  %v168 = vld [vmem:[%s1 + $0x390] sm:$0xff]
  %v169 = vld [vmem:[%s1 + $0x398] sm:$0xff]
  %v170 = vld [vmem:[%s1 + $0x3a0] sm:$0xff]
  %v171 = vld [vmem:[%s1 + $0x3a8] sm:$0xff]
  %v172 = vld [vmem:[%s1 + $0x3b0] sm:$0xff]
  %v173 = vld [vmem:[%s1 + $0x3b8] sm:$0xff]
  %v174 = vld [vmem:[%s1 + $0x3c0] sm:$0xff]
  %v175 = vld [vmem:[%s1 + $0x3c8] sm:$0xff]
  %v176 = vld [vmem:[%s1 + $0x3d0] sm:$0xff]
  %v177 = vld [vmem:[%s1 + $0x3d8] sm:$0xff]
  %v178 = vld [vmem:[%s1 + $0x3e0] sm:$0xff]
  %v179 = vld [vmem:[%s1 + $0x3e8] sm:$0xff]
  %v180 = vld [vmem:[%s1 + $0x3f0] sm:$0xff]
  %v181 = vld [vmem:[%s1 + $0x3f8] sm:$0xff]
  %v182 = vld [vmem:[%s1 + $0x400] sm:$0xff]
  %v183 = vld [vmem:[%s1 + $0x408] sm:$0xff]
  %v184 = vld [vmem:[%s1 + $0x410] sm:$0xff]
  %v185 = vld [vmem:[%s1 + $0x418] sm:$0xff]
  %v186 = vld [vmem:[%s1 + $0x420] sm:$0xff]
  %v187 = vld [vmem:[%s1 + $0x428] sm:$0xff]
  %v188 = vld [vmem:[%s1 + $0x430] sm:$0xff]
  %v189 = vld [vmem:[%s1 + $0x438] sm:$0xff]
  %v190 = vld [vmem:[%s1 + $0x440] sm:$0xff]
  %v191 = vld [vmem:[%s1 + $0x448] sm:$0xff]
  %v192 = vld [vmem:[%s1 + $0x450] sm:$0xff]
  %v193 = vld [vmem:[%s1 + $0x458] sm:$0xff]
  %v194 = vld [vmem:[%s1 + $0x460] sm:$0xff]
  %v195 = vld [vmem:[%s1 + $0x468] sm:$0xff]
  %v196 = vld [vmem:[%s1 + $0x470] sm:$0xff]
  %v197 = vld [vmem:[%s1 + $0x478] sm:$0xff]
  %v218 = vunpack.c.l.b16 %v34
  %v219 = vunpack.c.h.b16 %v34
  %v220 = vunpack.c.l.b16 %v35
  %v221 = vunpack.c.h.b16 %v35
  %v222 = vunpack.c.l.b16 %v36
  %v223 = vunpack.c.h.b16 %v36
  %v224 = vunpack.c.l.b16 %v37
  %v225 = vunpack.c.h.b16 %v37
  %v226 = vunpack.c.l.b16 %v38
  %v227 = vunpack.c.l.b16 %v39
  %v228 = vunpack.c.h.b16 %v39
  %v229 = vunpack.c.l.b16 %v40
  %v230 = vunpack.c.h.b16 %v40
  %v231 = vunpack.c.l.b16 %v41
  %v232 = vunpack.c.h.b16 %v41
  %v233 = vunpack.c.l.b16 %v42
  %v234 = vunpack.c.h.b16 %v42
  %v235 = vunpack.c.l.b16 %v43
  %v236 = vunpack.c.l.b16 %v44
  %v237 = vunpack.c.h.b16 %v44
  %v238 = vunpack.c.l.b16 %v45
  %v239 = vunpack.c.h.b16 %v45
  %v240 = vunpack.c.l.b16 %v46
  %v241 = vunpack.c.h.b16 %v46
  %v242 = vunpack.c.l.b16 %v47
  %v243 = vunpack.c.h.b16 %v47
  %v244 = vunpack.c.l.b16 %v48
  %v245 = vunpack.c.l.b16 %v49
  %v246 = vunpack.c.h.b16 %v49
  %v247 = vunpack.c.l.b16 %v50
  %v248 = vunpack.c.h.b16 %v50
  %v249 = vunpack.c.l.b16 %v51
  %v250 = vunpack.c.h.b16 %v51
  %v251 = vunpack.c.l.b16 %v52
  %v252 = vunpack.c.h.b16 %v52
  %v253 = vunpack.c.l.b16 %v53
  %v254 = vpack.c.b16 %v227, %v218
  %v255 = vpack.c.b16 %v228, %v219
  %v256 = vpack.c.b16 %v229, %v220
  %v257 = vpack.c.b16 %v230, %v221
  %v258 = vpack.c.b16 %v231, %v222
  %v259 = vpack.c.b16 %v232, %v223
  %v260 = vpack.c.b16 %v233, %v224
  %v261 = vpack.c.b16 %v234, %v225
  %v262 = vpack.c.b16 %v235, %v226
  %v263 = vpack.c.b16 %v245, %v236
  %v264 = vpack.c.b16 %v246, %v237
  %v265 = vpack.c.b16 %v247, %v238
  %v266 = vpack.c.b16 %v248, %v239
  %v267 = vpack.c.b16 %v249, %v240
  %v268 = vpack.c.b16 %v250, %v241
  %v269 = vpack.c.b16 %v251, %v242
  %v270 = vpack.c.b16 %v252, %v243
  %v271 = vpack.c.b16 %v253, %v244
  %v434 = vunpack.c.l.b16 %v54
  %v435 = vunpack.c.h.b16 %v54
  %v436 = vunpack.c.l.b16 %v55
  %v437 = vunpack.c.h.b16 %v55
  %v438 = vunpack.c.l.b16 %v56
  %v439 = vunpack.c.h.b16 %v56
  %v440 = vunpack.c.l.b16 %v57
  %v441 = vunpack.c.h.b16 %v57
  %v442 = vunpack.c.l.b16 %v58
  %v443 = vunpack.c.h.b16 %v58
  %v444 = vunpack.c.l.b16 %v59
  %v445 = vunpack.c.h.b16 %v59
  %v446 = vunpack.c.l.b16 %v60
  %v447 = vunpack.c.h.b16 %v60
  %v448 = vunpack.c.l.b16 %v61
  %v449 = vunpack.c.h.b16 %v61
  %v450 = vunpack.c.l.b16 %v62
  %v451 = vunpack.c.h.b16 %v62
  %v452 = vunpack.c.l.b16 %v63
  %v453 = vunpack.c.h.b16 %v63
  %v454 = vunpack.c.l.b16 %v64
  %v455 = vunpack.c.h.b16 %v64
  %v456 = vunpack.c.l.b16 %v65
  %v457 = vunpack.c.h.b16 %v65
  %v458 = vunpack.c.l.b16 %v66
  %v459 = vunpack.c.h.b16 %v66
  %v460 = vunpack.c.l.b16 %v67
  %v461 = vunpack.c.h.b16 %v67
  %v462 = vunpack.c.l.b16 %v68
  %v463 = vunpack.c.h.b16 %v68
  %v464 = vunpack.c.l.b16 %v69
  %v465 = vunpack.c.h.b16 %v69
  %v466 = vunpack.c.l.b16 %v70
  %v467 = vunpack.c.h.b16 %v70
  %v468 = vunpack.c.l.b16 %v71
  %v469 = vunpack.c.h.b16 %v71
  %v470 = vunpack.c.l.b16 %v72
  %v471 = vunpack.c.h.b16 %v72
  %v472 = vunpack.c.l.b16 %v73
  %v473 = vunpack.c.h.b16 %v73
  %v474 = vunpack.c.l.b16 %v74
  %v475 = vunpack.c.h.b16 %v74
  %v476 = vunpack.c.l.b16 %v75
  %v477 = vunpack.c.h.b16 %v75
  %v478 = vunpack.c.l.b16 %v76
  %v479 = vunpack.c.h.b16 %v76
  %v480 = vunpack.c.l.b16 %v77
  %v481 = vunpack.c.h.b16 %v77
  %v482 = vunpack.c.l.b16 %v78
  %v483 = vunpack.c.h.b16 %v78
  %v484 = vunpack.c.l.b16 %v79
  %v485 = vunpack.c.h.b16 %v79
  %v486 = vunpack.c.l.b16 %v80
  %v487 = vunpack.c.h.b16 %v80
  %v488 = vunpack.c.l.b16 %v81
  %v489 = vunpack.c.h.b16 %v81
  %v490 = vunpack.c.l.b16 %v82
  %v491 = vunpack.c.h.b16 %v82
  %v492 = vunpack.c.l.b16 %v83
  %v493 = vunpack.c.h.b16 %v83
  %v494 = vunpack.c.l.b16 %v84
  %v495 = vunpack.c.h.b16 %v84
  %v496 = vunpack.c.l.b16 %v85
  %v497 = vunpack.c.h.b16 %v85
  %v498 = vunpack.c.l.b16 %v86
  %v499 = vunpack.c.h.b16 %v86
  %v500 = vunpack.c.l.b16 %v87
  %v501 = vunpack.c.h.b16 %v87
  %v502 = vunpack.c.l.b16 %v88
  %v503 = vunpack.c.h.b16 %v88
  %v504 = vunpack.c.l.b16 %v89
  %v505 = vunpack.c.h.b16 %v89
  %v506 = vunpack.c.l.b16 %v90
  %v507 = vunpack.c.h.b16 %v90
  %v508 = vunpack.c.l.b16 %v91
  %v509 = vunpack.c.h.b16 %v91
  %v510 = vunpack.c.l.b16 %v92
  %v511 = vunpack.c.h.b16 %v92
  %v512 = vunpack.c.l.b16 %v93
  %v513 = vunpack.c.h.b16 %v93
  %v514 = vunpack.c.l.b16 %v94
  %v515 = vunpack.c.h.b16 %v94
  %v516 = vunpack.c.l.b16 %v95
  %v517 = vunpack.c.h.b16 %v95
  %v518 = vunpack.c.l.b16 %v96
  %v519 = vunpack.c.h.b16 %v96
  %v520 = vunpack.c.l.b16 %v97
  %v521 = vunpack.c.h.b16 %v97
  %v522 = vunpack.c.l.b16 %v98
  %v523 = vunpack.c.h.b16 %v98
  %v524 = vunpack.c.l.b16 %v99
  %v525 = vunpack.c.h.b16 %v99
  %v526 = vunpack.c.l.b16 %v100
  %v527 = vunpack.c.h.b16 %v100
  %v528 = vunpack.c.l.b16 %v101
  %v529 = vunpack.c.h.b16 %v101
  %v530 = vunpack.c.l.b16 %v102
  %v531 = vunpack.c.h.b16 %v102
  %v532 = vunpack.c.l.b16 %v103
  %v533 = vunpack.c.h.b16 %v103
  %v534 = vunpack.c.l.b16 %v104
  %v535 = vunpack.c.h.b16 %v104
  %v536 = vunpack.c.l.b16 %v105
  %v537 = vunpack.c.h.b16 %v105
  %v538 = vunpack.c.l.b16 %v106
  %v539 = vunpack.c.h.b16 %v106
  %v540 = vunpack.c.l.b16 %v107
  %v541 = vunpack.c.h.b16 %v107
  %v542 = vunpack.c.l.b16 %v108
  %v543 = vunpack.c.h.b16 %v108
  %v544 = vunpack.c.l.b16 %v109
  %v545 = vunpack.c.h.b16 %v109
  %v546 = vunpack.c.l.b16 %v110
  %v547 = vunpack.c.h.b16 %v110
  %v548 = vunpack.c.l.b16 %v111
  %v549 = vunpack.c.h.b16 %v111
  %v550 = vunpack.c.l.b16 %v112
  %v551 = vunpack.c.h.b16 %v112
  %v552 = vunpack.c.l.b16 %v113
  %v553 = vunpack.c.h.b16 %v113
  %v554 = vunpack.c.l.b16 %v114
  %v555 = vunpack.c.h.b16 %v114
  %v556 = vunpack.c.l.b16 %v115
  %v557 = vunpack.c.h.b16 %v115
  %v558 = vunpack.c.l.b16 %v116
  %v559 = vunpack.c.h.b16 %v116
  %v560 = vunpack.c.l.b16 %v117
  %v561 = vunpack.c.h.b16 %v117
  %v562 = vunpack.c.l.b16 %v118
  %v563 = vunpack.c.h.b16 %v118
  %v564 = vunpack.c.l.b16 %v119
  %v565 = vunpack.c.h.b16 %v119
  %v566 = vunpack.c.l.b16 %v120
  %v567 = vunpack.c.h.b16 %v120
  %v568 = vunpack.c.l.b16 %v121
  %v569 = vunpack.c.h.b16 %v121
  %v570 = vunpack.c.l.b16 %v122
  %v571 = vunpack.c.h.b16 %v122
  %v572 = vunpack.c.l.b16 %v123
  %v573 = vunpack.c.h.b16 %v123
  %v574 = vunpack.c.l.b16 %v124
  %v575 = vunpack.c.h.b16 %v124
  %v576 = vunpack.c.l.b16 %v125
  %v577 = vunpack.c.h.b16 %v125
  %v578 = vunpack.c.l.b16 %v126
  %v579 = vunpack.c.h.b16 %v126
  %v580 = vunpack.c.l.b16 %v127
  %v581 = vunpack.c.h.b16 %v127
  %v582 = vunpack.c.l.b16 %v128
  %v583 = vunpack.c.h.b16 %v128
  %v584 = vunpack.c.l.b16 %v129
  %v585 = vunpack.c.h.b16 %v129
  %v586 = vunpack.c.l.b16 %v130
  %v587 = vunpack.c.h.b16 %v130
  %v588 = vunpack.c.l.b16 %v131
  %v589 = vunpack.c.h.b16 %v131
  %v590 = vunpack.c.l.b16 %v132
  %v591 = vunpack.c.h.b16 %v132
  %v592 = vunpack.c.l.b16 %v133
  %v593 = vunpack.c.h.b16 %v133
  %v594 = vunpack.c.l.b16 %v134
  %v595 = vunpack.c.h.b16 %v134
  %v596 = vunpack.c.l.b16 %v135
  %v597 = vunpack.c.h.b16 %v135
  %v598 = vunpack.c.l.b16 %v136
  %v599 = vunpack.c.h.b16 %v136
  %v600 = vunpack.c.l.b16 %v137
  %v601 = vunpack.c.h.b16 %v137
  %v602 = vunpack.c.l.b16 %v138
  %v603 = vunpack.c.h.b16 %v138
  %v604 = vunpack.c.l.b16 %v139
  %v605 = vunpack.c.h.b16 %v139
  %v606 = vunpack.c.l.b16 %v140
  %v607 = vunpack.c.h.b16 %v140
  %v608 = vunpack.c.l.b16 %v141
  %v609 = vunpack.c.h.b16 %v141
  %v610 = vunpack.c.l.b16 %v142
  %v611 = vunpack.c.h.b16 %v142
  %v612 = vunpack.c.l.b16 %v143
  %v613 = vunpack.c.h.b16 %v143
  %v614 = vunpack.c.l.b16 %v144
  %v615 = vunpack.c.h.b16 %v144
  %v616 = vunpack.c.l.b16 %v145
  %v617 = vunpack.c.h.b16 %v145
  %v618 = vunpack.c.l.b16 %v146
  %v619 = vunpack.c.h.b16 %v146
  %v620 = vunpack.c.l.b16 %v147
  %v621 = vunpack.c.h.b16 %v147
  %v622 = vunpack.c.l.b16 %v148
  %v623 = vunpack.c.h.b16 %v148
  %v624 = vunpack.c.l.b16 %v149
  %v625 = vunpack.c.h.b16 %v149
  %v626 = vunpack.c.l.b16 %v150
  %v627 = vunpack.c.h.b16 %v150
  %v628 = vunpack.c.l.b16 %v151
  %v629 = vunpack.c.h.b16 %v151
  %v630 = vunpack.c.l.b16 %v152
  %v631 = vunpack.c.h.b16 %v152
  %v632 = vunpack.c.l.b16 %v153
  %v633 = vunpack.c.h.b16 %v153
  %v634 = vunpack.c.l.b16 %v154
  %v635 = vunpack.c.h.b16 %v154
  %v636 = vunpack.c.l.b16 %v155
  %v637 = vunpack.c.h.b16 %v155
  %v638 = vunpack.c.l.b16 %v156
  %v639 = vunpack.c.h.b16 %v156
  %v640 = vunpack.c.l.b16 %v157
  %v641 = vunpack.c.h.b16 %v157
  %v642 = vunpack.c.l.b16 %v158
  %v643 = vunpack.c.h.b16 %v158
  %v644 = vunpack.c.l.b16 %v159
  %v645 = vunpack.c.h.b16 %v159
  %v646 = vunpack.c.l.b16 %v160
  %v647 = vunpack.c.h.b16 %v160
  %v648 = vunpack.c.l.b16 %v161
  %v649 = vunpack.c.h.b16 %v161
  %v650 = vunpack.c.l.b16 %v162
  %v651 = vunpack.c.h.b16 %v162
  %v652 = vunpack.c.l.b16 %v163
  %v653 = vunpack.c.h.b16 %v163
  %v654 = vunpack.c.l.b16 %v164
  %v655 = vunpack.c.h.b16 %v164
  %v656 = vunpack.c.l.b16 %v165
  %v657 = vunpack.c.h.b16 %v165
  %v658 = vunpack.c.l.b16 %v166
  %v659 = vunpack.c.h.b16 %v166
  %v660 = vunpack.c.l.b16 %v167
  %v661 = vunpack.c.h.b16 %v167
  %v662 = vunpack.c.l.b16 %v168
  %v663 = vunpack.c.h.b16 %v168
  %v664 = vunpack.c.l.b16 %v169
  %v665 = vunpack.c.h.b16 %v169
  %v666 = vunpack.c.l.b16 %v170
  %v667 = vunpack.c.h.b16 %v170
  %v668 = vunpack.c.l.b16 %v171
  %v669 = vunpack.c.h.b16 %v171
  %v670 = vunpack.c.l.b16 %v172
  %v671 = vunpack.c.h.b16 %v172
  %v672 = vunpack.c.l.b16 %v173
  %v673 = vunpack.c.h.b16 %v173
  %v674 = vunpack.c.l.b16 %v174
  %v675 = vunpack.c.h.b16 %v174
  %v676 = vunpack.c.l.b16 %v175
  %v677 = vunpack.c.h.b16 %v175
  %v678 = vunpack.c.l.b16 %v176
  %v679 = vunpack.c.h.b16 %v176
  %v680 = vunpack.c.l.b16 %v177
  %v681 = vunpack.c.h.b16 %v177
  %v682 = vunpack.c.l.b16 %v178
  %v683 = vunpack.c.h.b16 %v178
  %v684 = vunpack.c.l.b16 %v179
  %v685 = vunpack.c.h.b16 %v179
  %v686 = vunpack.c.l.b16 %v180
  %v687 = vunpack.c.h.b16 %v180
  %v688 = vunpack.c.l.b16 %v181
  %v689 = vunpack.c.h.b16 %v181
  %v690 = vunpack.c.l.b16 %v182
  %v691 = vunpack.c.h.b16 %v182
  %v692 = vunpack.c.l.b16 %v183
  %v693 = vunpack.c.h.b16 %v183
  %v694 = vunpack.c.l.b16 %v184
  %v695 = vunpack.c.h.b16 %v184
  %v696 = vunpack.c.l.b16 %v185
  %v697 = vunpack.c.h.b16 %v185
  %v698 = vunpack.c.l.b16 %v186
  %v699 = vunpack.c.h.b16 %v186
  %v700 = vunpack.c.l.b16 %v187
  %v701 = vunpack.c.h.b16 %v187
  %v702 = vunpack.c.l.b16 %v188
  %v703 = vunpack.c.h.b16 %v188
  %v704 = vunpack.c.l.b16 %v189
  %v705 = vunpack.c.h.b16 %v189
  %v706 = vunpack.c.l.b16 %v190
  %v707 = vunpack.c.h.b16 %v190
  %v708 = vunpack.c.l.b16 %v191
  %v709 = vunpack.c.h.b16 %v191
  %v710 = vunpack.c.l.b16 %v192
  %v711 = vunpack.c.h.b16 %v192
  %v712 = vunpack.c.l.b16 %v193
  %v713 = vunpack.c.h.b16 %v193
  %v714 = vunpack.c.l.b16 %v194
  %v715 = vunpack.c.h.b16 %v194
  %v716 = vunpack.c.l.b16 %v195
  %v717 = vunpack.c.h.b16 %v195
  %v718 = vunpack.c.l.b16 %v196
  %v719 = vunpack.c.h.b16 %v196
  %v720 = vunpack.c.l.b16 %v197
  %v721 = vunpack.c.h.b16 %v197
  %v722 = vpack.c.b16 %v436, %v434
  %v723 = vpack.c.b16 %v437, %v435
  %v724 = vpack.c.b16 %v440, %v438
  %v725 = vpack.c.b16 %v441, %v439
  %v726 = vpack.c.b16 %v444, %v442
  %v727 = vpack.c.b16 %v445, %v443
  %v728 = vpack.c.b16 %v448, %v446
  %v729 = vpack.c.b16 %v449, %v447
  %v730 = vpack.c.b16 %v452, %v450
  %v731 = vpack.c.b16 %v453, %v451
  %v732 = vpack.c.b16 %v456, %v454
  %v733 = vpack.c.b16 %v457, %v455
  %v734 = vpack.c.b16 %v460, %v458
  %v735 = vpack.c.b16 %v461, %v459
  %v736 = vpack.c.b16 %v464, %v462
  %v737 = vpack.c.b16 %v465, %v463
  %v738 = vpack.c.b16 %v468, %v466
  %v739 = vpack.c.b16 %v469, %v467
  %v740 = vpack.c.b16 %v472, %v470
  %v741 = vpack.c.b16 %v473, %v471
  %v742 = vpack.c.b16 %v476, %v474
  %v743 = vpack.c.b16 %v477, %v475
  %v744 = vpack.c.b16 %v480, %v478
  %v745 = vpack.c.b16 %v481, %v479
  %v746 = vpack.c.b16 %v484, %v482
  %v747 = vpack.c.b16 %v485, %v483
  %v748 = vpack.c.b16 %v488, %v486
  %v749 = vpack.c.b16 %v489, %v487
  %v750 = vpack.c.b16 %v492, %v490
  %v751 = vpack.c.b16 %v493, %v491
  %v752 = vpack.c.b16 %v496, %v494
  %v753 = vpack.c.b16 %v497, %v495
  %v754 = vpack.c.b16 %v500, %v498
  %v755 = vpack.c.b16 %v501, %v499
  %v756 = vpack.c.b16 %v504, %v502
  %v757 = vpack.c.b16 %v505, %v503
  %v758 = vpack.c.b16 %v508, %v506
  %v759 = vpack.c.b16 %v509, %v507
  %v760 = vpack.c.b16 %v512, %v510
  %v761 = vpack.c.b16 %v513, %v511
  %v762 = vpack.c.b16 %v516, %v514
  %v763 = vpack.c.b16 %v517, %v515
  %v764 = vpack.c.b16 %v520, %v518
  %v765 = vpack.c.b16 %v521, %v519
  %v766 = vpack.c.b16 %v524, %v522
  %v767 = vpack.c.b16 %v525, %v523
  %v768 = vpack.c.b16 %v528, %v526
  %v769 = vpack.c.b16 %v529, %v527
  %v770 = vpack.c.b16 %v532, %v530
  %v771 = vpack.c.b16 %v533, %v531
  %v772 = vpack.c.b16 %v536, %v534
  %v773 = vpack.c.b16 %v537, %v535
  %v774 = vpack.c.b16 %v540, %v538
  %v775 = vpack.c.b16 %v541, %v539
  %v776 = vpack.c.b16 %v544, %v542
  %v777 = vpack.c.b16 %v545, %v543
  %v778 = vpack.c.b16 %v548, %v546
  %v779 = vpack.c.b16 %v549, %v547
  %v780 = vpack.c.b16 %v552, %v550
  %v781 = vpack.c.b16 %v553, %v551
  %v782 = vpack.c.b16 %v556, %v554
  %v783 = vpack.c.b16 %v557, %v555
  %v784 = vpack.c.b16 %v560, %v558
  %v785 = vpack.c.b16 %v561, %v559
  %v786 = vpack.c.b16 %v564, %v562
  %v787 = vpack.c.b16 %v565, %v563
  %v788 = vpack.c.b16 %v568, %v566
  %v789 = vpack.c.b16 %v569, %v567
  %v790 = vpack.c.b16 %v572, %v570
  %v791 = vpack.c.b16 %v573, %v571
  %v792 = vpack.c.b16 %v576, %v574
  %v793 = vpack.c.b16 %v577, %v575
  %v794 = vpack.c.b16 %v580, %v578
  %v795 = vpack.c.b16 %v581, %v579
  %v796 = vpack.c.b16 %v584, %v582
  %v797 = vpack.c.b16 %v585, %v583
  %v798 = vpack.c.b16 %v588, %v586
  %v799 = vpack.c.b16 %v589, %v587
  %v800 = vpack.c.b16 %v592, %v590
  %v801 = vpack.c.b16 %v593, %v591
  %v802 = vpack.c.b16 %v596, %v594
  %v803 = vpack.c.b16 %v597, %v595
  %v804 = vpack.c.b16 %v600, %v598
  %v805 = vpack.c.b16 %v601, %v599
  %v806 = vpack.c.b16 %v604, %v602
  %v807 = vpack.c.b16 %v605, %v603
  %v808 = vpack.c.b16 %v608, %v606
  %v809 = vpack.c.b16 %v609, %v607
  %v810 = vpack.c.b16 %v612, %v610
  %v811 = vpack.c.b16 %v613, %v611
  %v812 = vpack.c.b16 %v616, %v614
  %v813 = vpack.c.b16 %v617, %v615
  %v814 = vpack.c.b16 %v620, %v618
  %v815 = vpack.c.b16 %v621, %v619
  %v816 = vpack.c.b16 %v624, %v622
  %v817 = vpack.c.b16 %v625, %v623
  %v818 = vpack.c.b16 %v628, %v626
  %v819 = vpack.c.b16 %v629, %v627
  %v820 = vpack.c.b16 %v632, %v630
  %v821 = vpack.c.b16 %v633, %v631
  %v822 = vpack.c.b16 %v636, %v634
  %v823 = vpack.c.b16 %v637, %v635
  %v824 = vpack.c.b16 %v640, %v638
  %v825 = vpack.c.b16 %v641, %v639
  %v826 = vpack.c.b16 %v644, %v642
  %v827 = vpack.c.b16 %v645, %v643
  %v828 = vpack.c.b16 %v648, %v646
  %v829 = vpack.c.b16 %v649, %v647
  %v830 = vpack.c.b16 %v652, %v650
  %v831 = vpack.c.b16 %v653, %v651
  %v832 = vpack.c.b16 %v656, %v654
  %v833 = vpack.c.b16 %v657, %v655
  %v834 = vpack.c.b16 %v660, %v658
  %v835 = vpack.c.b16 %v661, %v659
  %v836 = vpack.c.b16 %v664, %v662
  %v837 = vpack.c.b16 %v665, %v663
  %v838 = vpack.c.b16 %v668, %v666
  %v839 = vpack.c.b16 %v669, %v667
  %v840 = vpack.c.b16 %v672, %v670
  %v841 = vpack.c.b16 %v673, %v671
  %v842 = vpack.c.b16 %v676, %v674
  %v843 = vpack.c.b16 %v677, %v675
  %v844 = vpack.c.b16 %v680, %v678
  %v845 = vpack.c.b16 %v681, %v679
  %v846 = vpack.c.b16 %v684, %v682
  %v847 = vpack.c.b16 %v685, %v683
  %v848 = vpack.c.b16 %v688, %v686
  %v849 = vpack.c.b16 %v689, %v687
  %v850 = vpack.c.b16 %v692, %v690
  %v851 = vpack.c.b16 %v693, %v691
  %v852 = vpack.c.b16 %v696, %v694
  %v853 = vpack.c.b16 %v697, %v695
  %v854 = vpack.c.b16 %v700, %v698
  %v855 = vpack.c.b16 %v701, %v699
  %v856 = vpack.c.b16 %v704, %v702
  %v857 = vpack.c.b16 %v705, %v703
  %v858 = vpack.c.b16 %v708, %v706
  %v859 = vpack.c.b16 %v709, %v707
  %v860 = vpack.c.b16 %v712, %v710
  %v861 = vpack.c.b16 %v713, %v711
  %v862 = vpack.c.b16 %v716, %v714
  %v863 = vpack.c.b16 %v717, %v715
  %v864 = vpack.c.b16 %v720, %v718
  %v865 = vpack.c.b16 %v721, %v719
  %1010 = vmatpush.bf16.msra.mxu0 %v736
  %1011 = vmatpush.bf16.msra.mxu0 %v734
  %1012 = vmatpush.bf16.msra.mxu0 %v732
  %1013 = vmatpush.bf16.msra.mxu0 %v730
  %1014 = vmatpush.bf16.msra.mxu0 %v728
  %1015 = vmatpush.bf16.msra.mxu0 %v726
  %1016 = vmatpush.bf16.msra.mxu0 %v724
  %1017 = vmatpush.bf16.msra.mxu0 %v722
  %1018 = vmatmul.bf16.gmra.mxu0 %v254
  %v1019 = vpop.f32.mrf.mxu0
  %v1020 = vadd.f32 0.0, %v1019
  %v1021 = vpop.f32.mrf.mxu0
  %v1022 = vadd.f32 0.0, %v1021
  %1023 = vmatmul.bf16.gmra.mxu0 %v263
  %v1024 = vpop.f32.mrf.mxu0
  %v1025 = vadd.f32 0.0, %v1024
  %v1026 = vpop.f32.mrf.mxu0
  %v1027 = vadd.f32 0.0, %v1026
  %1028 = vdwg.mxu0
  %1029 = vmatpush.bf16.msra.mxu0 %v752
  %1030 = vmatpush.bf16.msra.mxu0 %v750
  %1031 = vmatpush.bf16.msra.mxu0 %v748
  %1032 = vmatpush.bf16.msra.mxu0 %v746
  %1033 = vmatpush.bf16.msra.mxu0 %v744
  %1034 = vmatpush.bf16.msra.mxu0 %v742
  %1035 = vmatpush.bf16.msra.mxu0 %v740
  %1036 = vmatpush.bf16.msra.mxu0 %v738
  %1037 = vmatmul.bf16.gmra.mxu0 %v255
  %v1038 = vpop.f32.mrf.mxu0
  %v1039 = vadd.f32 %v1020, %v1038
  %v1040 = vpop.f32.mrf.mxu0
  %v1041 = vadd.f32 %v1022, %v1040
  %1042 = vmatmul.bf16.gmra.mxu0 %v264
  %v1043 = vpop.f32.mrf.mxu0
  %v1044 = vadd.f32 %v1025, %v1043
  %v1045 = vpop.f32.mrf.mxu0
  %v1046 = vadd.f32 %v1027, %v1045
  %1047 = vdwg.mxu0
  %1048 = vmatpush.bf16.msra.mxu0 %v768
  %1049 = vmatpush.bf16.msra.mxu0 %v766
  %1050 = vmatpush.bf16.msra.mxu0 %v764
  %1051 = vmatpush.bf16.msra.mxu0 %v762
  %1052 = vmatpush.bf16.msra.mxu0 %v760
  %1053 = vmatpush.bf16.msra.mxu0 %v758
  %1054 = vmatpush.bf16.msra.mxu0 %v756
  %1055 = vmatpush.bf16.msra.mxu0 %v754
  %1056 = vmatmul.bf16.gmra.mxu0 %v256
  %v1057 = vpop.f32.mrf.mxu0
  %v1058 = vadd.f32 %v1039, %v1057
  %v1059 = vpop.f32.mrf.mxu0
  %v1060 = vadd.f32 %v1041, %v1059
  %1061 = vmatmul.bf16.gmra.mxu0 %v265
  %v1062 = vpop.f32.mrf.mxu0
  %v1063 = vadd.f32 %v1044, %v1062
  %v1064 = vpop.f32.mrf.mxu0
  %v1065 = vadd.f32 %v1046, %v1064
  %1066 = vdwg.mxu0
  %1067 = vmatpush.bf16.msra.mxu0 %v784
  %1068 = vmatpush.bf16.msra.mxu0 %v782
  %1069 = vmatpush.bf16.msra.mxu0 %v780
  %1070 = vmatpush.bf16.msra.mxu0 %v778
  %1071 = vmatpush.bf16.msra.mxu0 %v776
  %1072 = vmatpush.bf16.msra.mxu0 %v774
  %1073 = vmatpush.bf16.msra.mxu0 %v772
  %1074 = vmatpush.bf16.msra.mxu0 %v770
  %1075 = vmatmul.bf16.gmra.mxu0 %v257
  %v1076 = vpop.f32.mrf.mxu0
  %v1077 = vadd.f32 %v1058, %v1076
  %v1078 = vpop.f32.mrf.mxu0
  %v1079 = vadd.f32 %v1060, %v1078
  %1080 = vmatmul.bf16.gmra.mxu0 %v266
  %v1081 = vpop.f32.mrf.mxu0
  %v1082 = vadd.f32 %v1063, %v1081
  %v1083 = vpop.f32.mrf.mxu0
  %v1084 = vadd.f32 %v1065, %v1083
  %1085 = vdwg.mxu0
  %1086 = vmatpush.bf16.msra.mxu0 %v800
  %1087 = vmatpush.bf16.msra.mxu0 %v798
  %1088 = vmatpush.bf16.msra.mxu0 %v796
  %1089 = vmatpush.bf16.msra.mxu0 %v794
  %1090 = vmatpush.bf16.msra.mxu0 %v792
  %1091 = vmatpush.bf16.msra.mxu0 %v790
  %1092 = vmatpush.bf16.msra.mxu0 %v788
  %1093 = vmatpush.bf16.msra.mxu0 %v786
  %1094 = vmatmul.bf16.gmra.mxu0 %v258
  %v1095 = vpop.f32.mrf.mxu0
  %v1096 = vadd.f32 %v1077, %v1095
  %v1097 = vpop.f32.mrf.mxu0
  %v1098 = vadd.f32 %v1079, %v1097
  %1099 = vmatmul.bf16.gmra.mxu0 %v267
  %v1100 = vpop.f32.mrf.mxu0
  %v1101 = vadd.f32 %v1082, %v1100
  %v1102 = vpop.f32.mrf.mxu0
  %v1103 = vadd.f32 %v1084, %v1102
  %1104 = vdwg.mxu0
  %1105 = vmatpush.bf16.msra.mxu0 %v816
  %1106 = vmatpush.bf16.msra.mxu0 %v814
  %1107 = vmatpush.bf16.msra.mxu0 %v812
  %1108 = vmatpush.bf16.msra.mxu0 %v810
  %1109 = vmatpush.bf16.msra.mxu0 %v808
  %1110 = vmatpush.bf16.msra.mxu0 %v806
  %1111 = vmatpush.bf16.msra.mxu0 %v804
  %1112 = vmatpush.bf16.msra.mxu0 %v802
  %1113 = vmatmul.bf16.gmra.mxu0 %v259
  %v1114 = vpop.f32.mrf.mxu0
  %v1115 = vadd.f32 %v1096, %v1114
  %v1116 = vpop.f32.mrf.mxu0
  %v1117 = vadd.f32 %v1098, %v1116
  %1118 = vmatmul.bf16.gmra.mxu0 %v268
  %v1119 = vpop.f32.mrf.mxu0
  %v1120 = vadd.f32 %v1101, %v1119
  %v1121 = vpop.f32.mrf.mxu0
  %v1122 = vadd.f32 %v1103, %v1121
  %1123 = vdwg.mxu0
  %1124 = vmatpush.bf16.msra.mxu0 %v832
  %1125 = vmatpush.bf16.msra.mxu0 %v830
  %1126 = vmatpush.bf16.msra.mxu0 %v828
  %1127 = vmatpush.bf16.msra.mxu0 %v826
  %1128 = vmatpush.bf16.msra.mxu0 %v824
  %1129 = vmatpush.bf16.msra.mxu0 %v822
  %1130 = vmatpush.bf16.msra.mxu0 %v820
  %1131 = vmatpush.bf16.msra.mxu0 %v818
  %1132 = vmatmul.bf16.gmra.mxu0 %v260
  %v1133 = vpop.f32.mrf.mxu0
  %v1134 = vadd.f32 %v1115, %v1133
  %v1135 = vpop.f32.mrf.mxu0
  %v1136 = vadd.f32 %v1117, %v1135
  %1137 = vmatmul.bf16.gmra.mxu0 %v269
  %v1138 = vpop.f32.mrf.mxu0
  %v1139 = vadd.f32 %v1120, %v1138
  %v1140 = vpop.f32.mrf.mxu0
  %v1141 = vadd.f32 %v1122, %v1140
  %1142 = vdwg.mxu0
  %1143 = vmatpush.bf16.msra.mxu0 %v848
  %1144 = vmatpush.bf16.msra.mxu0 %v846
  %1145 = vmatpush.bf16.msra.mxu0 %v844
  %1146 = vmatpush.bf16.msra.mxu0 %v842
  %1147 = vmatpush.bf16.msra.mxu0 %v840
  %1148 = vmatpush.bf16.msra.mxu0 %v838
  %1149 = vmatpush.bf16.msra.mxu0 %v836
  %1150 = vmatpush.bf16.msra.mxu0 %v834
  %1151 = vmatmul.bf16.gmra.mxu0 %v261
  %v1152 = vpop.f32.mrf.mxu0
  %v1153 = vadd.f32 %v1134, %v1152
  %v1154 = vpop.f32.mrf.mxu0
  %v1155 = vadd.f32 %v1136, %v1154
  %1156 = vmatmul.bf16.gmra.mxu0 %v270
  %v1157 = vpop.f32.mrf.mxu0
  %v1158 = vadd.f32 %v1139, %v1157
  %v1159 = vpop.f32.mrf.mxu0
  %v1160 = vadd.f32 %v1141, %v1159
  %1161 = vdwg.mxu0
  %1162 = vmatpush.bf16.msra.mxu0 %v864
  %1163 = vmatpush.bf16.msra.mxu0 %v862
  %1164 = vmatpush.bf16.msra.mxu0 %v860
  %1165 = vmatpush.bf16.msra.mxu0 %v858
  %1166 = vmatpush.bf16.msra.mxu0 %v856
  %1167 = vmatpush.bf16.msra.mxu0 %v854
  %1168 = vmatpush.bf16.msra.mxu0 %v852
  %1169 = vmatpush.bf16.msra.mxu0 %v850
  %1170 = vmatmul.bf16.gmra.mxu0 %v262
  %v1171 = vpop.f32.mrf.mxu0
  %v1172 = vadd.f32 %v1153, %v1171
  %v1173 = vpop.f32.mrf.mxu0
  %v1174 = vadd.f32 %v1155, %v1173
  %1175 = vmatmul.bf16.gmra.mxu0 %v271
  %v1176 = vpop.f32.mrf.mxu0
  %v1177 = vadd.f32 %v1158, %v1176
  %v1178 = vpop.f32.mrf.mxu0
  %v1179 = vadd.f32 %v1160, %v1178
  %1180 = vdwg.mxu0
  %1181 = vmatpush.bf16.msra.mxu0 %v737
  %1182 = vmatpush.bf16.msra.mxu0 %v735
  %1183 = vmatpush.bf16.msra.mxu0 %v733
  %1184 = vmatpush.bf16.msra.mxu0 %v731
  %1185 = vmatpush.bf16.msra.mxu0 %v729
  %1186 = vmatpush.bf16.msra.mxu0 %v727
  %1187 = vmatpush.bf16.msra.mxu0 %v725
  %1188 = vmatpush.bf16.msra.mxu0 %v723
  %1189 = vmatmul.bf16.gmra.mxu0 %v254
  %v1190 = vpop.f32.mrf.mxu0
  %v1191 = vadd.f32 0.0, %v1190
  %v1192 = vpop.f32.mrf.mxu0
  %v1193 = vadd.f32 0.0, %v1192
  %1194 = vmatmul.bf16.gmra.mxu0 %v263
  %v1195 = vpop.f32.mrf.mxu0
  %v1196 = vadd.f32 0.0, %v1195
  %v1197 = vpop.f32.mrf.mxu0
  %v1198 = vadd.f32 0.0, %v1197
  %1199 = vdwg.mxu0
  %1200 = vmatpush.bf16.msra.mxu0 %v753
  %1201 = vmatpush.bf16.msra.mxu0 %v751
  %1202 = vmatpush.bf16.msra.mxu0 %v749
  %1203 = vmatpush.bf16.msra.mxu0 %v747
  %1204 = vmatpush.bf16.msra.mxu0 %v745
  %1205 = vmatpush.bf16.msra.mxu0 %v743
  %1206 = vmatpush.bf16.msra.mxu0 %v741
  %1207 = vmatpush.bf16.msra.mxu0 %v739
  %1208 = vmatmul.bf16.gmra.mxu0 %v255
  %v1209 = vpop.f32.mrf.mxu0
  %v1210 = vadd.f32 %v1191, %v1209
  %v1211 = vpop.f32.mrf.mxu0
  %v1212 = vadd.f32 %v1193, %v1211
  %1213 = vmatmul.bf16.gmra.mxu0 %v264
  %v1214 = vpop.f32.mrf.mxu0
  %v1215 = vadd.f32 %v1196, %v1214
  %v1216 = vpop.f32.mrf.mxu0
  %v1217 = vadd.f32 %v1198, %v1216
  %1218 = vdwg.mxu0
  %1219 = vmatpush.bf16.msra.mxu0 %v769
  %1220 = vmatpush.bf16.msra.mxu0 %v767
  %1221 = vmatpush.bf16.msra.mxu0 %v765
  %1222 = vmatpush.bf16.msra.mxu0 %v763
  %1223 = vmatpush.bf16.msra.mxu0 %v761
  %1224 = vmatpush.bf16.msra.mxu0 %v759
  %1225 = vmatpush.bf16.msra.mxu0 %v757
  %1226 = vmatpush.bf16.msra.mxu0 %v755
  %1227 = vmatmul.bf16.gmra.mxu0 %v256
  %v1228 = vpop.f32.mrf.mxu0
  %v1229 = vadd.f32 %v1210, %v1228
  %v1230 = vpop.f32.mrf.mxu0
  %v1231 = vadd.f32 %v1212, %v1230
  %1232 = vmatmul.bf16.gmra.mxu0 %v265
  %v1233 = vpop.f32.mrf.mxu0
  %v1234 = vadd.f32 %v1215, %v1233
  %v1235 = vpop.f32.mrf.mxu0
  %v1236 = vadd.f32 %v1217, %v1235
  %1237 = vdwg.mxu0
  %1238 = vmatpush.bf16.msra.mxu0 %v785
  %1239 = vmatpush.bf16.msra.mxu0 %v783
  %1240 = vmatpush.bf16.msra.mxu0 %v781
  %1241 = vmatpush.bf16.msra.mxu0 %v779
  %1242 = vmatpush.bf16.msra.mxu0 %v777
  %1243 = vmatpush.bf16.msra.mxu0 %v775
  %1244 = vmatpush.bf16.msra.mxu0 %v773
  %1245 = vmatpush.bf16.msra.mxu0 %v771
  %1246 = vmatmul.bf16.gmra.mxu0 %v257
  %v1247 = vpop.f32.mrf.mxu0
  %v1248 = vadd.f32 %v1229, %v1247
  %v1249 = vpop.f32.mrf.mxu0
  %v1250 = vadd.f32 %v1231, %v1249
  %1251 = vmatmul.bf16.gmra.mxu0 %v266
  %v1252 = vpop.f32.mrf.mxu0
  %v1253 = vadd.f32 %v1234, %v1252
  %v1254 = vpop.f32.mrf.mxu0
  %v1255 = vadd.f32 %v1236, %v1254
  %1256 = vdwg.mxu0
  %1257 = vmatpush.bf16.msra.mxu0 %v801
  %1258 = vmatpush.bf16.msra.mxu0 %v799
  %1259 = vmatpush.bf16.msra.mxu0 %v797
  %1260 = vmatpush.bf16.msra.mxu0 %v795
  %1261 = vmatpush.bf16.msra.mxu0 %v793
  %1262 = vmatpush.bf16.msra.mxu0 %v791
  %1263 = vmatpush.bf16.msra.mxu0 %v789
  %1264 = vmatpush.bf16.msra.mxu0 %v787
  %1265 = vmatmul.bf16.gmra.mxu0 %v258
  %v1266 = vpop.f32.mrf.mxu0
  %v1267 = vadd.f32 %v1248, %v1266
  %v1268 = vpop.f32.mrf.mxu0
  %v1269 = vadd.f32 %v1250, %v1268
  %1270 = vmatmul.bf16.gmra.mxu0 %v267
  %v1271 = vpop.f32.mrf.mxu0
  %v1272 = vadd.f32 %v1253, %v1271
  %v1273 = vpop.f32.mrf.mxu0
  %v1274 = vadd.f32 %v1255, %v1273
  %1275 = vdwg.mxu0
  %1276 = vmatpush.bf16.msra.mxu0 %v817
  %1277 = vmatpush.bf16.msra.mxu0 %v815
  %1278 = vmatpush.bf16.msra.mxu0 %v813
  %1279 = vmatpush.bf16.msra.mxu0 %v811
  %1280 = vmatpush.bf16.msra.mxu0 %v809
  %1281 = vmatpush.bf16.msra.mxu0 %v807
  %1282 = vmatpush.bf16.msra.mxu0 %v805
  %1283 = vmatpush.bf16.msra.mxu0 %v803
  %1284 = vmatmul.bf16.gmra.mxu0 %v259
  %v1285 = vpop.f32.mrf.mxu0
  %v1286 = vadd.f32 %v1267, %v1285
  %v1287 = vpop.f32.mrf.mxu0
  %v1288 = vadd.f32 %v1269, %v1287
  %1289 = vmatmul.bf16.gmra.mxu0 %v268
  %v1290 = vpop.f32.mrf.mxu0
  %v1291 = vadd.f32 %v1272, %v1290
  %v1292 = vpop.f32.mrf.mxu0
  %v1293 = vadd.f32 %v1274, %v1292
  %1294 = vdwg.mxu0
  %1295 = vmatpush.bf16.msra.mxu0 %v833
  %1296 = vmatpush.bf16.msra.mxu0 %v831
  %1297 = vmatpush.bf16.msra.mxu0 %v829
  %1298 = vmatpush.bf16.msra.mxu0 %v827
  %1299 = vmatpush.bf16.msra.mxu0 %v825
  %1300 = vmatpush.bf16.msra.mxu0 %v823
  %1301 = vmatpush.bf16.msra.mxu0 %v821
  %1302 = vmatpush.bf16.msra.mxu0 %v819
  %1303 = vmatmul.bf16.gmra.mxu0 %v260
  %v1304 = vpop.f32.mrf.mxu0
  %v1305 = vadd.f32 %v1286, %v1304
  %v1306 = vpop.f32.mrf.mxu0
  %v1307 = vadd.f32 %v1288, %v1306
  %1308 = vmatmul.bf16.gmra.mxu0 %v269
  %v1309 = vpop.f32.mrf.mxu0
  %v1310 = vadd.f32 %v1291, %v1309
  %v1311 = vpop.f32.mrf.mxu0
  %v1312 = vadd.f32 %v1293, %v1311
  %1313 = vdwg.mxu0
  %1314 = vmatpush.bf16.msra.mxu0 %v849
  %1315 = vmatpush.bf16.msra.mxu0 %v847
  %1316 = vmatpush.bf16.msra.mxu0 %v845
  %1317 = vmatpush.bf16.msra.mxu0 %v843
  %1318 = vmatpush.bf16.msra.mxu0 %v841
  %1319 = vmatpush.bf16.msra.mxu0 %v839
  %1320 = vmatpush.bf16.msra.mxu0 %v837
  %1321 = vmatpush.bf16.msra.mxu0 %v835
  %1322 = vmatmul.bf16.gmra.mxu0 %v261
  %v1323 = vpop.f32.mrf.mxu0
  %v1324 = vadd.f32 %v1305, %v1323
  %v1325 = vpop.f32.mrf.mxu0
  %v1326 = vadd.f32 %v1307, %v1325
  %1327 = vmatmul.bf16.gmra.mxu0 %v270
  %v1328 = vpop.f32.mrf.mxu0
  %v1329 = vadd.f32 %v1310, %v1328
  %v1330 = vpop.f32.mrf.mxu0
  %v1331 = vadd.f32 %v1312, %v1330
  %1332 = vdwg.mxu0
  %1333 = vmatpush.bf16.msra.mxu0 %v865
  %1334 = vmatpush.bf16.msra.mxu0 %v863
  %1335 = vmatpush.bf16.msra.mxu0 %v861
  %1336 = vmatpush.bf16.msra.mxu0 %v859
  %1337 = vmatpush.bf16.msra.mxu0 %v857
  %1338 = vmatpush.bf16.msra.mxu0 %v855
  %1339 = vmatpush.bf16.msra.mxu0 %v853
  %1340 = vmatpush.bf16.msra.mxu0 %v851
  %1341 = vmatmul.bf16.gmra.mxu0 %v262
  %v1342 = vpop.f32.mrf.mxu0
  %v1343 = vadd.f32 %v1324, %v1342
  %v1344 = vpop.f32.mrf.mxu0
  %v1345 = vadd.f32 %v1326, %v1344
  %1346 = vmatmul.bf16.gmra.mxu0 %v271
  %v1347 = vpop.f32.mrf.mxu0
  %v1348 = vadd.f32 %v1329, %v1347
  %v1349 = vpop.f32.mrf.mxu0
  %v1350 = vadd.f32 %v1331, %v1349
  %1351 = vdwg.mxu0
  %v1352 = vadd.f32 %v26, %v1172
  %v1353 = vadd.f32 %v27, %v1343
  %v1354 = vadd.f32 %v28, %v1174
  %v1355 = vadd.f32 %v29, %v1345
  %v1356 = vadd.f32 %v30, %v1177
  %v1357 = vadd.f32 %v31, %v1348
  %v1358 = vadd.f32 %v32, %v1179
  %v1359 = vadd.f32 %v33, %v1350
  %1360 = vst [vmem:[#allocation2] sm:$0xff] %v1352
  %1361 = vst [vmem:[#allocation2 + $0x8] sm:$0xff] %v1353
  %1362 = vst [vmem:[#allocation2 + $0x10] sm:$0xff] %v1354
  %1363 = vst [vmem:[#allocation2 + $0x18] sm:$0xff] %v1355
  %1364 = vst [vmem:[#allocation2 + $0x20] sm:$0xff] %v1356
  %1365 = vst [vmem:[#allocation2 + $0x28] sm:$0xff] %v1357
  %1366 = vst [vmem:[#allocation2 + $0x30] sm:$0xff] %v1358
  %1367 = vst [vmem:[#allocation2 + $0x38] sm:$0xff] %v1359
  // Predicated region
  $region18: #{flownet_encoder_forward.8} parent=0 // pred_check
    %p1368 = pneg %p14
  $region19: #{flownet_encoder_forward.8} parent=0 // pred_check_branch
    %1370 = sbr.rel (%p1368) target = $region21
  $region20: #{flownet_encoder_forward.8} parent=0 // pred_region
    %v1371 = vld [vmem:[#allocation2] sm:$0xff]
    %v1372 = vld [vmem:[#allocation2 + $0x8] sm:$0xff]
    %v1373 = vld [vmem:[#allocation2 + $0x10] sm:$0xff]
    %v1374 = vld [vmem:[#allocation2 + $0x18] sm:$0xff]
    %v1375 = vld [vmem:[#allocation2 + $0x20] sm:$0xff]
    %v1376 = vld [vmem:[#allocation2 + $0x28] sm:$0xff]
    %v1377 = vld [vmem:[#allocation2 + $0x30] sm:$0xff]
    %v1378 = vld [vmem:[#allocation2 + $0x38] sm:$0xff]
    %v1379 = vld [vmem:[%s2] sm:$0x3]
    %v1381 = vperm.slane %v1379, 0
    %v1382 = vperm.slane %v1379, 1
    %v1385 = vadd.f32 %v1371, %v1381
    %v1386 = vadd.f32 %v1372, %v1382
    %v1387 = vadd.f32 %v1373, %v1381
    %v1388 = vadd.f32 %v1374, %v1382
    %v1389 = vadd.f32 %v1375, %v1381
    %v1390 = vadd.f32 %v1376, %v1382
    %v1391 = vadd.f32 %v1377, %v1381
    %v1392 = vadd.f32 %v1378, %v1382
    %vm1393 = vcmp.gt.f32.partialorder %v1385, 0.0
    %vm1394 = vcmp.gt.f32.partialorder %v1386, 0.0
    %vm1395 = vcmp.gt.f32.partialorder %v1387, 0.0
    %vm1396 = vcmp.gt.f32.partialorder %v1388, 0.0
    %vm1397 = vcmp.gt.f32.partialorder %v1389, 0.0
    %vm1398 = vcmp.gt.f32.partialorder %v1390, 0.0
    %vm1399 = vcmp.gt.f32.partialorder %v1391, 0.0
    %vm1400 = vcmp.gt.f32.partialorder %v1392, 0.0
    %v1401 = vmul.f32 %v1385, 0.01
    %v1402 = vmul.f32 %v1386, 0.01
    %v1403 = vmul.f32 %v1387, 0.01
    %v1404 = vmul.f32 %v1388, 0.01
    %v1405 = vmul.f32 %v1389, 0.01
    %v1406 = vmul.f32 %v1390, 0.01
    %v1407 = vmul.f32 %v1391, 0.01
    %v1408 = vmul.f32 %v1392, 0.01
    %v1409 = vsel %vm1393, %v1385, %v1401
    %v1410 = vsel %vm1394, %v1386, %v1402
    %v1411 = vsel %vm1395, %v1387, %v1403
    %v1412 = vsel %vm1396, %v1388, %v1404
    %v1413 = vsel %vm1397, %v1389, %v1405
    %v1414 = vsel %vm1398, %v1390, %v1406
    %v1415 = vsel %vm1399, %v1391, %v1407
    %v1416 = vsel %vm1400, %v1392, %v1408
    %1417 = vst [vmem:[%s3] sm:$0xff] %v1409
    %1418 = vst [vmem:[%s3 + $0x8] sm:$0xff] %v1410
    %1419 = vst [vmem:[%s3 + $0x10] sm:$0xff] %v1411
    %1420 = vst [vmem:[%s3 + $0x18] sm:$0xff] %v1412
    %1421 = vst [vmem:[%s3 + $0x20] sm:$0xff] %v1413
    %1422 = vst [vmem:[%s3 + $0x28] sm:$0xff] %v1414
    %1423 = vst [vmem:[%s3 + $0x30] sm:$0xff] %v1415
    %1424 = vst [vmem:[%s3 + $0x38] sm:$0xff] %v1416
  $region21: #{flownet_encoder_forward.8} parent=0 // pred_fallthru
    _
  // Predicated region
  $region22: #{flownet_encoder_forward.8} parent=0 // pred_check
    _
  $region23: #{flownet_encoder_forward.8} parent=0 // pred_check_branch
    %1426 = sbr.rel (0) target = $region25
  $region24: #{flownet_encoder_forward.8} parent=0 // pred_region
    _
  $region25: #{flownet_encoder_forward.8} parent=0 // pred_fallthru
    _
  // Predicated region
  $region26: #{flownet_encoder_forward.8} parent=0 // pred_check
    _
  $region27: #{flownet_encoder_forward.8} parent=0 // pred_check_branch
    %1428 = sbr.rel (0) target = $region29
  $region28: #{flownet_encoder_forward.8} parent=0 // pred_region
    _
  $region29: #{flownet_encoder_forward.8} parent=0 // pred_fallthru
    _

// kernel: flownet_encoder_forward.9
$region0: #{flownet_encoder_forward.9}
  #allocation0 [shape = 'u32[]', space=smem, size = 0x4, offset = 0x4, fixed_abs, tag = 'smem constant byte address 0x4 - core index']
  #allocation1 [shape = 'u32[72,128]{1,0:T(1,128)}', space=vmem, size = 0x9000, scoped, tag = 'internal scratch']
  #allocation2 [shape = 'f32[32,256]{1,0:T(8,128)}', space=vmem, size = 0x8000, scoped, tag = 'scratch operand']
  %s0 = inlined_call_operand.vmem [shape: bf16[32,2304], index: 0, kind: input, shape index: {}]
  %s1 = inlined_call_operand.vmem [shape: bf16[2304,512], index: 1, kind: input, shape index: {}]
  %s2 = inlined_call_operand.vmem [shape: f32[1,512], index: 2, kind: input, shape index: {}]
  %s3 = inlined_call_operand.vmem [shape: f32[32,512], index: 3, kind: output, shape index: {}]
  %s4 = sld [smem:[#allocation0]]
  $region136: #{flownet_encoder_forward.9} parent=0
    _
  %s6 = ssub.s32 1, %s4
  %s7 = scalar_select 0, %s6, %s4
  $region1: #{flownet_encoder_forward.9} parent=0
    #allocation3 [shape = 'u8[147456]{0}', space=vmem, size = 0x24000, scoped, tag = 'input window, operand 0']
    #allocation4 [shape = 'u8[1179648]{0}', space=vmem, size = 0x120000, scoped, tag = 'input window, operand 1']
    #allocation5 [shape = 'u8[65536]{0}', space=vmem, size = 0x10000, scoped, tag = 'output window, operand 0']
    loop: start=0, step=1, limit=6
    $region2: #{flownet_encoder_forward.9} parent=1 // loop_pre_header
      _
    $region3: #{flownet_encoder_forward.9} parent=1 // loop_header
      %s9 = sphi 0, %s13
      %p10 = scmp.ge.s32.totalorder %s9, 6
      %s16 = sphi 0, %s35
      %s17 = sphi 0, %s31
      %s18 = sphi 0, %s27
      %s19 = sphi 0, %s16
      %s20 = sphi 0, %s17
      %s21 = sphi 0, %s18
      %s22 = sphi 0, %s19
      %s23 = sphi 0, %s20
      %s24 = sphi 0, %s21
      %s40 = sphi 0, %s42
      %s43 = sphi 0, %s40
      %s44 = sphi 0, %s43
      %s60 = sphi 0, %s44
      %s68 = sphi 0, %s70
      %s71 = sphi 0, %s68
      %s72 = sphi 0, %s71
      %s88 = sphi 0, %s72
      %s94 = sphi 0, %s96
      %s97 = sphi 0, %s94
      %s98 = sphi 0, %s97
      %s114 = sphi 0, %s98
      %s122 = sphi 0, %s124
      %s125 = sphi 0, %s122
      %s126 = sphi 0, %s125
      %s142 = sphi 0, %s126
    $region4: #{flownet_encoder_forward.9} parent=1 // loop_header_branch
      %12 = sbr.rel (%p10) target = $region8
    $region5: #{flownet_encoder_forward.9} parent=1 // loop_body
      %s14 = ssub.s32 %s9, 1
      %s15 = ssub.s32 %s9, 2
      %s25 = sadd.s32 1, %s18
      %p26 = scmp.ge.s32.totalorder %s25, 2
      %s27 = scalar_select %p26, 0, %s25
      %s28 = sadd.s32 1, %s17
      %s29 = scalar_select %p26, %s28, %s17
      %p30 = scmp.ge.s32.totalorder %s29, 2
      %s31 = scalar_select %p30, 0, %s29
      %s32 = sadd.s32 1, %s16
      %s33 = scalar_select %p30, %s32, %s16
      %p34 = scmp.ge.s32.totalorder %s33, 1
      %s35 = scalar_select %p34, 0, %s33
      %s36 = ssub.s32 %s16, %s35
      %s37 = ssub.s32 %s18, %s27
      %s38 = sor.u32 %s36, %s37
      %p39 = scmp.eq.s32.totalorder %s38, 0
      %s41 = sadd.s32 %s40, 1
      %s42 = scalar_select %p39, %s40, %s41
      %p45 = pneg %p39
      %p46 = scmp.eq.s32.totalorder %s9, 3
      %p47 = por %p45, %p46
      %p48 = scmp.ne.s32.totalorder %s40, %s43
      %p49 = scmp.eq.s32.totalorder %s9, 0
      %p50 = por %p48, %p49
      %p51 = scmp.ne.s32.totalorder %s40, %s43
      %p52 = scmp.eq.s32.totalorder %s14, 3
      %p53 = por %p51, %p52
      %p54 = scmp.ne.s32.totalorder %s43, %s44
      %p55 = scmp.eq.s32.totalorder %s14, 0
      %p56 = por %p54, %p55
      %p57 = scmp.ne.s32.totalorder %s43, %s44
      %p58 = scmp.eq.s32.totalorder %s15, 3
      %p59 = por %p57, %p58
      %p61 = scmp.ne.s32.totalorder %s44, %s60
      %p62 = scmp.eq.s32.totalorder %s15, 0
      %p63 = por %p61, %p62
      %s64 = ssub.s32 %s18, %s27
      %s65 = ssub.s32 %s17, %s31
      %s66 = sor.u32 %s64, %s65
      %p67 = scmp.eq.s32.totalorder %s66, 0
      %s69 = sadd.s32 %s68, 1
      %s70 = scalar_select %p67, %s68, %s69
      %p73 = pneg %p67
      %p74 = scmp.eq.s32.totalorder %s9, 3
      %p75 = por %p73, %p74
      %p76 = scmp.ne.s32.totalorder %s68, %s71
      %p77 = scmp.eq.s32.totalorder %s9, 0
      %p78 = por %p76, %p77
      %p79 = scmp.ne.s32.totalorder %s68, %s71
      %p80 = scmp.eq.s32.totalorder %s14, 3
      %p81 = por %p79, %p80
      %p82 = scmp.ne.s32.totalorder %s71, %s72
      %p83 = scmp.eq.s32.totalorder %s14, 0
      %p84 = por %p82, %p83
      %p85 = scmp.ne.s32.totalorder %s71, %s72
      %p86 = scmp.eq.s32.totalorder %s15, 3
      %p87 = por %p85, %p86
      %p89 = scmp.ne.s32.totalorder %s72, %s88
      %p90 = scmp.eq.s32.totalorder %s15, 0
      %p91 = por %p89, %p90
      %s92 = ssub.s32 %s17, %s31
      %p93 = scmp.eq.s32.totalorder %s92, 0
      %s95 = sadd.s32 %s94, 1
      %s96 = scalar_select %p93, %s94, %s95
      %p99 = pneg %p93
      %p100 = scmp.eq.s32.totalorder %s9, 3
      %p101 = por %p99, %p100
      %p102 = scmp.ne.s32.totalorder %s94, %s97
      %p103 = scmp.eq.s32.totalorder %s9, 0
      %p104 = por %p102, %p103
      %p105 = scmp.ne.s32.totalorder %s94, %s97
      %p106 = scmp.eq.s32.totalorder %s14, 3
      %p107 = por %p105, %p106
      %p108 = scmp.ne.s32.totalorder %s97, %s98
      %p109 = scmp.eq.s32.totalorder %s14, 0
      %p110 = por %p108, %p109
      %p111 = scmp.ne.s32.totalorder %s97, %s98
      %p112 = scmp.eq.s32.totalorder %s15, 3
      %p113 = por %p111, %p112
      %p115 = scmp.ne.s32.totalorder %s98, %s114
      %p116 = scmp.eq.s32.totalorder %s15, 0
      %p117 = por %p115, %p116
      %s118 = ssub.s32 %s16, %s35
      %s119 = ssub.s32 %s17, %s31
      %s120 = sor.u32 %s118, %s119
      %p121 = scmp.eq.s32.totalorder %s120, 0
      %s123 = sadd.s32 %s122, 1
      %s124 = scalar_select %p121, %s122, %s123
      %p127 = pneg %p121
      %p128 = scmp.eq.s32.totalorder %s9, 3
      %p129 = por %p127, %p128
      %p130 = scmp.ne.s32.totalorder %s122, %s125
      %p131 = scmp.eq.s32.totalorder %s9, 0
      %p132 = por %p130, %p131
      %p133 = scmp.ne.s32.totalorder %s122, %s125
      %p134 = scmp.eq.s32.totalorder %s14, 3
      %p135 = por %p133, %p134
      %p136 = scmp.ne.s32.totalorder %s125, %s126
      %p137 = scmp.eq.s32.totalorder %s14, 0
      %p138 = por %p136, %p137
      %p139 = scmp.ne.s32.totalorder %s125, %s126
      %p140 = scmp.eq.s32.totalorder %s15, 3
      %p141 = por %p139, %p140
      %p143 = scmp.ne.s32.totalorder %s126, %s142
      %p144 = scmp.eq.s32.totalorder %s15, 0
      %p145 = por %p143, %p144
      %p146 = scmp.le.s32.totalorder 1, %s9
      %p147 = scmp.lt.s32.totalorder %s9, 5
      %p148 = pnand %p146, %p147
      %p149 = pneg %p148
      // Predicated region
      $region9: #{flownet_encoder_forward.9} parent=5 // pred_check
        _
      $region10: #{flownet_encoder_forward.9} parent=5 // pred_check_branch
        %151 = sbr.rel (%p148) target = $region12
      $region11: #{flownet_encoder_forward.9} parent=5 // pred_region
        %s152 = ssub.s32 %s9, 1
      $region12: #{flownet_encoder_forward.9} parent=5 // pred_fallthru
        _
      %p153 = scmp.lt.s32.totalorder %s9, 4
      // Predicated region
      $region13: #{flownet_encoder_forward.9} parent=5 // pred_check
        %p154 = pneg %p153
      $region14: #{flownet_encoder_forward.9} parent=5 // pred_check_branch
        %156 = sbr.rel (%p154) target = $region16
      $region15: #{flownet_encoder_forward.9} parent=5 // pred_region
        // Predicated region
        $region17: #{flownet_encoder_forward.9} parent=15 // pred_check
          %p157 = pneg %p50
        $region18: #{flownet_encoder_forward.9} parent=15 // pred_check_branch
          %159 = sbr.rel (%p157) target = $region20
        $region19: #{flownet_encoder_forward.9} parent=15 // pred_region
          %s160 = sand.u32 %s40, 1
          %s161 = sand.u32 %s40, 1
          %s162 = smul.addr %s161, 144
          %s163 = scalar_lea.vmem [#allocation3], %s162
          %s164 = smul.u32 4, %s16
          %s165 = smul.u32 9, %s18
          %s166 = smul.addr %s164, 18
          %s167 = sadd.s32 %s165, %s166
          %s168 = smul.addr %s167, 4
          %s169 = scalar_lea.vmem %s0, %s168
          // Predicated region
          $region21: #{flownet_encoder_forward.9} parent=19 // pred_check
            _
          $region22: #{flownet_encoder_forward.9} parent=19 // pred_check_branch
            %171 = sbr.rel (0) target = $region24
          $region23: #{flownet_encoder_forward.9} parent=19 // pred_region
            // Predicated region
            $region25: #{flownet_encoder_forward.9} parent=23 // pred_check
              _
            $region26: #{flownet_encoder_forward.9} parent=23 // pred_check_branch
              %173 = sbr.rel (0) target = $region28
            $region27: #{flownet_encoder_forward.9} parent=23 // pred_region
              %s174 = scalar_lea.vmem %s169, 32
              %s175 = scalar_lea.vmem %s163, 32 [#allocation3]
              loop: start=0, step=1, limit=1
              $region29: #{flownet_encoder_forward.9} parent=27 // loop_pre_header
                _
              $region30: #{flownet_encoder_forward.9} parent=27 // loop_header
                %s177 = sphi 0, %s181
                %p178 = scmp.ge.s32.totalorder %s177, 1
                %s182 = sphi %s169, %s169
                %s183 = sphi %s163, %s163
              $region31: #{flownet_encoder_forward.9} parent=27 // loop_header_branch
                %180 = sbr.rel (%p178) target = $region35
              $region32: #{flownet_encoder_forward.9} parent=27 // loop_body
                %v184 = vld [vmem:[%s182] sm:$0xff]
                %185 = vst [vmem:[%s183] sm:$0xff] %v184
                %v186 = vld [vmem:[%s182 + $0x8] sm:$0xff]
                %187 = vst [vmem:[%s183 + $0x8] sm:$0xff] %v186
                %v188 = vld [vmem:[%s182 + $0x10] sm:$0xff]
                %189 = vst [vmem:[%s183 + $0x10] sm:$0xff] %v188
                %v190 = vld [vmem:[%s182 + $0x18] sm:$0xff]
                %191 = vst [vmem:[%s183 + $0x18] sm:$0xff] %v190
                %v192 = vld [vmem:[%s182 + $0x48] sm:$0xff]
                %193 = vst [vmem:[%s183 + $0x24] sm:$0xff] %v192
                %v194 = vld [vmem:[%s182 + $0x50] sm:$0xff]
                %195 = vst [vmem:[%s183 + $0x2c] sm:$0xff] %v194
                %v196 = vld [vmem:[%s182 + $0x58] sm:$0xff]
                %197 = vst [vmem:[%s183 + $0x34] sm:$0xff] %v196
                %v198 = vld [vmem:[%s182 + $0x60] sm:$0xff]
                %199 = vst [vmem:[%s183 + $0x3c] sm:$0xff] %v198
                %v200 = vld [vmem:[%s182 + $0x90] sm:$0xff]
                %201 = vst [vmem:[%s183 + $0x48] sm:$0xff] %v200
                %v202 = vld [vmem:[%s182 + $0x98] sm:$0xff]
                %203 = vst [vmem:[%s183 + $0x50] sm:$0xff] %v202
                %v204 = vld [vmem:[%s182 + $0xa0] sm:$0xff]
                %205 = vst [vmem:[%s183 + $0x58] sm:$0xff] %v204
                %v206 = vld [vmem:[%s182 + $0xa8] sm:$0xff]
                %207 = vst [vmem:[%s183 + $0x60] sm:$0xff] %v206
                %v208 = vld [vmem:[%s182 + $0xd8] sm:$0xff]
                %209 = vst [vmem:[%s183 + $0x6c] sm:$0xff] %v208
                %v210 = vld [vmem:[%s182 + $0xe0] sm:$0xff]
                %211 = vst [vmem:[%s183 + $0x74] sm:$0xff] %v210
                %v212 = vld [vmem:[%s182 + $0xe8] sm:$0xff]
                %213 = vst [vmem:[%s183 + $0x7c] sm:$0xff] %v212
                %v214 = vld [vmem:[%s182 + $0xf0] sm:$0xff]
                %215 = vst [vmem:[%s183 + $0x84] sm:$0xff] %v214
              $region33: #{flownet_encoder_forward.9} parent=27 // loop_footer
                %s181 = sadd.s32 1, %s177
              $region34: #{flownet_encoder_forward.9} parent=27 // loop_footer_branch
                %176 = sbr.rel target = $region30
              $region35: #{flownet_encoder_forward.9} parent=27 // loop_exit
                _
              %s217 = ssub.s32 16, 1
              loop: start=0, step=1, limit=1
              $region36: #{flownet_encoder_forward.9} parent=27 // loop_pre_header
                _
              $region37: #{flownet_encoder_forward.9} parent=27 // loop_header
                %s219 = sphi 0, %s223
                %p220 = scmp.ge.s32.totalorder %s219, 1
                %s224 = sphi %s174, %s174
                %s225 = sphi %s175, %s175
              $region38: #{flownet_encoder_forward.9} parent=27 // loop_header_branch
                %222 = sbr.rel (%p220) target = $region42
              $region39: #{flownet_encoder_forward.9} parent=27 // loop_body
                %v226 = vld [vmem:[%s224] sm:%s217]
                %227 = vst [vmem:[%s225] sm:%s217] %v226
                %v228 = vld [vmem:[%s224 + $0x48] sm:%s217]
                %229 = vst [vmem:[%s225 + $0x24] sm:%s217] %v228
                %v230 = vld [vmem:[%s224 + $0x90] sm:%s217]
                %231 = vst [vmem:[%s225 + $0x48] sm:%s217] %v230
                %v232 = vld [vmem:[%s224 + $0xd8] sm:%s217]
                %233 = vst [vmem:[%s225 + $0x6c] sm:%s217] %v232
              $region40: #{flownet_encoder_forward.9} parent=27 // loop_footer
                %s223 = sadd.s32 1, %s219
              $region41: #{flownet_encoder_forward.9} parent=27 // loop_footer_branch
                %218 = sbr.rel target = $region37
              $region42: #{flownet_encoder_forward.9} parent=27 // loop_exit
                _
            $region28: #{flownet_encoder_forward.9} parent=23 // pred_fallthru
              _
          $region24: #{flownet_encoder_forward.9} parent=19 // pred_fallthru
            _
          %234 = vnop
        $region20: #{flownet_encoder_forward.9} parent=15 // pred_fallthru
          _
        // Predicated region
        $region43: #{flownet_encoder_forward.9} parent=15 // pred_check
          %p235 = pneg %p78
        $region44: #{flownet_encoder_forward.9} parent=15 // pred_check_branch
          %237 = sbr.rel (%p235) target = $region46
        $region45: #{flownet_encoder_forward.9} parent=15 // pred_region
          %s238 = sand.u32 %s68, 1
          %s239 = sand.u32 %s68, 1
          %s240 = smul.addr %s239, 1152
          %s241 = scalar_lea.vmem [#allocation4], %s240
          %s242 = smul.u32 144, %s18
          %s243 = smul.u32 2, %s17
          %s244 = smul.addr %s242, 4
          %s245 = sadd.s32 %s243, %s244
          %s246 = smul.addr %s245, 4
          %s247 = scalar_lea.vmem %s1, %s246
          // Predicated region
          $region47: #{flownet_encoder_forward.9} parent=45 // pred_check
            _
          $region48: #{flownet_encoder_forward.9} parent=45 // pred_check_branch
            %249 = sbr.rel (0) target = $region50
          $region49: #{flownet_encoder_forward.9} parent=45 // pred_region
            // Predicated region
            $region51: #{flownet_encoder_forward.9} parent=49 // pred_check
              _
            $region52: #{flownet_encoder_forward.9} parent=49 // pred_check_branch
              %251 = sbr.rel (0) target = $region54
            $region53: #{flownet_encoder_forward.9} parent=49 // pred_region
              // Predicated region
              $region66: #{flownet_encoder_forward.9} parent=53 // pred_check
                _
              $region67: #{flownet_encoder_forward.9} parent=53 // pred_check_branch
                %553 = sbr.rel (0) target = $region69
              $region68: #{flownet_encoder_forward.9} parent=53 // pred_region
                loop: start=0, step=1, limit=1
                $region70: #{flownet_encoder_forward.9} parent=68 // loop_pre_header
                  _
                $region71: #{flownet_encoder_forward.9} parent=68 // loop_header
                  %s555 = sphi 0, %s559
                  %p556 = scmp.ge.s32.totalorder %s555, 1
                  %s560 = sphi %s247, %s247
                  %s561 = sphi %s241, %s241
                $region72: #{flownet_encoder_forward.9} parent=68 // loop_header_branch
                  %558 = sbr.rel (%p556) target = $region76
                $region73: #{flownet_encoder_forward.9} parent=68 // loop_body
                  %v562 = vld [vmem:[%s560] sm:$0xff]
                  %563 = vst [vmem:[%s561] sm:$0xff] %v562
                  %v564 = vld [vmem:[%s560 + $0x10] sm:$0xff]
                  %565 = vst [vmem:[%s561 + $0x8] sm:$0xff] %v564
                  %v566 = vld [vmem:[%s560 + $0x20] sm:$0xff]
                  %567 = vst [vmem:[%s561 + $0x10] sm:$0xff] %v566
                  %v568 = vld [vmem:[%s560 + $0x30] sm:$0xff]
                  %569 = vst [vmem:[%s561 + $0x18] sm:$0xff] %v568
                  %v570 = vld [vmem:[%s560 + $0x40] sm:$0xff]
                  %571 = vst [vmem:[%s561 + $0x20] sm:$0xff] %v570
                  %v572 = vld [vmem:[%s560 + $0x50] sm:$0xff]
                  %573 = vst [vmem:[%s561 + $0x28] sm:$0xff] %v572
                  %v574 = vld [vmem:[%s560 + $0x60] sm:$0xff]
                  %575 = vst [vmem:[%s561 + $0x30] sm:$0xff] %v574
                  %v576 = vld [vmem:[%s560 + $0x70] sm:$0xff]
                  %577 = vst [vmem:[%s561 + $0x38] sm:$0xff] %v576
                  %v578 = vld [vmem:[%s560 + $0x80] sm:$0xff]
                  %579 = vst [vmem:[%s561 + $0x40] sm:$0xff] %v578
                  %v580 = vld [vmem:[%s560 + $0x90] sm:$0xff]
                  %581 = vst [vmem:[%s561 + $0x48] sm:$0xff] %v580
                  %v582 = vld [vmem:[%s560 + $0xa0] sm:$0xff]
                  %583 = vst [vmem:[%s561 + $0x50] sm:$0xff] %v582
                  %v584 = vld [vmem:[%s560 + $0xb0] sm:$0xff]
                  %585 = vst [vmem:[%s561 + $0x58] sm:$0xff] %v584
                  %v586 = vld [vmem:[%s560 + $0xc0] sm:$0xff]
                  %587 = vst [vmem:[%s561 + $0x60] sm:$0xff] %v586
                  %v588 = vld [vmem:[%s560 + $0xd0] sm:$0xff]
                  %589 = vst [vmem:[%s561 + $0x68] sm:$0xff] %v588
                  %v590 = vld [vmem:[%s560 + $0xe0] sm:$0xff]
                  %591 = vst [vmem:[%s561 + $0x70] sm:$0xff] %v590
                  %v592 = vld [vmem:[%s560 + $0xf0] sm:$0xff]
                  %593 = vst [vmem:[%s561 + $0x78] sm:$0xff] %v592
                  %v594 = vld [vmem:[%s560 + $0x100] sm:$0xff]
                  %595 = vst [vmem:[%s561 + $0x80] sm:$0xff] %v594
                  %v596 = vld [vmem:[%s560 + $0x110] sm:$0xff]
                  %597 = vst [vmem:[%s561 + $0x88] sm:$0xff] %v596
                  %v598 = vld [vmem:[%s560 + $0x120] sm:$0xff]
                  %599 = vst [vmem:[%s561 + $0x90] sm:$0xff] %v598
                  %v600 = vld [vmem:[%s560 + $0x130] sm:$0xff]
                  %601 = vst [vmem:[%s561 + $0x98] sm:$0xff] %v600
                  %v602 = vld [vmem:[%s560 + $0x140] sm:$0xff]
                  %603 = vst [vmem:[%s561 + $0xa0] sm:$0xff] %v602
                  %v604 = vld [vmem:[%s560 + $0x150] sm:$0xff]
                  %605 = vst [vmem:[%s561 + $0xa8] sm:$0xff] %v604
                  %v606 = vld [vmem:[%s560 + $0x160] sm:$0xff]
                  %607 = vst [vmem:[%s561 + $0xb0] sm:$0xff] %v606
                  %v608 = vld [vmem:[%s560 + $0x170] sm:$0xff]
                  %609 = vst [vmem:[%s561 + $0xb8] sm:$0xff] %v608
                  %v610 = vld [vmem:[%s560 + $0x180] sm:$0xff]
                  %611 = vst [vmem:[%s561 + $0xc0] sm:$0xff] %v610
                  %v612 = vld [vmem:[%s560 + $0x190] sm:$0xff]
                  %613 = vst [vmem:[%s561 + $0xc8] sm:$0xff] %v612
                  %v614 = vld [vmem:[%s560 + $0x1a0] sm:$0xff]
                  %615 = vst [vmem:[%s561 + $0xd0] sm:$0xff] %v614
                  %v616 = vld [vmem:[%s560 + $0x1b0] sm:$0xff]
                  %617 = vst [vmem:[%s561 + $0xd8] sm:$0xff] %v616
                  %v618 = vld [vmem:[%s560 + $0x1c0] sm:$0xff]
                  %619 = vst [vmem:[%s561 + $0xe0] sm:$0xff] %v618
                  %v620 = vld [vmem:[%s560 + $0x1d0] sm:$0xff]
                  %621 = vst [vmem:[%s561 + $0xe8] sm:$0xff] %v620
                  %v622 = vld [vmem:[%s560 + $0x1e0] sm:$0xff]
                  %623 = vst [vmem:[%s561 + $0xf0] sm:$0xff] %v622
                  %v624 = vld [vmem:[%s560 + $0x1f0] sm:$0xff]
                  %625 = vst [vmem:[%s561 + $0xf8] sm:$0xff] %v624
                  %v626 = vld [vmem:[%s560 + $0x200] sm:$0xff]
                  %627 = vst [vmem:[%s561 + $0x100] sm:$0xff] %v626
                  %v628 = vld [vmem:[%s560 + $0x210] sm:$0xff]
                  %629 = vst [vmem:[%s561 + $0x108] sm:$0xff] %v628
                  %v630 = vld [vmem:[%s560 + $0x220] sm:$0xff]
                  %631 = vst [vmem:[%s561 + $0x110] sm:$0xff] %v630
                  %v632 = vld [vmem:[%s560 + $0x230] sm:$0xff]
                  %633 = vst [vmem:[%s561 + $0x118] sm:$0xff] %v632
                  %v634 = vld [vmem:[%s560 + $0x240] sm:$0xff]
                  %635 = vst [vmem:[%s561 + $0x120] sm:$0xff] %v634
                  %v636 = vld [vmem:[%s560 + $0x250] sm:$0xff]
                  %637 = vst [vmem:[%s561 + $0x128] sm:$0xff] %v636
                  %v638 = vld [vmem:[%s560 + $0x260] sm:$0xff]
                  %639 = vst [vmem:[%s561 + $0x130] sm:$0xff] %v638
                  %v640 = vld [vmem:[%s560 + $0x270] sm:$0xff]
                  %641 = vst [vmem:[%s561 + $0x138] sm:$0xff] %v640
                  %v642 = vld [vmem:[%s560 + $0x280] sm:$0xff]
                  %643 = vst [vmem:[%s561 + $0x140] sm:$0xff] %v642
                  %v644 = vld [vmem:[%s560 + $0x290] sm:$0xff]
                  %645 = vst [vmem:[%s561 + $0x148] sm:$0xff] %v644
                  %v646 = vld [vmem:[%s560 + $0x2a0] sm:$0xff]
                  %647 = vst [vmem:[%s561 + $0x150] sm:$0xff] %v646
                  %v648 = vld [vmem:[%s560 + $0x2b0] sm:$0xff]
                  %649 = vst [vmem:[%s561 + $0x158] sm:$0xff] %v648
                  %v650 = vld [vmem:[%s560 + $0x2c0] sm:$0xff]
                  %651 = vst [vmem:[%s561 + $0x160] sm:$0xff] %v650
                  %v652 = vld [vmem:[%s560 + $0x2d0] sm:$0xff]
                  %653 = vst [vmem:[%s561 + $0x168] sm:$0xff] %v652
                  %v654 = vld [vmem:[%s560 + $0x2e0] sm:$0xff]
                  %655 = vst [vmem:[%s561 + $0x170] sm:$0xff] %v654
                  %v656 = vld [vmem:[%s560 + $0x2f0] sm:$0xff]
                  %657 = vst [vmem:[%s561 + $0x178] sm:$0xff] %v656
                  %v658 = vld [vmem:[%s560 + $0x300] sm:$0xff]
                  %659 = vst [vmem:[%s561 + $0x180] sm:$0xff] %v658
                  %v660 = vld [vmem:[%s560 + $0x310] sm:$0xff]
                  %661 = vst [vmem:[%s561 + $0x188] sm:$0xff] %v660
                  %v662 = vld [vmem:[%s560 + $0x320] sm:$0xff]
                  %663 = vst [vmem:[%s561 + $0x190] sm:$0xff] %v662
                  %v664 = vld [vmem:[%s560 + $0x330] sm:$0xff]
                  %665 = vst [vmem:[%s561 + $0x198] sm:$0xff] %v664
                  %v666 = vld [vmem:[%s560 + $0x340] sm:$0xff]
                  %667 = vst [vmem:[%s561 + $0x1a0] sm:$0xff] %v666
                  %v668 = vld [vmem:[%s560 + $0x350] sm:$0xff]
                  %669 = vst [vmem:[%s561 + $0x1a8] sm:$0xff] %v668
                  %v670 = vld [vmem:[%s560 + $0x360] sm:$0xff]
                  %671 = vst [vmem:[%s561 + $0x1b0] sm:$0xff] %v670
                  %v672 = vld [vmem:[%s560 + $0x370] sm:$0xff]
                  %673 = vst [vmem:[%s561 + $0x1b8] sm:$0xff] %v672
                  %v674 = vld [vmem:[%s560 + $0x380] sm:$0xff]
                  %675 = vst [vmem:[%s561 + $0x1c0] sm:$0xff] %v674
                  %v676 = vld [vmem:[%s560 + $0x390] sm:$0xff]
                  %677 = vst [vmem:[%s561 + $0x1c8] sm:$0xff] %v676
                  %v678 = vld [vmem:[%s560 + $0x3a0] sm:$0xff]
                  %679 = vst [vmem:[%s561 + $0x1d0] sm:$0xff] %v678
                  %v680 = vld [vmem:[%s560 + $0x3b0] sm:$0xff]
                  %681 = vst [vmem:[%s561 + $0x1d8] sm:$0xff] %v680
                  %v682 = vld [vmem:[%s560 + $0x3c0] sm:$0xff]
                  %683 = vst [vmem:[%s561 + $0x1e0] sm:$0xff] %v682
                  %v684 = vld [vmem:[%s560 + $0x3d0] sm:$0xff]
                  %685 = vst [vmem:[%s561 + $0x1e8] sm:$0xff] %v684
                  %v686 = vld [vmem:[%s560 + $0x3e0] sm:$0xff]
                  %687 = vst [vmem:[%s561 + $0x1f0] sm:$0xff] %v686
                  %v688 = vld [vmem:[%s560 + $0x3f0] sm:$0xff]
                  %689 = vst [vmem:[%s561 + $0x1f8] sm:$0xff] %v688
                  %v690 = vld [vmem:[%s560 + $0x400] sm:$0xff]
                  %691 = vst [vmem:[%s561 + $0x200] sm:$0xff] %v690
                  %v692 = vld [vmem:[%s560 + $0x410] sm:$0xff]
                  %693 = vst [vmem:[%s561 + $0x208] sm:$0xff] %v692
                  %v694 = vld [vmem:[%s560 + $0x420] sm:$0xff]
                  %695 = vst [vmem:[%s561 + $0x210] sm:$0xff] %v694
                  %v696 = vld [vmem:[%s560 + $0x430] sm:$0xff]
                  %697 = vst [vmem:[%s561 + $0x218] sm:$0xff] %v696
                  %v698 = vld [vmem:[%s560 + $0x440] sm:$0xff]
                  %699 = vst [vmem:[%s561 + $0x220] sm:$0xff] %v698
                  %v700 = vld [vmem:[%s560 + $0x450] sm:$0xff]
                  %701 = vst [vmem:[%s561 + $0x228] sm:$0xff] %v700
                  %v702 = vld [vmem:[%s560 + $0x460] sm:$0xff]
                  %703 = vst [vmem:[%s561 + $0x230] sm:$0xff] %v702
                  %v704 = vld [vmem:[%s560 + $0x470] sm:$0xff]
                  %705 = vst [vmem:[%s561 + $0x238] sm:$0xff] %v704
                  %v706 = vld [vmem:[%s560 + $0x480] sm:$0xff]
                  %707 = vst [vmem:[%s561 + $0x240] sm:$0xff] %v706
                  %v708 = vld [vmem:[%s560 + $0x490] sm:$0xff]
                  %709 = vst [vmem:[%s561 + $0x248] sm:$0xff] %v708
                  %v710 = vld [vmem:[%s560 + $0x4a0] sm:$0xff]
                  %711 = vst [vmem:[%s561 + $0x250] sm:$0xff] %v710
                  %v712 = vld [vmem:[%s560 + $0x4b0] sm:$0xff]
                  %713 = vst [vmem:[%s561 + $0x258] sm:$0xff] %v712
                  %v714 = vld [vmem:[%s560 + $0x4c0] sm:$0xff]
                  %715 = vst [vmem:[%s561 + $0x260] sm:$0xff] %v714
                  %v716 = vld [vmem:[%s560 + $0x4d0] sm:$0xff]
                  %717 = vst [vmem:[%s561 + $0x268] sm:$0xff] %v716
                  %v718 = vld [vmem:[%s560 + $0x4e0] sm:$0xff]
                  %719 = vst [vmem:[%s561 + $0x270] sm:$0xff] %v718
                  %v720 = vld [vmem:[%s560 + $0x4f0] sm:$0xff]
                  %721 = vst [vmem:[%s561 + $0x278] sm:$0xff] %v720
                  %v722 = vld [vmem:[%s560 + $0x500] sm:$0xff]
                  %723 = vst [vmem:[%s561 + $0x280] sm:$0xff] %v722
                  %v724 = vld [vmem:[%s560 + $0x510] sm:$0xff]
                  %725 = vst [vmem:[%s561 + $0x288] sm:$0xff] %v724
                  %v726 = vld [vmem:[%s560 + $0x520] sm:$0xff]
                  %727 = vst [vmem:[%s561 + $0x290] sm:$0xff] %v726
                  %v728 = vld [vmem:[%s560 + $0x530] sm:$0xff]
                  %729 = vst [vmem:[%s561 + $0x298] sm:$0xff] %v728
                  %v730 = vld [vmem:[%s560 + $0x540] sm:$0xff]
                  %731 = vst [vmem:[%s561 + $0x2a0] sm:$0xff] %v730
                  %v732 = vld [vmem:[%s560 + $0x550] sm:$0xff]
                  %733 = vst [vmem:[%s561 + $0x2a8] sm:$0xff] %v732
                  %v734 = vld [vmem:[%s560 + $0x560] sm:$0xff]
                  %735 = vst [vmem:[%s561 + $0x2b0] sm:$0xff] %v734
                  %v736 = vld [vmem:[%s560 + $0x570] sm:$0xff]
                  %737 = vst [vmem:[%s561 + $0x2b8] sm:$0xff] %v736
                  %v738 = vld [vmem:[%s560 + $0x580] sm:$0xff]
                  %739 = vst [vmem:[%s561 + $0x2c0] sm:$0xff] %v738
                  %v740 = vld [vmem:[%s560 + $0x590] sm:$0xff]
                  %741 = vst [vmem:[%s561 + $0x2c8] sm:$0xff] %v740
                  %v742 = vld [vmem:[%s560 + $0x5a0] sm:$0xff]
                  %743 = vst [vmem:[%s561 + $0x2d0] sm:$0xff] %v742
                  %v744 = vld [vmem:[%s560 + $0x5b0] sm:$0xff]
                  %745 = vst [vmem:[%s561 + $0x2d8] sm:$0xff] %v744
                  %v746 = vld [vmem:[%s560 + $0x5c0] sm:$0xff]
                  %747 = vst [vmem:[%s561 + $0x2e0] sm:$0xff] %v746
                  %v748 = vld [vmem:[%s560 + $0x5d0] sm:$0xff]
                  %749 = vst [vmem:[%s561 + $0x2e8] sm:$0xff] %v748
                  %v750 = vld [vmem:[%s560 + $0x5e0] sm:$0xff]
                  %751 = vst [vmem:[%s561 + $0x2f0] sm:$0xff] %v750
                  %v752 = vld [vmem:[%s560 + $0x5f0] sm:$0xff]
                  %753 = vst [vmem:[%s561 + $0x2f8] sm:$0xff] %v752
                  %v754 = vld [vmem:[%s560 + $0x600] sm:$0xff]
                  %755 = vst [vmem:[%s561 + $0x300] sm:$0xff] %v754
                  %v756 = vld [vmem:[%s560 + $0x610] sm:$0xff]
                  %757 = vst [vmem:[%s561 + $0x308] sm:$0xff] %v756
                  %v758 = vld [vmem:[%s560 + $0x620] sm:$0xff]
                  %759 = vst [vmem:[%s561 + $0x310] sm:$0xff] %v758
                  %v760 = vld [vmem:[%s560 + $0x630] sm:$0xff]
                  %761 = vst [vmem:[%s561 + $0x318] sm:$0xff] %v760
                  %v762 = vld [vmem:[%s560 + $0x640] sm:$0xff]
                  %763 = vst [vmem:[%s561 + $0x320] sm:$0xff] %v762
                  %v764 = vld [vmem:[%s560 + $0x650] sm:$0xff]
                  %765 = vst [vmem:[%s561 + $0x328] sm:$0xff] %v764
                  %v766 = vld [vmem:[%s560 + $0x660] sm:$0xff]
                  %767 = vst [vmem:[%s561 + $0x330] sm:$0xff] %v766
                  %v768 = vld [vmem:[%s560 + $0x670] sm:$0xff]
                  %769 = vst [vmem:[%s561 + $0x338] sm:$0xff] %v768
                  %v770 = vld [vmem:[%s560 + $0x680] sm:$0xff]
                  %771 = vst [vmem:[%s561 + $0x340] sm:$0xff] %v770
                  %v772 = vld [vmem:[%s560 + $0x690] sm:$0xff]
                  %773 = vst [vmem:[%s561 + $0x348] sm:$0xff] %v772
                  %v774 = vld [vmem:[%s560 + $0x6a0] sm:$0xff]
                  %775 = vst [vmem:[%s561 + $0x350] sm:$0xff] %v774
                  %v776 = vld [vmem:[%s560 + $0x6b0] sm:$0xff]
                  %777 = vst [vmem:[%s561 + $0x358] sm:$0xff] %v776
                  %v778 = vld [vmem:[%s560 + $0x6c0] sm:$0xff]
                  %779 = vst [vmem:[%s561 + $0x360] sm:$0xff] %v778
                  %v780 = vld [vmem:[%s560 + $0x6d0] sm:$0xff]
                  %781 = vst [vmem:[%s561 + $0x368] sm:$0xff] %v780
                  %v782 = vld [vmem:[%s560 + $0x6e0] sm:$0xff]
                  %783 = vst [vmem:[%s561 + $0x370] sm:$0xff] %v782
                  %v784 = vld [vmem:[%s560 + $0x6f0] sm:$0xff]
                  %785 = vst [vmem:[%s561 + $0x378] sm:$0xff] %v784
                  %v786 = vld [vmem:[%s560 + $0x700] sm:$0xff]
                  %787 = vst [vmem:[%s561 + $0x380] sm:$0xff] %v786
                  %v788 = vld [vmem:[%s560 + $0x710] sm:$0xff]
                  %789 = vst [vmem:[%s561 + $0x388] sm:$0xff] %v788
                  %v790 = vld [vmem:[%s560 + $0x720] sm:$0xff]
                  %791 = vst [vmem:[%s561 + $0x390] sm:$0xff] %v790
                  %v792 = vld [vmem:[%s560 + $0x730] sm:$0xff]
                  %793 = vst [vmem:[%s561 + $0x398] sm:$0xff] %v792
                  %v794 = vld [vmem:[%s560 + $0x740] sm:$0xff]
                  %795 = vst [vmem:[%s561 + $0x3a0] sm:$0xff] %v794
                  %v796 = vld [vmem:[%s560 + $0x750] sm:$0xff]
                  %797 = vst [vmem:[%s561 + $0x3a8] sm:$0xff] %v796
                  %v798 = vld [vmem:[%s560 + $0x760] sm:$0xff]
                  %799 = vst [vmem:[%s561 + $0x3b0] sm:$0xff] %v798
                  %v800 = vld [vmem:[%s560 + $0x770] sm:$0xff]
                  %801 = vst [vmem:[%s561 + $0x3b8] sm:$0xff] %v800
                  %v802 = vld [vmem:[%s560 + $0x780] sm:$0xff]
                  %803 = vst [vmem:[%s561 + $0x3c0] sm:$0xff] %v802
                  %v804 = vld [vmem:[%s560 + $0x790] sm:$0xff]
                  %805 = vst [vmem:[%s561 + $0x3c8] sm:$0xff] %v804
                  %v806 = vld [vmem:[%s560 + $0x7a0] sm:$0xff]
                  %807 = vst [vmem:[%s561 + $0x3d0] sm:$0xff] %v806
                  %v808 = vld [vmem:[%s560 + $0x7b0] sm:$0xff]
                  %809 = vst [vmem:[%s561 + $0x3d8] sm:$0xff] %v808
                  %v810 = vld [vmem:[%s560 + $0x7c0] sm:$0xff]
                  %811 = vst [vmem:[%s561 + $0x3e0] sm:$0xff] %v810
                  %v812 = vld [vmem:[%s560 + $0x7d0] sm:$0xff]
                  %813 = vst [vmem:[%s561 + $0x3e8] sm:$0xff] %v812
                  %v814 = vld [vmem:[%s560 + $0x7e0] sm:$0xff]
                  %815 = vst [vmem:[%s561 + $0x3f0] sm:$0xff] %v814
                  %v816 = vld [vmem:[%s560 + $0x7f0] sm:$0xff]
                  %817 = vst [vmem:[%s561 + $0x3f8] sm:$0xff] %v816
                  %v818 = vld [vmem:[%s560 + $0x800] sm:$0xff]
                  %819 = vst [vmem:[%s561 + $0x400] sm:$0xff] %v818
                  %v820 = vld [vmem:[%s560 + $0x810] sm:$0xff]
                  %821 = vst [vmem:[%s561 + $0x408] sm:$0xff] %v820
                  %v822 = vld [vmem:[%s560 + $0x820] sm:$0xff]
                  %823 = vst [vmem:[%s561 + $0x410] sm:$0xff] %v822
                  %v824 = vld [vmem:[%s560 + $0x830] sm:$0xff]
                  %825 = vst [vmem:[%s561 + $0x418] sm:$0xff] %v824
                  %v826 = vld [vmem:[%s560 + $0x840] sm:$0xff]
                  %827 = vst [vmem:[%s561 + $0x420] sm:$0xff] %v826
                  %v828 = vld [vmem:[%s560 + $0x850] sm:$0xff]
                  %829 = vst [vmem:[%s561 + $0x428] sm:$0xff] %v828
                  %v830 = vld [vmem:[%s560 + $0x860] sm:$0xff]
                  %831 = vst [vmem:[%s561 + $0x430] sm:$0xff] %v830
                  %v832 = vld [vmem:[%s560 + $0x870] sm:$0xff]
                  %833 = vst [vmem:[%s561 + $0x438] sm:$0xff] %v832
                  %v834 = vld [vmem:[%s560 + $0x880] sm:$0xff]
                  %835 = vst [vmem:[%s561 + $0x440] sm:$0xff] %v834
                  %v836 = vld [vmem:[%s560 + $0x890] sm:$0xff]
                  %837 = vst [vmem:[%s561 + $0x448] sm:$0xff] %v836
                  %v838 = vld [vmem:[%s560 + $0x8a0] sm:$0xff]
                  %839 = vst [vmem:[%s561 + $0x450] sm:$0xff] %v838
                  %v840 = vld [vmem:[%s560 + $0x8b0] sm:$0xff]
                  %841 = vst [vmem:[%s561 + $0x458] sm:$0xff] %v840
                  %v842 = vld [vmem:[%s560 + $0x8c0] sm:$0xff]
                  %843 = vst [vmem:[%s561 + $0x460] sm:$0xff] %v842
                  %v844 = vld [vmem:[%s560 + $0x8d0] sm:$0xff]
                  %845 = vst [vmem:[%s561 + $0x468] sm:$0xff] %v844
                  %v846 = vld [vmem:[%s560 + $0x8e0] sm:$0xff]
                  %847 = vst [vmem:[%s561 + $0x470] sm:$0xff] %v846
                  %v848 = vld [vmem:[%s560 + $0x8f0] sm:$0xff]
                  %849 = vst [vmem:[%s561 + $0x478] sm:$0xff] %v848
                $region74: #{flownet_encoder_forward.9} parent=68 // loop_footer
                  %s559 = sadd.s32 1, %s555
                $region75: #{flownet_encoder_forward.9} parent=68 // loop_footer_branch
                  %554 = sbr.rel target = $region71
                $region76: #{flownet_encoder_forward.9} parent=68 // loop_exit
                  _
              $region69: #{flownet_encoder_forward.9} parent=53 // pred_fallthru
                _
              // Predicated region
              $region77: #{flownet_encoder_forward.9} parent=53 // pred_check
                _
              $region78: #{flownet_encoder_forward.9} parent=53 // pred_check_branch
                %851 = sbr.rel target = $region80
              $region79: #{flownet_encoder_forward.9} parent=53 // pred_region
                _
              $region80: #{flownet_encoder_forward.9} parent=53 // pred_fallthru
                _
            $region54: #{flownet_encoder_forward.9} parent=49 // pred_fallthru
              _
            // Predicated region
            $region55: #{flownet_encoder_forward.9} parent=49 // pred_check
              _
            $region56: #{flownet_encoder_forward.9} parent=49 // pred_check_branch
              %253 = sbr.rel target = $region58
            $region57: #{flownet_encoder_forward.9} parent=49 // pred_region
              %s255 = ssub.s32 256, 1
              loop: start=0, step=1, limit=1
              $region59: #{flownet_encoder_forward.9} parent=57 // loop_pre_header
                _
              $region60: #{flownet_encoder_forward.9} parent=57 // loop_header
                %s257 = sphi 0, %s261
                %p258 = scmp.ge.s32.totalorder %s257, 1
                %s262 = sphi %s247, %s247
                %s263 = sphi %s241, %s241
              $region61: #{flownet_encoder_forward.9} parent=57 // loop_header_branch
                %260 = sbr.rel (%p258) target = $region65
              $region62: #{flownet_encoder_forward.9} parent=57 // loop_body
                %v264 = vld [vmem:[%s262] sm:%s255]
                %265 = vst [vmem:[%s263] sm:%s255] %v264
                %v266 = vld [vmem:[%s262 + $0x10] sm:%s255]
                %267 = vst [vmem:[%s263 + $0x8] sm:%s255] %v266
                %v268 = vld [vmem:[%s262 + $0x20] sm:%s255]
                %269 = vst [vmem:[%s263 + $0x10] sm:%s255] %v268
                %v270 = vld [vmem:[%s262 + $0x30] sm:%s255]
                %271 = vst [vmem:[%s263 + $0x18] sm:%s255] %v270
                %v272 = vld [vmem:[%s262 + $0x40] sm:%s255]
                %273 = vst [vmem:[%s263 + $0x20] sm:%s255] %v272
                %v274 = vld [vmem:[%s262 + $0x50] sm:%s255]
                %275 = vst [vmem:[%s263 + $0x28] sm:%s255] %v274
                %v276 = vld [vmem:[%s262 + $0x60] sm:%s255]
                %277 = vst [vmem:[%s263 + $0x30] sm:%s255] %v276
                %v278 = vld [vmem:[%s262 + $0x70] sm:%s255]
                %279 = vst [vmem:[%s263 + $0x38] sm:%s255] %v278
                %v280 = vld [vmem:[%s262 + $0x80] sm:%s255]
                %281 = vst [vmem:[%s263 + $0x40] sm:%s255] %v280
                %v282 = vld [vmem:[%s262 + $0x90] sm:%s255]
                %283 = vst [vmem:[%s263 + $0x48] sm:%s255] %v282
                %v284 = vld [vmem:[%s262 + $0xa0] sm:%s255]
                %285 = vst [vmem:[%s263 + $0x50] sm:%s255] %v284
                %v286 = vld [vmem:[%s262 + $0xb0] sm:%s255]
                %287 = vst [vmem:[%s263 + $0x58] sm:%s255] %v286
                %v288 = vld [vmem:[%s262 + $0xc0] sm:%s255]
                %289 = vst [vmem:[%s263 + $0x60] sm:%s255] %v288
                %v290 = vld [vmem:[%s262 + $0xd0] sm:%s255]
                %291 = vst [vmem:[%s263 + $0x68] sm:%s255] %v290
                %v292 = vld [vmem:[%s262 + $0xe0] sm:%s255]
                %293 = vst [vmem:[%s263 + $0x70] sm:%s255] %v292
                %v294 = vld [vmem:[%s262 + $0xf0] sm:%s255]
                %295 = vst [vmem:[%s263 + $0x78] sm:%s255] %v294
                %v296 = vld [vmem:[%s262 + $0x100] sm:%s255]
                %297 = vst [vmem:[%s263 + $0x80] sm:%s255] %v296
                %v298 = vld [vmem:[%s262 + $0x110] sm:%s255]
                %299 = vst [vmem:[%s263 + $0x88] sm:%s255] %v298
                %v300 = vld [vmem:[%s262 + $0x120] sm:%s255]
                %301 = vst [vmem:[%s263 + $0x90] sm:%s255] %v300
                %v302 = vld [vmem:[%s262 + $0x130] sm:%s255]
                %303 = vst [vmem:[%s263 + $0x98] sm:%s255] %v302
                %v304 = vld [vmem:[%s262 + $0x140] sm:%s255]
                %305 = vst [vmem:[%s263 + $0xa0] sm:%s255] %v304
                %v306 = vld [vmem:[%s262 + $0x150] sm:%s255]
                %307 = vst [vmem:[%s263 + $0xa8] sm:%s255] %v306
                %v308 = vld [vmem:[%s262 + $0x160] sm:%s255]
                %309 = vst [vmem:[%s263 + $0xb0] sm:%s255] %v308
                %v310 = vld [vmem:[%s262 + $0x170] sm:%s255]
                %311 = vst [vmem:[%s263 + $0xb8] sm:%s255] %v310
                %v312 = vld [vmem:[%s262 + $0x180] sm:%s255]
                %313 = vst [vmem:[%s263 + $0xc0] sm:%s255] %v312
                %v314 = vld [vmem:[%s262 + $0x190] sm:%s255]
                %315 = vst [vmem:[%s263 + $0xc8] sm:%s255] %v314
                %v316 = vld [vmem:[%s262 + $0x1a0] sm:%s255]
                %317 = vst [vmem:[%s263 + $0xd0] sm:%s255] %v316
                %v318 = vld [vmem:[%s262 + $0x1b0] sm:%s255]
                %319 = vst [vmem:[%s263 + $0xd8] sm:%s255] %v318
                %v320 = vld [vmem:[%s262 + $0x1c0] sm:%s255]
                %321 = vst [vmem:[%s263 + $0xe0] sm:%s255] %v320
                %v322 = vld [vmem:[%s262 + $0x1d0] sm:%s255]
                %323 = vst [vmem:[%s263 + $0xe8] sm:%s255] %v322
                %v324 = vld [vmem:[%s262 + $0x1e0] sm:%s255]
                %325 = vst [vmem:[%s263 + $0xf0] sm:%s255] %v324
                %v326 = vld [vmem:[%s262 + $0x1f0] sm:%s255]
                %327 = vst [vmem:[%s263 + $0xf8] sm:%s255] %v326
                %v328 = vld [vmem:[%s262 + $0x200] sm:%s255]
                %329 = vst [vmem:[%s263 + $0x100] sm:%s255] %v328
                %v330 = vld [vmem:[%s262 + $0x210] sm:%s255]
                %331 = vst [vmem:[%s263 + $0x108] sm:%s255] %v330
                %v332 = vld [vmem:[%s262 + $0x220] sm:%s255]
                %333 = vst [vmem:[%s263 + $0x110] sm:%s255] %v332
                %v334 = vld [vmem:[%s262 + $0x230] sm:%s255]
                %335 = vst [vmem:[%s263 + $0x118] sm:%s255] %v334
                %v336 = vld [vmem:[%s262 + $0x240] sm:%s255]
                %337 = vst [vmem:[%s263 + $0x120] sm:%s255] %v336
                %v338 = vld [vmem:[%s262 + $0x250] sm:%s255]
                %339 = vst [vmem:[%s263 + $0x128] sm:%s255] %v338
                %v340 = vld [vmem:[%s262 + $0x260] sm:%s255]
                %341 = vst [vmem:[%s263 + $0x130] sm:%s255] %v340
                %v342 = vld [vmem:[%s262 + $0x270] sm:%s255]
                %343 = vst [vmem:[%s263 + $0x138] sm:%s255] %v342
                %v344 = vld [vmem:[%s262 + $0x280] sm:%s255]
                %345 = vst [vmem:[%s263 + $0x140] sm:%s255] %v344
                %v346 = vld [vmem:[%s262 + $0x290] sm:%s255]
                %347 = vst [vmem:[%s263 + $0x148] sm:%s255] %v346
                %v348 = vld [vmem:[%s262 + $0x2a0] sm:%s255]
                %349 = vst [vmem:[%s263 + $0x150] sm:%s255] %v348
                %v350 = vld [vmem:[%s262 + $0x2b0] sm:%s255]
                %351 = vst [vmem:[%s263 + $0x158] sm:%s255] %v350
                %v352 = vld [vmem:[%s262 + $0x2c0] sm:%s255]
                %353 = vst [vmem:[%s263 + $0x160] sm:%s255] %v352
                %v354 = vld [vmem:[%s262 + $0x2d0] sm:%s255]
                %355 = vst [vmem:[%s263 + $0x168] sm:%s255] %v354
                %v356 = vld [vmem:[%s262 + $0x2e0] sm:%s255]
                %357 = vst [vmem:[%s263 + $0x170] sm:%s255] %v356
                %v358 = vld [vmem:[%s262 + $0x2f0] sm:%s255]
                %359 = vst [vmem:[%s263 + $0x178] sm:%s255] %v358
                %v360 = vld [vmem:[%s262 + $0x300] sm:%s255]
                %361 = vst [vmem:[%s263 + $0x180] sm:%s255] %v360
                %v362 = vld [vmem:[%s262 + $0x310] sm:%s255]
                %363 = vst [vmem:[%s263 + $0x188] sm:%s255] %v362
                %v364 = vld [vmem:[%s262 + $0x320] sm:%s255]
                %365 = vst [vmem:[%s263 + $0x190] sm:%s255] %v364
                %v366 = vld [vmem:[%s262 + $0x330] sm:%s255]
                %367 = vst [vmem:[%s263 + $0x198] sm:%s255] %v366
                %v368 = vld [vmem:[%s262 + $0x340] sm:%s255]
                %369 = vst [vmem:[%s263 + $0x1a0] sm:%s255] %v368
                %v370 = vld [vmem:[%s262 + $0x350] sm:%s255]
                %371 = vst [vmem:[%s263 + $0x1a8] sm:%s255] %v370
                %v372 = vld [vmem:[%s262 + $0x360] sm:%s255]
                %373 = vst [vmem:[%s263 + $0x1b0] sm:%s255] %v372
                %v374 = vld [vmem:[%s262 + $0x370] sm:%s255]
                %375 = vst [vmem:[%s263 + $0x1b8] sm:%s255] %v374
                %v376 = vld [vmem:[%s262 + $0x380] sm:%s255]
                %377 = vst [vmem:[%s263 + $0x1c0] sm:%s255] %v376
                %v378 = vld [vmem:[%s262 + $0x390] sm:%s255]
                %379 = vst [vmem:[%s263 + $0x1c8] sm:%s255] %v378
                %v380 = vld [vmem:[%s262 + $0x3a0] sm:%s255]
                %381 = vst [vmem:[%s263 + $0x1d0] sm:%s255] %v380
                %v382 = vld [vmem:[%s262 + $0x3b0] sm:%s255]
                %383 = vst [vmem:[%s263 + $0x1d8] sm:%s255] %v382
                %v384 = vld [vmem:[%s262 + $0x3c0] sm:%s255]
                %385 = vst [vmem:[%s263 + $0x1e0] sm:%s255] %v384
                %v386 = vld [vmem:[%s262 + $0x3d0] sm:%s255]
                %387 = vst [vmem:[%s263 + $0x1e8] sm:%s255] %v386
                %v388 = vld [vmem:[%s262 + $0x3e0] sm:%s255]
                %389 = vst [vmem:[%s263 + $0x1f0] sm:%s255] %v388
                %v390 = vld [vmem:[%s262 + $0x3f0] sm:%s255]
                %391 = vst [vmem:[%s263 + $0x1f8] sm:%s255] %v390
                %v392 = vld [vmem:[%s262 + $0x400] sm:%s255]
                %393 = vst [vmem:[%s263 + $0x200] sm:%s255] %v392
                %v394 = vld [vmem:[%s262 + $0x410] sm:%s255]
                %395 = vst [vmem:[%s263 + $0x208] sm:%s255] %v394
                %v396 = vld [vmem:[%s262 + $0x420] sm:%s255]
                %397 = vst [vmem:[%s263 + $0x210] sm:%s255] %v396
                %v398 = vld [vmem:[%s262 + $0x430] sm:%s255]
                %399 = vst [vmem:[%s263 + $0x218] sm:%s255] %v398
                %v400 = vld [vmem:[%s262 + $0x440] sm:%s255]
                %401 = vst [vmem:[%s263 + $0x220] sm:%s255] %v400
                %v402 = vld [vmem:[%s262 + $0x450] sm:%s255]
                %403 = vst [vmem:[%s263 + $0x228] sm:%s255] %v402
                %v404 = vld [vmem:[%s262 + $0x460] sm:%s255]
                %405 = vst [vmem:[%s263 + $0x230] sm:%s255] %v404
                %v406 = vld [vmem:[%s262 + $0x470] sm:%s255]
                %407 = vst [vmem:[%s263 + $0x238] sm:%s255] %v406
                %v408 = vld [vmem:[%s262 + $0x480] sm:%s255]
                %409 = vst [vmem:[%s263 + $0x240] sm:%s255] %v408
                %v410 = vld [vmem:[%s262 + $0x490] sm:%s255]
                %411 = vst [vmem:[%s263 + $0x248] sm:%s255] %v410
                %v412 = vld [vmem:[%s262 + $0x4a0] sm:%s255]
                %413 = vst [vmem:[%s263 + $0x250] sm:%s255] %v412
                %v414 = vld [vmem:[%s262 + $0x4b0] sm:%s255]
                %415 = vst [vmem:[%s263 + $0x258] sm:%s255] %v414
                %v416 = vld [vmem:[%s262 + $0x4c0] sm:%s255]
                %417 = vst [vmem:[%s263 + $0x260] sm:%s255] %v416
                %v418 = vld [vmem:[%s262 + $0x4d0] sm:%s255]
                %419 = vst [vmem:[%s263 + $0x268] sm:%s255] %v418
                %v420 = vld [vmem:[%s262 + $0x4e0] sm:%s255]
                %421 = vst [vmem:[%s263 + $0x270] sm:%s255] %v420
                %v422 = vld [vmem:[%s262 + $0x4f0] sm:%s255]
                %423 = vst [vmem:[%s263 + $0x278] sm:%s255] %v422
                %v424 = vld [vmem:[%s262 + $0x500] sm:%s255]
                %425 = vst [vmem:[%s263 + $0x280] sm:%s255] %v424
                %v426 = vld [vmem:[%s262 + $0x510] sm:%s255]
                %427 = vst [vmem:[%s263 + $0x288] sm:%s255] %v426
                %v428 = vld [vmem:[%s262 + $0x520] sm:%s255]
                %429 = vst [vmem:[%s263 + $0x290] sm:%s255] %v428
                %v430 = vld [vmem:[%s262 + $0x530] sm:%s255]
                %431 = vst [vmem:[%s263 + $0x298] sm:%s255] %v430
                %v432 = vld [vmem:[%s262 + $0x540] sm:%s255]
                %433 = vst [vmem:[%s263 + $0x2a0] sm:%s255] %v432
                %v434 = vld [vmem:[%s262 + $0x550] sm:%s255]
                %435 = vst [vmem:[%s263 + $0x2a8] sm:%s255] %v434
                %v436 = vld [vmem:[%s262 + $0x560] sm:%s255]
                %437 = vst [vmem:[%s263 + $0x2b0] sm:%s255] %v436
                %v438 = vld [vmem:[%s262 + $0x570] sm:%s255]
                %439 = vst [vmem:[%s263 + $0x2b8] sm:%s255] %v438
                %v440 = vld [vmem:[%s262 + $0x580] sm:%s255]
                %441 = vst [vmem:[%s263 + $0x2c0] sm:%s255] %v440
                %v442 = vld [vmem:[%s262 + $0x590] sm:%s255]
                %443 = vst [vmem:[%s263 + $0x2c8] sm:%s255] %v442
                %v444 = vld [vmem:[%s262 + $0x5a0] sm:%s255]
                %445 = vst [vmem:[%s263 + $0x2d0] sm:%s255] %v444
                %v446 = vld [vmem:[%s262 + $0x5b0] sm:%s255]
                %447 = vst [vmem:[%s263 + $0x2d8] sm:%s255] %v446
                %v448 = vld [vmem:[%s262 + $0x5c0] sm:%s255]
                %449 = vst [vmem:[%s263 + $0x2e0] sm:%s255] %v448
                %v450 = vld [vmem:[%s262 + $0x5d0] sm:%s255]
                %451 = vst [vmem:[%s263 + $0x2e8] sm:%s255] %v450
                %v452 = vld [vmem:[%s262 + $0x5e0] sm:%s255]
                %453 = vst [vmem:[%s263 + $0x2f0] sm:%s255] %v452
                %v454 = vld [vmem:[%s262 + $0x5f0] sm:%s255]
                %455 = vst [vmem:[%s263 + $0x2f8] sm:%s255] %v454
                %v456 = vld [vmem:[%s262 + $0x600] sm:%s255]
                %457 = vst [vmem:[%s263 + $0x300] sm:%s255] %v456
                %v458 = vld [vmem:[%s262 + $0x610] sm:%s255]
                %459 = vst [vmem:[%s263 + $0x308] sm:%s255] %v458
                %v460 = vld [vmem:[%s262 + $0x620] sm:%s255]
                %461 = vst [vmem:[%s263 + $0x310] sm:%s255] %v460
                %v462 = vld [vmem:[%s262 + $0x630] sm:%s255]
                %463 = vst [vmem:[%s263 + $0x318] sm:%s255] %v462
                %v464 = vld [vmem:[%s262 + $0x640] sm:%s255]
                %465 = vst [vmem:[%s263 + $0x320] sm:%s255] %v464
                %v466 = vld [vmem:[%s262 + $0x650] sm:%s255]
                %467 = vst [vmem:[%s263 + $0x328] sm:%s255] %v466
                %v468 = vld [vmem:[%s262 + $0x660] sm:%s255]
                %469 = vst [vmem:[%s263 + $0x330] sm:%s255] %v468
                %v470 = vld [vmem:[%s262 + $0x670] sm:%s255]
                %471 = vst [vmem:[%s263 + $0x338] sm:%s255] %v470
                %v472 = vld [vmem:[%s262 + $0x680] sm:%s255]
                %473 = vst [vmem:[%s263 + $0x340] sm:%s255] %v472
                %v474 = vld [vmem:[%s262 + $0x690] sm:%s255]
                %475 = vst [vmem:[%s263 + $0x348] sm:%s255] %v474
                %v476 = vld [vmem:[%s262 + $0x6a0] sm:%s255]
                %477 = vst [vmem:[%s263 + $0x350] sm:%s255] %v476
                %v478 = vld [vmem:[%s262 + $0x6b0] sm:%s255]
                %479 = vst [vmem:[%s263 + $0x358] sm:%s255] %v478
                %v480 = vld [vmem:[%s262 + $0x6c0] sm:%s255]
                %481 = vst [vmem:[%s263 + $0x360] sm:%s255] %v480
                %v482 = vld [vmem:[%s262 + $0x6d0] sm:%s255]
                %483 = vst [vmem:[%s263 + $0x368] sm:%s255] %v482
                %v484 = vld [vmem:[%s262 + $0x6e0] sm:%s255]
                %485 = vst [vmem:[%s263 + $0x370] sm:%s255] %v484
                %v486 = vld [vmem:[%s262 + $0x6f0] sm:%s255]
                %487 = vst [vmem:[%s263 + $0x378] sm:%s255] %v486
                %v488 = vld [vmem:[%s262 + $0x700] sm:%s255]
                %489 = vst [vmem:[%s263 + $0x380] sm:%s255] %v488
                %v490 = vld [vmem:[%s262 + $0x710] sm:%s255]
                %491 = vst [vmem:[%s263 + $0x388] sm:%s255] %v490
                %v492 = vld [vmem:[%s262 + $0x720] sm:%s255]
                %493 = vst [vmem:[%s263 + $0x390] sm:%s255] %v492
                %v494 = vld [vmem:[%s262 + $0x730] sm:%s255]
                %495 = vst [vmem:[%s263 + $0x398] sm:%s255] %v494
                %v496 = vld [vmem:[%s262 + $0x740] sm:%s255]
                %497 = vst [vmem:[%s263 + $0x3a0] sm:%s255] %v496
                %v498 = vld [vmem:[%s262 + $0x750] sm:%s255]
                %499 = vst [vmem:[%s263 + $0x3a8] sm:%s255] %v498
                %v500 = vld [vmem:[%s262 + $0x760] sm:%s255]
                %501 = vst [vmem:[%s263 + $0x3b0] sm:%s255] %v500
                %v502 = vld [vmem:[%s262 + $0x770] sm:%s255]
                %503 = vst [vmem:[%s263 + $0x3b8] sm:%s255] %v502
                %v504 = vld [vmem:[%s262 + $0x780] sm:%s255]
                %505 = vst [vmem:[%s263 + $0x3c0] sm:%s255] %v504
                %v506 = vld [vmem:[%s262 + $0x790] sm:%s255]
                %507 = vst [vmem:[%s263 + $0x3c8] sm:%s255] %v506
                %v508 = vld [vmem:[%s262 + $0x7a0] sm:%s255]
                %509 = vst [vmem:[%s263 + $0x3d0] sm:%s255] %v508
                %v510 = vld [vmem:[%s262 + $0x7b0] sm:%s255]
                %511 = vst [vmem:[%s263 + $0x3d8] sm:%s255] %v510
                %v512 = vld [vmem:[%s262 + $0x7c0] sm:%s255]
                %513 = vst [vmem:[%s263 + $0x3e0] sm:%s255] %v512
                %v514 = vld [vmem:[%s262 + $0x7d0] sm:%s255]
                %515 = vst [vmem:[%s263 + $0x3e8] sm:%s255] %v514
                %v516 = vld [vmem:[%s262 + $0x7e0] sm:%s255]
                %517 = vst [vmem:[%s263 + $0x3f0] sm:%s255] %v516
                %v518 = vld [vmem:[%s262 + $0x7f0] sm:%s255]
                %519 = vst [vmem:[%s263 + $0x3f8] sm:%s255] %v518
                %v520 = vld [vmem:[%s262 + $0x800] sm:%s255]
                %521 = vst [vmem:[%s263 + $0x400] sm:%s255] %v520
                %v522 = vld [vmem:[%s262 + $0x810] sm:%s255]
                %523 = vst [vmem:[%s263 + $0x408] sm:%s255] %v522
                %v524 = vld [vmem:[%s262 + $0x820] sm:%s255]
                %525 = vst [vmem:[%s263 + $0x410] sm:%s255] %v524
                %v526 = vld [vmem:[%s262 + $0x830] sm:%s255]
                %527 = vst [vmem:[%s263 + $0x418] sm:%s255] %v526
                %v528 = vld [vmem:[%s262 + $0x840] sm:%s255]
                %529 = vst [vmem:[%s263 + $0x420] sm:%s255] %v528
                %v530 = vld [vmem:[%s262 + $0x850] sm:%s255]
                %531 = vst [vmem:[%s263 + $0x428] sm:%s255] %v530
                %v532 = vld [vmem:[%s262 + $0x860] sm:%s255]
                %533 = vst [vmem:[%s263 + $0x430] sm:%s255] %v532
                %v534 = vld [vmem:[%s262 + $0x870] sm:%s255]
                %535 = vst [vmem:[%s263 + $0x438] sm:%s255] %v534
                %v536 = vld [vmem:[%s262 + $0x880] sm:%s255]
                %537 = vst [vmem:[%s263 + $0x440] sm:%s255] %v536
                %v538 = vld [vmem:[%s262 + $0x890] sm:%s255]
                %539 = vst [vmem:[%s263 + $0x448] sm:%s255] %v538
                %v540 = vld [vmem:[%s262 + $0x8a0] sm:%s255]
                %541 = vst [vmem:[%s263 + $0x450] sm:%s255] %v540
                %v542 = vld [vmem:[%s262 + $0x8b0] sm:%s255]
                %543 = vst [vmem:[%s263 + $0x458] sm:%s255] %v542
                %v544 = vld [vmem:[%s262 + $0x8c0] sm:%s255]
                %545 = vst [vmem:[%s263 + $0x460] sm:%s255] %v544
                %v546 = vld [vmem:[%s262 + $0x8d0] sm:%s255]
                %547 = vst [vmem:[%s263 + $0x468] sm:%s255] %v546
                %v548 = vld [vmem:[%s262 + $0x8e0] sm:%s255]
                %549 = vst [vmem:[%s263 + $0x470] sm:%s255] %v548
                %v550 = vld [vmem:[%s262 + $0x8f0] sm:%s255]
                %551 = vst [vmem:[%s263 + $0x478] sm:%s255] %v550
              $region63: #{flownet_encoder_forward.9} parent=57 // loop_footer
                %s261 = sadd.s32 1, %s257
              $region64: #{flownet_encoder_forward.9} parent=57 // loop_footer_branch
                %256 = sbr.rel target = $region60
              $region65: #{flownet_encoder_forward.9} parent=57 // loop_exit
                _
            $region58: #{flownet_encoder_forward.9} parent=49 // pred_fallthru
              _
          $region50: #{flownet_encoder_forward.9} parent=45 // pred_fallthru
            _
          %852 = vnop
        $region46: #{flownet_encoder_forward.9} parent=15 // pred_fallthru
          _
        // Predicated region
        $region81: #{flownet_encoder_forward.9} parent=15 // pred_check
          %p853 = pneg %p104
        $region82: #{flownet_encoder_forward.9} parent=15 // pred_check_branch
          %855 = sbr.rel (%p853) target = $region84
        $region83: #{flownet_encoder_forward.9} parent=15 // pred_region
          %s856 = smul.u32 2, %s17
          %p857 = scmp.lt.s32.totalorder %s856, 3
          %s858 = scalar_select %p857, %s856, 3
          %s859 = scalar_lea.vmem %s2, %s858
          %s860 = smul.u32 2, %s17
        $region84: #{flownet_encoder_forward.9} parent=15 // pred_fallthru
          _
      $region16: #{flownet_encoder_forward.9} parent=5 // pred_fallthru
        _
      %p861 = scmp.le.s32.totalorder 1, %s9
      %p862 = scmp.lt.s32.totalorder %s9, 5
      %p863 = pnand %p861, %p862
      %p864 = pneg %p863
      // Predicated region
      $region85: #{flownet_encoder_forward.9} parent=5 // pred_check
        _
      $region86: #{flownet_encoder_forward.9} parent=5 // pred_check_branch
        %866 = sbr.rel (%p863) target = $region88
      $region87: #{flownet_encoder_forward.9} parent=5 // pred_region
        %s867 = ssub.s32 %s9, 1
        %s868 = sand.u32 %s43, 1
        %s869 = sand.u32 %s43, 1
        %s870 = smul.addr %s869, 144
        %s871 = scalar_lea.vmem [#allocation3], %s870
        // Predicated region
        $region89: #{flownet_encoder_forward.9} parent=87 // pred_check
          %p872 = pneg %p56
        $region90: #{flownet_encoder_forward.9} parent=87 // pred_check_branch
          %874 = sbr.rel (%p872) target = $region92
        $region91: #{flownet_encoder_forward.9} parent=87 // pred_region
          _
        $region92: #{flownet_encoder_forward.9} parent=87 // pred_fallthru
          _
        %s875 = sand.u32 %s71, 1
        %s876 = sand.u32 %s71, 1
        %s877 = smul.addr %s876, 1152
        %s878 = scalar_lea.vmem [#allocation4], %s877
        // Predicated region
        $region93: #{flownet_encoder_forward.9} parent=87 // pred_check
          %p879 = pneg %p84
        $region94: #{flownet_encoder_forward.9} parent=87 // pred_check_branch
          %881 = sbr.rel (%p879) target = $region96
        $region95: #{flownet_encoder_forward.9} parent=87 // pred_region
          _
        $region96: #{flownet_encoder_forward.9} parent=87 // pred_fallthru
          _
        %s882 = sand.u32 %s43, 1
        %s883 = sand.u32 %s43, 1
        %s884 = smul.addr %s883, 144
        %s885 = scalar_lea.vmem [#allocation3], %s884
        %p886 = pneg %p56
        %p887 = pneg %p53
        %s888 = sand.u32 %s71, 1
        %s889 = sand.u32 %s71, 1
        %s890 = smul.addr %s889, 1152
        %s891 = scalar_lea.vmem [#allocation4], %s890
        %p892 = pneg %p84
        %p893 = pneg %p81
        %s894 = smul.u32 2, %s20
        %p895 = scmp.lt.s32.totalorder %s894, 3
        %s896 = scalar_select %p895, %s894, 3
        %s897 = scalar_lea.vmem %s2, %s896
        %p898 = pneg %p110
        %p899 = pneg %p107
        %p900 = pneg %p138
        %p901 = pneg %p135
        %s902 = sand.u32 %s125, 1
        %s903 = sand.u32 %s125, 1
        %s904 = smul.addr %s903, 64
        %s905 = scalar_lea.vmem [#allocation5], %s904
        %s906 = smul.u32 4, %s19
        %s907 = smul.u32 9, %s21
        %s908 = smul.u32 144, %s21
        %s909 = smul.u32 2, %s20
        %s910 = smul.u32 2, %s20
        %p911 = scmp.lt.s32.totalorder %s910, 3
        %s912 = scalar_select %p911, %s910, 3
        %s913 = scalar_lea.vmem %s2, %s912
        %s914 = smul.u32 2, %s20
        %s915 = smul.u32 4, %s19
        %s916 = smul.u32 2, %s20
        %p917 = scmp.eq.s32.totalorder %s21, 0
        // Predicated region
        $region97: #{flownet_encoder_forward.9} parent=87 // pred_check
          %p918 = pneg %p917
        $region98: #{flownet_encoder_forward.9} parent=87 // pred_check_branch
          %920 = sbr.rel (%p918) target = $region100
        $region99: #{flownet_encoder_forward.9} parent=87 // pred_region
          %921 = vst [vmem:[#allocation2] sm:$0xff] 0.0
          %922 = vst [vmem:[#allocation2 + $0x8] sm:$0xff] 0.0
          %923 = vst [vmem:[#allocation2 + $0x10] sm:$0xff] 0.0
          %924 = vst [vmem:[#allocation2 + $0x18] sm:$0xff] 0.0
          %925 = vst [vmem:[#allocation2 + $0x20] sm:$0xff] 0.0
          %926 = vst [vmem:[#allocation2 + $0x28] sm:$0xff] 0.0
          %927 = vst [vmem:[#allocation2 + $0x30] sm:$0xff] 0.0
          %928 = vst [vmem:[#allocation2 + $0x38] sm:$0xff] 0.0
        $region100: #{flownet_encoder_forward.9} parent=87 // pred_fallthru
          _
        %v929 = vld [vmem:[#allocation2] sm:$0xff]
        %v930 = vld [vmem:[#allocation2 + $0x8] sm:$0xff]
        %v931 = vld [vmem:[#allocation2 + $0x10] sm:$0xff]
        %v932 = vld [vmem:[#allocation2 + $0x18] sm:$0xff]
        %v933 = vld [vmem:[#allocation2 + $0x20] sm:$0xff]
        %v934 = vld [vmem:[#allocation2 + $0x28] sm:$0xff]
        %v935 = vld [vmem:[#allocation2 + $0x30] sm:$0xff]
        %v936 = vld [vmem:[#allocation2 + $0x38] sm:$0xff]
        %v937 = vld [vmem:[%s871] sm:$0xff]
        %v938 = vld [vmem:[%s871 + $0x8] sm:$0xff]
        %v939 = vld [vmem:[%s871 + $0x10] sm:$0xff]
        %v940 = vld [vmem:[%s871 + $0x18] sm:$0xff]
        %v941 = vld [vmem:[%s871 + $0x20] sm:$0xf]
        %v942 = vld [vmem:[%s871 + $0x24] sm:$0xff]
        %v943 = vld [vmem:[%s871 + $0x2c] sm:$0xff]
        %v944 = vld [vmem:[%s871 + $0x34] sm:$0xff]
        %v945 = vld [vmem:[%s871 + $0x3c] sm:$0xff]
        %v946 = vld [vmem:[%s871 + $0x44] sm:$0xf]
        %v947 = vld [vmem:[%s871 + $0x48] sm:$0xff]
        %v948 = vld [vmem:[%s871 + $0x50] sm:$0xff]
        %v949 = vld [vmem:[%s871 + $0x58] sm:$0xff]
        %v950 = vld [vmem:[%s871 + $0x60] sm:$0xff]
        %v951 = vld [vmem:[%s871 + $0x68] sm:$0xf]
        %v952 = vld [vmem:[%s871 + $0x6c] sm:$0xff]
        %v953 = vld [vmem:[%s871 + $0x74] sm:$0xff]
        %v954 = vld [vmem:[%s871 + $0x7c] sm:$0xff]
        %v955 = vld [vmem:[%s871 + $0x84] sm:$0xff]
        %v956 = vld [vmem:[%s871 + $0x8c] sm:$0xf]
        %v957 = vld [vmem:[%s878] sm:$0xff]
        %v958 = vld [vmem:[%s878 + $0x8] sm:$0xff]
        %v959 = vld [vmem:[%s878 + $0x10] sm:$0xff]
        %v960 = vld [vmem:[%s878 + $0x18] sm:$0xff]
        %v961 = vld [vmem:[%s878 + $0x20] sm:$0xff]
        %v962 = vld [vmem:[%s878 + $0x28] sm:$0xff]
        %v963 = vld [vmem:[%s878 + $0x30] sm:$0xff]
        %v964 = vld [vmem:[%s878 + $0x38] sm:$0xff]
        %v965 = vld [vmem:[%s878 + $0x40] sm:$0xff]
        %v966 = vld [vmem:[%s878 + $0x48] sm:$0xff]
        %v967 = vld [vmem:[%s878 + $0x50] sm:$0xff]
        %v968 = vld [vmem:[%s878 + $0x58] sm:$0xff]
        %v969 = vld [vmem:[%s878 + $0x60] sm:$0xff]
        %v970 = vld [vmem:[%s878 + $0x68] sm:$0xff]
        %v971 = vld [vmem:[%s878 + $0x70] sm:$0xff]
        %v972 = vld [vmem:[%s878 + $0x78] sm:$0xff]
        %v973 = vld [vmem:[%s878 + $0x80] sm:$0xff]
        %v974 = vld [vmem:[%s878 + $0x88] sm:$0xff]
        %v975 = vld [vmem:[%s878 + $0x90] sm:$0xff]
        %v976 = vld [vmem:[%s878 + $0x98] sm:$0xff]
        %v977 = vld [vmem:[%s878 + $0xa0] sm:$0xff]
        %v978 = vld [vmem:[%s878 + $0xa8] sm:$0xff]
        %v979 = vld [vmem:[%s878 + $0xb0] sm:$0xff]
        %v980 = vld [vmem:[%s878 + $0xb8] sm:$0xff]
        %v981 = vld [vmem:[%s878 + $0xc0] sm:$0xff]
        %v982 = vld [vmem:[%s878 + $0xc8] sm:$0xff]
        %v983 = vld [vmem:[%s878 + $0xd0] sm:$0xff]
        %v984 = vld [vmem:[%s878 + $0xd8] sm:$0xff]
        %v985 = vld [vmem:[%s878 + $0xe0] sm:$0xff]
        %v986 = vld [vmem:[%s878 + $0xe8] sm:$0xff]
        %v987 = vld [vmem:[%s878 + $0xf0] sm:$0xff]
        %v988 = vld [vmem:[%s878 + $0xf8] sm:$0xff]
        %v989 = vld [vmem:[%s878 + $0x100] sm:$0xff]
        %v990 = vld [vmem:[%s878 + $0x108] sm:$0xff]
        %v991 = vld [vmem:[%s878 + $0x110] sm:$0xff]
        %v992 = vld [vmem:[%s878 + $0x118] sm:$0xff]
        %v993 = vld [vmem:[%s878 + $0x120] sm:$0xff]
        %v994 = vld [vmem:[%s878 + $0x128] sm:$0xff]
        %v995 = vld [vmem:[%s878 + $0x130] sm:$0xff]
        %v996 = vld [vmem:[%s878 + $0x138] sm:$0xff]
        %v997 = vld [vmem:[%s878 + $0x140] sm:$0xff]
        %v998 = vld [vmem:[%s878 + $0x148] sm:$0xff]
        %v999 = vld [vmem:[%s878 + $0x150] sm:$0xff]
        %v1000 = vld [vmem:[%s878 + $0x158] sm:$0xff]
        %v1001 = vld [vmem:[%s878 + $0x160] sm:$0xff]
        %v1002 = vld [vmem:[%s878 + $0x168] sm:$0xff]
        %v1003 = vld [vmem:[%s878 + $0x170] sm:$0xff]
        %v1004 = vld [vmem:[%s878 + $0x178] sm:$0xff]
        %v1005 = vld [vmem:[%s878 + $0x180] sm:$0xff]
        %v1006 = vld [vmem:[%s878 + $0x188] sm:$0xff]
        %v1007 = vld [vmem:[%s878 + $0x190] sm:$0xff]
        %v1008 = vld [vmem:[%s878 + $0x198] sm:$0xff]
        %v1009 = vld [vmem:[%s878 + $0x1a0] sm:$0xff]
        %v1010 = vld [vmem:[%s878 + $0x1a8] sm:$0xff]
        %v1011 = vld [vmem:[%s878 + $0x1b0] sm:$0xff]
        %v1012 = vld [vmem:[%s878 + $0x1b8] sm:$0xff]
        %v1013 = vld [vmem:[%s878 + $0x1c0] sm:$0xff]
        %v1014 = vld [vmem:[%s878 + $0x1c8] sm:$0xff]
        %v1015 = vld [vmem:[%s878 + $0x1d0] sm:$0xff]
        %v1016 = vld [vmem:[%s878 + $0x1d8] sm:$0xff]
        %v1017 = vld [vmem:[%s878 + $0x1e0] sm:$0xff]
        %v1018 = vld [vmem:[%s878 + $0x1e8] sm:$0xff]
        %v1019 = vld [vmem:[%s878 + $0x1f0] sm:$0xff]
        %v1020 = vld [vmem:[%s878 + $0x1f8] sm:$0xff]
        %v1021 = vld [vmem:[%s878 + $0x200] sm:$0xff]
        %v1022 = vld [vmem:[%s878 + $0x208] sm:$0xff]
        %v1023 = vld [vmem:[%s878 + $0x210] sm:$0xff]
        %v1024 = vld [vmem:[%s878 + $0x218] sm:$0xff]
        %v1025 = vld [vmem:[%s878 + $0x220] sm:$0xff]
        %v1026 = vld [vmem:[%s878 + $0x228] sm:$0xff]
        %v1027 = vld [vmem:[%s878 + $0x230] sm:$0xff]
        %v1028 = vld [vmem:[%s878 + $0x238] sm:$0xff]
        %v1029 = vld [vmem:[%s878 + $0x240] sm:$0xff]
        %v1030 = vld [vmem:[%s878 + $0x248] sm:$0xff]
        %v1031 = vld [vmem:[%s878 + $0x250] sm:$0xff]
        %v1032 = vld [vmem:[%s878 + $0x258] sm:$0xff]
        %v1033 = vld [vmem:[%s878 + $0x260] sm:$0xff]
        %v1034 = vld [vmem:[%s878 + $0x268] sm:$0xff]
        %v1035 = vld [vmem:[%s878 + $0x270] sm:$0xff]
        %v1036 = vld [vmem:[%s878 + $0x278] sm:$0xff]
        %v1037 = vld [vmem:[%s878 + $0x280] sm:$0xff]
        %v1038 = vld [vmem:[%s878 + $0x288] sm:$0xff]
        %v1039 = vld [vmem:[%s878 + $0x290] sm:$0xff]
        %v1040 = vld [vmem:[%s878 + $0x298] sm:$0xff]
        %v1041 = vld [vmem:[%s878 + $0x2a0] sm:$0xff]
        %v1042 = vld [vmem:[%s878 + $0x2a8] sm:$0xff]
        %v1043 = vld [vmem:[%s878 + $0x2b0] sm:$0xff]
        %v1044 = vld [vmem:[%s878 + $0x2b8] sm:$0xff]
        %v1045 = vld [vmem:[%s878 + $0x2c0] sm:$0xff]
        %v1046 = vld [vmem:[%s878 + $0x2c8] sm:$0xff]
        %v1047 = vld [vmem:[%s878 + $0x2d0] sm:$0xff]
        %v1048 = vld [vmem:[%s878 + $0x2d8] sm:$0xff]
        %v1049 = vld [vmem:[%s878 + $0x2e0] sm:$0xff]
        %v1050 = vld [vmem:[%s878 + $0x2e8] sm:$0xff]
        %v1051 = vld [vmem:[%s878 + $0x2f0] sm:$0xff]
        %v1052 = vld [vmem:[%s878 + $0x2f8] sm:$0xff]
        %v1053 = vld [vmem:[%s878 + $0x300] sm:$0xff]
        %v1054 = vld [vmem:[%s878 + $0x308] sm:$0xff]
        %v1055 = vld [vmem:[%s878 + $0x310] sm:$0xff]
        %v1056 = vld [vmem:[%s878 + $0x318] sm:$0xff]
        %v1057 = vld [vmem:[%s878 + $0x320] sm:$0xff]
        %v1058 = vld [vmem:[%s878 + $0x328] sm:$0xff]
        %v1059 = vld [vmem:[%s878 + $0x330] sm:$0xff]
        %v1060 = vld [vmem:[%s878 + $0x338] sm:$0xff]
        %v1061 = vld [vmem:[%s878 + $0x340] sm:$0xff]
        %v1062 = vld [vmem:[%s878 + $0x348] sm:$0xff]
        %v1063 = vld [vmem:[%s878 + $0x350] sm:$0xff]
        %v1064 = vld [vmem:[%s878 + $0x358] sm:$0xff]
        %v1065 = vld [vmem:[%s878 + $0x360] sm:$0xff]
        %v1066 = vld [vmem:[%s878 + $0x368] sm:$0xff]
        %v1067 = vld [vmem:[%s878 + $0x370] sm:$0xff]
        %v1068 = vld [vmem:[%s878 + $0x378] sm:$0xff]
        %v1069 = vld [vmem:[%s878 + $0x380] sm:$0xff]
        %v1070 = vld [vmem:[%s878 + $0x388] sm:$0xff]
        %v1071 = vld [vmem:[%s878 + $0x390] sm:$0xff]
        %v1072 = vld [vmem:[%s878 + $0x398] sm:$0xff]
        %v1073 = vld [vmem:[%s878 + $0x3a0] sm:$0xff]
        %v1074 = vld [vmem:[%s878 + $0x3a8] sm:$0xff]
        %v1075 = vld [vmem:[%s878 + $0x3b0] sm:$0xff]
        %v1076 = vld [vmem:[%s878 + $0x3b8] sm:$0xff]
        %v1077 = vld [vmem:[%s878 + $0x3c0] sm:$0xff]
        %v1078 = vld [vmem:[%s878 + $0x3c8] sm:$0xff]
        %v1079 = vld [vmem:[%s878 + $0x3d0] sm:$0xff]
        %v1080 = vld [vmem:[%s878 + $0x3d8] sm:$0xff]
        %v1081 = vld [vmem:[%s878 + $0x3e0] sm:$0xff]
        %v1082 = vld [vmem:[%s878 + $0x3e8] sm:$0xff]
        %v1083 = vld [vmem:[%s878 + $0x3f0] sm:$0xff]
        %v1084 = vld [vmem:[%s878 + $0x3f8] sm:$0xff]
        %v1085 = vld [vmem:[%s878 + $0x400] sm:$0xff]
        %v1086 = vld [vmem:[%s878 + $0x408] sm:$0xff]
        %v1087 = vld [vmem:[%s878 + $0x410] sm:$0xff]
        %v1088 = vld [vmem:[%s878 + $0x418] sm:$0xff]
        %v1089 = vld [vmem:[%s878 + $0x420] sm:$0xff]
        %v1090 = vld [vmem:[%s878 + $0x428] sm:$0xff]
        %v1091 = vld [vmem:[%s878 + $0x430] sm:$0xff]
        %v1092 = vld [vmem:[%s878 + $0x438] sm:$0xff]
        %v1093 = vld [vmem:[%s878 + $0x440] sm:$0xff]
        %v1094 = vld [vmem:[%s878 + $0x448] sm:$0xff]
        %v1095 = vld [vmem:[%s878 + $0x450] sm:$0xff]
        %v1096 = vld [vmem:[%s878 + $0x458] sm:$0xff]
        %v1097 = vld [vmem:[%s878 + $0x460] sm:$0xff]
        %v1098 = vld [vmem:[%s878 + $0x468] sm:$0xff]
        %v1099 = vld [vmem:[%s878 + $0x470] sm:$0xff]
        %v1100 = vld [vmem:[%s878 + $0x478] sm:$0xff]
        %v1121 = vunpack.c.l.b16 %v937
        %v1122 = vunpack.c.h.b16 %v937
        %v1123 = vunpack.c.l.b16 %v938
        %v1124 = vunpack.c.h.b16 %v938
        %v1125 = vunpack.c.l.b16 %v939
        %v1126 = vunpack.c.h.b16 %v939
        %v1127 = vunpack.c.l.b16 %v940
        %v1128 = vunpack.c.h.b16 %v940
        %v1129 = vunpack.c.l.b16 %v941
        %v1130 = vunpack.c.l.b16 %v942
        %v1131 = vunpack.c.h.b16 %v942
        %v1132 = vunpack.c.l.b16 %v943
        %v1133 = vunpack.c.h.b16 %v943
        %v1134 = vunpack.c.l.b16 %v944
        %v1135 = vunpack.c.h.b16 %v944
        %v1136 = vunpack.c.l.b16 %v945
        %v1137 = vunpack.c.h.b16 %v945
        %v1138 = vunpack.c.l.b16 %v946
        %v1139 = vunpack.c.l.b16 %v947
        %v1140 = vunpack.c.h.b16 %v947
        %v1141 = vunpack.c.l.b16 %v948
        %v1142 = vunpack.c.h.b16 %v948
        %v1143 = vunpack.c.l.b16 %v949
        %v1144 = vunpack.c.h.b16 %v949
        %v1145 = vunpack.c.l.b16 %v950
        %v1146 = vunpack.c.h.b16 %v950
        %v1147 = vunpack.c.l.b16 %v951
        %v1148 = vunpack.c.l.b16 %v952
        %v1149 = vunpack.c.h.b16 %v952
        %v1150 = vunpack.c.l.b16 %v953
        %v1151 = vunpack.c.h.b16 %v953
        %v1152 = vunpack.c.l.b16 %v954
        %v1153 = vunpack.c.h.b16 %v954
        %v1154 = vunpack.c.l.b16 %v955
        %v1155 = vunpack.c.h.b16 %v955
        %v1156 = vunpack.c.l.b16 %v956
        %v1157 = vpack.c.b16 %v1130, %v1121
        %v1158 = vpack.c.b16 %v1131, %v1122
        %v1159 = vpack.c.b16 %v1132, %v1123
        %v1160 = vpack.c.b16 %v1133, %v1124
        %v1161 = vpack.c.b16 %v1134, %v1125
        %v1162 = vpack.c.b16 %v1135, %v1126
        %v1163 = vpack.c.b16 %v1136, %v1127
        %v1164 = vpack.c.b16 %v1137, %v1128
        %v1165 = vpack.c.b16 %v1138, %v1129
        %v1166 = vpack.c.b16 %v1148, %v1139
        %v1167 = vpack.c.b16 %v1149, %v1140
        %v1168 = vpack.c.b16 %v1150, %v1141
        %v1169 = vpack.c.b16 %v1151, %v1142
        %v1170 = vpack.c.b16 %v1152, %v1143
        %v1171 = vpack.c.b16 %v1153, %v1144
        %v1172 = vpack.c.b16 %v1154, %v1145
        %v1173 = vpack.c.b16 %v1155, %v1146
        %v1174 = vpack.c.b16 %v1156, %v1147
        %v1337 = vunpack.c.l.b16 %v957
        %v1338 = vunpack.c.h.b16 %v957
        %v1339 = vunpack.c.l.b16 %v958
        %v1340 = vunpack.c.h.b16 %v958
        %v1341 = vunpack.c.l.b16 %v959
        %v1342 = vunpack.c.h.b16 %v959
        %v1343 = vunpack.c.l.b16 %v960
        %v1344 = vunpack.c.h.b16 %v960
        %v1345 = vunpack.c.l.b16 %v961
        %v1346 = vunpack.c.h.b16 %v961
        %v1347 = vunpack.c.l.b16 %v962
        %v1348 = vunpack.c.h.b16 %v962
        %v1349 = vunpack.c.l.b16 %v963
        %v1350 = vunpack.c.h.b16 %v963
        %v1351 = vunpack.c.l.b16 %v964
        %v1352 = vunpack.c.h.b16 %v964
        %v1353 = vunpack.c.l.b16 %v965
        %v1354 = vunpack.c.h.b16 %v965
        %v1355 = vunpack.c.l.b16 %v966
        %v1356 = vunpack.c.h.b16 %v966
        %v1357 = vunpack.c.l.b16 %v967
        %v1358 = vunpack.c.h.b16 %v967
        %v1359 = vunpack.c.l.b16 %v968
        %v1360 = vunpack.c.h.b16 %v968
        %v1361 = vunpack.c.l.b16 %v969
        %v1362 = vunpack.c.h.b16 %v969
        %v1363 = vunpack.c.l.b16 %v970
        %v1364 = vunpack.c.h.b16 %v970
        %v1365 = vunpack.c.l.b16 %v971
        %v1366 = vunpack.c.h.b16 %v971
        %v1367 = vunpack.c.l.b16 %v972
        %v1368 = vunpack.c.h.b16 %v972
        %v1369 = vunpack.c.l.b16 %v973
        %v1370 = vunpack.c.h.b16 %v973
        %v1371 = vunpack.c.l.b16 %v974
        %v1372 = vunpack.c.h.b16 %v974
        %v1373 = vunpack.c.l.b16 %v975
        %v1374 = vunpack.c.h.b16 %v975
        %v1375 = vunpack.c.l.b16 %v976
        %v1376 = vunpack.c.h.b16 %v976
        %v1377 = vunpack.c.l.b16 %v977
        %v1378 = vunpack.c.h.b16 %v977
        %v1379 = vunpack.c.l.b16 %v978
        %v1380 = vunpack.c.h.b16 %v978
        %v1381 = vunpack.c.l.b16 %v979
        %v1382 = vunpack.c.h.b16 %v979
        %v1383 = vunpack.c.l.b16 %v980
        %v1384 = vunpack.c.h.b16 %v980
        %v1385 = vunpack.c.l.b16 %v981
        %v1386 = vunpack.c.h.b16 %v981
        %v1387 = vunpack.c.l.b16 %v982
        %v1388 = vunpack.c.h.b16 %v982
        %v1389 = vunpack.c.l.b16 %v983
        %v1390 = vunpack.c.h.b16 %v983
        %v1391 = vunpack.c.l.b16 %v984
        %v1392 = vunpack.c.h.b16 %v984
        %v1393 = vunpack.c.l.b16 %v985
        %v1394 = vunpack.c.h.b16 %v985
        %v1395 = vunpack.c.l.b16 %v986
        %v1396 = vunpack.c.h.b16 %v986
        %v1397 = vunpack.c.l.b16 %v987
        %v1398 = vunpack.c.h.b16 %v987
        %v1399 = vunpack.c.l.b16 %v988
        %v1400 = vunpack.c.h.b16 %v988
        %v1401 = vunpack.c.l.b16 %v989
        %v1402 = vunpack.c.h.b16 %v989
        %v1403 = vunpack.c.l.b16 %v990
        %v1404 = vunpack.c.h.b16 %v990
        %v1405 = vunpack.c.l.b16 %v991
        %v1406 = vunpack.c.h.b16 %v991
        %v1407 = vunpack.c.l.b16 %v992
        %v1408 = vunpack.c.h.b16 %v992
        %v1409 = vunpack.c.l.b16 %v993
        %v1410 = vunpack.c.h.b16 %v993
        %v1411 = vunpack.c.l.b16 %v994
        %v1412 = vunpack.c.h.b16 %v994
        %v1413 = vunpack.c.l.b16 %v995
        %v1414 = vunpack.c.h.b16 %v995
        %v1415 = vunpack.c.l.b16 %v996
        %v1416 = vunpack.c.h.b16 %v996
        %v1417 = vunpack.c.l.b16 %v997
        %v1418 = vunpack.c.h.b16 %v997
        %v1419 = vunpack.c.l.b16 %v998
        %v1420 = vunpack.c.h.b16 %v998
        %v1421 = vunpack.c.l.b16 %v999
        %v1422 = vunpack.c.h.b16 %v999
        %v1423 = vunpack.c.l.b16 %v1000
        %v1424 = vunpack.c.h.b16 %v1000
        %v1425 = vunpack.c.l.b16 %v1001
        %v1426 = vunpack.c.h.b16 %v1001
        %v1427 = vunpack.c.l.b16 %v1002
        %v1428 = vunpack.c.h.b16 %v1002
        %v1429 = vunpack.c.l.b16 %v1003
        %v1430 = vunpack.c.h.b16 %v1003
        %v1431 = vunpack.c.l.b16 %v1004
        %v1432 = vunpack.c.h.b16 %v1004
        %v1433 = vunpack.c.l.b16 %v1005
        %v1434 = vunpack.c.h.b16 %v1005
        %v1435 = vunpack.c.l.b16 %v1006
        %v1436 = vunpack.c.h.b16 %v1006
        %v1437 = vunpack.c.l.b16 %v1007
        %v1438 = vunpack.c.h.b16 %v1007
        %v1439 = vunpack.c.l.b16 %v1008
        %v1440 = vunpack.c.h.b16 %v1008
        %v1441 = vunpack.c.l.b16 %v1009
        %v1442 = vunpack.c.h.b16 %v1009
        %v1443 = vunpack.c.l.b16 %v1010
        %v1444 = vunpack.c.h.b16 %v1010
        %v1445 = vunpack.c.l.b16 %v1011
        %v1446 = vunpack.c.h.b16 %v1011
        %v1447 = vunpack.c.l.b16 %v1012
        %v1448 = vunpack.c.h.b16 %v1012
        %v1449 = vunpack.c.l.b16 %v1013
        %v1450 = vunpack.c.h.b16 %v1013
        %v1451 = vunpack.c.l.b16 %v1014
        %v1452 = vunpack.c.h.b16 %v1014
        %v1453 = vunpack.c.l.b16 %v1015
        %v1454 = vunpack.c.h.b16 %v1015
        %v1455 = vunpack.c.l.b16 %v1016
        %v1456 = vunpack.c.h.b16 %v1016
        %v1457 = vunpack.c.l.b16 %v1017
        %v1458 = vunpack.c.h.b16 %v1017
        %v1459 = vunpack.c.l.b16 %v1018
        %v1460 = vunpack.c.h.b16 %v1018
        %v1461 = vunpack.c.l.b16 %v1019
        %v1462 = vunpack.c.h.b16 %v1019
        %v1463 = vunpack.c.l.b16 %v1020
        %v1464 = vunpack.c.h.b16 %v1020
        %v1465 = vunpack.c.l.b16 %v1021
        %v1466 = vunpack.c.h.b16 %v1021
        %v1467 = vunpack.c.l.b16 %v1022
        %v1468 = vunpack.c.h.b16 %v1022
        %v1469 = vunpack.c.l.b16 %v1023
        %v1470 = vunpack.c.h.b16 %v1023
        %v1471 = vunpack.c.l.b16 %v1024
        %v1472 = vunpack.c.h.b16 %v1024
        %v1473 = vunpack.c.l.b16 %v1025
        %v1474 = vunpack.c.h.b16 %v1025
        %v1475 = vunpack.c.l.b16 %v1026
        %v1476 = vunpack.c.h.b16 %v1026
        %v1477 = vunpack.c.l.b16 %v1027
        %v1478 = vunpack.c.h.b16 %v1027
        %v1479 = vunpack.c.l.b16 %v1028
        %v1480 = vunpack.c.h.b16 %v1028
        %v1481 = vunpack.c.l.b16 %v1029
        %v1482 = vunpack.c.h.b16 %v1029
        %v1483 = vunpack.c.l.b16 %v1030
        %v1484 = vunpack.c.h.b16 %v1030
        %v1485 = vunpack.c.l.b16 %v1031
        %v1486 = vunpack.c.h.b16 %v1031
        %v1487 = vunpack.c.l.b16 %v1032
        %v1488 = vunpack.c.h.b16 %v1032
        %v1489 = vunpack.c.l.b16 %v1033
        %v1490 = vunpack.c.h.b16 %v1033
        %v1491 = vunpack.c.l.b16 %v1034
        %v1492 = vunpack.c.h.b16 %v1034
        %v1493 = vunpack.c.l.b16 %v1035
        %v1494 = vunpack.c.h.b16 %v1035
        %v1495 = vunpack.c.l.b16 %v1036
        %v1496 = vunpack.c.h.b16 %v1036
        %v1497 = vunpack.c.l.b16 %v1037
        %v1498 = vunpack.c.h.b16 %v1037
        %v1499 = vunpack.c.l.b16 %v1038
        %v1500 = vunpack.c.h.b16 %v1038
        %v1501 = vunpack.c.l.b16 %v1039
        %v1502 = vunpack.c.h.b16 %v1039
        %v1503 = vunpack.c.l.b16 %v1040
        %v1504 = vunpack.c.h.b16 %v1040
        %v1505 = vunpack.c.l.b16 %v1041
        %v1506 = vunpack.c.h.b16 %v1041
        %v1507 = vunpack.c.l.b16 %v1042
        %v1508 = vunpack.c.h.b16 %v1042
        %v1509 = vunpack.c.l.b16 %v1043
        %v1510 = vunpack.c.h.b16 %v1043
        %v1511 = vunpack.c.l.b16 %v1044
        %v1512 = vunpack.c.h.b16 %v1044
        %v1513 = vunpack.c.l.b16 %v1045
        %v1514 = vunpack.c.h.b16 %v1045
        %v1515 = vunpack.c.l.b16 %v1046
        %v1516 = vunpack.c.h.b16 %v1046
        %v1517 = vunpack.c.l.b16 %v1047
        %v1518 = vunpack.c.h.b16 %v1047
        %v1519 = vunpack.c.l.b16 %v1048
        %v1520 = vunpack.c.h.b16 %v1048
        %v1521 = vunpack.c.l.b16 %v1049
        %v1522 = vunpack.c.h.b16 %v1049
        %v1523 = vunpack.c.l.b16 %v1050
        %v1524 = vunpack.c.h.b16 %v1050
        %v1525 = vunpack.c.l.b16 %v1051
        %v1526 = vunpack.c.h.b16 %v1051
        %v1527 = vunpack.c.l.b16 %v1052
        %v1528 = vunpack.c.h.b16 %v1052
        %v1529 = vunpack.c.l.b16 %v1053
        %v1530 = vunpack.c.h.b16 %v1053
        %v1531 = vunpack.c.l.b16 %v1054
        %v1532 = vunpack.c.h.b16 %v1054
        %v1533 = vunpack.c.l.b16 %v1055
        %v1534 = vunpack.c.h.b16 %v1055
        %v1535 = vunpack.c.l.b16 %v1056
        %v1536 = vunpack.c.h.b16 %v1056
        %v1537 = vunpack.c.l.b16 %v1057
        %v1538 = vunpack.c.h.b16 %v1057
        %v1539 = vunpack.c.l.b16 %v1058
        %v1540 = vunpack.c.h.b16 %v1058
        %v1541 = vunpack.c.l.b16 %v1059
        %v1542 = vunpack.c.h.b16 %v1059
        %v1543 = vunpack.c.l.b16 %v1060
        %v1544 = vunpack.c.h.b16 %v1060
        %v1545 = vunpack.c.l.b16 %v1061
        %v1546 = vunpack.c.h.b16 %v1061
        %v1547 = vunpack.c.l.b16 %v1062
        %v1548 = vunpack.c.h.b16 %v1062
        %v1549 = vunpack.c.l.b16 %v1063
        %v1550 = vunpack.c.h.b16 %v1063
        %v1551 = vunpack.c.l.b16 %v1064
        %v1552 = vunpack.c.h.b16 %v1064
        %v1553 = vunpack.c.l.b16 %v1065
        %v1554 = vunpack.c.h.b16 %v1065
        %v1555 = vunpack.c.l.b16 %v1066
        %v1556 = vunpack.c.h.b16 %v1066
        %v1557 = vunpack.c.l.b16 %v1067
        %v1558 = vunpack.c.h.b16 %v1067
        %v1559 = vunpack.c.l.b16 %v1068
        %v1560 = vunpack.c.h.b16 %v1068
        %v1561 = vunpack.c.l.b16 %v1069
        %v1562 = vunpack.c.h.b16 %v1069
        %v1563 = vunpack.c.l.b16 %v1070
        %v1564 = vunpack.c.h.b16 %v1070
        %v1565 = vunpack.c.l.b16 %v1071
        %v1566 = vunpack.c.h.b16 %v1071
        %v1567 = vunpack.c.l.b16 %v1072
        %v1568 = vunpack.c.h.b16 %v1072
        %v1569 = vunpack.c.l.b16 %v1073
        %v1570 = vunpack.c.h.b16 %v1073
        %v1571 = vunpack.c.l.b16 %v1074
        %v1572 = vunpack.c.h.b16 %v1074
        %v1573 = vunpack.c.l.b16 %v1075
        %v1574 = vunpack.c.h.b16 %v1075
        %v1575 = vunpack.c.l.b16 %v1076
        %v1576 = vunpack.c.h.b16 %v1076
        %v1577 = vunpack.c.l.b16 %v1077
        %v1578 = vunpack.c.h.b16 %v1077
        %v1579 = vunpack.c.l.b16 %v1078
        %v1580 = vunpack.c.h.b16 %v1078
        %v1581 = vunpack.c.l.b16 %v1079
        %v1582 = vunpack.c.h.b16 %v1079
        %v1583 = vunpack.c.l.b16 %v1080
        %v1584 = vunpack.c.h.b16 %v1080
        %v1585 = vunpack.c.l.b16 %v1081
        %v1586 = vunpack.c.h.b16 %v1081
        %v1587 = vunpack.c.l.b16 %v1082
        %v1588 = vunpack.c.h.b16 %v1082
        %v1589 = vunpack.c.l.b16 %v1083
        %v1590 = vunpack.c.h.b16 %v1083
        %v1591 = vunpack.c.l.b16 %v1084
        %v1592 = vunpack.c.h.b16 %v1084
        %v1593 = vunpack.c.l.b16 %v1085
        %v1594 = vunpack.c.h.b16 %v1085
        %v1595 = vunpack.c.l.b16 %v1086
        %v1596 = vunpack.c.h.b16 %v1086
        %v1597 = vunpack.c.l.b16 %v1087
        %v1598 = vunpack.c.h.b16 %v1087
        %v1599 = vunpack.c.l.b16 %v1088
        %v1600 = vunpack.c.h.b16 %v1088
        %v1601 = vunpack.c.l.b16 %v1089
        %v1602 = vunpack.c.h.b16 %v1089
        %v1603 = vunpack.c.l.b16 %v1090
        %v1604 = vunpack.c.h.b16 %v1090
        %v1605 = vunpack.c.l.b16 %v1091
        %v1606 = vunpack.c.h.b16 %v1091
        %v1607 = vunpack.c.l.b16 %v1092
        %v1608 = vunpack.c.h.b16 %v1092
        %v1609 = vunpack.c.l.b16 %v1093
        %v1610 = vunpack.c.h.b16 %v1093
        %v1611 = vunpack.c.l.b16 %v1094
        %v1612 = vunpack.c.h.b16 %v1094
        %v1613 = vunpack.c.l.b16 %v1095
        %v1614 = vunpack.c.h.b16 %v1095
        %v1615 = vunpack.c.l.b16 %v1096
        %v1616 = vunpack.c.h.b16 %v1096
        %v1617 = vunpack.c.l.b16 %v1097
        %v1618 = vunpack.c.h.b16 %v1097
        %v1619 = vunpack.c.l.b16 %v1098
        %v1620 = vunpack.c.h.b16 %v1098
        %v1621 = vunpack.c.l.b16 %v1099
        %v1622 = vunpack.c.h.b16 %v1099
        %v1623 = vunpack.c.l.b16 %v1100
        %v1624 = vunpack.c.h.b16 %v1100
        %v1625 = vpack.c.b16 %v1339, %v1337
        %v1626 = vpack.c.b16 %v1340, %v1338
        %v1627 = vpack.c.b16 %v1343, %v1341
        %v1628 = vpack.c.b16 %v1344, %v1342
        %v1629 = vpack.c.b16 %v1347, %v1345
        %v1630 = vpack.c.b16 %v1348, %v1346
        %v1631 = vpack.c.b16 %v1351, %v1349
        %v1632 = vpack.c.b16 %v1352, %v1350
        %v1633 = vpack.c.b16 %v1355, %v1353
        %v1634 = vpack.c.b16 %v1356, %v1354
        %v1635 = vpack.c.b16 %v1359, %v1357
        %v1636 = vpack.c.b16 %v1360, %v1358
        %v1637 = vpack.c.b16 %v1363, %v1361
        %v1638 = vpack.c.b16 %v1364, %v1362
        %v1639 = vpack.c.b16 %v1367, %v1365
        %v1640 = vpack.c.b16 %v1368, %v1366
        %v1641 = vpack.c.b16 %v1371, %v1369
        %v1642 = vpack.c.b16 %v1372, %v1370
        %v1643 = vpack.c.b16 %v1375, %v1373
        %v1644 = vpack.c.b16 %v1376, %v1374
        %v1645 = vpack.c.b16 %v1379, %v1377
        %v1646 = vpack.c.b16 %v1380, %v1378
        %v1647 = vpack.c.b16 %v1383, %v1381
        %v1648 = vpack.c.b16 %v1384, %v1382
        %v1649 = vpack.c.b16 %v1387, %v1385
        %v1650 = vpack.c.b16 %v1388, %v1386
        %v1651 = vpack.c.b16 %v1391, %v1389
        %v1652 = vpack.c.b16 %v1392, %v1390
        %v1653 = vpack.c.b16 %v1395, %v1393
        %v1654 = vpack.c.b16 %v1396, %v1394
        %v1655 = vpack.c.b16 %v1399, %v1397
        %v1656 = vpack.c.b16 %v1400, %v1398
        %v1657 = vpack.c.b16 %v1403, %v1401
        %v1658 = vpack.c.b16 %v1404, %v1402
        %v1659 = vpack.c.b16 %v1407, %v1405
        %v1660 = vpack.c.b16 %v1408, %v1406
        %v1661 = vpack.c.b16 %v1411, %v1409
        %v1662 = vpack.c.b16 %v1412, %v1410
        %v1663 = vpack.c.b16 %v1415, %v1413
        %v1664 = vpack.c.b16 %v1416, %v1414
        %v1665 = vpack.c.b16 %v1419, %v1417
        %v1666 = vpack.c.b16 %v1420, %v1418
        %v1667 = vpack.c.b16 %v1423, %v1421
        %v1668 = vpack.c.b16 %v1424, %v1422
        %v1669 = vpack.c.b16 %v1427, %v1425
        %v1670 = vpack.c.b16 %v1428, %v1426
        %v1671 = vpack.c.b16 %v1431, %v1429
        %v1672 = vpack.c.b16 %v1432, %v1430
        %v1673 = vpack.c.b16 %v1435, %v1433
        %v1674 = vpack.c.b16 %v1436, %v1434
        %v1675 = vpack.c.b16 %v1439, %v1437
        %v1676 = vpack.c.b16 %v1440, %v1438
        %v1677 = vpack.c.b16 %v1443, %v1441
        %v1678 = vpack.c.b16 %v1444, %v1442
        %v1679 = vpack.c.b16 %v1447, %v1445
        %v1680 = vpack.c.b16 %v1448, %v1446
        %v1681 = vpack.c.b16 %v1451, %v1449
        %v1682 = vpack.c.b16 %v1452, %v1450
        %v1683 = vpack.c.b16 %v1455, %v1453
        %v1684 = vpack.c.b16 %v1456, %v1454
        %v1685 = vpack.c.b16 %v1459, %v1457
        %v1686 = vpack.c.b16 %v1460, %v1458
        %v1687 = vpack.c.b16 %v1463, %v1461
        %v1688 = vpack.c.b16 %v1464, %v1462
        %v1689 = vpack.c.b16 %v1467, %v1465
        %v1690 = vpack.c.b16 %v1468, %v1466
        %v1691 = vpack.c.b16 %v1471, %v1469
        %v1692 = vpack.c.b16 %v1472, %v1470
        %v1693 = vpack.c.b16 %v1475, %v1473
        %v1694 = vpack.c.b16 %v1476, %v1474
        %v1695 = vpack.c.b16 %v1479, %v1477
        %v1696 = vpack.c.b16 %v1480, %v1478
        %v1697 = vpack.c.b16 %v1483, %v1481
        %v1698 = vpack.c.b16 %v1484, %v1482
        %v1699 = vpack.c.b16 %v1487, %v1485
        %v1700 = vpack.c.b16 %v1488, %v1486
        %v1701 = vpack.c.b16 %v1491, %v1489
        %v1702 = vpack.c.b16 %v1492, %v1490
        %v1703 = vpack.c.b16 %v1495, %v1493
        %v1704 = vpack.c.b16 %v1496, %v1494
        %v1705 = vpack.c.b16 %v1499, %v1497
        %v1706 = vpack.c.b16 %v1500, %v1498
        %v1707 = vpack.c.b16 %v1503, %v1501
        %v1708 = vpack.c.b16 %v1504, %v1502
        %v1709 = vpack.c.b16 %v1507, %v1505
        %v1710 = vpack.c.b16 %v1508, %v1506
        %v1711 = vpack.c.b16 %v1511, %v1509
        %v1712 = vpack.c.b16 %v1512, %v1510
        %v1713 = vpack.c.b16 %v1515, %v1513
        %v1714 = vpack.c.b16 %v1516, %v1514
        %v1715 = vpack.c.b16 %v1519, %v1517
        %v1716 = vpack.c.b16 %v1520, %v1518
        %v1717 = vpack.c.b16 %v1523, %v1521
        %v1718 = vpack.c.b16 %v1524, %v1522
        %v1719 = vpack.c.b16 %v1527, %v1525
        %v1720 = vpack.c.b16 %v1528, %v1526
        %v1721 = vpack.c.b16 %v1531, %v1529
        %v1722 = vpack.c.b16 %v1532, %v1530
        %v1723 = vpack.c.b16 %v1535, %v1533
        %v1724 = vpack.c.b16 %v1536, %v1534
        %v1725 = vpack.c.b16 %v1539, %v1537
        %v1726 = vpack.c.b16 %v1540, %v1538
        %v1727 = vpack.c.b16 %v1543, %v1541
        %v1728 = vpack.c.b16 %v1544, %v1542
        %v1729 = vpack.c.b16 %v1547, %v1545
        %v1730 = vpack.c.b16 %v1548, %v1546
        %v1731 = vpack.c.b16 %v1551, %v1549
        %v1732 = vpack.c.b16 %v1552, %v1550
        %v1733 = vpack.c.b16 %v1555, %v1553
        %v1734 = vpack.c.b16 %v1556, %v1554
        %v1735 = vpack.c.b16 %v1559, %v1557
        %v1736 = vpack.c.b16 %v1560, %v1558
        %v1737 = vpack.c.b16 %v1563, %v1561
        %v1738 = vpack.c.b16 %v1564, %v1562
        %v1739 = vpack.c.b16 %v1567, %v1565
        %v1740 = vpack.c.b16 %v1568, %v1566
        %v1741 = vpack.c.b16 %v1571, %v1569
        %v1742 = vpack.c.b16 %v1572, %v1570
        %v1743 = vpack.c.b16 %v1575, %v1573
        %v1744 = vpack.c.b16 %v1576, %v1574
        %v1745 = vpack.c.b16 %v1579, %v1577
        %v1746 = vpack.c.b16 %v1580, %v1578
        %v1747 = vpack.c.b16 %v1583, %v1581
        %v1748 = vpack.c.b16 %v1584, %v1582
        %v1749 = vpack.c.b16 %v1587, %v1585
        %v1750 = vpack.c.b16 %v1588, %v1586
        %v1751 = vpack.c.b16 %v1591, %v1589
        %v1752 = vpack.c.b16 %v1592, %v1590
        %v1753 = vpack.c.b16 %v1595, %v1593
        %v1754 = vpack.c.b16 %v1596, %v1594
        %v1755 = vpack.c.b16 %v1599, %v1597
        %v1756 = vpack.c.b16 %v1600, %v1598
        %v1757 = vpack.c.b16 %v1603, %v1601
        %v1758 = vpack.c.b16 %v1604, %v1602
        %v1759 = vpack.c.b16 %v1607, %v1605
        %v1760 = vpack.c.b16 %v1608, %v1606
        %v1761 = vpack.c.b16 %v1611, %v1609
        %v1762 = vpack.c.b16 %v1612, %v1610
        %v1763 = vpack.c.b16 %v1615, %v1613
        %v1764 = vpack.c.b16 %v1616, %v1614
        %v1765 = vpack.c.b16 %v1619, %v1617
        %v1766 = vpack.c.b16 %v1620, %v1618
        %v1767 = vpack.c.b16 %v1623, %v1621
        %v1768 = vpack.c.b16 %v1624, %v1622
        %1913 = vmatpush.bf16.msra.mxu0 %v1639
        %1914 = vmatpush.bf16.msra.mxu0 %v1637
        %1915 = vmatpush.bf16.msra.mxu0 %v1635
        %1916 = vmatpush.bf16.msra.mxu0 %v1633
        %1917 = vmatpush.bf16.msra.mxu0 %v1631
        %1918 = vmatpush.bf16.msra.mxu0 %v1629
        %1919 = vmatpush.bf16.msra.mxu0 %v1627
        %1920 = vmatpush.bf16.msra.mxu0 %v1625
        %1921 = vmatmul.bf16.gmra.mxu0 %v1157
        %v1922 = vpop.f32.mrf.mxu0
        %v1923 = vadd.f32 0.0, %v1922
        %v1924 = vpop.f32.mrf.mxu0
        %v1925 = vadd.f32 0.0, %v1924
        %1926 = vmatmul.bf16.gmra.mxu0 %v1166
        %v1927 = vpop.f32.mrf.mxu0
        %v1928 = vadd.f32 0.0, %v1927
        %v1929 = vpop.f32.mrf.mxu0
        %v1930 = vadd.f32 0.0, %v1929
        %1931 = vdwg.mxu0
        %1932 = vmatpush.bf16.msra.mxu0 %v1655
        %1933 = vmatpush.bf16.msra.mxu0 %v1653
        %1934 = vmatpush.bf16.msra.mxu0 %v1651
        %1935 = vmatpush.bf16.msra.mxu0 %v1649
        %1936 = vmatpush.bf16.msra.mxu0 %v1647
        %1937 = vmatpush.bf16.msra.mxu0 %v1645
        %1938 = vmatpush.bf16.msra.mxu0 %v1643
        %1939 = vmatpush.bf16.msra.mxu0 %v1641
        %1940 = vmatmul.bf16.gmra.mxu0 %v1158
        %v1941 = vpop.f32.mrf.mxu0
        %v1942 = vadd.f32 %v1923, %v1941
        %v1943 = vpop.f32.mrf.mxu0
        %v1944 = vadd.f32 %v1925, %v1943
        %1945 = vmatmul.bf16.gmra.mxu0 %v1167
        %v1946 = vpop.f32.mrf.mxu0
        %v1947 = vadd.f32 %v1928, %v1946
        %v1948 = vpop.f32.mrf.mxu0
        %v1949 = vadd.f32 %v1930, %v1948
        %1950 = vdwg.mxu0
        %1951 = vmatpush.bf16.msra.mxu0 %v1671
        %1952 = vmatpush.bf16.msra.mxu0 %v1669
        %1953 = vmatpush.bf16.msra.mxu0 %v1667
        %1954 = vmatpush.bf16.msra.mxu0 %v1665
        %1955 = vmatpush.bf16.msra.mxu0 %v1663
        %1956 = vmatpush.bf16.msra.mxu0 %v1661
        %1957 = vmatpush.bf16.msra.mxu0 %v1659
        %1958 = vmatpush.bf16.msra.mxu0 %v1657
        %1959 = vmatmul.bf16.gmra.mxu0 %v1159
        %v1960 = vpop.f32.mrf.mxu0
        %v1961 = vadd.f32 %v1942, %v1960
        %v1962 = vpop.f32.mrf.mxu0
        %v1963 = vadd.f32 %v1944, %v1962
        %1964 = vmatmul.bf16.gmra.mxu0 %v1168
        %v1965 = vpop.f32.mrf.mxu0
        %v1966 = vadd.f32 %v1947, %v1965
        %v1967 = vpop.f32.mrf.mxu0
        %v1968 = vadd.f32 %v1949, %v1967
        %1969 = vdwg.mxu0
        %1970 = vmatpush.bf16.msra.mxu0 %v1687
        %1971 = vmatpush.bf16.msra.mxu0 %v1685
        %1972 = vmatpush.bf16.msra.mxu0 %v1683
        %1973 = vmatpush.bf16.msra.mxu0 %v1681
        %1974 = vmatpush.bf16.msra.mxu0 %v1679
        %1975 = vmatpush.bf16.msra.mxu0 %v1677
        %1976 = vmatpush.bf16.msra.mxu0 %v1675
        %1977 = vmatpush.bf16.msra.mxu0 %v1673
        %1978 = vmatmul.bf16.gmra.mxu0 %v1160
        %v1979 = vpop.f32.mrf.mxu0
        %v1980 = vadd.f32 %v1961, %v1979
        %v1981 = vpop.f32.mrf.mxu0
        %v1982 = vadd.f32 %v1963, %v1981
        %1983 = vmatmul.bf16.gmra.mxu0 %v1169
        %v1984 = vpop.f32.mrf.mxu0
        %v1985 = vadd.f32 %v1966, %v1984
        %v1986 = vpop.f32.mrf.mxu0
        %v1987 = vadd.f32 %v1968, %v1986
        %1988 = vdwg.mxu0
        %1989 = vmatpush.bf16.msra.mxu0 %v1703
        %1990 = vmatpush.bf16.msra.mxu0 %v1701
        %1991 = vmatpush.bf16.msra.mxu0 %v1699
        %1992 = vmatpush.bf16.msra.mxu0 %v1697
        %1993 = vmatpush.bf16.msra.mxu0 %v1695
        %1994 = vmatpush.bf16.msra.mxu0 %v1693
        %1995 = vmatpush.bf16.msra.mxu0 %v1691
        %1996 = vmatpush.bf16.msra.mxu0 %v1689
        %1997 = vmatmul.bf16.gmra.mxu0 %v1161
        %v1998 = vpop.f32.mrf.mxu0
        %v1999 = vadd.f32 %v1980, %v1998
        %v2000 = vpop.f32.mrf.mxu0
        %v2001 = vadd.f32 %v1982, %v2000
        %2002 = vmatmul.bf16.gmra.mxu0 %v1170
        %v2003 = vpop.f32.mrf.mxu0
        %v2004 = vadd.f32 %v1985, %v2003
        %v2005 = vpop.f32.mrf.mxu0
        %v2006 = vadd.f32 %v1987, %v2005
        %2007 = vdwg.mxu0
        %2008 = vmatpush.bf16.msra.mxu0 %v1719
        %2009 = vmatpush.bf16.msra.mxu0 %v1717
        %2010 = vmatpush.bf16.msra.mxu0 %v1715
        %2011 = vmatpush.bf16.msra.mxu0 %v1713
        %2012 = vmatpush.bf16.msra.mxu0 %v1711
        %2013 = vmatpush.bf16.msra.mxu0 %v1709
        %2014 = vmatpush.bf16.msra.mxu0 %v1707
        %2015 = vmatpush.bf16.msra.mxu0 %v1705
        %2016 = vmatmul.bf16.gmra.mxu0 %v1162
        %v2017 = vpop.f32.mrf.mxu0
        %v2018 = vadd.f32 %v1999, %v2017
        %v2019 = vpop.f32.mrf.mxu0
        %v2020 = vadd.f32 %v2001, %v2019
        %2021 = vmatmul.bf16.gmra.mxu0 %v1171
        %v2022 = vpop.f32.mrf.mxu0
        %v2023 = vadd.f32 %v2004, %v2022
        %v2024 = vpop.f32.mrf.mxu0
        %v2025 = vadd.f32 %v2006, %v2024
        %2026 = vdwg.mxu0
        %2027 = vmatpush.bf16.msra.mxu0 %v1735
        %2028 = vmatpush.bf16.msra.mxu0 %v1733
        %2029 = vmatpush.bf16.msra.mxu0 %v1731
        %2030 = vmatpush.bf16.msra.mxu0 %v1729
        %2031 = vmatpush.bf16.msra.mxu0 %v1727
        %2032 = vmatpush.bf16.msra.mxu0 %v1725
        %2033 = vmatpush.bf16.msra.mxu0 %v1723
        %2034 = vmatpush.bf16.msra.mxu0 %v1721
        %2035 = vmatmul.bf16.gmra.mxu0 %v1163
        %v2036 = vpop.f32.mrf.mxu0
        %v2037 = vadd.f32 %v2018, %v2036
        %v2038 = vpop.f32.mrf.mxu0
        %v2039 = vadd.f32 %v2020, %v2038
        %2040 = vmatmul.bf16.gmra.mxu0 %v1172
        %v2041 = vpop.f32.mrf.mxu0
        %v2042 = vadd.f32 %v2023, %v2041
        %v2043 = vpop.f32.mrf.mxu0
        %v2044 = vadd.f32 %v2025, %v2043
        %2045 = vdwg.mxu0
        %2046 = vmatpush.bf16.msra.mxu0 %v1751
        %2047 = vmatpush.bf16.msra.mxu0 %v1749
        %2048 = vmatpush.bf16.msra.mxu0 %v1747
        %2049 = vmatpush.bf16.msra.mxu0 %v1745
        %2050 = vmatpush.bf16.msra.mxu0 %v1743
        %2051 = vmatpush.bf16.msra.mxu0 %v1741
        %2052 = vmatpush.bf16.msra.mxu0 %v1739
        %2053 = vmatpush.bf16.msra.mxu0 %v1737
        %2054 = vmatmul.bf16.gmra.mxu0 %v1164
        %v2055 = vpop.f32.mrf.mxu0
        %v2056 = vadd.f32 %v2037, %v2055
        %v2057 = vpop.f32.mrf.mxu0
        %v2058 = vadd.f32 %v2039, %v2057
        %2059 = vmatmul.bf16.gmra.mxu0 %v1173
        %v2060 = vpop.f32.mrf.mxu0
        %v2061 = vadd.f32 %v2042, %v2060
        %v2062 = vpop.f32.mrf.mxu0
        %v2063 = vadd.f32 %v2044, %v2062
        %2064 = vdwg.mxu0
        %2065 = vmatpush.bf16.msra.mxu0 %v1767
        %2066 = vmatpush.bf16.msra.mxu0 %v1765
        %2067 = vmatpush.bf16.msra.mxu0 %v1763
        %2068 = vmatpush.bf16.msra.mxu0 %v1761
        %2069 = vmatpush.bf16.msra.mxu0 %v1759
        %2070 = vmatpush.bf16.msra.mxu0 %v1757
        %2071 = vmatpush.bf16.msra.mxu0 %v1755
        %2072 = vmatpush.bf16.msra.mxu0 %v1753
        %2073 = vmatmul.bf16.gmra.mxu0 %v1165
        %v2074 = vpop.f32.mrf.mxu0
        %v2075 = vadd.f32 %v2056, %v2074
        %v2076 = vpop.f32.mrf.mxu0
        %v2077 = vadd.f32 %v2058, %v2076
        %2078 = vmatmul.bf16.gmra.mxu0 %v1174
        %v2079 = vpop.f32.mrf.mxu0
        %v2080 = vadd.f32 %v2061, %v2079
        %v2081 = vpop.f32.mrf.mxu0
        %v2082 = vadd.f32 %v2063, %v2081
        %2083 = vdwg.mxu0
        %2084 = vmatpush.bf16.msra.mxu0 %v1640
        %2085 = vmatpush.bf16.msra.mxu0 %v1638
        %2086 = vmatpush.bf16.msra.mxu0 %v1636
        %2087 = vmatpush.bf16.msra.mxu0 %v1634
        %2088 = vmatpush.bf16.msra.mxu0 %v1632
        %2089 = vmatpush.bf16.msra.mxu0 %v1630
        %2090 = vmatpush.bf16.msra.mxu0 %v1628
        %2091 = vmatpush.bf16.msra.mxu0 %v1626
        %2092 = vmatmul.bf16.gmra.mxu0 %v1157
        %v2093 = vpop.f32.mrf.mxu0
        %v2094 = vadd.f32 0.0, %v2093
        %v2095 = vpop.f32.mrf.mxu0
        %v2096 = vadd.f32 0.0, %v2095
        %2097 = vmatmul.bf16.gmra.mxu0 %v1166
        %v2098 = vpop.f32.mrf.mxu0
        %v2099 = vadd.f32 0.0, %v2098
        %v2100 = vpop.f32.mrf.mxu0
        %v2101 = vadd.f32 0.0, %v2100
        %2102 = vdwg.mxu0
        %2103 = vmatpush.bf16.msra.mxu0 %v1656
        %2104 = vmatpush.bf16.msra.mxu0 %v1654
        %2105 = vmatpush.bf16.msra.mxu0 %v1652
        %2106 = vmatpush.bf16.msra.mxu0 %v1650
        %2107 = vmatpush.bf16.msra.mxu0 %v1648
        %2108 = vmatpush.bf16.msra.mxu0 %v1646
        %2109 = vmatpush.bf16.msra.mxu0 %v1644
        %2110 = vmatpush.bf16.msra.mxu0 %v1642
        %2111 = vmatmul.bf16.gmra.mxu0 %v1158
        %v2112 = vpop.f32.mrf.mxu0
        %v2113 = vadd.f32 %v2094, %v2112
        %v2114 = vpop.f32.mrf.mxu0
        %v2115 = vadd.f32 %v2096, %v2114
        %2116 = vmatmul.bf16.gmra.mxu0 %v1167
        %v2117 = vpop.f32.mrf.mxu0
        %v2118 = vadd.f32 %v2099, %v2117
        %v2119 = vpop.f32.mrf.mxu0
        %v2120 = vadd.f32 %v2101, %v2119
        %2121 = vdwg.mxu0
        %2122 = vmatpush.bf16.msra.mxu0 %v1672
        %2123 = vmatpush.bf16.msra.mxu0 %v1670
        %2124 = vmatpush.bf16.msra.mxu0 %v1668
        %2125 = vmatpush.bf16.msra.mxu0 %v1666
        %2126 = vmatpush.bf16.msra.mxu0 %v1664
        %2127 = vmatpush.bf16.msra.mxu0 %v1662
        %2128 = vmatpush.bf16.msra.mxu0 %v1660
        %2129 = vmatpush.bf16.msra.mxu0 %v1658
        %2130 = vmatmul.bf16.gmra.mxu0 %v1159
        %v2131 = vpop.f32.mrf.mxu0
        %v2132 = vadd.f32 %v2113, %v2131
        %v2133 = vpop.f32.mrf.mxu0
        %v2134 = vadd.f32 %v2115, %v2133
        %2135 = vmatmul.bf16.gmra.mxu0 %v1168
        %v2136 = vpop.f32.mrf.mxu0
        %v2137 = vadd.f32 %v2118, %v2136
        %v2138 = vpop.f32.mrf.mxu0
        %v2139 = vadd.f32 %v2120, %v2138
        %2140 = vdwg.mxu0
        %2141 = vmatpush.bf16.msra.mxu0 %v1688
        %2142 = vmatpush.bf16.msra.mxu0 %v1686
        %2143 = vmatpush.bf16.msra.mxu0 %v1684
        %2144 = vmatpush.bf16.msra.mxu0 %v1682
        %2145 = vmatpush.bf16.msra.mxu0 %v1680
        %2146 = vmatpush.bf16.msra.mxu0 %v1678
        %2147 = vmatpush.bf16.msra.mxu0 %v1676
        %2148 = vmatpush.bf16.msra.mxu0 %v1674
        %2149 = vmatmul.bf16.gmra.mxu0 %v1160
        %v2150 = vpop.f32.mrf.mxu0
        %v2151 = vadd.f32 %v2132, %v2150
        %v2152 = vpop.f32.mrf.mxu0
        %v2153 = vadd.f32 %v2134, %v2152
        %2154 = vmatmul.bf16.gmra.mxu0 %v1169
        %v2155 = vpop.f32.mrf.mxu0
        %v2156 = vadd.f32 %v2137, %v2155
        %v2157 = vpop.f32.mrf.mxu0
        %v2158 = vadd.f32 %v2139, %v2157
        %2159 = vdwg.mxu0
        %2160 = vmatpush.bf16.msra.mxu0 %v1704
        %2161 = vmatpush.bf16.msra.mxu0 %v1702
        %2162 = vmatpush.bf16.msra.mxu0 %v1700
        %2163 = vmatpush.bf16.msra.mxu0 %v1698
        %2164 = vmatpush.bf16.msra.mxu0 %v1696
        %2165 = vmatpush.bf16.msra.mxu0 %v1694
        %2166 = vmatpush.bf16.msra.mxu0 %v1692
        %2167 = vmatpush.bf16.msra.mxu0 %v1690
        %2168 = vmatmul.bf16.gmra.mxu0 %v1161
        %v2169 = vpop.f32.mrf.mxu0
        %v2170 = vadd.f32 %v2151, %v2169
        %v2171 = vpop.f32.mrf.mxu0
        %v2172 = vadd.f32 %v2153, %v2171
        %2173 = vmatmul.bf16.gmra.mxu0 %v1170
        %v2174 = vpop.f32.mrf.mxu0
        %v2175 = vadd.f32 %v2156, %v2174
        %v2176 = vpop.f32.mrf.mxu0
        %v2177 = vadd.f32 %v2158, %v2176
        %2178 = vdwg.mxu0
        %2179 = vmatpush.bf16.msra.mxu0 %v1720
        %2180 = vmatpush.bf16.msra.mxu0 %v1718
        %2181 = vmatpush.bf16.msra.mxu0 %v1716
        %2182 = vmatpush.bf16.msra.mxu0 %v1714
        %2183 = vmatpush.bf16.msra.mxu0 %v1712
        %2184 = vmatpush.bf16.msra.mxu0 %v1710
        %2185 = vmatpush.bf16.msra.mxu0 %v1708
        %2186 = vmatpush.bf16.msra.mxu0 %v1706
        %2187 = vmatmul.bf16.gmra.mxu0 %v1162
        %v2188 = vpop.f32.mrf.mxu0
        %v2189 = vadd.f32 %v2170, %v2188
        %v2190 = vpop.f32.mrf.mxu0
        %v2191 = vadd.f32 %v2172, %v2190
        %2192 = vmatmul.bf16.gmra.mxu0 %v1171
        %v2193 = vpop.f32.mrf.mxu0
        %v2194 = vadd.f32 %v2175, %v2193
        %v2195 = vpop.f32.mrf.mxu0
        %v2196 = vadd.f32 %v2177, %v2195
        %2197 = vdwg.mxu0
        %2198 = vmatpush.bf16.msra.mxu0 %v1736
        %2199 = vmatpush.bf16.msra.mxu0 %v1734
        %2200 = vmatpush.bf16.msra.mxu0 %v1732
        %2201 = vmatpush.bf16.msra.mxu0 %v1730
        %2202 = vmatpush.bf16.msra.mxu0 %v1728
        %2203 = vmatpush.bf16.msra.mxu0 %v1726
        %2204 = vmatpush.bf16.msra.mxu0 %v1724
        %2205 = vmatpush.bf16.msra.mxu0 %v1722
        %2206 = vmatmul.bf16.gmra.mxu0 %v1163
        %v2207 = vpop.f32.mrf.mxu0
        %v2208 = vadd.f32 %v2189, %v2207
        %v2209 = vpop.f32.mrf.mxu0
        %v2210 = vadd.f32 %v2191, %v2209
        %2211 = vmatmul.bf16.gmra.mxu0 %v1172
        %v2212 = vpop.f32.mrf.mxu0
        %v2213 = vadd.f32 %v2194, %v2212
        %v2214 = vpop.f32.mrf.mxu0
        %v2215 = vadd.f32 %v2196, %v2214
        %2216 = vdwg.mxu0
        %2217 = vmatpush.bf16.msra.mxu0 %v1752
        %2218 = vmatpush.bf16.msra.mxu0 %v1750
        %2219 = vmatpush.bf16.msra.mxu0 %v1748
        %2220 = vmatpush.bf16.msra.mxu0 %v1746
        %2221 = vmatpush.bf16.msra.mxu0 %v1744
        %2222 = vmatpush.bf16.msra.mxu0 %v1742
        %2223 = vmatpush.bf16.msra.mxu0 %v1740
        %2224 = vmatpush.bf16.msra.mxu0 %v1738
        %2225 = vmatmul.bf16.gmra.mxu0 %v1164
        %v2226 = vpop.f32.mrf.mxu0
        %v2227 = vadd.f32 %v2208, %v2226
        %v2228 = vpop.f32.mrf.mxu0
        %v2229 = vadd.f32 %v2210, %v2228
        %2230 = vmatmul.bf16.gmra.mxu0 %v1173
        %v2231 = vpop.f32.mrf.mxu0
        %v2232 = vadd.f32 %v2213, %v2231
        %v2233 = vpop.f32.mrf.mxu0
        %v2234 = vadd.f32 %v2215, %v2233
        %2235 = vdwg.mxu0
        %2236 = vmatpush.bf16.msra.mxu0 %v1768
        %2237 = vmatpush.bf16.msra.mxu0 %v1766
        %2238 = vmatpush.bf16.msra.mxu0 %v1764
        %2239 = vmatpush.bf16.msra.mxu0 %v1762
        %2240 = vmatpush.bf16.msra.mxu0 %v1760
        %2241 = vmatpush.bf16.msra.mxu0 %v1758
        %2242 = vmatpush.bf16.msra.mxu0 %v1756
        %2243 = vmatpush.bf16.msra.mxu0 %v1754
        %2244 = vmatmul.bf16.gmra.mxu0 %v1165
        %v2245 = vpop.f32.mrf.mxu0
        %v2246 = vadd.f32 %v2227, %v2245
        %v2247 = vpop.f32.mrf.mxu0
        %v2248 = vadd.f32 %v2229, %v2247
        %2249 = vmatmul.bf16.gmra.mxu0 %v1174
        %v2250 = vpop.f32.mrf.mxu0
        %v2251 = vadd.f32 %v2232, %v2250
        %v2252 = vpop.f32.mrf.mxu0
        %v2253 = vadd.f32 %v2234, %v2252
        %2254 = vdwg.mxu0
        %v2255 = vadd.f32 %v929, %v2075
        %v2256 = vadd.f32 %v930, %v2246
        %v2257 = vadd.f32 %v931, %v2077
        %v2258 = vadd.f32 %v932, %v2248
        %v2259 = vadd.f32 %v933, %v2080
        %v2260 = vadd.f32 %v934, %v2251
        %v2261 = vadd.f32 %v935, %v2082
        %v2262 = vadd.f32 %v936, %v2253
        %2263 = vst [vmem:[#allocation2] sm:$0xff] %v2255
        %2264 = vst [vmem:[#allocation2 + $0x8] sm:$0xff] %v2256
        %2265 = vst [vmem:[#allocation2 + $0x10] sm:$0xff] %v2257
        %2266 = vst [vmem:[#allocation2 + $0x18] sm:$0xff] %v2258
        %2267 = vst [vmem:[#allocation2 + $0x20] sm:$0xff] %v2259
        %2268 = vst [vmem:[#allocation2 + $0x28] sm:$0xff] %v2260
        %2269 = vst [vmem:[#allocation2 + $0x30] sm:$0xff] %v2261
        %2270 = vst [vmem:[#allocation2 + $0x38] sm:$0xff] %v2262
        %p2271 = scmp.eq.s32.totalorder %s21, 1
        // Predicated region
        $region101: #{flownet_encoder_forward.9} parent=87 // pred_check
          %p2272 = pneg %p2271
        $region102: #{flownet_encoder_forward.9} parent=87 // pred_check_branch
          %2274 = sbr.rel (%p2272) target = $region104
        $region103: #{flownet_encoder_forward.9} parent=87 // pred_region
          %v2275 = vld [vmem:[#allocation2] sm:$0xff]
          %v2276 = vld [vmem:[#allocation2 + $0x8] sm:$0xff]
          %v2277 = vld [vmem:[#allocation2 + $0x10] sm:$0xff]
          %v2278 = vld [vmem:[#allocation2 + $0x18] sm:$0xff]
          %v2279 = vld [vmem:[#allocation2 + $0x20] sm:$0xff]
          %v2280 = vld [vmem:[#allocation2 + $0x28] sm:$0xff]
          %v2281 = vld [vmem:[#allocation2 + $0x30] sm:$0xff]
          %v2282 = vld [vmem:[#allocation2 + $0x38] sm:$0xff]
          %v2283 = vld [vmem:[%s913] sm:$0x3]
          %v2285 = vperm.slane %v2283, 0
          %v2286 = vperm.slane %v2283, 1
          %v2289 = vadd.f32 %v2275, %v2285
          %v2290 = vadd.f32 %v2276, %v2286
          %v2291 = vadd.f32 %v2277, %v2285
          %v2292 = vadd.f32 %v2278, %v2286
          %v2293 = vadd.f32 %v2279, %v2285
          %v2294 = vadd.f32 %v2280, %v2286
          %v2295 = vadd.f32 %v2281, %v2285
          %v2296 = vadd.f32 %v2282, %v2286
          %vm2297 = vcmp.gt.f32.partialorder %v2289, 0.0
          %vm2298 = vcmp.gt.f32.partialorder %v2290, 0.0
          %vm2299 = vcmp.gt.f32.partialorder %v2291, 0.0
          %vm2300 = vcmp.gt.f32.partialorder %v2292, 0.0
          %vm2301 = vcmp.gt.f32.partialorder %v2293, 0.0
          %vm2302 = vcmp.gt.f32.partialorder %v2294, 0.0
          %vm2303 = vcmp.gt.f32.partialorder %v2295, 0.0
          %vm2304 = vcmp.gt.f32.partialorder %v2296, 0.0
          %v2305 = vmul.f32 %v2289, 0.01
          %v2306 = vmul.f32 %v2290, 0.01
          %v2307 = vmul.f32 %v2291, 0.01
          %v2308 = vmul.f32 %v2292, 0.01
          %v2309 = vmul.f32 %v2293, 0.01
          %v2310 = vmul.f32 %v2294, 0.01
          %v2311 = vmul.f32 %v2295, 0.01
          %v2312 = vmul.f32 %v2296, 0.01
          %v2313 = vsel %vm2297, %v2289, %v2305
          %v2314 = vsel %vm2298, %v2290, %v2306
          %v2315 = vsel %vm2299, %v2291, %v2307
          %v2316 = vsel %vm2300, %v2292, %v2308
          %v2317 = vsel %vm2301, %v2293, %v2309
          %v2318 = vsel %vm2302, %v2294, %v2310
          %v2319 = vsel %vm2303, %v2295, %v2311
          %v2320 = vsel %vm2304, %v2296, %v2312
          %2321 = vst [vmem:[%s905] sm:$0xff] %v2313
          %2322 = vst [vmem:[%s905 + $0x8] sm:$0xff] %v2314
          %2323 = vst [vmem:[%s905 + $0x10] sm:$0xff] %v2315
          %2324 = vst [vmem:[%s905 + $0x18] sm:$0xff] %v2316
          %2325 = vst [vmem:[%s905 + $0x20] sm:$0xff] %v2317
          %2326 = vst [vmem:[%s905 + $0x28] sm:$0xff] %v2318
          %2327 = vst [vmem:[%s905 + $0x30] sm:$0xff] %v2319
          %2328 = vst [vmem:[%s905 + $0x38] sm:$0xff] %v2320
        $region104: #{flownet_encoder_forward.9} parent=87 // pred_fallthru
          _
        %s2329 = sand.u32 %s125, 1
        %s2330 = sand.u32 %s125, 1
        %s2331 = smul.addr %s2330, 64
        %s2332 = scalar_lea.vmem [#allocation5], %s2331
        // Predicated region
        $region105: #{flownet_encoder_forward.9} parent=87 // pred_check
          %p2333 = pneg %p135
        $region106: #{flownet_encoder_forward.9} parent=87 // pred_check_branch
          %2335 = sbr.rel (%p2333) target = $region108
        $region107: #{flownet_encoder_forward.9} parent=87 // pred_region
          %s2336 = smul.u32 4, %s19
          %s2337 = smul.u32 2, %s20
          %s2338 = smul.addr %s2336, 4
          %s2339 = sadd.s32 %s2337, %s2338
          %s2340 = smul.addr %s2339, 8
          %s2341 = scalar_lea.vmem %s3, %s2340
          // Predicated region
          $region109: #{flownet_encoder_forward.9} parent=107 // pred_check
            _
          $region110: #{flownet_encoder_forward.9} parent=107 // pred_check_branch
            %2343 = sbr.rel (0) target = $region112
          $region111: #{flownet_encoder_forward.9} parent=107 // pred_region
            // Predicated region
            $region113: #{flownet_encoder_forward.9} parent=111 // pred_check
              _
            $region114: #{flownet_encoder_forward.9} parent=111 // pred_check_branch
              %2345 = sbr.rel (0) target = $region116
            $region115: #{flownet_encoder_forward.9} parent=111 // pred_region
              loop: start=0, step=1, limit=1
              $region117: #{flownet_encoder_forward.9} parent=115 // loop_pre_header
                _
              $region118: #{flownet_encoder_forward.9} parent=115 // loop_header
                %s2347 = sphi 0, %s2351
                %p2348 = scmp.ge.s32.totalorder %s2347, 1
                %s2352 = sphi %s2332, %s2332
                %s2353 = sphi %s2341, %s2341
              $region119: #{flownet_encoder_forward.9} parent=115 // loop_header_branch
                %2350 = sbr.rel (%p2348) target = $region123
              $region120: #{flownet_encoder_forward.9} parent=115 // loop_body
                %v2354 = vld [vmem:[%s2352] sm:$0xff]
                %2355 = vst [vmem:[%s2353] sm:$0xff] %v2354
                %v2356 = vld [vmem:[%s2352 + $0x8] sm:$0xff]
                %2357 = vst [vmem:[%s2353 + $0x8] sm:$0xff] %v2356
                %v2358 = vld [vmem:[%s2352 + $0x10] sm:$0xff]
                %2359 = vst [vmem:[%s2353 + $0x20] sm:$0xff] %v2358
                %v2360 = vld [vmem:[%s2352 + $0x18] sm:$0xff]
                %2361 = vst [vmem:[%s2353 + $0x28] sm:$0xff] %v2360
                %v2362 = vld [vmem:[%s2352 + $0x20] sm:$0xff]
                %2363 = vst [vmem:[%s2353 + $0x40] sm:$0xff] %v2362
                %v2364 = vld [vmem:[%s2352 + $0x28] sm:$0xff]
                %2365 = vst [vmem:[%s2353 + $0x48] sm:$0xff] %v2364
                %v2366 = vld [vmem:[%s2352 + $0x30] sm:$0xff]
                %2367 = vst [vmem:[%s2353 + $0x60] sm:$0xff] %v2366
                %v2368 = vld [vmem:[%s2352 + $0x38] sm:$0xff]
                %2369 = vst [vmem:[%s2353 + $0x68] sm:$0xff] %v2368
              $region121: #{flownet_encoder_forward.9} parent=115 // loop_footer
                %s2351 = sadd.s32 1, %s2347
              $region122: #{flownet_encoder_forward.9} parent=115 // loop_footer_branch
                %2346 = sbr.rel target = $region118
              $region123: #{flownet_encoder_forward.9} parent=115 // loop_exit
                _
            $region116: #{flownet_encoder_forward.9} parent=111 // pred_fallthru
              _
            // Predicated region
            $region124: #{flownet_encoder_forward.9} parent=111 // pred_check
              _
            $region125: #{flownet_encoder_forward.9} parent=111 // pred_check_branch
              %2371 = sbr.rel target = $region127
            $region126: #{flownet_encoder_forward.9} parent=111 // pred_region
              _
            $region127: #{flownet_encoder_forward.9} parent=111 // pred_fallthru
              _
          $region112: #{flownet_encoder_forward.9} parent=107 // pred_fallthru
            _
          %2372 = vnop
        $region108: #{flownet_encoder_forward.9} parent=87 // pred_fallthru
          _
      $region88: #{flownet_encoder_forward.9} parent=5 // pred_fallthru
        _
      %p2373 = scmp.le.s32.totalorder 2, %s9
      // Predicated region
      $region128: #{flownet_encoder_forward.9} parent=5 // pred_check
        %p2374 = pneg %p2373
      $region129: #{flownet_encoder_forward.9} parent=5 // pred_check_branch
        %2376 = sbr.rel (%p2374) target = $region131
      $region130: #{flownet_encoder_forward.9} parent=5 // pred_region
        %s2377 = ssub.s32 %s9, 2
        // Predicated region
        $region132: #{flownet_encoder_forward.9} parent=130 // pred_check
          %p2378 = pneg %p141
        $region133: #{flownet_encoder_forward.9} parent=130 // pred_check_branch
          %2380 = sbr.rel (%p2378) target = $region135
        $region134: #{flownet_encoder_forward.9} parent=130 // pred_region
          %s2381 = sand.u32 %s126, 1
          %s2382 = sand.u32 %s126, 1
          %s2383 = smul.addr %s2382, 64
          %s2384 = scalar_lea.vmem [#allocation5], %s2383
        $region135: #{flownet_encoder_forward.9} parent=130 // pred_fallthru
          _
      $region131: #{flownet_encoder_forward.9} parent=5 // pred_fallthru
        _
    $region6: #{flownet_encoder_forward.9} parent=1 // loop_footer
      %s13 = sadd.s32 1, %s9
    $region7: #{flownet_encoder_forward.9} parent=1 // loop_footer_branch
      %8 = sbr.rel target = $region3
    $region8: #{flownet_encoder_forward.9} parent=1 // loop_exit
      _

// kernel: flownet_encoder_forward.10
$region0: #{flownet_encoder_forward.10}
  #allocation0 [shape = 'u32[]', space=smem, size = 0x4, offset = 0x4, fixed_abs, tag = 'smem constant byte address 0x4 - core index']
  #allocation1 [shape = 'u32[72,128]{1,0:T(1,128)}', space=vmem, size = 0x9000, scoped, tag = 'internal scratch']
  #allocation2 [shape = 'f32[8,256]{1,0:T(8,128)}', space=vmem, size = 0x2000, scoped, tag = 'scratch operand']
  %s0 = inlined_call_operand.vmem [shape: bf16[8,4608], index: 0, kind: input, shape index: {}]
  %s1 = inlined_call_operand.vmem [shape: bf16[4608,512], index: 1, kind: input, shape index: {}]
  %s2 = inlined_call_operand.vmem [shape: f32[1,512], index: 2, kind: input, shape index: {}]
  %s3 = inlined_call_operand.vmem [shape: f32[8,512], index: 3, kind: output, shape index: {}]
  %s4 = sld [smem:[#allocation0]]
  $region91: #{flownet_encoder_forward.10} parent=0
    _
  %s6 = ssub.s32 1, %s4
  %s7 = scalar_select 0, %s6, %s4
  $region1: #{flownet_encoder_forward.10} parent=0
    #allocation3 [shape = 'u8[1572864]{0}', space=vmem, size = 0x180000, scoped, tag = 'input window, operand 1']
    loop: start=0, step=1, limit=8
    $region2: #{flownet_encoder_forward.10} parent=1 // loop_pre_header
      _
    $region3: #{flownet_encoder_forward.10} parent=1 // loop_header
      %s9 = sphi 0, %s13
      %p10 = scmp.ge.s32.totalorder %s9, 8
      %s16 = sphi 0, %s35
      %s17 = sphi 0, %s31
      %s18 = sphi 0, %s27
      %s19 = sphi 0, %s16
      %s20 = sphi 0, %s17
      %s21 = sphi 0, %s18
      %s22 = sphi 0, %s19
      %s23 = sphi 0, %s20
      %s24 = sphi 0, %s21
      %s40 = sphi 0, %s42
      %s43 = sphi 0, %s40
      %s44 = sphi 0, %s43
      %s60 = sphi 0, %s44
      %s68 = sphi 0, %s70
      %s71 = sphi 0, %s68
      %s72 = sphi 0, %s71
      %s88 = sphi 0, %s72
      %s94 = sphi 0, %s96
      %s97 = sphi 0, %s94
      %s98 = sphi 0, %s97
      %s114 = sphi 0, %s98
      %s122 = sphi 0, %s124
      %s125 = sphi 0, %s122
      %s126 = sphi 0, %s125
      %s142 = sphi 0, %s126
    $region4: #{flownet_encoder_forward.10} parent=1 // loop_header_branch
      %12 = sbr.rel (%p10) target = $region8
    $region5: #{flownet_encoder_forward.10} parent=1 // loop_body
      %s14 = ssub.s32 %s9, 1
      %s15 = ssub.s32 %s9, 2
      %s25 = sadd.s32 1, %s18
      %p26 = scmp.ge.s32.totalorder %s25, 3
      %s27 = scalar_select %p26, 0, %s25
      %s28 = sadd.s32 1, %s17
      %s29 = scalar_select %p26, %s28, %s17
      %p30 = scmp.ge.s32.totalorder %s29, 2
      %s31 = scalar_select %p30, 0, %s29
      %s32 = sadd.s32 1, %s16
      %s33 = scalar_select %p30, %s32, %s16
      %p34 = scmp.ge.s32.totalorder %s33, 1
      %s35 = scalar_select %p34, 0, %s33
      %s36 = ssub.s32 %s16, %s35
      %s37 = ssub.s32 %s18, %s27
      %s38 = sor.u32 %s36, %s37
      %p39 = scmp.eq.s32.totalorder %s38, 0
      %s41 = sadd.s32 %s40, 1
      %s42 = scalar_select %p39, %s40, %s41
      %p45 = pneg %p39
      %p46 = scmp.eq.s32.totalorder %s9, 5
      %p47 = por %p45, %p46
      %p48 = scmp.ne.s32.totalorder %s40, %s43
      %p49 = scmp.eq.s32.totalorder %s9, 0
      %p50 = por %p48, %p49
      %p51 = scmp.ne.s32.totalorder %s40, %s43
      %p52 = scmp.eq.s32.totalorder %s14, 5
      %p53 = por %p51, %p52
      %p54 = scmp.ne.s32.totalorder %s43, %s44
      %p55 = scmp.eq.s32.totalorder %s14, 0
      %p56 = por %p54, %p55
      %p57 = scmp.ne.s32.totalorder %s43, %s44
      %p58 = scmp.eq.s32.totalorder %s15, 5
      %p59 = por %p57, %p58
      %p61 = scmp.ne.s32.totalorder %s44, %s60
      %p62 = scmp.eq.s32.totalorder %s15, 0
      %p63 = por %p61, %p62
      %s64 = ssub.s32 %s18, %s27
      %s65 = ssub.s32 %s17, %s31
      %s66 = sor.u32 %s64, %s65
      %p67 = scmp.eq.s32.totalorder %s66, 0
      %s69 = sadd.s32 %s68, 1
      %s70 = scalar_select %p67, %s68, %s69
      %p73 = pneg %p67
      %p74 = scmp.eq.s32.totalorder %s9, 5
      %p75 = por %p73, %p74
      %p76 = scmp.ne.s32.totalorder %s68, %s71
      %p77 = scmp.eq.s32.totalorder %s9, 0
      %p78 = por %p76, %p77
      %p79 = scmp.ne.s32.totalorder %s68, %s71
      %p80 = scmp.eq.s32.totalorder %s14, 5
      %p81 = por %p79, %p80
      %p82 = scmp.ne.s32.totalorder %s71, %s72
      %p83 = scmp.eq.s32.totalorder %s14, 0
      %p84 = por %p82, %p83
      %p85 = scmp.ne.s32.totalorder %s71, %s72
      %p86 = scmp.eq.s32.totalorder %s15, 5
      %p87 = por %p85, %p86
      %p89 = scmp.ne.s32.totalorder %s72, %s88
      %p90 = scmp.eq.s32.totalorder %s15, 0
      %p91 = por %p89, %p90
      %s92 = ssub.s32 %s17, %s31
      %p93 = scmp.eq.s32.totalorder %s92, 0
      %s95 = sadd.s32 %s94, 1
      %s96 = scalar_select %p93, %s94, %s95
      %p99 = pneg %p93
      %p100 = scmp.eq.s32.totalorder %s9, 5
      %p101 = por %p99, %p100
      %p102 = scmp.ne.s32.totalorder %s94, %s97
      %p103 = scmp.eq.s32.totalorder %s9, 0
      %p104 = por %p102, %p103
      %p105 = scmp.ne.s32.totalorder %s94, %s97
      %p106 = scmp.eq.s32.totalorder %s14, 5
      %p107 = por %p105, %p106
      %p108 = scmp.ne.s32.totalorder %s97, %s98
      %p109 = scmp.eq.s32.totalorder %s14, 0
      %p110 = por %p108, %p109
      %p111 = scmp.ne.s32.totalorder %s97, %s98
      %p112 = scmp.eq.s32.totalorder %s15, 5
      %p113 = por %p111, %p112
      %p115 = scmp.ne.s32.totalorder %s98, %s114
      %p116 = scmp.eq.s32.totalorder %s15, 0
      %p117 = por %p115, %p116
      %s118 = ssub.s32 %s16, %s35
      %s119 = ssub.s32 %s17, %s31
      %s120 = sor.u32 %s118, %s119
      %p121 = scmp.eq.s32.totalorder %s120, 0
      %s123 = sadd.s32 %s122, 1
      %s124 = scalar_select %p121, %s122, %s123
      %p127 = pneg %p121
      %p128 = scmp.eq.s32.totalorder %s9, 5
      %p129 = por %p127, %p128
      %p130 = scmp.ne.s32.totalorder %s122, %s125
      %p131 = scmp.eq.s32.totalorder %s9, 0
      %p132 = por %p130, %p131
      %p133 = scmp.ne.s32.totalorder %s122, %s125
      %p134 = scmp.eq.s32.totalorder %s14, 5
      %p135 = por %p133, %p134
      %p136 = scmp.ne.s32.totalorder %s125, %s126
      %p137 = scmp.eq.s32.totalorder %s14, 0
      %p138 = por %p136, %p137
      %p139 = scmp.ne.s32.totalorder %s125, %s126
      %p140 = scmp.eq.s32.totalorder %s15, 5
      %p141 = por %p139, %p140
      %p143 = scmp.ne.s32.totalorder %s126, %s142
      %p144 = scmp.eq.s32.totalorder %s15, 0
      %p145 = por %p143, %p144
      %p146 = scmp.le.s32.totalorder 1, %s9
      %p147 = scmp.lt.s32.totalorder %s9, 7
      %p148 = pnand %p146, %p147
      %p149 = pneg %p148
      // Predicated region
      $region9: #{flownet_encoder_forward.10} parent=5 // pred_check
        _
      $region10: #{flownet_encoder_forward.10} parent=5 // pred_check_branch
        %151 = sbr.rel (%p148) target = $region12
      $region11: #{flownet_encoder_forward.10} parent=5 // pred_region
        %s152 = ssub.s32 %s9, 1
      $region12: #{flownet_encoder_forward.10} parent=5 // pred_fallthru
        _
      %p153 = scmp.lt.s32.totalorder %s9, 6
      // Predicated region
      $region13: #{flownet_encoder_forward.10} parent=5 // pred_check
        %p154 = pneg %p153
      $region14: #{flownet_encoder_forward.10} parent=5 // pred_check_branch
        %156 = sbr.rel (%p154) target = $region16
      $region15: #{flownet_encoder_forward.10} parent=5 // pred_region
        // Predicated region
        $region17: #{flownet_encoder_forward.10} parent=15 // pred_check
          %p157 = pneg %p50
        $region18: #{flownet_encoder_forward.10} parent=15 // pred_check_branch
          %159 = sbr.rel (%p157) target = $region20
        $region19: #{flownet_encoder_forward.10} parent=15 // pred_region
          %s160 = smul.u32 12, %s18
          %p161 = scmp.lt.s32.totalorder %s16, 0
          %s162 = scalar_select %p161, %s16, 0
          %p163 = scmp.lt.s32.totalorder %s160, 35
          %s164 = scalar_select %p163, %s160, 35
          %s165 = smul.addr %s162, 36
          %s166 = sadd.s32 %s164, %s165
          %s167 = smul.addr %s166, 4
          %s168 = scalar_lea.vmem %s0, %s167
          %s169 = smul.u32 12, %s18
        $region20: #{flownet_encoder_forward.10} parent=15 // pred_fallthru
          _
        // Predicated region
        $region21: #{flownet_encoder_forward.10} parent=15 // pred_check
          %p170 = pneg %p78
        $region22: #{flownet_encoder_forward.10} parent=15 // pred_check_branch
          %172 = sbr.rel (%p170) target = $region24
        $region23: #{flownet_encoder_forward.10} parent=15 // pred_region
          %s173 = sand.u32 %s68, 1
          %s174 = sand.u32 %s68, 1
          %s175 = smul.addr %s174, 1536
          %s176 = scalar_lea.vmem [#allocation3], %s175
          %s177 = smul.u32 192, %s18
          %s178 = smul.u32 2, %s17
          %s179 = smul.addr %s177, 4
          %s180 = sadd.s32 %s178, %s179
          %s181 = smul.addr %s180, 4
          %s182 = scalar_lea.vmem %s1, %s181
          // Predicated region
          $region25: #{flownet_encoder_forward.10} parent=23 // pred_check
            _
          $region26: #{flownet_encoder_forward.10} parent=23 // pred_check_branch
            %184 = sbr.rel (0) target = $region28
          $region27: #{flownet_encoder_forward.10} parent=23 // pred_region
            // Predicated region
            $region29: #{flownet_encoder_forward.10} parent=27 // pred_check
              _
            $region30: #{flownet_encoder_forward.10} parent=27 // pred_check_branch
              %186 = sbr.rel (0) target = $region32
            $region31: #{flownet_encoder_forward.10} parent=27 // pred_region
              // Predicated region
              $region44: #{flownet_encoder_forward.10} parent=31 // pred_check
                _
              $region45: #{flownet_encoder_forward.10} parent=31 // pred_check_branch
                %584 = sbr.rel (0) target = $region47
              $region46: #{flownet_encoder_forward.10} parent=31 // pred_region
                loop: start=0, step=1, limit=1
                $region48: #{flownet_encoder_forward.10} parent=46 // loop_pre_header
                  _
                $region49: #{flownet_encoder_forward.10} parent=46 // loop_header
                  %s586 = sphi 0, %s590
                  %p587 = scmp.ge.s32.totalorder %s586, 1
                  %s591 = sphi %s182, %s182
                  %s592 = sphi %s176, %s176
                $region50: #{flownet_encoder_forward.10} parent=46 // loop_header_branch
                  %589 = sbr.rel (%p587) target = $region54
                $region51: #{flownet_encoder_forward.10} parent=46 // loop_body
                  %v593 = vld [vmem:[%s591] sm:$0xff]
                  %594 = vst [vmem:[%s592] sm:$0xff] %v593
                  %v595 = vld [vmem:[%s591 + $0x10] sm:$0xff]
                  %596 = vst [vmem:[%s592 + $0x8] sm:$0xff] %v595
                  %v597 = vld [vmem:[%s591 + $0x20] sm:$0xff]
                  %598 = vst [vmem:[%s592 + $0x10] sm:$0xff] %v597
                  %v599 = vld [vmem:[%s591 + $0x30] sm:$0xff]
                  %600 = vst [vmem:[%s592 + $0x18] sm:$0xff] %v599
                  %v601 = vld [vmem:[%s591 + $0x40] sm:$0xff]
                  %602 = vst [vmem:[%s592 + $0x20] sm:$0xff] %v601
                  %v603 = vld [vmem:[%s591 + $0x50] sm:$0xff]
                  %604 = vst [vmem:[%s592 + $0x28] sm:$0xff] %v603
                  %v605 = vld [vmem:[%s591 + $0x60] sm:$0xff]
                  %606 = vst [vmem:[%s592 + $0x30] sm:$0xff] %v605
                  %v607 = vld [vmem:[%s591 + $0x70] sm:$0xff]
                  %608 = vst [vmem:[%s592 + $0x38] sm:$0xff] %v607
                  %v609 = vld [vmem:[%s591 + $0x80] sm:$0xff]
                  %610 = vst [vmem:[%s592 + $0x40] sm:$0xff] %v609
                  %v611 = vld [vmem:[%s591 + $0x90] sm:$0xff]
                  %612 = vst [vmem:[%s592 + $0x48] sm:$0xff] %v611
                  %v613 = vld [vmem:[%s591 + $0xa0] sm:$0xff]
                  %614 = vst [vmem:[%s592 + $0x50] sm:$0xff] %v613
                  %v615 = vld [vmem:[%s591 + $0xb0] sm:$0xff]
                  %616 = vst [vmem:[%s592 + $0x58] sm:$0xff] %v615
                  %v617 = vld [vmem:[%s591 + $0xc0] sm:$0xff]
                  %618 = vst [vmem:[%s592 + $0x60] sm:$0xff] %v617
                  %v619 = vld [vmem:[%s591 + $0xd0] sm:$0xff]
                  %620 = vst [vmem:[%s592 + $0x68] sm:$0xff] %v619
                  %v621 = vld [vmem:[%s591 + $0xe0] sm:$0xff]
                  %622 = vst [vmem:[%s592 + $0x70] sm:$0xff] %v621
                  %v623 = vld [vmem:[%s591 + $0xf0] sm:$0xff]
                  %624 = vst [vmem:[%s592 + $0x78] sm:$0xff] %v623
                  %v625 = vld [vmem:[%s591 + $0x100] sm:$0xff]
                  %626 = vst [vmem:[%s592 + $0x80] sm:$0xff] %v625
                  %v627 = vld [vmem:[%s591 + $0x110] sm:$0xff]
                  %628 = vst [vmem:[%s592 + $0x88] sm:$0xff] %v627
                  %v629 = vld [vmem:[%s591 + $0x120] sm:$0xff]
                  %630 = vst [vmem:[%s592 + $0x90] sm:$0xff] %v629
                  %v631 = vld [vmem:[%s591 + $0x130] sm:$0xff]
                  %632 = vst [vmem:[%s592 + $0x98] sm:$0xff] %v631
                  %v633 = vld [vmem:[%s591 + $0x140] sm:$0xff]
                  %634 = vst [vmem:[%s592 + $0xa0] sm:$0xff] %v633
                  %v635 = vld [vmem:[%s591 + $0x150] sm:$0xff]
                  %636 = vst [vmem:[%s592 + $0xa8] sm:$0xff] %v635
                  %v637 = vld [vmem:[%s591 + $0x160] sm:$0xff]
                  %638 = vst [vmem:[%s592 + $0xb0] sm:$0xff] %v637
                  %v639 = vld [vmem:[%s591 + $0x170] sm:$0xff]
                  %640 = vst [vmem:[%s592 + $0xb8] sm:$0xff] %v639
                  %v641 = vld [vmem:[%s591 + $0x180] sm:$0xff]
                  %642 = vst [vmem:[%s592 + $0xc0] sm:$0xff] %v641
                  %v643 = vld [vmem:[%s591 + $0x190] sm:$0xff]
                  %644 = vst [vmem:[%s592 + $0xc8] sm:$0xff] %v643
                  %v645 = vld [vmem:[%s591 + $0x1a0] sm:$0xff]
                  %646 = vst [vmem:[%s592 + $0xd0] sm:$0xff] %v645
                  %v647 = vld [vmem:[%s591 + $0x1b0] sm:$0xff]
                  %648 = vst [vmem:[%s592 + $0xd8] sm:$0xff] %v647
                  %v649 = vld [vmem:[%s591 + $0x1c0] sm:$0xff]
                  %650 = vst [vmem:[%s592 + $0xe0] sm:$0xff] %v649
                  %v651 = vld [vmem:[%s591 + $0x1d0] sm:$0xff]
                  %652 = vst [vmem:[%s592 + $0xe8] sm:$0xff] %v651
                  %v653 = vld [vmem:[%s591 + $0x1e0] sm:$0xff]
                  %654 = vst [vmem:[%s592 + $0xf0] sm:$0xff] %v653
                  %v655 = vld [vmem:[%s591 + $0x1f0] sm:$0xff]
                  %656 = vst [vmem:[%s592 + $0xf8] sm:$0xff] %v655
                  %v657 = vld [vmem:[%s591 + $0x200] sm:$0xff]
                  %658 = vst [vmem:[%s592 + $0x100] sm:$0xff] %v657
                  %v659 = vld [vmem:[%s591 + $0x210] sm:$0xff]
                  %660 = vst [vmem:[%s592 + $0x108] sm:$0xff] %v659
                  %v661 = vld [vmem:[%s591 + $0x220] sm:$0xff]
                  %662 = vst [vmem:[%s592 + $0x110] sm:$0xff] %v661
                  %v663 = vld [vmem:[%s591 + $0x230] sm:$0xff]
                  %664 = vst [vmem:[%s592 + $0x118] sm:$0xff] %v663
                  %v665 = vld [vmem:[%s591 + $0x240] sm:$0xff]
                  %666 = vst [vmem:[%s592 + $0x120] sm:$0xff] %v665
                  %v667 = vld [vmem:[%s591 + $0x250] sm:$0xff]
                  %668 = vst [vmem:[%s592 + $0x128] sm:$0xff] %v667
                  %v669 = vld [vmem:[%s591 + $0x260] sm:$0xff]
                  %670 = vst [vmem:[%s592 + $0x130] sm:$0xff] %v669
                  %v671 = vld [vmem:[%s591 + $0x270] sm:$0xff]
                  %672 = vst [vmem:[%s592 + $0x138] sm:$0xff] %v671
                  %v673 = vld [vmem:[%s591 + $0x280] sm:$0xff]
                  %674 = vst [vmem:[%s592 + $0x140] sm:$0xff] %v673
                  %v675 = vld [vmem:[%s591 + $0x290] sm:$0xff]
                  %676 = vst [vmem:[%s592 + $0x148] sm:$0xff] %v675
                  %v677 = vld [vmem:[%s591 + $0x2a0] sm:$0xff]
                  %678 = vst [vmem:[%s592 + $0x150] sm:$0xff] %v677
                  %v679 = vld [vmem:[%s591 + $0x2b0] sm:$0xff]
                  %680 = vst [vmem:[%s592 + $0x158] sm:$0xff] %v679
                  %v681 = vld [vmem:[%s591 + $0x2c0] sm:$0xff]
                  %682 = vst [vmem:[%s592 + $0x160] sm:$0xff] %v681
                  %v683 = vld [vmem:[%s591 + $0x2d0] sm:$0xff]
                  %684 = vst [vmem:[%s592 + $0x168] sm:$0xff] %v683
                  %v685 = vld [vmem:[%s591 + $0x2e0] sm:$0xff]
                  %686 = vst [vmem:[%s592 + $0x170] sm:$0xff] %v685
                  %v687 = vld [vmem:[%s591 + $0x2f0] sm:$0xff]
                  %688 = vst [vmem:[%s592 + $0x178] sm:$0xff] %v687
                  %v689 = vld [vmem:[%s591 + $0x300] sm:$0xff]
                  %690 = vst [vmem:[%s592 + $0x180] sm:$0xff] %v689
                  %v691 = vld [vmem:[%s591 + $0x310] sm:$0xff]
                  %692 = vst [vmem:[%s592 + $0x188] sm:$0xff] %v691
                  %v693 = vld [vmem:[%s591 + $0x320] sm:$0xff]
                  %694 = vst [vmem:[%s592 + $0x190] sm:$0xff] %v693
                  %v695 = vld [vmem:[%s591 + $0x330] sm:$0xff]
                  %696 = vst [vmem:[%s592 + $0x198] sm:$0xff] %v695
                  %v697 = vld [vmem:[%s591 + $0x340] sm:$0xff]
                  %698 = vst [vmem:[%s592 + $0x1a0] sm:$0xff] %v697
                  %v699 = vld [vmem:[%s591 + $0x350] sm:$0xff]
                  %700 = vst [vmem:[%s592 + $0x1a8] sm:$0xff] %v699
                  %v701 = vld [vmem:[%s591 + $0x360] sm:$0xff]
                  %702 = vst [vmem:[%s592 + $0x1b0] sm:$0xff] %v701
                  %v703 = vld [vmem:[%s591 + $0x370] sm:$0xff]
                  %704 = vst [vmem:[%s592 + $0x1b8] sm:$0xff] %v703
                  %v705 = vld [vmem:[%s591 + $0x380] sm:$0xff]
                  %706 = vst [vmem:[%s592 + $0x1c0] sm:$0xff] %v705
                  %v707 = vld [vmem:[%s591 + $0x390] sm:$0xff]
                  %708 = vst [vmem:[%s592 + $0x1c8] sm:$0xff] %v707
                  %v709 = vld [vmem:[%s591 + $0x3a0] sm:$0xff]
                  %710 = vst [vmem:[%s592 + $0x1d0] sm:$0xff] %v709
                  %v711 = vld [vmem:[%s591 + $0x3b0] sm:$0xff]
                  %712 = vst [vmem:[%s592 + $0x1d8] sm:$0xff] %v711
                  %v713 = vld [vmem:[%s591 + $0x3c0] sm:$0xff]
                  %714 = vst [vmem:[%s592 + $0x1e0] sm:$0xff] %v713
                  %v715 = vld [vmem:[%s591 + $0x3d0] sm:$0xff]
                  %716 = vst [vmem:[%s592 + $0x1e8] sm:$0xff] %v715
                  %v717 = vld [vmem:[%s591 + $0x3e0] sm:$0xff]
                  %718 = vst [vmem:[%s592 + $0x1f0] sm:$0xff] %v717
                  %v719 = vld [vmem:[%s591 + $0x3f0] sm:$0xff]
                  %720 = vst [vmem:[%s592 + $0x1f8] sm:$0xff] %v719
                  %v721 = vld [vmem:[%s591 + $0x400] sm:$0xff]
                  %722 = vst [vmem:[%s592 + $0x200] sm:$0xff] %v721
                  %v723 = vld [vmem:[%s591 + $0x410] sm:$0xff]
                  %724 = vst [vmem:[%s592 + $0x208] sm:$0xff] %v723
                  %v725 = vld [vmem:[%s591 + $0x420] sm:$0xff]
                  %726 = vst [vmem:[%s592 + $0x210] sm:$0xff] %v725
                  %v727 = vld [vmem:[%s591 + $0x430] sm:$0xff]
                  %728 = vst [vmem:[%s592 + $0x218] sm:$0xff] %v727
                  %v729 = vld [vmem:[%s591 + $0x440] sm:$0xff]
                  %730 = vst [vmem:[%s592 + $0x220] sm:$0xff] %v729
                  %v731 = vld [vmem:[%s591 + $0x450] sm:$0xff]
                  %732 = vst [vmem:[%s592 + $0x228] sm:$0xff] %v731
                  %v733 = vld [vmem:[%s591 + $0x460] sm:$0xff]
                  %734 = vst [vmem:[%s592 + $0x230] sm:$0xff] %v733
                  %v735 = vld [vmem:[%s591 + $0x470] sm:$0xff]
                  %736 = vst [vmem:[%s592 + $0x238] sm:$0xff] %v735
                  %v737 = vld [vmem:[%s591 + $0x480] sm:$0xff]
                  %738 = vst [vmem:[%s592 + $0x240] sm:$0xff] %v737
                  %v739 = vld [vmem:[%s591 + $0x490] sm:$0xff]
                  %740 = vst [vmem:[%s592 + $0x248] sm:$0xff] %v739
                  %v741 = vld [vmem:[%s591 + $0x4a0] sm:$0xff]
                  %742 = vst [vmem:[%s592 + $0x250] sm:$0xff] %v741
                  %v743 = vld [vmem:[%s591 + $0x4b0] sm:$0xff]
                  %744 = vst [vmem:[%s592 + $0x258] sm:$0xff] %v743
                  %v745 = vld [vmem:[%s591 + $0x4c0] sm:$0xff]
                  %746 = vst [vmem:[%s592 + $0x260] sm:$0xff] %v745
                  %v747 = vld [vmem:[%s591 + $0x4d0] sm:$0xff]
                  %748 = vst [vmem:[%s592 + $0x268] sm:$0xff] %v747
                  %v749 = vld [vmem:[%s591 + $0x4e0] sm:$0xff]
                  %750 = vst [vmem:[%s592 + $0x270] sm:$0xff] %v749
                  %v751 = vld [vmem:[%s591 + $0x4f0] sm:$0xff]
                  %752 = vst [vmem:[%s592 + $0x278] sm:$0xff] %v751
                  %v753 = vld [vmem:[%s591 + $0x500] sm:$0xff]
                  %754 = vst [vmem:[%s592 + $0x280] sm:$0xff] %v753
                  %v755 = vld [vmem:[%s591 + $0x510] sm:$0xff]
                  %756 = vst [vmem:[%s592 + $0x288] sm:$0xff] %v755
                  %v757 = vld [vmem:[%s591 + $0x520] sm:$0xff]
                  %758 = vst [vmem:[%s592 + $0x290] sm:$0xff] %v757
                  %v759 = vld [vmem:[%s591 + $0x530] sm:$0xff]
                  %760 = vst [vmem:[%s592 + $0x298] sm:$0xff] %v759
                  %v761 = vld [vmem:[%s591 + $0x540] sm:$0xff]
                  %762 = vst [vmem:[%s592 + $0x2a0] sm:$0xff] %v761
                  %v763 = vld [vmem:[%s591 + $0x550] sm:$0xff]
                  %764 = vst [vmem:[%s592 + $0x2a8] sm:$0xff] %v763
                  %v765 = vld [vmem:[%s591 + $0x560] sm:$0xff]
                  %766 = vst [vmem:[%s592 + $0x2b0] sm:$0xff] %v765
                  %v767 = vld [vmem:[%s591 + $0x570] sm:$0xff]
                  %768 = vst [vmem:[%s592 + $0x2b8] sm:$0xff] %v767
                  %v769 = vld [vmem:[%s591 + $0x580] sm:$0xff]
                  %770 = vst [vmem:[%s592 + $0x2c0] sm:$0xff] %v769
                  %v771 = vld [vmem:[%s591 + $0x590] sm:$0xff]
                  %772 = vst [vmem:[%s592 + $0x2c8] sm:$0xff] %v771
                  %v773 = vld [vmem:[%s591 + $0x5a0] sm:$0xff]
                  %774 = vst [vmem:[%s592 + $0x2d0] sm:$0xff] %v773
                  %v775 = vld [vmem:[%s591 + $0x5b0] sm:$0xff]
                  %776 = vst [vmem:[%s592 + $0x2d8] sm:$0xff] %v775
                  %v777 = vld [vmem:[%s591 + $0x5c0] sm:$0xff]
                  %778 = vst [vmem:[%s592 + $0x2e0] sm:$0xff] %v777
                  %v779 = vld [vmem:[%s591 + $0x5d0] sm:$0xff]
                  %780 = vst [vmem:[%s592 + $0x2e8] sm:$0xff] %v779
                  %v781 = vld [vmem:[%s591 + $0x5e0] sm:$0xff]
                  %782 = vst [vmem:[%s592 + $0x2f0] sm:$0xff] %v781
                  %v783 = vld [vmem:[%s591 + $0x5f0] sm:$0xff]
                  %784 = vst [vmem:[%s592 + $0x2f8] sm:$0xff] %v783
                  %v785 = vld [vmem:[%s591 + $0x600] sm:$0xff]
                  %786 = vst [vmem:[%s592 + $0x300] sm:$0xff] %v785
                  %v787 = vld [vmem:[%s591 + $0x610] sm:$0xff]
                  %788 = vst [vmem:[%s592 + $0x308] sm:$0xff] %v787
                  %v789 = vld [vmem:[%s591 + $0x620] sm:$0xff]
                  %790 = vst [vmem:[%s592 + $0x310] sm:$0xff] %v789
                  %v791 = vld [vmem:[%s591 + $0x630] sm:$0xff]
                  %792 = vst [vmem:[%s592 + $0x318] sm:$0xff] %v791
                  %v793 = vld [vmem:[%s591 + $0x640] sm:$0xff]
                  %794 = vst [vmem:[%s592 + $0x320] sm:$0xff] %v793
                  %v795 = vld [vmem:[%s591 + $0x650] sm:$0xff]
                  %796 = vst [vmem:[%s592 + $0x328] sm:$0xff] %v795
                  %v797 = vld [vmem:[%s591 + $0x660] sm:$0xff]
                  %798 = vst [vmem:[%s592 + $0x330] sm:$0xff] %v797
                  %v799 = vld [vmem:[%s591 + $0x670] sm:$0xff]
                  %800 = vst [vmem:[%s592 + $0x338] sm:$0xff] %v799
                  %v801 = vld [vmem:[%s591 + $0x680] sm:$0xff]
                  %802 = vst [vmem:[%s592 + $0x340] sm:$0xff] %v801
                  %v803 = vld [vmem:[%s591 + $0x690] sm:$0xff]
                  %804 = vst [vmem:[%s592 + $0x348] sm:$0xff] %v803
                  %v805 = vld [vmem:[%s591 + $0x6a0] sm:$0xff]
                  %806 = vst [vmem:[%s592 + $0x350] sm:$0xff] %v805
                  %v807 = vld [vmem:[%s591 + $0x6b0] sm:$0xff]
                  %808 = vst [vmem:[%s592 + $0x358] sm:$0xff] %v807
                  %v809 = vld [vmem:[%s591 + $0x6c0] sm:$0xff]
                  %810 = vst [vmem:[%s592 + $0x360] sm:$0xff] %v809
                  %v811 = vld [vmem:[%s591 + $0x6d0] sm:$0xff]
                  %812 = vst [vmem:[%s592 + $0x368] sm:$0xff] %v811
                  %v813 = vld [vmem:[%s591 + $0x6e0] sm:$0xff]
                  %814 = vst [vmem:[%s592 + $0x370] sm:$0xff] %v813
                  %v815 = vld [vmem:[%s591 + $0x6f0] sm:$0xff]
                  %816 = vst [vmem:[%s592 + $0x378] sm:$0xff] %v815
                  %v817 = vld [vmem:[%s591 + $0x700] sm:$0xff]
                  %818 = vst [vmem:[%s592 + $0x380] sm:$0xff] %v817
                  %v819 = vld [vmem:[%s591 + $0x710] sm:$0xff]
                  %820 = vst [vmem:[%s592 + $0x388] sm:$0xff] %v819
                  %v821 = vld [vmem:[%s591 + $0x720] sm:$0xff]
                  %822 = vst [vmem:[%s592 + $0x390] sm:$0xff] %v821
                  %v823 = vld [vmem:[%s591 + $0x730] sm:$0xff]
                  %824 = vst [vmem:[%s592 + $0x398] sm:$0xff] %v823
                  %v825 = vld [vmem:[%s591 + $0x740] sm:$0xff]
                  %826 = vst [vmem:[%s592 + $0x3a0] sm:$0xff] %v825
                  %v827 = vld [vmem:[%s591 + $0x750] sm:$0xff]
                  %828 = vst [vmem:[%s592 + $0x3a8] sm:$0xff] %v827
                  %v829 = vld [vmem:[%s591 + $0x760] sm:$0xff]
                  %830 = vst [vmem:[%s592 + $0x3b0] sm:$0xff] %v829
                  %v831 = vld [vmem:[%s591 + $0x770] sm:$0xff]
                  %832 = vst [vmem:[%s592 + $0x3b8] sm:$0xff] %v831
                  %v833 = vld [vmem:[%s591 + $0x780] sm:$0xff]
                  %834 = vst [vmem:[%s592 + $0x3c0] sm:$0xff] %v833
                  %v835 = vld [vmem:[%s591 + $0x790] sm:$0xff]
                  %836 = vst [vmem:[%s592 + $0x3c8] sm:$0xff] %v835
                  %v837 = vld [vmem:[%s591 + $0x7a0] sm:$0xff]
                  %838 = vst [vmem:[%s592 + $0x3d0] sm:$0xff] %v837
                  %v839 = vld [vmem:[%s591 + $0x7b0] sm:$0xff]
                  %840 = vst [vmem:[%s592 + $0x3d8] sm:$0xff] %v839
                  %v841 = vld [vmem:[%s591 + $0x7c0] sm:$0xff]
                  %842 = vst [vmem:[%s592 + $0x3e0] sm:$0xff] %v841
                  %v843 = vld [vmem:[%s591 + $0x7d0] sm:$0xff]
                  %844 = vst [vmem:[%s592 + $0x3e8] sm:$0xff] %v843
                  %v845 = vld [vmem:[%s591 + $0x7e0] sm:$0xff]
                  %846 = vst [vmem:[%s592 + $0x3f0] sm:$0xff] %v845
                  %v847 = vld [vmem:[%s591 + $0x7f0] sm:$0xff]
                  %848 = vst [vmem:[%s592 + $0x3f8] sm:$0xff] %v847
                  %v849 = vld [vmem:[%s591 + $0x800] sm:$0xff]
                  %850 = vst [vmem:[%s592 + $0x400] sm:$0xff] %v849
                  %v851 = vld [vmem:[%s591 + $0x810] sm:$0xff]
                  %852 = vst [vmem:[%s592 + $0x408] sm:$0xff] %v851
                  %v853 = vld [vmem:[%s591 + $0x820] sm:$0xff]
                  %854 = vst [vmem:[%s592 + $0x410] sm:$0xff] %v853
                  %v855 = vld [vmem:[%s591 + $0x830] sm:$0xff]
                  %856 = vst [vmem:[%s592 + $0x418] sm:$0xff] %v855
                  %v857 = vld [vmem:[%s591 + $0x840] sm:$0xff]
                  %858 = vst [vmem:[%s592 + $0x420] sm:$0xff] %v857
                  %v859 = vld [vmem:[%s591 + $0x850] sm:$0xff]
                  %860 = vst [vmem:[%s592 + $0x428] sm:$0xff] %v859
                  %v861 = vld [vmem:[%s591 + $0x860] sm:$0xff]
                  %862 = vst [vmem:[%s592 + $0x430] sm:$0xff] %v861
                  %v863 = vld [vmem:[%s591 + $0x870] sm:$0xff]
                  %864 = vst [vmem:[%s592 + $0x438] sm:$0xff] %v863
                  %v865 = vld [vmem:[%s591 + $0x880] sm:$0xff]
                  %866 = vst [vmem:[%s592 + $0x440] sm:$0xff] %v865
                  %v867 = vld [vmem:[%s591 + $0x890] sm:$0xff]
                  %868 = vst [vmem:[%s592 + $0x448] sm:$0xff] %v867
                  %v869 = vld [vmem:[%s591 + $0x8a0] sm:$0xff]
                  %870 = vst [vmem:[%s592 + $0x450] sm:$0xff] %v869
                  %v871 = vld [vmem:[%s591 + $0x8b0] sm:$0xff]
                  %872 = vst [vmem:[%s592 + $0x458] sm:$0xff] %v871
                  %v873 = vld [vmem:[%s591 + $0x8c0] sm:$0xff]
                  %874 = vst [vmem:[%s592 + $0x460] sm:$0xff] %v873
                  %v875 = vld [vmem:[%s591 + $0x8d0] sm:$0xff]
                  %876 = vst [vmem:[%s592 + $0x468] sm:$0xff] %v875
                  %v877 = vld [vmem:[%s591 + $0x8e0] sm:$0xff]
                  %878 = vst [vmem:[%s592 + $0x470] sm:$0xff] %v877
                  %v879 = vld [vmem:[%s591 + $0x8f0] sm:$0xff]
                  %880 = vst [vmem:[%s592 + $0x478] sm:$0xff] %v879
                  %v881 = vld [vmem:[%s591 + $0x900] sm:$0xff]
                  %882 = vst [vmem:[%s592 + $0x480] sm:$0xff] %v881
                  %v883 = vld [vmem:[%s591 + $0x910] sm:$0xff]
                  %884 = vst [vmem:[%s592 + $0x488] sm:$0xff] %v883
                  %v885 = vld [vmem:[%s591 + $0x920] sm:$0xff]
                  %886 = vst [vmem:[%s592 + $0x490] sm:$0xff] %v885
                  %v887 = vld [vmem:[%s591 + $0x930] sm:$0xff]
                  %888 = vst [vmem:[%s592 + $0x498] sm:$0xff] %v887
                  %v889 = vld [vmem:[%s591 + $0x940] sm:$0xff]
                  %890 = vst [vmem:[%s592 + $0x4a0] sm:$0xff] %v889
                  %v891 = vld [vmem:[%s591 + $0x950] sm:$0xff]
                  %892 = vst [vmem:[%s592 + $0x4a8] sm:$0xff] %v891
                  %v893 = vld [vmem:[%s591 + $0x960] sm:$0xff]
                  %894 = vst [vmem:[%s592 + $0x4b0] sm:$0xff] %v893
                  %v895 = vld [vmem:[%s591 + $0x970] sm:$0xff]
                  %896 = vst [vmem:[%s592 + $0x4b8] sm:$0xff] %v895
                  %v897 = vld [vmem:[%s591 + $0x980] sm:$0xff]
                  %898 = vst [vmem:[%s592 + $0x4c0] sm:$0xff] %v897
                  %v899 = vld [vmem:[%s591 + $0x990] sm:$0xff]
                  %900 = vst [vmem:[%s592 + $0x4c8] sm:$0xff] %v899
                  %v901 = vld [vmem:[%s591 + $0x9a0] sm:$0xff]
                  %902 = vst [vmem:[%s592 + $0x4d0] sm:$0xff] %v901
                  %v903 = vld [vmem:[%s591 + $0x9b0] sm:$0xff]
                  %904 = vst [vmem:[%s592 + $0x4d8] sm:$0xff] %v903
                  %v905 = vld [vmem:[%s591 + $0x9c0] sm:$0xff]
                  %906 = vst [vmem:[%s592 + $0x4e0] sm:$0xff] %v905
                  %v907 = vld [vmem:[%s591 + $0x9d0] sm:$0xff]
                  %908 = vst [vmem:[%s592 + $0x4e8] sm:$0xff] %v907
                  %v909 = vld [vmem:[%s591 + $0x9e0] sm:$0xff]
                  %910 = vst [vmem:[%s592 + $0x4f0] sm:$0xff] %v909
                  %v911 = vld [vmem:[%s591 + $0x9f0] sm:$0xff]
                  %912 = vst [vmem:[%s592 + $0x4f8] sm:$0xff] %v911
                  %v913 = vld [vmem:[%s591 + $0xa00] sm:$0xff]
                  %914 = vst [vmem:[%s592 + $0x500] sm:$0xff] %v913
                  %v915 = vld [vmem:[%s591 + $0xa10] sm:$0xff]
                  %916 = vst [vmem:[%s592 + $0x508] sm:$0xff] %v915
                  %v917 = vld [vmem:[%s591 + $0xa20] sm:$0xff]
                  %918 = vst [vmem:[%s592 + $0x510] sm:$0xff] %v917
                  %v919 = vld [vmem:[%s591 + $0xa30] sm:$0xff]
                  %920 = vst [vmem:[%s592 + $0x518] sm:$0xff] %v919
                  %v921 = vld [vmem:[%s591 + $0xa40] sm:$0xff]
                  %922 = vst [vmem:[%s592 + $0x520] sm:$0xff] %v921
                  %v923 = vld [vmem:[%s591 + $0xa50] sm:$0xff]
                  %924 = vst [vmem:[%s592 + $0x528] sm:$0xff] %v923
                  %v925 = vld [vmem:[%s591 + $0xa60] sm:$0xff]
                  %926 = vst [vmem:[%s592 + $0x530] sm:$0xff] %v925
                  %v927 = vld [vmem:[%s591 + $0xa70] sm:$0xff]
                  %928 = vst [vmem:[%s592 + $0x538] sm:$0xff] %v927
                  %v929 = vld [vmem:[%s591 + $0xa80] sm:$0xff]
                  %930 = vst [vmem:[%s592 + $0x540] sm:$0xff] %v929
                  %v931 = vld [vmem:[%s591 + $0xa90] sm:$0xff]
                  %932 = vst [vmem:[%s592 + $0x548] sm:$0xff] %v931
                  %v933 = vld [vmem:[%s591 + $0xaa0] sm:$0xff]
                  %934 = vst [vmem:[%s592 + $0x550] sm:$0xff] %v933
                  %v935 = vld [vmem:[%s591 + $0xab0] sm:$0xff]
                  %936 = vst [vmem:[%s592 + $0x558] sm:$0xff] %v935
                  %v937 = vld [vmem:[%s591 + $0xac0] sm:$0xff]
                  %938 = vst [vmem:[%s592 + $0x560] sm:$0xff] %v937
                  %v939 = vld [vmem:[%s591 + $0xad0] sm:$0xff]
                  %940 = vst [vmem:[%s592 + $0x568] sm:$0xff] %v939
                  %v941 = vld [vmem:[%s591 + $0xae0] sm:$0xff]
                  %942 = vst [vmem:[%s592 + $0x570] sm:$0xff] %v941
                  %v943 = vld [vmem:[%s591 + $0xaf0] sm:$0xff]
                  %944 = vst [vmem:[%s592 + $0x578] sm:$0xff] %v943
                  %v945 = vld [vmem:[%s591 + $0xb00] sm:$0xff]
                  %946 = vst [vmem:[%s592 + $0x580] sm:$0xff] %v945
                  %v947 = vld [vmem:[%s591 + $0xb10] sm:$0xff]
                  %948 = vst [vmem:[%s592 + $0x588] sm:$0xff] %v947
                  %v949 = vld [vmem:[%s591 + $0xb20] sm:$0xff]
                  %950 = vst [vmem:[%s592 + $0x590] sm:$0xff] %v949
                  %v951 = vld [vmem:[%s591 + $0xb30] sm:$0xff]
                  %952 = vst [vmem:[%s592 + $0x598] sm:$0xff] %v951
                  %v953 = vld [vmem:[%s591 + $0xb40] sm:$0xff]
                  %954 = vst [vmem:[%s592 + $0x5a0] sm:$0xff] %v953
                  %v955 = vld [vmem:[%s591 + $0xb50] sm:$0xff]
                  %956 = vst [vmem:[%s592 + $0x5a8] sm:$0xff] %v955
                  %v957 = vld [vmem:[%s591 + $0xb60] sm:$0xff]
                  %958 = vst [vmem:[%s592 + $0x5b0] sm:$0xff] %v957
                  %v959 = vld [vmem:[%s591 + $0xb70] sm:$0xff]
                  %960 = vst [vmem:[%s592 + $0x5b8] sm:$0xff] %v959
                  %v961 = vld [vmem:[%s591 + $0xb80] sm:$0xff]
                  %962 = vst [vmem:[%s592 + $0x5c0] sm:$0xff] %v961
                  %v963 = vld [vmem:[%s591 + $0xb90] sm:$0xff]
                  %964 = vst [vmem:[%s592 + $0x5c8] sm:$0xff] %v963
                  %v965 = vld [vmem:[%s591 + $0xba0] sm:$0xff]
                  %966 = vst [vmem:[%s592 + $0x5d0] sm:$0xff] %v965
                  %v967 = vld [vmem:[%s591 + $0xbb0] sm:$0xff]
                  %968 = vst [vmem:[%s592 + $0x5d8] sm:$0xff] %v967
                  %v969 = vld [vmem:[%s591 + $0xbc0] sm:$0xff]
                  %970 = vst [vmem:[%s592 + $0x5e0] sm:$0xff] %v969
                  %v971 = vld [vmem:[%s591 + $0xbd0] sm:$0xff]
                  %972 = vst [vmem:[%s592 + $0x5e8] sm:$0xff] %v971
                  %v973 = vld [vmem:[%s591 + $0xbe0] sm:$0xff]
                  %974 = vst [vmem:[%s592 + $0x5f0] sm:$0xff] %v973
                  %v975 = vld [vmem:[%s591 + $0xbf0] sm:$0xff]
                  %976 = vst [vmem:[%s592 + $0x5f8] sm:$0xff] %v975
                $region52: #{flownet_encoder_forward.10} parent=46 // loop_footer
                  %s590 = sadd.s32 1, %s586
                $region53: #{flownet_encoder_forward.10} parent=46 // loop_footer_branch
                  %585 = sbr.rel target = $region49
                $region54: #{flownet_encoder_forward.10} parent=46 // loop_exit
                  _
              $region47: #{flownet_encoder_forward.10} parent=31 // pred_fallthru
                _
              // Predicated region
              $region55: #{flownet_encoder_forward.10} parent=31 // pred_check
                _
              $region56: #{flownet_encoder_forward.10} parent=31 // pred_check_branch
                %978 = sbr.rel target = $region58
              $region57: #{flownet_encoder_forward.10} parent=31 // pred_region
                _
              $region58: #{flownet_encoder_forward.10} parent=31 // pred_fallthru
                _
            $region32: #{flownet_encoder_forward.10} parent=27 // pred_fallthru
              _
            // Predicated region
            $region33: #{flownet_encoder_forward.10} parent=27 // pred_check
              _
            $region34: #{flownet_encoder_forward.10} parent=27 // pred_check_branch
              %188 = sbr.rel target = $region36
            $region35: #{flownet_encoder_forward.10} parent=27 // pred_region
              %s190 = ssub.s32 256, 1
              loop: start=0, step=1, limit=1
              $region37: #{flownet_encoder_forward.10} parent=35 // loop_pre_header
                _
              $region38: #{flownet_encoder_forward.10} parent=35 // loop_header
                %s192 = sphi 0, %s196
                %p193 = scmp.ge.s32.totalorder %s192, 1
                %s197 = sphi %s182, %s182
                %s198 = sphi %s176, %s176
              $region39: #{flownet_encoder_forward.10} parent=35 // loop_header_branch
                %195 = sbr.rel (%p193) target = $region43
              $region40: #{flownet_encoder_forward.10} parent=35 // loop_body
                %v199 = vld [vmem:[%s197] sm:%s190]
                %200 = vst [vmem:[%s198] sm:%s190] %v199
                %v201 = vld [vmem:[%s197 + $0x10] sm:%s190]
                %202 = vst [vmem:[%s198 + $0x8] sm:%s190] %v201
                %v203 = vld [vmem:[%s197 + $0x20] sm:%s190]
                %204 = vst [vmem:[%s198 + $0x10] sm:%s190] %v203
                %v205 = vld [vmem:[%s197 + $0x30] sm:%s190]
                %206 = vst [vmem:[%s198 + $0x18] sm:%s190] %v205
                %v207 = vld [vmem:[%s197 + $0x40] sm:%s190]
                %208 = vst [vmem:[%s198 + $0x20] sm:%s190] %v207
                %v209 = vld [vmem:[%s197 + $0x50] sm:%s190]
                %210 = vst [vmem:[%s198 + $0x28] sm:%s190] %v209
                %v211 = vld [vmem:[%s197 + $0x60] sm:%s190]
                %212 = vst [vmem:[%s198 + $0x30] sm:%s190] %v211
                %v213 = vld [vmem:[%s197 + $0x70] sm:%s190]
                %214 = vst [vmem:[%s198 + $0x38] sm:%s190] %v213
                %v215 = vld [vmem:[%s197 + $0x80] sm:%s190]
                %216 = vst [vmem:[%s198 + $0x40] sm:%s190] %v215
                %v217 = vld [vmem:[%s197 + $0x90] sm:%s190]
                %218 = vst [vmem:[%s198 + $0x48] sm:%s190] %v217
                %v219 = vld [vmem:[%s197 + $0xa0] sm:%s190]
                %220 = vst [vmem:[%s198 + $0x50] sm:%s190] %v219
                %v221 = vld [vmem:[%s197 + $0xb0] sm:%s190]
                %222 = vst [vmem:[%s198 + $0x58] sm:%s190] %v221
                %v223 = vld [vmem:[%s197 + $0xc0] sm:%s190]
                %224 = vst [vmem:[%s198 + $0x60] sm:%s190] %v223
                %v225 = vld [vmem:[%s197 + $0xd0] sm:%s190]
                %226 = vst [vmem:[%s198 + $0x68] sm:%s190] %v225
                %v227 = vld [vmem:[%s197 + $0xe0] sm:%s190]
                %228 = vst [vmem:[%s198 + $0x70] sm:%s190] %v227
                %v229 = vld [vmem:[%s197 + $0xf0] sm:%s190]
                %230 = vst [vmem:[%s198 + $0x78] sm:%s190] %v229
                %v231 = vld [vmem:[%s197 + $0x100] sm:%s190]
                %232 = vst [vmem:[%s198 + $0x80] sm:%s190] %v231
                %v233 = vld [vmem:[%s197 + $0x110] sm:%s190]
                %234 = vst [vmem:[%s198 + $0x88] sm:%s190] %v233
                %v235 = vld [vmem:[%s197 + $0x120] sm:%s190]
                %236 = vst [vmem:[%s198 + $0x90] sm:%s190] %v235
                %v237 = vld [vmem:[%s197 + $0x130] sm:%s190]
                %238 = vst [vmem:[%s198 + $0x98] sm:%s190] %v237
                %v239 = vld [vmem:[%s197 + $0x140] sm:%s190]
                %240 = vst [vmem:[%s198 + $0xa0] sm:%s190] %v239
                %v241 = vld [vmem:[%s197 + $0x150] sm:%s190]
                %242 = vst [vmem:[%s198 + $0xa8] sm:%s190] %v241
                %v243 = vld [vmem:[%s197 + $0x160] sm:%s190]
                %244 = vst [vmem:[%s198 + $0xb0] sm:%s190] %v243
                %v245 = vld [vmem:[%s197 + $0x170] sm:%s190]
                %246 = vst [vmem:[%s198 + $0xb8] sm:%s190] %v245
                %v247 = vld [vmem:[%s197 + $0x180] sm:%s190]
                %248 = vst [vmem:[%s198 + $0xc0] sm:%s190] %v247
                %v249 = vld [vmem:[%s197 + $0x190] sm:%s190]
                %250 = vst [vmem:[%s198 + $0xc8] sm:%s190] %v249
                %v251 = vld [vmem:[%s197 + $0x1a0] sm:%s190]
                %252 = vst [vmem:[%s198 + $0xd0] sm:%s190] %v251
                %v253 = vld [vmem:[%s197 + $0x1b0] sm:%s190]
                %254 = vst [vmem:[%s198 + $0xd8] sm:%s190] %v253
                %v255 = vld [vmem:[%s197 + $0x1c0] sm:%s190]
                %256 = vst [vmem:[%s198 + $0xe0] sm:%s190] %v255
                %v257 = vld [vmem:[%s197 + $0x1d0] sm:%s190]
                %258 = vst [vmem:[%s198 + $0xe8] sm:%s190] %v257
                %v259 = vld [vmem:[%s197 + $0x1e0] sm:%s190]
                %260 = vst [vmem:[%s198 + $0xf0] sm:%s190] %v259
                %v261 = vld [vmem:[%s197 + $0x1f0] sm:%s190]
                %262 = vst [vmem:[%s198 + $0xf8] sm:%s190] %v261
                %v263 = vld [vmem:[%s197 + $0x200] sm:%s190]
                %264 = vst [vmem:[%s198 + $0x100] sm:%s190] %v263
                %v265 = vld [vmem:[%s197 + $0x210] sm:%s190]
                %266 = vst [vmem:[%s198 + $0x108] sm:%s190] %v265
                %v267 = vld [vmem:[%s197 + $0x220] sm:%s190]
                %268 = vst [vmem:[%s198 + $0x110] sm:%s190] %v267
                %v269 = vld [vmem:[%s197 + $0x230] sm:%s190]
                %270 = vst [vmem:[%s198 + $0x118] sm:%s190] %v269
                %v271 = vld [vmem:[%s197 + $0x240] sm:%s190]
                %272 = vst [vmem:[%s198 + $0x120] sm:%s190] %v271
                %v273 = vld [vmem:[%s197 + $0x250] sm:%s190]
                %274 = vst [vmem:[%s198 + $0x128] sm:%s190] %v273
                %v275 = vld [vmem:[%s197 + $0x260] sm:%s190]
                %276 = vst [vmem:[%s198 + $0x130] sm:%s190] %v275
                %v277 = vld [vmem:[%s197 + $0x270] sm:%s190]
                %278 = vst [vmem:[%s198 + $0x138] sm:%s190] %v277
                %v279 = vld [vmem:[%s197 + $0x280] sm:%s190]
                %280 = vst [vmem:[%s198 + $0x140] sm:%s190] %v279
                %v281 = vld [vmem:[%s197 + $0x290] sm:%s190]
                %282 = vst [vmem:[%s198 + $0x148] sm:%s190] %v281
                %v283 = vld [vmem:[%s197 + $0x2a0] sm:%s190]
                %284 = vst [vmem:[%s198 + $0x150] sm:%s190] %v283
                %v285 = vld [vmem:[%s197 + $0x2b0] sm:%s190]
                %286 = vst [vmem:[%s198 + $0x158] sm:%s190] %v285
                %v287 = vld [vmem:[%s197 + $0x2c0] sm:%s190]
                %288 = vst [vmem:[%s198 + $0x160] sm:%s190] %v287
                %v289 = vld [vmem:[%s197 + $0x2d0] sm:%s190]
                %290 = vst [vmem:[%s198 + $0x168] sm:%s190] %v289
                %v291 = vld [vmem:[%s197 + $0x2e0] sm:%s190]
                %292 = vst [vmem:[%s198 + $0x170] sm:%s190] %v291
                %v293 = vld [vmem:[%s197 + $0x2f0] sm:%s190]
                %294 = vst [vmem:[%s198 + $0x178] sm:%s190] %v293
                %v295 = vld [vmem:[%s197 + $0x300] sm:%s190]
                %296 = vst [vmem:[%s198 + $0x180] sm:%s190] %v295
                %v297 = vld [vmem:[%s197 + $0x310] sm:%s190]
                %298 = vst [vmem:[%s198 + $0x188] sm:%s190] %v297
                %v299 = vld [vmem:[%s197 + $0x320] sm:%s190]
                %300 = vst [vmem:[%s198 + $0x190] sm:%s190] %v299
                %v301 = vld [vmem:[%s197 + $0x330] sm:%s190]
                %302 = vst [vmem:[%s198 + $0x198] sm:%s190] %v301
                %v303 = vld [vmem:[%s197 + $0x340] sm:%s190]
                %304 = vst [vmem:[%s198 + $0x1a0] sm:%s190] %v303
                %v305 = vld [vmem:[%s197 + $0x350] sm:%s190]
                %306 = vst [vmem:[%s198 + $0x1a8] sm:%s190] %v305
                %v307 = vld [vmem:[%s197 + $0x360] sm:%s190]
                %308 = vst [vmem:[%s198 + $0x1b0] sm:%s190] %v307
                %v309 = vld [vmem:[%s197 + $0x370] sm:%s190]
                %310 = vst [vmem:[%s198 + $0x1b8] sm:%s190] %v309
                %v311 = vld [vmem:[%s197 + $0x380] sm:%s190]
                %312 = vst [vmem:[%s198 + $0x1c0] sm:%s190] %v311
                %v313 = vld [vmem:[%s197 + $0x390] sm:%s190]
                %314 = vst [vmem:[%s198 + $0x1c8] sm:%s190] %v313
                %v315 = vld [vmem:[%s197 + $0x3a0] sm:%s190]
                %316 = vst [vmem:[%s198 + $0x1d0] sm:%s190] %v315
                %v317 = vld [vmem:[%s197 + $0x3b0] sm:%s190]
                %318 = vst [vmem:[%s198 + $0x1d8] sm:%s190] %v317
                %v319 = vld [vmem:[%s197 + $0x3c0] sm:%s190]
                %320 = vst [vmem:[%s198 + $0x1e0] sm:%s190] %v319
                %v321 = vld [vmem:[%s197 + $0x3d0] sm:%s190]
                %322 = vst [vmem:[%s198 + $0x1e8] sm:%s190] %v321
                %v323 = vld [vmem:[%s197 + $0x3e0] sm:%s190]
                %324 = vst [vmem:[%s198 + $0x1f0] sm:%s190] %v323
                %v325 = vld [vmem:[%s197 + $0x3f0] sm:%s190]
                %326 = vst [vmem:[%s198 + $0x1f8] sm:%s190] %v325
                %v327 = vld [vmem:[%s197 + $0x400] sm:%s190]
                %328 = vst [vmem:[%s198 + $0x200] sm:%s190] %v327
                %v329 = vld [vmem:[%s197 + $0x410] sm:%s190]
                %330 = vst [vmem:[%s198 + $0x208] sm:%s190] %v329
                %v331 = vld [vmem:[%s197 + $0x420] sm:%s190]
                %332 = vst [vmem:[%s198 + $0x210] sm:%s190] %v331
                %v333 = vld [vmem:[%s197 + $0x430] sm:%s190]
                %334 = vst [vmem:[%s198 + $0x218] sm:%s190] %v333
                %v335 = vld [vmem:[%s197 + $0x440] sm:%s190]
                %336 = vst [vmem:[%s198 + $0x220] sm:%s190] %v335
                %v337 = vld [vmem:[%s197 + $0x450] sm:%s190]
                %338 = vst [vmem:[%s198 + $0x228] sm:%s190] %v337
                %v339 = vld [vmem:[%s197 + $0x460] sm:%s190]
                %340 = vst [vmem:[%s198 + $0x230] sm:%s190] %v339
                %v341 = vld [vmem:[%s197 + $0x470] sm:%s190]
                %342 = vst [vmem:[%s198 + $0x238] sm:%s190] %v341
                %v343 = vld [vmem:[%s197 + $0x480] sm:%s190]
                %344 = vst [vmem:[%s198 + $0x240] sm:%s190] %v343
                %v345 = vld [vmem:[%s197 + $0x490] sm:%s190]
                %346 = vst [vmem:[%s198 + $0x248] sm:%s190] %v345
                %v347 = vld [vmem:[%s197 + $0x4a0] sm:%s190]
                %348 = vst [vmem:[%s198 + $0x250] sm:%s190] %v347
                %v349 = vld [vmem:[%s197 + $0x4b0] sm:%s190]
                %350 = vst [vmem:[%s198 + $0x258] sm:%s190] %v349
                %v351 = vld [vmem:[%s197 + $0x4c0] sm:%s190]
                %352 = vst [vmem:[%s198 + $0x260] sm:%s190] %v351
                %v353 = vld [vmem:[%s197 + $0x4d0] sm:%s190]
                %354 = vst [vmem:[%s198 + $0x268] sm:%s190] %v353
                %v355 = vld [vmem:[%s197 + $0x4e0] sm:%s190]
                %356 = vst [vmem:[%s198 + $0x270] sm:%s190] %v355
                %v357 = vld [vmem:[%s197 + $0x4f0] sm:%s190]
                %358 = vst [vmem:[%s198 + $0x278] sm:%s190] %v357
                %v359 = vld [vmem:[%s197 + $0x500] sm:%s190]
                %360 = vst [vmem:[%s198 + $0x280] sm:%s190] %v359
                %v361 = vld [vmem:[%s197 + $0x510] sm:%s190]
                %362 = vst [vmem:[%s198 + $0x288] sm:%s190] %v361
                %v363 = vld [vmem:[%s197 + $0x520] sm:%s190]
                %364 = vst [vmem:[%s198 + $0x290] sm:%s190] %v363
                %v365 = vld [vmem:[%s197 + $0x530] sm:%s190]
                %366 = vst [vmem:[%s198 + $0x298] sm:%s190] %v365
                %v367 = vld [vmem:[%s197 + $0x540] sm:%s190]
                %368 = vst [vmem:[%s198 + $0x2a0] sm:%s190] %v367
                %v369 = vld [vmem:[%s197 + $0x550] sm:%s190]
                %370 = vst [vmem:[%s198 + $0x2a8] sm:%s190] %v369
                %v371 = vld [vmem:[%s197 + $0x560] sm:%s190]
                %372 = vst [vmem:[%s198 + $0x2b0] sm:%s190] %v371
                %v373 = vld [vmem:[%s197 + $0x570] sm:%s190]
                %374 = vst [vmem:[%s198 + $0x2b8] sm:%s190] %v373
                %v375 = vld [vmem:[%s197 + $0x580] sm:%s190]
                %376 = vst [vmem:[%s198 + $0x2c0] sm:%s190] %v375
                %v377 = vld [vmem:[%s197 + $0x590] sm:%s190]
                %378 = vst [vmem:[%s198 + $0x2c8] sm:%s190] %v377
                %v379 = vld [vmem:[%s197 + $0x5a0] sm:%s190]
                %380 = vst [vmem:[%s198 + $0x2d0] sm:%s190] %v379
                %v381 = vld [vmem:[%s197 + $0x5b0] sm:%s190]
                %382 = vst [vmem:[%s198 + $0x2d8] sm:%s190] %v381
                %v383 = vld [vmem:[%s197 + $0x5c0] sm:%s190]
                %384 = vst [vmem:[%s198 + $0x2e0] sm:%s190] %v383
                %v385 = vld [vmem:[%s197 + $0x5d0] sm:%s190]
                %386 = vst [vmem:[%s198 + $0x2e8] sm:%s190] %v385
                %v387 = vld [vmem:[%s197 + $0x5e0] sm:%s190]
                %388 = vst [vmem:[%s198 + $0x2f0] sm:%s190] %v387
                %v389 = vld [vmem:[%s197 + $0x5f0] sm:%s190]
                %390 = vst [vmem:[%s198 + $0x2f8] sm:%s190] %v389
                %v391 = vld [vmem:[%s197 + $0x600] sm:%s190]
                %392 = vst [vmem:[%s198 + $0x300] sm:%s190] %v391
                %v393 = vld [vmem:[%s197 + $0x610] sm:%s190]
                %394 = vst [vmem:[%s198 + $0x308] sm:%s190] %v393
                %v395 = vld [vmem:[%s197 + $0x620] sm:%s190]
                %396 = vst [vmem:[%s198 + $0x310] sm:%s190] %v395
                %v397 = vld [vmem:[%s197 + $0x630] sm:%s190]
                %398 = vst [vmem:[%s198 + $0x318] sm:%s190] %v397
                %v399 = vld [vmem:[%s197 + $0x640] sm:%s190]
                %400 = vst [vmem:[%s198 + $0x320] sm:%s190] %v399
                %v401 = vld [vmem:[%s197 + $0x650] sm:%s190]
                %402 = vst [vmem:[%s198 + $0x328] sm:%s190] %v401
                %v403 = vld [vmem:[%s197 + $0x660] sm:%s190]
                %404 = vst [vmem:[%s198 + $0x330] sm:%s190] %v403
                %v405 = vld [vmem:[%s197 + $0x670] sm:%s190]
                %406 = vst [vmem:[%s198 + $0x338] sm:%s190] %v405
                %v407 = vld [vmem:[%s197 + $0x680] sm:%s190]
                %408 = vst [vmem:[%s198 + $0x340] sm:%s190] %v407
                %v409 = vld [vmem:[%s197 + $0x690] sm:%s190]
                %410 = vst [vmem:[%s198 + $0x348] sm:%s190] %v409
                %v411 = vld [vmem:[%s197 + $0x6a0] sm:%s190]
                %412 = vst [vmem:[%s198 + $0x350] sm:%s190] %v411
                %v413 = vld [vmem:[%s197 + $0x6b0] sm:%s190]
                %414 = vst [vmem:[%s198 + $0x358] sm:%s190] %v413
                %v415 = vld [vmem:[%s197 + $0x6c0] sm:%s190]
                %416 = vst [vmem:[%s198 + $0x360] sm:%s190] %v415
                %v417 = vld [vmem:[%s197 + $0x6d0] sm:%s190]
                %418 = vst [vmem:[%s198 + $0x368] sm:%s190] %v417
                %v419 = vld [vmem:[%s197 + $0x6e0] sm:%s190]
                %420 = vst [vmem:[%s198 + $0x370] sm:%s190] %v419
                %v421 = vld [vmem:[%s197 + $0x6f0] sm:%s190]
                %422 = vst [vmem:[%s198 + $0x378] sm:%s190] %v421
                %v423 = vld [vmem:[%s197 + $0x700] sm:%s190]
                %424 = vst [vmem:[%s198 + $0x380] sm:%s190] %v423
                %v425 = vld [vmem:[%s197 + $0x710] sm:%s190]
                %426 = vst [vmem:[%s198 + $0x388] sm:%s190] %v425
                %v427 = vld [vmem:[%s197 + $0x720] sm:%s190]
                %428 = vst [vmem:[%s198 + $0x390] sm:%s190] %v427
                %v429 = vld [vmem:[%s197 + $0x730] sm:%s190]
                %430 = vst [vmem:[%s198 + $0x398] sm:%s190] %v429
                %v431 = vld [vmem:[%s197 + $0x740] sm:%s190]
                %432 = vst [vmem:[%s198 + $0x3a0] sm:%s190] %v431
                %v433 = vld [vmem:[%s197 + $0x750] sm:%s190]
                %434 = vst [vmem:[%s198 + $0x3a8] sm:%s190] %v433
                %v435 = vld [vmem:[%s197 + $0x760] sm:%s190]
                %436 = vst [vmem:[%s198 + $0x3b0] sm:%s190] %v435
                %v437 = vld [vmem:[%s197 + $0x770] sm:%s190]
                %438 = vst [vmem:[%s198 + $0x3b8] sm:%s190] %v437
                %v439 = vld [vmem:[%s197 + $0x780] sm:%s190]
                %440 = vst [vmem:[%s198 + $0x3c0] sm:%s190] %v439
                %v441 = vld [vmem:[%s197 + $0x790] sm:%s190]
                %442 = vst [vmem:[%s198 + $0x3c8] sm:%s190] %v441
                %v443 = vld [vmem:[%s197 + $0x7a0] sm:%s190]
                %444 = vst [vmem:[%s198 + $0x3d0] sm:%s190] %v443
                %v445 = vld [vmem:[%s197 + $0x7b0] sm:%s190]
                %446 = vst [vmem:[%s198 + $0x3d8] sm:%s190] %v445
                %v447 = vld [vmem:[%s197 + $0x7c0] sm:%s190]
                %448 = vst [vmem:[%s198 + $0x3e0] sm:%s190] %v447
                %v449 = vld [vmem:[%s197 + $0x7d0] sm:%s190]
                %450 = vst [vmem:[%s198 + $0x3e8] sm:%s190] %v449
                %v451 = vld [vmem:[%s197 + $0x7e0] sm:%s190]
                %452 = vst [vmem:[%s198 + $0x3f0] sm:%s190] %v451
                %v453 = vld [vmem:[%s197 + $0x7f0] sm:%s190]
                %454 = vst [vmem:[%s198 + $0x3f8] sm:%s190] %v453
                %v455 = vld [vmem:[%s197 + $0x800] sm:%s190]
                %456 = vst [vmem:[%s198 + $0x400] sm:%s190] %v455
                %v457 = vld [vmem:[%s197 + $0x810] sm:%s190]
                %458 = vst [vmem:[%s198 + $0x408] sm:%s190] %v457
                %v459 = vld [vmem:[%s197 + $0x820] sm:%s190]
                %460 = vst [vmem:[%s198 + $0x410] sm:%s190] %v459
                %v461 = vld [vmem:[%s197 + $0x830] sm:%s190]
                %462 = vst [vmem:[%s198 + $0x418] sm:%s190] %v461
                %v463 = vld [vmem:[%s197 + $0x840] sm:%s190]
                %464 = vst [vmem:[%s198 + $0x420] sm:%s190] %v463
                %v465 = vld [vmem:[%s197 + $0x850] sm:%s190]
                %466 = vst [vmem:[%s198 + $0x428] sm:%s190] %v465
                %v467 = vld [vmem:[%s197 + $0x860] sm:%s190]
                %468 = vst [vmem:[%s198 + $0x430] sm:%s190] %v467
                %v469 = vld [vmem:[%s197 + $0x870] sm:%s190]
                %470 = vst [vmem:[%s198 + $0x438] sm:%s190] %v469
                %v471 = vld [vmem:[%s197 + $0x880] sm:%s190]
                %472 = vst [vmem:[%s198 + $0x440] sm:%s190] %v471
                %v473 = vld [vmem:[%s197 + $0x890] sm:%s190]
                %474 = vst [vmem:[%s198 + $0x448] sm:%s190] %v473
                %v475 = vld [vmem:[%s197 + $0x8a0] sm:%s190]
                %476 = vst [vmem:[%s198 + $0x450] sm:%s190] %v475
                %v477 = vld [vmem:[%s197 + $0x8b0] sm:%s190]
                %478 = vst [vmem:[%s198 + $0x458] sm:%s190] %v477
                %v479 = vld [vmem:[%s197 + $0x8c0] sm:%s190]
                %480 = vst [vmem:[%s198 + $0x460] sm:%s190] %v479
                %v481 = vld [vmem:[%s197 + $0x8d0] sm:%s190]
                %482 = vst [vmem:[%s198 + $0x468] sm:%s190] %v481
                %v483 = vld [vmem:[%s197 + $0x8e0] sm:%s190]
                %484 = vst [vmem:[%s198 + $0x470] sm:%s190] %v483
                %v485 = vld [vmem:[%s197 + $0x8f0] sm:%s190]
                %486 = vst [vmem:[%s198 + $0x478] sm:%s190] %v485
                %v487 = vld [vmem:[%s197 + $0x900] sm:%s190]
                %488 = vst [vmem:[%s198 + $0x480] sm:%s190] %v487
                %v489 = vld [vmem:[%s197 + $0x910] sm:%s190]
                %490 = vst [vmem:[%s198 + $0x488] sm:%s190] %v489
                %v491 = vld [vmem:[%s197 + $0x920] sm:%s190]
                %492 = vst [vmem:[%s198 + $0x490] sm:%s190] %v491
                %v493 = vld [vmem:[%s197 + $0x930] sm:%s190]
                %494 = vst [vmem:[%s198 + $0x498] sm:%s190] %v493
                %v495 = vld [vmem:[%s197 + $0x940] sm:%s190]
                %496 = vst [vmem:[%s198 + $0x4a0] sm:%s190] %v495
                %v497 = vld [vmem:[%s197 + $0x950] sm:%s190]
                %498 = vst [vmem:[%s198 + $0x4a8] sm:%s190] %v497
                %v499 = vld [vmem:[%s197 + $0x960] sm:%s190]
                %500 = vst [vmem:[%s198 + $0x4b0] sm:%s190] %v499
                %v501 = vld [vmem:[%s197 + $0x970] sm:%s190]
                %502 = vst [vmem:[%s198 + $0x4b8] sm:%s190] %v501
                %v503 = vld [vmem:[%s197 + $0x980] sm:%s190]
                %504 = vst [vmem:[%s198 + $0x4c0] sm:%s190] %v503
                %v505 = vld [vmem:[%s197 + $0x990] sm:%s190]
                %506 = vst [vmem:[%s198 + $0x4c8] sm:%s190] %v505
                %v507 = vld [vmem:[%s197 + $0x9a0] sm:%s190]
                %508 = vst [vmem:[%s198 + $0x4d0] sm:%s190] %v507
                %v509 = vld [vmem:[%s197 + $0x9b0] sm:%s190]
                %510 = vst [vmem:[%s198 + $0x4d8] sm:%s190] %v509
                %v511 = vld [vmem:[%s197 + $0x9c0] sm:%s190]
                %512 = vst [vmem:[%s198 + $0x4e0] sm:%s190] %v511
                %v513 = vld [vmem:[%s197 + $0x9d0] sm:%s190]
                %514 = vst [vmem:[%s198 + $0x4e8] sm:%s190] %v513
                %v515 = vld [vmem:[%s197 + $0x9e0] sm:%s190]
                %516 = vst [vmem:[%s198 + $0x4f0] sm:%s190] %v515
                %v517 = vld [vmem:[%s197 + $0x9f0] sm:%s190]
                %518 = vst [vmem:[%s198 + $0x4f8] sm:%s190] %v517
                %v519 = vld [vmem:[%s197 + $0xa00] sm:%s190]
                %520 = vst [vmem:[%s198 + $0x500] sm:%s190] %v519
                %v521 = vld [vmem:[%s197 + $0xa10] sm:%s190]
                %522 = vst [vmem:[%s198 + $0x508] sm:%s190] %v521
                %v523 = vld [vmem:[%s197 + $0xa20] sm:%s190]
                %524 = vst [vmem:[%s198 + $0x510] sm:%s190] %v523
                %v525 = vld [vmem:[%s197 + $0xa30] sm:%s190]
                %526 = vst [vmem:[%s198 + $0x518] sm:%s190] %v525
                %v527 = vld [vmem:[%s197 + $0xa40] sm:%s190]
                %528 = vst [vmem:[%s198 + $0x520] sm:%s190] %v527
                %v529 = vld [vmem:[%s197 + $0xa50] sm:%s190]
                %530 = vst [vmem:[%s198 + $0x528] sm:%s190] %v529
                %v531 = vld [vmem:[%s197 + $0xa60] sm:%s190]
                %532 = vst [vmem:[%s198 + $0x530] sm:%s190] %v531
                %v533 = vld [vmem:[%s197 + $0xa70] sm:%s190]
                %534 = vst [vmem:[%s198 + $0x538] sm:%s190] %v533
                %v535 = vld [vmem:[%s197 + $0xa80] sm:%s190]
                %536 = vst [vmem:[%s198 + $0x540] sm:%s190] %v535
                %v537 = vld [vmem:[%s197 + $0xa90] sm:%s190]
                %538 = vst [vmem:[%s198 + $0x548] sm:%s190] %v537
                %v539 = vld [vmem:[%s197 + $0xaa0] sm:%s190]
                %540 = vst [vmem:[%s198 + $0x550] sm:%s190] %v539
                %v541 = vld [vmem:[%s197 + $0xab0] sm:%s190]
                %542 = vst [vmem:[%s198 + $0x558] sm:%s190] %v541
                %v543 = vld [vmem:[%s197 + $0xac0] sm:%s190]
                %544 = vst [vmem:[%s198 + $0x560] sm:%s190] %v543
                %v545 = vld [vmem:[%s197 + $0xad0] sm:%s190]
                %546 = vst [vmem:[%s198 + $0x568] sm:%s190] %v545
                %v547 = vld [vmem:[%s197 + $0xae0] sm:%s190]
                %548 = vst [vmem:[%s198 + $0x570] sm:%s190] %v547
                %v549 = vld [vmem:[%s197 + $0xaf0] sm:%s190]
                %550 = vst [vmem:[%s198 + $0x578] sm:%s190] %v549
                %v551 = vld [vmem:[%s197 + $0xb00] sm:%s190]
                %552 = vst [vmem:[%s198 + $0x580] sm:%s190] %v551
                %v553 = vld [vmem:[%s197 + $0xb10] sm:%s190]
                %554 = vst [vmem:[%s198 + $0x588] sm:%s190] %v553
                %v555 = vld [vmem:[%s197 + $0xb20] sm:%s190]
                %556 = vst [vmem:[%s198 + $0x590] sm:%s190] %v555
                %v557 = vld [vmem:[%s197 + $0xb30] sm:%s190]
                %558 = vst [vmem:[%s198 + $0x598] sm:%s190] %v557
                %v559 = vld [vmem:[%s197 + $0xb40] sm:%s190]
                %560 = vst [vmem:[%s198 + $0x5a0] sm:%s190] %v559
                %v561 = vld [vmem:[%s197 + $0xb50] sm:%s190]
                %562 = vst [vmem:[%s198 + $0x5a8] sm:%s190] %v561
                %v563 = vld [vmem:[%s197 + $0xb60] sm:%s190]
                %564 = vst [vmem:[%s198 + $0x5b0] sm:%s190] %v563
                %v565 = vld [vmem:[%s197 + $0xb70] sm:%s190]
                %566 = vst [vmem:[%s198 + $0x5b8] sm:%s190] %v565
                %v567 = vld [vmem:[%s197 + $0xb80] sm:%s190]
                %568 = vst [vmem:[%s198 + $0x5c0] sm:%s190] %v567
                %v569 = vld [vmem:[%s197 + $0xb90] sm:%s190]
                %570 = vst [vmem:[%s198 + $0x5c8] sm:%s190] %v569
                %v571 = vld [vmem:[%s197 + $0xba0] sm:%s190]
                %572 = vst [vmem:[%s198 + $0x5d0] sm:%s190] %v571
                %v573 = vld [vmem:[%s197 + $0xbb0] sm:%s190]
                %574 = vst [vmem:[%s198 + $0x5d8] sm:%s190] %v573
                %v575 = vld [vmem:[%s197 + $0xbc0] sm:%s190]
                %576 = vst [vmem:[%s198 + $0x5e0] sm:%s190] %v575
                %v577 = vld [vmem:[%s197 + $0xbd0] sm:%s190]
                %578 = vst [vmem:[%s198 + $0x5e8] sm:%s190] %v577
                %v579 = vld [vmem:[%s197 + $0xbe0] sm:%s190]
                %580 = vst [vmem:[%s198 + $0x5f0] sm:%s190] %v579
                %v581 = vld [vmem:[%s197 + $0xbf0] sm:%s190]
                %582 = vst [vmem:[%s198 + $0x5f8] sm:%s190] %v581
              $region41: #{flownet_encoder_forward.10} parent=35 // loop_footer
                %s196 = sadd.s32 1, %s192
              $region42: #{flownet_encoder_forward.10} parent=35 // loop_footer_branch
                %191 = sbr.rel target = $region38
              $region43: #{flownet_encoder_forward.10} parent=35 // loop_exit
                _
            $region36: #{flownet_encoder_forward.10} parent=27 // pred_fallthru
              _
          $region28: #{flownet_encoder_forward.10} parent=23 // pred_fallthru
            _
          %979 = vnop
        $region24: #{flownet_encoder_forward.10} parent=15 // pred_fallthru
          _
        // Predicated region
        $region59: #{flownet_encoder_forward.10} parent=15 // pred_check
          %p980 = pneg %p104
        $region60: #{flownet_encoder_forward.10} parent=15 // pred_check_branch
          %982 = sbr.rel (%p980) target = $region62
        $region61: #{flownet_encoder_forward.10} parent=15 // pred_region
          %s983 = smul.u32 2, %s17
          %p984 = scmp.lt.s32.totalorder %s983, 3
          %s985 = scalar_select %p984, %s983, 3
          %s986 = scalar_lea.vmem %s2, %s985
          %s987 = smul.u32 2, %s17
        $region62: #{flownet_encoder_forward.10} parent=15 // pred_fallthru
          _
      $region16: #{flownet_encoder_forward.10} parent=5 // pred_fallthru
        _
      %p988 = scmp.le.s32.totalorder 1, %s9
      %p989 = scmp.lt.s32.totalorder %s9, 7
      %p990 = pnand %p988, %p989
      %p991 = pneg %p990
      // Predicated region
      $region63: #{flownet_encoder_forward.10} parent=5 // pred_check
        _
      $region64: #{flownet_encoder_forward.10} parent=5 // pred_check_branch
        %993 = sbr.rel (%p990) target = $region66
      $region65: #{flownet_encoder_forward.10} parent=5 // pred_region
        %s994 = ssub.s32 %s9, 1
        %s995 = sand.u32 %s71, 1
        %s996 = sand.u32 %s71, 1
        %s997 = smul.addr %s996, 1536
        %s998 = scalar_lea.vmem [#allocation3], %s997
        // Predicated region
        $region67: #{flownet_encoder_forward.10} parent=65 // pred_check
          %p999 = pneg %p84
        $region68: #{flownet_encoder_forward.10} parent=65 // pred_check_branch
          %1001 = sbr.rel (%p999) target = $region70
        $region69: #{flownet_encoder_forward.10} parent=65 // pred_region
          _
        $region70: #{flownet_encoder_forward.10} parent=65 // pred_fallthru
          _
        %s1002 = smul.u32 12, %s21
        %p1003 = scmp.lt.s32.totalorder %s19, 0
        %s1004 = scalar_select %p1003, %s19, 0
        %p1005 = scmp.lt.s32.totalorder %s1002, 35
        %s1006 = scalar_select %p1005, %s1002, 35
        %s1007 = smul.addr %s1004, 36
        %s1008 = sadd.s32 %s1006, %s1007
        %s1009 = smul.addr %s1008, 4
        %s1010 = scalar_lea.vmem %s0, %s1009
        %p1011 = pneg %p56
        %p1012 = pneg %p53
        %s1013 = sand.u32 %s71, 1
        %s1014 = sand.u32 %s71, 1
        %s1015 = smul.addr %s1014, 1536
        %s1016 = scalar_lea.vmem [#allocation3], %s1015
        %p1017 = pneg %p84
        %p1018 = pneg %p81
        %s1019 = smul.u32 2, %s20
        %p1020 = scmp.lt.s32.totalorder %s1019, 3
        %s1021 = scalar_select %p1020, %s1019, 3
        %s1022 = scalar_lea.vmem %s2, %s1021
        %p1023 = pneg %p110
        %p1024 = pneg %p107
        %p1025 = pneg %p138
        %p1026 = pneg %p135
        %s1027 = smul.u32 2, %s20
        %p1028 = scmp.lt.s32.totalorder %s19, 0
        %s1029 = scalar_select %p1028, %s19, 0
        %p1030 = scmp.lt.s32.totalorder %s1027, 3
        %s1031 = scalar_select %p1030, %s1027, 3
        %s1032 = smul.addr %s1029, 4
        %s1033 = sadd.s32 %s1031, %s1032
        %s1034 = smul.addr %s1033, 8
        %s1035 = scalar_lea.vmem %s3, %s1034
        %s1036 = smul.u32 12, %s21
        %p1037 = scmp.lt.s32.totalorder %s19, 0
        %s1038 = scalar_select %p1037, %s19, 0
        %p1039 = scmp.lt.s32.totalorder %s1036, 35
        %s1040 = scalar_select %p1039, %s1036, 35
        %s1041 = smul.addr %s1038, 36
        %s1042 = sadd.s32 %s1040, %s1041
        %s1043 = smul.addr %s1042, 4
        %s1044 = scalar_lea.vmem %s0, %s1043
        %s1045 = smul.u32 12, %s21
        %s1046 = smul.u32 192, %s21
        %s1047 = smul.u32 2, %s20
        %s1048 = smul.u32 2, %s20
        %p1049 = scmp.lt.s32.totalorder %s1048, 3
        %s1050 = scalar_select %p1049, %s1048, 3
        %s1051 = scalar_lea.vmem %s2, %s1050
        %s1052 = smul.u32 2, %s20
        %s1053 = smul.u32 2, %s20
        %p1054 = scmp.lt.s32.totalorder %s19, 0
        %s1055 = scalar_select %p1054, %s19, 0
        %p1056 = scmp.lt.s32.totalorder %s1053, 3
        %s1057 = scalar_select %p1056, %s1053, 3
        %s1058 = smul.addr %s1055, 4
        %s1059 = sadd.s32 %s1057, %s1058
        %s1060 = smul.addr %s1059, 8
        %s1061 = scalar_lea.vmem %s3, %s1060
        %s1062 = smul.u32 2, %s20
        %p1063 = scmp.eq.s32.totalorder %s21, 0
        // Predicated region
        $region71: #{flownet_encoder_forward.10} parent=65 // pred_check
          %p1064 = pneg %p1063
        $region72: #{flownet_encoder_forward.10} parent=65 // pred_check_branch
          %1066 = sbr.rel (%p1064) target = $region74
        $region73: #{flownet_encoder_forward.10} parent=65 // pred_region
          %1067 = vst [vmem:[#allocation2] sm:$0xff] 0.0
          %1068 = vst [vmem:[#allocation2 + $0x8] sm:$0xff] 0.0
        $region74: #{flownet_encoder_forward.10} parent=65 // pred_fallthru
          _
        %v1069 = vld [vmem:[#allocation2] sm:$0xff]
        %v1070 = vld [vmem:[#allocation2 + $0x8] sm:$0xff]
        %v1071 = vld [vmem:[%s1044] sm:$0xff]
        %v1072 = vld [vmem:[%s1044 + $0x8] sm:$0xff]
        %v1073 = vld [vmem:[%s1044 + $0x10] sm:$0xff]
        %v1074 = vld [vmem:[%s1044 + $0x18] sm:$0xff]
        %v1075 = vld [vmem:[%s1044 + $0x20] sm:$0xff]
        %v1076 = vld [vmem:[%s1044 + $0x28] sm:$0xff]
        %v1077 = vld [vmem:[%s998] sm:$0xff]
        %v1078 = vld [vmem:[%s998 + $0x8] sm:$0xff]
        %v1079 = vld [vmem:[%s998 + $0x10] sm:$0xff]
        %v1080 = vld [vmem:[%s998 + $0x18] sm:$0xff]
        %v1081 = vld [vmem:[%s998 + $0x20] sm:$0xff]
        %v1082 = vld [vmem:[%s998 + $0x28] sm:$0xff]
        %v1083 = vld [vmem:[%s998 + $0x30] sm:$0xff]
        %v1084 = vld [vmem:[%s998 + $0x38] sm:$0xff]
        %v1085 = vld [vmem:[%s998 + $0x40] sm:$0xff]
        %v1086 = vld [vmem:[%s998 + $0x48] sm:$0xff]
        %v1087 = vld [vmem:[%s998 + $0x50] sm:$0xff]
        %v1088 = vld [vmem:[%s998 + $0x58] sm:$0xff]
        %v1089 = vld [vmem:[%s998 + $0x60] sm:$0xff]
        %v1090 = vld [vmem:[%s998 + $0x68] sm:$0xff]
        %v1091 = vld [vmem:[%s998 + $0x70] sm:$0xff]
        %v1092 = vld [vmem:[%s998 + $0x78] sm:$0xff]
        %v1093 = vld [vmem:[%s998 + $0x80] sm:$0xff]
        %v1094 = vld [vmem:[%s998 + $0x88] sm:$0xff]
        %v1095 = vld [vmem:[%s998 + $0x90] sm:$0xff]
        %v1096 = vld [vmem:[%s998 + $0x98] sm:$0xff]
        %v1097 = vld [vmem:[%s998 + $0xa0] sm:$0xff]
        %v1098 = vld [vmem:[%s998 + $0xa8] sm:$0xff]
        %v1099 = vld [vmem:[%s998 + $0xb0] sm:$0xff]
        %v1100 = vld [vmem:[%s998 + $0xb8] sm:$0xff]
        %v1101 = vld [vmem:[%s998 + $0xc0] sm:$0xff]
        %v1102 = vld [vmem:[%s998 + $0xc8] sm:$0xff]
        %v1103 = vld [vmem:[%s998 + $0xd0] sm:$0xff]
        %v1104 = vld [vmem:[%s998 + $0xd8] sm:$0xff]
        %v1105 = vld [vmem:[%s998 + $0xe0] sm:$0xff]
        %v1106 = vld [vmem:[%s998 + $0xe8] sm:$0xff]
        %v1107 = vld [vmem:[%s998 + $0xf0] sm:$0xff]
        %v1108 = vld [vmem:[%s998 + $0xf8] sm:$0xff]
        %v1109 = vld [vmem:[%s998 + $0x100] sm:$0xff]
        %v1110 = vld [vmem:[%s998 + $0x108] sm:$0xff]
        %v1111 = vld [vmem:[%s998 + $0x110] sm:$0xff]
        %v1112 = vld [vmem:[%s998 + $0x118] sm:$0xff]
        %v1113 = vld [vmem:[%s998 + $0x120] sm:$0xff]
        %v1114 = vld [vmem:[%s998 + $0x128] sm:$0xff]
        %v1115 = vld [vmem:[%s998 + $0x130] sm:$0xff]
        %v1116 = vld [vmem:[%s998 + $0x138] sm:$0xff]
        %v1117 = vld [vmem:[%s998 + $0x140] sm:$0xff]
        %v1118 = vld [vmem:[%s998 + $0x148] sm:$0xff]
        %v1119 = vld [vmem:[%s998 + $0x150] sm:$0xff]
        %v1120 = vld [vmem:[%s998 + $0x158] sm:$0xff]
        %v1121 = vld [vmem:[%s998 + $0x160] sm:$0xff]
        %v1122 = vld [vmem:[%s998 + $0x168] sm:$0xff]
        %v1123 = vld [vmem:[%s998 + $0x170] sm:$0xff]
        %v1124 = vld [vmem:[%s998 + $0x178] sm:$0xff]
        %v1125 = vld [vmem:[%s998 + $0x180] sm:$0xff]
        %v1126 = vld [vmem:[%s998 + $0x188] sm:$0xff]
        %v1127 = vld [vmem:[%s998 + $0x190] sm:$0xff]
        %v1128 = vld [vmem:[%s998 + $0x198] sm:$0xff]
        %v1129 = vld [vmem:[%s998 + $0x1a0] sm:$0xff]
        %v1130 = vld [vmem:[%s998 + $0x1a8] sm:$0xff]
        %v1131 = vld [vmem:[%s998 + $0x1b0] sm:$0xff]
        %v1132 = vld [vmem:[%s998 + $0x1b8] sm:$0xff]
        %v1133 = vld [vmem:[%s998 + $0x1c0] sm:$0xff]
        %v1134 = vld [vmem:[%s998 + $0x1c8] sm:$0xff]
        %v1135 = vld [vmem:[%s998 + $0x1d0] sm:$0xff]
        %v1136 = vld [vmem:[%s998 + $0x1d8] sm:$0xff]
        %v1137 = vld [vmem:[%s998 + $0x1e0] sm:$0xff]
        %v1138 = vld [vmem:[%s998 + $0x1e8] sm:$0xff]
        %v1139 = vld [vmem:[%s998 + $0x1f0] sm:$0xff]
        %v1140 = vld [vmem:[%s998 + $0x1f8] sm:$0xff]
        %v1141 = vld [vmem:[%s998 + $0x200] sm:$0xff]
        %v1142 = vld [vmem:[%s998 + $0x208] sm:$0xff]
        %v1143 = vld [vmem:[%s998 + $0x210] sm:$0xff]
        %v1144 = vld [vmem:[%s998 + $0x218] sm:$0xff]
        %v1145 = vld [vmem:[%s998 + $0x220] sm:$0xff]
        %v1146 = vld [vmem:[%s998 + $0x228] sm:$0xff]
        %v1147 = vld [vmem:[%s998 + $0x230] sm:$0xff]
        %v1148 = vld [vmem:[%s998 + $0x238] sm:$0xff]
        %v1149 = vld [vmem:[%s998 + $0x240] sm:$0xff]
        %v1150 = vld [vmem:[%s998 + $0x248] sm:$0xff]
        %v1151 = vld [vmem:[%s998 + $0x250] sm:$0xff]
        %v1152 = vld [vmem:[%s998 + $0x258] sm:$0xff]
        %v1153 = vld [vmem:[%s998 + $0x260] sm:$0xff]
        %v1154 = vld [vmem:[%s998 + $0x268] sm:$0xff]
        %v1155 = vld [vmem:[%s998 + $0x270] sm:$0xff]
        %v1156 = vld [vmem:[%s998 + $0x278] sm:$0xff]
        %v1157 = vld [vmem:[%s998 + $0x280] sm:$0xff]
        %v1158 = vld [vmem:[%s998 + $0x288] sm:$0xff]
        %v1159 = vld [vmem:[%s998 + $0x290] sm:$0xff]
        %v1160 = vld [vmem:[%s998 + $0x298] sm:$0xff]
        %v1161 = vld [vmem:[%s998 + $0x2a0] sm:$0xff]
        %v1162 = vld [vmem:[%s998 + $0x2a8] sm:$0xff]
        %v1163 = vld [vmem:[%s998 + $0x2b0] sm:$0xff]
        %v1164 = vld [vmem:[%s998 + $0x2b8] sm:$0xff]
        %v1165 = vld [vmem:[%s998 + $0x2c0] sm:$0xff]
        %v1166 = vld [vmem:[%s998 + $0x2c8] sm:$0xff]
        %v1167 = vld [vmem:[%s998 + $0x2d0] sm:$0xff]
        %v1168 = vld [vmem:[%s998 + $0x2d8] sm:$0xff]
        %v1169 = vld [vmem:[%s998 + $0x2e0] sm:$0xff]
        %v1170 = vld [vmem:[%s998 + $0x2e8] sm:$0xff]
        %v1171 = vld [vmem:[%s998 + $0x2f0] sm:$0xff]
        %v1172 = vld [vmem:[%s998 + $0x2f8] sm:$0xff]
        %v1173 = vld [vmem:[%s998 + $0x300] sm:$0xff]
        %v1174 = vld [vmem:[%s998 + $0x308] sm:$0xff]
        %v1175 = vld [vmem:[%s998 + $0x310] sm:$0xff]
        %v1176 = vld [vmem:[%s998 + $0x318] sm:$0xff]
        %v1177 = vld [vmem:[%s998 + $0x320] sm:$0xff]
        %v1178 = vld [vmem:[%s998 + $0x328] sm:$0xff]
        %v1179 = vld [vmem:[%s998 + $0x330] sm:$0xff]
        %v1180 = vld [vmem:[%s998 + $0x338] sm:$0xff]
        %v1181 = vld [vmem:[%s998 + $0x340] sm:$0xff]
        %v1182 = vld [vmem:[%s998 + $0x348] sm:$0xff]
        %v1183 = vld [vmem:[%s998 + $0x350] sm:$0xff]
        %v1184 = vld [vmem:[%s998 + $0x358] sm:$0xff]
        %v1185 = vld [vmem:[%s998 + $0x360] sm:$0xff]
        %v1186 = vld [vmem:[%s998 + $0x368] sm:$0xff]
        %v1187 = vld [vmem:[%s998 + $0x370] sm:$0xff]
        %v1188 = vld [vmem:[%s998 + $0x378] sm:$0xff]
        %v1189 = vld [vmem:[%s998 + $0x380] sm:$0xff]
        %v1190 = vld [vmem:[%s998 + $0x388] sm:$0xff]
        %v1191 = vld [vmem:[%s998 + $0x390] sm:$0xff]
        %v1192 = vld [vmem:[%s998 + $0x398] sm:$0xff]
        %v1193 = vld [vmem:[%s998 + $0x3a0] sm:$0xff]
        %v1194 = vld [vmem:[%s998 + $0x3a8] sm:$0xff]
        %v1195 = vld [vmem:[%s998 + $0x3b0] sm:$0xff]
        %v1196 = vld [vmem:[%s998 + $0x3b8] sm:$0xff]
        %v1197 = vld [vmem:[%s998 + $0x3c0] sm:$0xff]
        %v1198 = vld [vmem:[%s998 + $0x3c8] sm:$0xff]
        %v1199 = vld [vmem:[%s998 + $0x3d0] sm:$0xff]
        %v1200 = vld [vmem:[%s998 + $0x3d8] sm:$0xff]
        %v1201 = vld [vmem:[%s998 + $0x3e0] sm:$0xff]
        %v1202 = vld [vmem:[%s998 + $0x3e8] sm:$0xff]
        %v1203 = vld [vmem:[%s998 + $0x3f0] sm:$0xff]
        %v1204 = vld [vmem:[%s998 + $0x3f8] sm:$0xff]
        %v1205 = vld [vmem:[%s998 + $0x400] sm:$0xff]
        %v1206 = vld [vmem:[%s998 + $0x408] sm:$0xff]
        %v1207 = vld [vmem:[%s998 + $0x410] sm:$0xff]
        %v1208 = vld [vmem:[%s998 + $0x418] sm:$0xff]
        %v1209 = vld [vmem:[%s998 + $0x420] sm:$0xff]
        %v1210 = vld [vmem:[%s998 + $0x428] sm:$0xff]
        %v1211 = vld [vmem:[%s998 + $0x430] sm:$0xff]
        %v1212 = vld [vmem:[%s998 + $0x438] sm:$0xff]
        %v1213 = vld [vmem:[%s998 + $0x440] sm:$0xff]
        %v1214 = vld [vmem:[%s998 + $0x448] sm:$0xff]
        %v1215 = vld [vmem:[%s998 + $0x450] sm:$0xff]
        %v1216 = vld [vmem:[%s998 + $0x458] sm:$0xff]
        %v1217 = vld [vmem:[%s998 + $0x460] sm:$0xff]
        %v1218 = vld [vmem:[%s998 + $0x468] sm:$0xff]
        %v1219 = vld [vmem:[%s998 + $0x470] sm:$0xff]
        %v1220 = vld [vmem:[%s998 + $0x478] sm:$0xff]
        %v1221 = vld [vmem:[%s998 + $0x480] sm:$0xff]
        %v1222 = vld [vmem:[%s998 + $0x488] sm:$0xff]
        %v1223 = vld [vmem:[%s998 + $0x490] sm:$0xff]
        %v1224 = vld [vmem:[%s998 + $0x498] sm:$0xff]
        %v1225 = vld [vmem:[%s998 + $0x4a0] sm:$0xff]
        %v1226 = vld [vmem:[%s998 + $0x4a8] sm:$0xff]
        %v1227 = vld [vmem:[%s998 + $0x4b0] sm:$0xff]
        %v1228 = vld [vmem:[%s998 + $0x4b8] sm:$0xff]
        %v1229 = vld [vmem:[%s998 + $0x4c0] sm:$0xff]
        %v1230 = vld [vmem:[%s998 + $0x4c8] sm:$0xff]
        %v1231 = vld [vmem:[%s998 + $0x4d0] sm:$0xff]
        %v1232 = vld [vmem:[%s998 + $0x4d8] sm:$0xff]
        %v1233 = vld [vmem:[%s998 + $0x4e0] sm:$0xff]
        %v1234 = vld [vmem:[%s998 + $0x4e8] sm:$0xff]
        %v1235 = vld [vmem:[%s998 + $0x4f0] sm:$0xff]
        %v1236 = vld [vmem:[%s998 + $0x4f8] sm:$0xff]
        %v1237 = vld [vmem:[%s998 + $0x500] sm:$0xff]
        %v1238 = vld [vmem:[%s998 + $0x508] sm:$0xff]
        %v1239 = vld [vmem:[%s998 + $0x510] sm:$0xff]
        %v1240 = vld [vmem:[%s998 + $0x518] sm:$0xff]
        %v1241 = vld [vmem:[%s998 + $0x520] sm:$0xff]
        %v1242 = vld [vmem:[%s998 + $0x528] sm:$0xff]
        %v1243 = vld [vmem:[%s998 + $0x530] sm:$0xff]
        %v1244 = vld [vmem:[%s998 + $0x538] sm:$0xff]
        %v1245 = vld [vmem:[%s998 + $0x540] sm:$0xff]
        %v1246 = vld [vmem:[%s998 + $0x548] sm:$0xff]
        %v1247 = vld [vmem:[%s998 + $0x550] sm:$0xff]
        %v1248 = vld [vmem:[%s998 + $0x558] sm:$0xff]
        %v1249 = vld [vmem:[%s998 + $0x560] sm:$0xff]
        %v1250 = vld [vmem:[%s998 + $0x568] sm:$0xff]
        %v1251 = vld [vmem:[%s998 + $0x570] sm:$0xff]
        %v1252 = vld [vmem:[%s998 + $0x578] sm:$0xff]
        %v1253 = vld [vmem:[%s998 + $0x580] sm:$0xff]
        %v1254 = vld [vmem:[%s998 + $0x588] sm:$0xff]
        %v1255 = vld [vmem:[%s998 + $0x590] sm:$0xff]
        %v1256 = vld [vmem:[%s998 + $0x598] sm:$0xff]
        %v1257 = vld [vmem:[%s998 + $0x5a0] sm:$0xff]
        %v1258 = vld [vmem:[%s998 + $0x5a8] sm:$0xff]
        %v1259 = vld [vmem:[%s998 + $0x5b0] sm:$0xff]
        %v1260 = vld [vmem:[%s998 + $0x5b8] sm:$0xff]
        %v1261 = vld [vmem:[%s998 + $0x5c0] sm:$0xff]
        %v1262 = vld [vmem:[%s998 + $0x5c8] sm:$0xff]
        %v1263 = vld [vmem:[%s998 + $0x5d0] sm:$0xff]
        %v1264 = vld [vmem:[%s998 + $0x5d8] sm:$0xff]
        %v1265 = vld [vmem:[%s998 + $0x5e0] sm:$0xff]
        %v1266 = vld [vmem:[%s998 + $0x5e8] sm:$0xff]
        %v1267 = vld [vmem:[%s998 + $0x5f0] sm:$0xff]
        %v1268 = vld [vmem:[%s998 + $0x5f8] sm:$0xff]
        %v1275 = vunpack.c.l.b16 %v1071
        %v1276 = vunpack.c.h.b16 %v1071
        %v1277 = vunpack.c.l.b16 %v1072
        %v1278 = vunpack.c.h.b16 %v1072
        %v1279 = vunpack.c.l.b16 %v1073
        %v1280 = vunpack.c.h.b16 %v1073
        %v1281 = vunpack.c.l.b16 %v1074
        %v1282 = vunpack.c.h.b16 %v1074
        %v1283 = vunpack.c.l.b16 %v1075
        %v1284 = vunpack.c.h.b16 %v1075
        %v1285 = vunpack.c.l.b16 %v1076
        %v1286 = vunpack.c.h.b16 %v1076
        %v1287 = vpack.c.b16 %v1275, %v1275
        %v1288 = vpack.c.b16 %v1276, %v1276
        %v1289 = vpack.c.b16 %v1277, %v1277
        %v1290 = vpack.c.b16 %v1278, %v1278
        %v1291 = vpack.c.b16 %v1279, %v1279
        %v1292 = vpack.c.b16 %v1280, %v1280
        %v1293 = vpack.c.b16 %v1281, %v1281
        %v1294 = vpack.c.b16 %v1282, %v1282
        %v1295 = vpack.c.b16 %v1283, %v1283
        %v1296 = vpack.c.b16 %v1284, %v1284
        %v1297 = vpack.c.b16 %v1285, %v1285
        %v1298 = vpack.c.b16 %v1286, %v1286
        %v1503 = vunpack.c.l.b16 %v1077
        %v1504 = vunpack.c.h.b16 %v1077
        %v1505 = vunpack.c.l.b16 %v1078
        %v1506 = vunpack.c.h.b16 %v1078
        %v1507 = vunpack.c.l.b16 %v1079
        %v1508 = vunpack.c.h.b16 %v1079
        %v1509 = vunpack.c.l.b16 %v1080
        %v1510 = vunpack.c.h.b16 %v1080
        %v1511 = vunpack.c.l.b16 %v1081
        %v1512 = vunpack.c.h.b16 %v1081
        %v1513 = vunpack.c.l.b16 %v1082
        %v1514 = vunpack.c.h.b16 %v1082
        %v1515 = vunpack.c.l.b16 %v1083
        %v1516 = vunpack.c.h.b16 %v1083
        %v1517 = vunpack.c.l.b16 %v1084
        %v1518 = vunpack.c.h.b16 %v1084
        %v1519 = vunpack.c.l.b16 %v1085
        %v1520 = vunpack.c.h.b16 %v1085
        %v1521 = vunpack.c.l.b16 %v1086
        %v1522 = vunpack.c.h.b16 %v1086
        %v1523 = vunpack.c.l.b16 %v1087
        %v1524 = vunpack.c.h.b16 %v1087
        %v1525 = vunpack.c.l.b16 %v1088
        %v1526 = vunpack.c.h.b16 %v1088
        %v1527 = vunpack.c.l.b16 %v1089
        %v1528 = vunpack.c.h.b16 %v1089
        %v1529 = vunpack.c.l.b16 %v1090
        %v1530 = vunpack.c.h.b16 %v1090
        %v1531 = vunpack.c.l.b16 %v1091
        %v1532 = vunpack.c.h.b16 %v1091
        %v1533 = vunpack.c.l.b16 %v1092
        %v1534 = vunpack.c.h.b16 %v1092
        %v1535 = vunpack.c.l.b16 %v1093
        %v1536 = vunpack.c.h.b16 %v1093
        %v1537 = vunpack.c.l.b16 %v1094
        %v1538 = vunpack.c.h.b16 %v1094
        %v1539 = vunpack.c.l.b16 %v1095
        %v1540 = vunpack.c.h.b16 %v1095
        %v1541 = vunpack.c.l.b16 %v1096
        %v1542 = vunpack.c.h.b16 %v1096
        %v1543 = vunpack.c.l.b16 %v1097
        %v1544 = vunpack.c.h.b16 %v1097
        %v1545 = vunpack.c.l.b16 %v1098
        %v1546 = vunpack.c.h.b16 %v1098
        %v1547 = vunpack.c.l.b16 %v1099
        %v1548 = vunpack.c.h.b16 %v1099
        %v1549 = vunpack.c.l.b16 %v1100
        %v1550 = vunpack.c.h.b16 %v1100
        %v1551 = vunpack.c.l.b16 %v1101
        %v1552 = vunpack.c.h.b16 %v1101
        %v1553 = vunpack.c.l.b16 %v1102
        %v1554 = vunpack.c.h.b16 %v1102
        %v1555 = vunpack.c.l.b16 %v1103
        %v1556 = vunpack.c.h.b16 %v1103
        %v1557 = vunpack.c.l.b16 %v1104
        %v1558 = vunpack.c.h.b16 %v1104
        %v1559 = vunpack.c.l.b16 %v1105
        %v1560 = vunpack.c.h.b16 %v1105
        %v1561 = vunpack.c.l.b16 %v1106
        %v1562 = vunpack.c.h.b16 %v1106
        %v1563 = vunpack.c.l.b16 %v1107
        %v1564 = vunpack.c.h.b16 %v1107
        %v1565 = vunpack.c.l.b16 %v1108
        %v1566 = vunpack.c.h.b16 %v1108
        %v1567 = vunpack.c.l.b16 %v1109
        %v1568 = vunpack.c.h.b16 %v1109
        %v1569 = vunpack.c.l.b16 %v1110
        %v1570 = vunpack.c.h.b16 %v1110
        %v1571 = vunpack.c.l.b16 %v1111
        %v1572 = vunpack.c.h.b16 %v1111
        %v1573 = vunpack.c.l.b16 %v1112
        %v1574 = vunpack.c.h.b16 %v1112
        %v1575 = vunpack.c.l.b16 %v1113
        %v1576 = vunpack.c.h.b16 %v1113
        %v1577 = vunpack.c.l.b16 %v1114
        %v1578 = vunpack.c.h.b16 %v1114
        %v1579 = vunpack.c.l.b16 %v1115
        %v1580 = vunpack.c.h.b16 %v1115
        %v1581 = vunpack.c.l.b16 %v1116
        %v1582 = vunpack.c.h.b16 %v1116
        %v1583 = vunpack.c.l.b16 %v1117
        %v1584 = vunpack.c.h.b16 %v1117
        %v1585 = vunpack.c.l.b16 %v1118
        %v1586 = vunpack.c.h.b16 %v1118
        %v1587 = vunpack.c.l.b16 %v1119
        %v1588 = vunpack.c.h.b16 %v1119
        %v1589 = vunpack.c.l.b16 %v1120
        %v1590 = vunpack.c.h.b16 %v1120
        %v1591 = vunpack.c.l.b16 %v1121
        %v1592 = vunpack.c.h.b16 %v1121
        %v1593 = vunpack.c.l.b16 %v1122
        %v1594 = vunpack.c.h.b16 %v1122
        %v1595 = vunpack.c.l.b16 %v1123
        %v1596 = vunpack.c.h.b16 %v1123
        %v1597 = vunpack.c.l.b16 %v1124
        %v1598 = vunpack.c.h.b16 %v1124
        %v1599 = vunpack.c.l.b16 %v1125
        %v1600 = vunpack.c.h.b16 %v1125
        %v1601 = vunpack.c.l.b16 %v1126
        %v1602 = vunpack.c.h.b16 %v1126
        %v1603 = vunpack.c.l.b16 %v1127
        %v1604 = vunpack.c.h.b16 %v1127
        %v1605 = vunpack.c.l.b16 %v1128
        %v1606 = vunpack.c.h.b16 %v1128
        %v1607 = vunpack.c.l.b16 %v1129
        %v1608 = vunpack.c.h.b16 %v1129
        %v1609 = vunpack.c.l.b16 %v1130
        %v1610 = vunpack.c.h.b16 %v1130
        %v1611 = vunpack.c.l.b16 %v1131
        %v1612 = vunpack.c.h.b16 %v1131
        %v1613 = vunpack.c.l.b16 %v1132
        %v1614 = vunpack.c.h.b16 %v1132
        %v1615 = vunpack.c.l.b16 %v1133
        %v1616 = vunpack.c.h.b16 %v1133
        %v1617 = vunpack.c.l.b16 %v1134
        %v1618 = vunpack.c.h.b16 %v1134
        %v1619 = vunpack.c.l.b16 %v1135
        %v1620 = vunpack.c.h.b16 %v1135
        %v1621 = vunpack.c.l.b16 %v1136
        %v1622 = vunpack.c.h.b16 %v1136
        %v1623 = vunpack.c.l.b16 %v1137
        %v1624 = vunpack.c.h.b16 %v1137
        %v1625 = vunpack.c.l.b16 %v1138
        %v1626 = vunpack.c.h.b16 %v1138
        %v1627 = vunpack.c.l.b16 %v1139
        %v1628 = vunpack.c.h.b16 %v1139
        %v1629 = vunpack.c.l.b16 %v1140
        %v1630 = vunpack.c.h.b16 %v1140
        %v1631 = vunpack.c.l.b16 %v1141
        %v1632 = vunpack.c.h.b16 %v1141
        %v1633 = vunpack.c.l.b16 %v1142
        %v1634 = vunpack.c.h.b16 %v1142
        %v1635 = vunpack.c.l.b16 %v1143
        %v1636 = vunpack.c.h.b16 %v1143
        %v1637 = vunpack.c.l.b16 %v1144
        %v1638 = vunpack.c.h.b16 %v1144
        %v1639 = vunpack.c.l.b16 %v1145
        %v1640 = vunpack.c.h.b16 %v1145
        %v1641 = vunpack.c.l.b16 %v1146
        %v1642 = vunpack.c.h.b16 %v1146
        %v1643 = vunpack.c.l.b16 %v1147
        %v1644 = vunpack.c.h.b16 %v1147
        %v1645 = vunpack.c.l.b16 %v1148
        %v1646 = vunpack.c.h.b16 %v1148
        %v1647 = vunpack.c.l.b16 %v1149
        %v1648 = vunpack.c.h.b16 %v1149
        %v1649 = vunpack.c.l.b16 %v1150
        %v1650 = vunpack.c.h.b16 %v1150
        %v1651 = vunpack.c.l.b16 %v1151
        %v1652 = vunpack.c.h.b16 %v1151
        %v1653 = vunpack.c.l.b16 %v1152
        %v1654 = vunpack.c.h.b16 %v1152
        %v1655 = vunpack.c.l.b16 %v1153
        %v1656 = vunpack.c.h.b16 %v1153
        %v1657 = vunpack.c.l.b16 %v1154
        %v1658 = vunpack.c.h.b16 %v1154
        %v1659 = vunpack.c.l.b16 %v1155
        %v1660 = vunpack.c.h.b16 %v1155
        %v1661 = vunpack.c.l.b16 %v1156
        %v1662 = vunpack.c.h.b16 %v1156
        %v1663 = vunpack.c.l.b16 %v1157
        %v1664 = vunpack.c.h.b16 %v1157
        %v1665 = vunpack.c.l.b16 %v1158
        %v1666 = vunpack.c.h.b16 %v1158
        %v1667 = vunpack.c.l.b16 %v1159
        %v1668 = vunpack.c.h.b16 %v1159
        %v1669 = vunpack.c.l.b16 %v1160
        %v1670 = vunpack.c.h.b16 %v1160
        %v1671 = vunpack.c.l.b16 %v1161
        %v1672 = vunpack.c.h.b16 %v1161
        %v1673 = vunpack.c.l.b16 %v1162
        %v1674 = vunpack.c.h.b16 %v1162
        %v1675 = vunpack.c.l.b16 %v1163
        %v1676 = vunpack.c.h.b16 %v1163
        %v1677 = vunpack.c.l.b16 %v1164
        %v1678 = vunpack.c.h.b16 %v1164
        %v1679 = vunpack.c.l.b16 %v1165
        %v1680 = vunpack.c.h.b16 %v1165
        %v1681 = vunpack.c.l.b16 %v1166
        %v1682 = vunpack.c.h.b16 %v1166
        %v1683 = vunpack.c.l.b16 %v1167
        %v1684 = vunpack.c.h.b16 %v1167
        %v1685 = vunpack.c.l.b16 %v1168
        %v1686 = vunpack.c.h.b16 %v1168
        %v1687 = vunpack.c.l.b16 %v1169
        %v1688 = vunpack.c.h.b16 %v1169
        %v1689 = vunpack.c.l.b16 %v1170
        %v1690 = vunpack.c.h.b16 %v1170
        %v1691 = vunpack.c.l.b16 %v1171
        %v1692 = vunpack.c.h.b16 %v1171
        %v1693 = vunpack.c.l.b16 %v1172
        %v1694 = vunpack.c.h.b16 %v1172
        %v1695 = vunpack.c.l.b16 %v1173
        %v1696 = vunpack.c.h.b16 %v1173
        %v1697 = vunpack.c.l.b16 %v1174
        %v1698 = vunpack.c.h.b16 %v1174
        %v1699 = vunpack.c.l.b16 %v1175
        %v1700 = vunpack.c.h.b16 %v1175
        %v1701 = vunpack.c.l.b16 %v1176
        %v1702 = vunpack.c.h.b16 %v1176
        %v1703 = vunpack.c.l.b16 %v1177
        %v1704 = vunpack.c.h.b16 %v1177
        %v1705 = vunpack.c.l.b16 %v1178
        %v1706 = vunpack.c.h.b16 %v1178
        %v1707 = vunpack.c.l.b16 %v1179
        %v1708 = vunpack.c.h.b16 %v1179
        %v1709 = vunpack.c.l.b16 %v1180
        %v1710 = vunpack.c.h.b16 %v1180
        %v1711 = vunpack.c.l.b16 %v1181
        %v1712 = vunpack.c.h.b16 %v1181
        %v1713 = vunpack.c.l.b16 %v1182
        %v1714 = vunpack.c.h.b16 %v1182
        %v1715 = vunpack.c.l.b16 %v1183
        %v1716 = vunpack.c.h.b16 %v1183
        %v1717 = vunpack.c.l.b16 %v1184
        %v1718 = vunpack.c.h.b16 %v1184
        %v1719 = vunpack.c.l.b16 %v1185
        %v1720 = vunpack.c.h.b16 %v1185
        %v1721 = vunpack.c.l.b16 %v1186
        %v1722 = vunpack.c.h.b16 %v1186
        %v1723 = vunpack.c.l.b16 %v1187
        %v1724 = vunpack.c.h.b16 %v1187
        %v1725 = vunpack.c.l.b16 %v1188
        %v1726 = vunpack.c.h.b16 %v1188
        %v1727 = vunpack.c.l.b16 %v1189
        %v1728 = vunpack.c.h.b16 %v1189
        %v1729 = vunpack.c.l.b16 %v1190
        %v1730 = vunpack.c.h.b16 %v1190
        %v1731 = vunpack.c.l.b16 %v1191
        %v1732 = vunpack.c.h.b16 %v1191
        %v1733 = vunpack.c.l.b16 %v1192
        %v1734 = vunpack.c.h.b16 %v1192
        %v1735 = vunpack.c.l.b16 %v1193
        %v1736 = vunpack.c.h.b16 %v1193
        %v1737 = vunpack.c.l.b16 %v1194
        %v1738 = vunpack.c.h.b16 %v1194
        %v1739 = vunpack.c.l.b16 %v1195
        %v1740 = vunpack.c.h.b16 %v1195
        %v1741 = vunpack.c.l.b16 %v1196
        %v1742 = vunpack.c.h.b16 %v1196
        %v1743 = vunpack.c.l.b16 %v1197
        %v1744 = vunpack.c.h.b16 %v1197
        %v1745 = vunpack.c.l.b16 %v1198
        %v1746 = vunpack.c.h.b16 %v1198
        %v1747 = vunpack.c.l.b16 %v1199
        %v1748 = vunpack.c.h.b16 %v1199
        %v1749 = vunpack.c.l.b16 %v1200
        %v1750 = vunpack.c.h.b16 %v1200
        %v1751 = vunpack.c.l.b16 %v1201
        %v1752 = vunpack.c.h.b16 %v1201
        %v1753 = vunpack.c.l.b16 %v1202
        %v1754 = vunpack.c.h.b16 %v1202
        %v1755 = vunpack.c.l.b16 %v1203
        %v1756 = vunpack.c.h.b16 %v1203
        %v1757 = vunpack.c.l.b16 %v1204
        %v1758 = vunpack.c.h.b16 %v1204
        %v1759 = vunpack.c.l.b16 %v1205
        %v1760 = vunpack.c.h.b16 %v1205
        %v1761 = vunpack.c.l.b16 %v1206
        %v1762 = vunpack.c.h.b16 %v1206
        %v1763 = vunpack.c.l.b16 %v1207
        %v1764 = vunpack.c.h.b16 %v1207
        %v1765 = vunpack.c.l.b16 %v1208
        %v1766 = vunpack.c.h.b16 %v1208
        %v1767 = vunpack.c.l.b16 %v1209
        %v1768 = vunpack.c.h.b16 %v1209
        %v1769 = vunpack.c.l.b16 %v1210
        %v1770 = vunpack.c.h.b16 %v1210
        %v1771 = vunpack.c.l.b16 %v1211
        %v1772 = vunpack.c.h.b16 %v1211
        %v1773 = vunpack.c.l.b16 %v1212
        %v1774 = vunpack.c.h.b16 %v1212
        %v1775 = vunpack.c.l.b16 %v1213
        %v1776 = vunpack.c.h.b16 %v1213
        %v1777 = vunpack.c.l.b16 %v1214
        %v1778 = vunpack.c.h.b16 %v1214
        %v1779 = vunpack.c.l.b16 %v1215
        %v1780 = vunpack.c.h.b16 %v1215
        %v1781 = vunpack.c.l.b16 %v1216
        %v1782 = vunpack.c.h.b16 %v1216
        %v1783 = vunpack.c.l.b16 %v1217
        %v1784 = vunpack.c.h.b16 %v1217
        %v1785 = vunpack.c.l.b16 %v1218
        %v1786 = vunpack.c.h.b16 %v1218
        %v1787 = vunpack.c.l.b16 %v1219
        %v1788 = vunpack.c.h.b16 %v1219
        %v1789 = vunpack.c.l.b16 %v1220
        %v1790 = vunpack.c.h.b16 %v1220
        %v1791 = vunpack.c.l.b16 %v1221
        %v1792 = vunpack.c.h.b16 %v1221
        %v1793 = vunpack.c.l.b16 %v1222
        %v1794 = vunpack.c.h.b16 %v1222
        %v1795 = vunpack.c.l.b16 %v1223
        %v1796 = vunpack.c.h.b16 %v1223
        %v1797 = vunpack.c.l.b16 %v1224
        %v1798 = vunpack.c.h.b16 %v1224
        %v1799 = vunpack.c.l.b16 %v1225
        %v1800 = vunpack.c.h.b16 %v1225
        %v1801 = vunpack.c.l.b16 %v1226
        %v1802 = vunpack.c.h.b16 %v1226
        %v1803 = vunpack.c.l.b16 %v1227
        %v1804 = vunpack.c.h.b16 %v1227
        %v1805 = vunpack.c.l.b16 %v1228
        %v1806 = vunpack.c.h.b16 %v1228
        %v1807 = vunpack.c.l.b16 %v1229
        %v1808 = vunpack.c.h.b16 %v1229
        %v1809 = vunpack.c.l.b16 %v1230
        %v1810 = vunpack.c.h.b16 %v1230
        %v1811 = vunpack.c.l.b16 %v1231
        %v1812 = vunpack.c.h.b16 %v1231
        %v1813 = vunpack.c.l.b16 %v1232
        %v1814 = vunpack.c.h.b16 %v1232
        %v1815 = vunpack.c.l.b16 %v1233
        %v1816 = vunpack.c.h.b16 %v1233
        %v1817 = vunpack.c.l.b16 %v1234
        %v1818 = vunpack.c.h.b16 %v1234
        %v1819 = vunpack.c.l.b16 %v1235
        %v1820 = vunpack.c.h.b16 %v1235
        %v1821 = vunpack.c.l.b16 %v1236
        %v1822 = vunpack.c.h.b16 %v1236
        %v1823 = vunpack.c.l.b16 %v1237
        %v1824 = vunpack.c.h.b16 %v1237
        %v1825 = vunpack.c.l.b16 %v1238
        %v1826 = vunpack.c.h.b16 %v1238
        %v1827 = vunpack.c.l.b16 %v1239
        %v1828 = vunpack.c.h.b16 %v1239
        %v1829 = vunpack.c.l.b16 %v1240
        %v1830 = vunpack.c.h.b16 %v1240
        %v1831 = vunpack.c.l.b16 %v1241
        %v1832 = vunpack.c.h.b16 %v1241
        %v1833 = vunpack.c.l.b16 %v1242
        %v1834 = vunpack.c.h.b16 %v1242
        %v1835 = vunpack.c.l.b16 %v1243
        %v1836 = vunpack.c.h.b16 %v1243
        %v1837 = vunpack.c.l.b16 %v1244
        %v1838 = vunpack.c.h.b16 %v1244
        %v1839 = vunpack.c.l.b16 %v1245
        %v1840 = vunpack.c.h.b16 %v1245
        %v1841 = vunpack.c.l.b16 %v1246
        %v1842 = vunpack.c.h.b16 %v1246
        %v1843 = vunpack.c.l.b16 %v1247
        %v1844 = vunpack.c.h.b16 %v1247
        %v1845 = vunpack.c.l.b16 %v1248
        %v1846 = vunpack.c.h.b16 %v1248
        %v1847 = vunpack.c.l.b16 %v1249
        %v1848 = vunpack.c.h.b16 %v1249
        %v1849 = vunpack.c.l.b16 %v1250
        %v1850 = vunpack.c.h.b16 %v1250
        %v1851 = vunpack.c.l.b16 %v1251
        %v1852 = vunpack.c.h.b16 %v1251
        %v1853 = vunpack.c.l.b16 %v1252
        %v1854 = vunpack.c.h.b16 %v1252
        %v1855 = vunpack.c.l.b16 %v1253
        %v1856 = vunpack.c.h.b16 %v1253
        %v1857 = vunpack.c.l.b16 %v1254
        %v1858 = vunpack.c.h.b16 %v1254
        %v1859 = vunpack.c.l.b16 %v1255
        %v1860 = vunpack.c.h.b16 %v1255
        %v1861 = vunpack.c.l.b16 %v1256
        %v1862 = vunpack.c.h.b16 %v1256
        %v1863 = vunpack.c.l.b16 %v1257
        %v1864 = vunpack.c.h.b16 %v1257
        %v1865 = vunpack.c.l.b16 %v1258
        %v1866 = vunpack.c.h.b16 %v1258
        %v1867 = vunpack.c.l.b16 %v1259
        %v1868 = vunpack.c.h.b16 %v1259
        %v1869 = vunpack.c.l.b16 %v1260
        %v1870 = vunpack.c.h.b16 %v1260
        %v1871 = vunpack.c.l.b16 %v1261
        %v1872 = vunpack.c.h.b16 %v1261
        %v1873 = vunpack.c.l.b16 %v1262
        %v1874 = vunpack.c.h.b16 %v1262
        %v1875 = vunpack.c.l.b16 %v1263
        %v1876 = vunpack.c.h.b16 %v1263
        %v1877 = vunpack.c.l.b16 %v1264
        %v1878 = vunpack.c.h.b16 %v1264
        %v1879 = vunpack.c.l.b16 %v1265
        %v1880 = vunpack.c.h.b16 %v1265
        %v1881 = vunpack.c.l.b16 %v1266
        %v1882 = vunpack.c.h.b16 %v1266
        %v1883 = vunpack.c.l.b16 %v1267
        %v1884 = vunpack.c.h.b16 %v1267
        %v1885 = vunpack.c.l.b16 %v1268
        %v1886 = vunpack.c.h.b16 %v1268
        %v1887 = vpack.c.b16 %v1505, %v1503
        %v1888 = vpack.c.b16 %v1506, %v1504
        %v1889 = vpack.c.b16 %v1509, %v1507
        %v1890 = vpack.c.b16 %v1510, %v1508
        %v1891 = vpack.c.b16 %v1513, %v1511
        %v1892 = vpack.c.b16 %v1514, %v1512
        %v1893 = vpack.c.b16 %v1517, %v1515
        %v1894 = vpack.c.b16 %v1518, %v1516
        %v1895 = vpack.c.b16 %v1521, %v1519
        %v1896 = vpack.c.b16 %v1522, %v1520
        %v1897 = vpack.c.b16 %v1525, %v1523
        %v1898 = vpack.c.b16 %v1526, %v1524
        %v1899 = vpack.c.b16 %v1529, %v1527
        %v1900 = vpack.c.b16 %v1530, %v1528
        %v1901 = vpack.c.b16 %v1533, %v1531
        %v1902 = vpack.c.b16 %v1534, %v1532
        %v1903 = vpack.c.b16 %v1537, %v1535
        %v1904 = vpack.c.b16 %v1538, %v1536
        %v1905 = vpack.c.b16 %v1541, %v1539
        %v1906 = vpack.c.b16 %v1542, %v1540
        %v1907 = vpack.c.b16 %v1545, %v1543
        %v1908 = vpack.c.b16 %v1546, %v1544
        %v1909 = vpack.c.b16 %v1549, %v1547
        %v1910 = vpack.c.b16 %v1550, %v1548
        %v1911 = vpack.c.b16 %v1553, %v1551
        %v1912 = vpack.c.b16 %v1554, %v1552
        %v1913 = vpack.c.b16 %v1557, %v1555
        %v1914 = vpack.c.b16 %v1558, %v1556
        %v1915 = vpack.c.b16 %v1561, %v1559
        %v1916 = vpack.c.b16 %v1562, %v1560
        %v1917 = vpack.c.b16 %v1565, %v1563
        %v1918 = vpack.c.b16 %v1566, %v1564
        %v1919 = vpack.c.b16 %v1569, %v1567
        %v1920 = vpack.c.b16 %v1570, %v1568
        %v1921 = vpack.c.b16 %v1573, %v1571
        %v1922 = vpack.c.b16 %v1574, %v1572
        %v1923 = vpack.c.b16 %v1577, %v1575
        %v1924 = vpack.c.b16 %v1578, %v1576
        %v1925 = vpack.c.b16 %v1581, %v1579
        %v1926 = vpack.c.b16 %v1582, %v1580
        %v1927 = vpack.c.b16 %v1585, %v1583
        %v1928 = vpack.c.b16 %v1586, %v1584
        %v1929 = vpack.c.b16 %v1589, %v1587
        %v1930 = vpack.c.b16 %v1590, %v1588
        %v1931 = vpack.c.b16 %v1593, %v1591
        %v1932 = vpack.c.b16 %v1594, %v1592
        %v1933 = vpack.c.b16 %v1597, %v1595
        %v1934 = vpack.c.b16 %v1598, %v1596
        %v1935 = vpack.c.b16 %v1601, %v1599
        %v1936 = vpack.c.b16 %v1602, %v1600
        %v1937 = vpack.c.b16 %v1605, %v1603
        %v1938 = vpack.c.b16 %v1606, %v1604
        %v1939 = vpack.c.b16 %v1609, %v1607
        %v1940 = vpack.c.b16 %v1610, %v1608
        %v1941 = vpack.c.b16 %v1613, %v1611
        %v1942 = vpack.c.b16 %v1614, %v1612
        %v1943 = vpack.c.b16 %v1617, %v1615
        %v1944 = vpack.c.b16 %v1618, %v1616
        %v1945 = vpack.c.b16 %v1621, %v1619
        %v1946 = vpack.c.b16 %v1622, %v1620
        %v1947 = vpack.c.b16 %v1625, %v1623
        %v1948 = vpack.c.b16 %v1626, %v1624
        %v1949 = vpack.c.b16 %v1629, %v1627
        %v1950 = vpack.c.b16 %v1630, %v1628
        %v1951 = vpack.c.b16 %v1633, %v1631
        %v1952 = vpack.c.b16 %v1634, %v1632
        %v1953 = vpack.c.b16 %v1637, %v1635
        %v1954 = vpack.c.b16 %v1638, %v1636
        %v1955 = vpack.c.b16 %v1641, %v1639
        %v1956 = vpack.c.b16 %v1642, %v1640
        %v1957 = vpack.c.b16 %v1645, %v1643
        %v1958 = vpack.c.b16 %v1646, %v1644
        %v1959 = vpack.c.b16 %v1649, %v1647
        %v1960 = vpack.c.b16 %v1650, %v1648
        %v1961 = vpack.c.b16 %v1653, %v1651
        %v1962 = vpack.c.b16 %v1654, %v1652
        %v1963 = vpack.c.b16 %v1657, %v1655
        %v1964 = vpack.c.b16 %v1658, %v1656
        %v1965 = vpack.c.b16 %v1661, %v1659
        %v1966 = vpack.c.b16 %v1662, %v1660
        %v1967 = vpack.c.b16 %v1665, %v1663
        %v1968 = vpack.c.b16 %v1666, %v1664
        %v1969 = vpack.c.b16 %v1669, %v1667
        %v1970 = vpack.c.b16 %v1670, %v1668
        %v1971 = vpack.c.b16 %v1673, %v1671
        %v1972 = vpack.c.b16 %v1674, %v1672
        %v1973 = vpack.c.b16 %v1677, %v1675
        %v1974 = vpack.c.b16 %v1678, %v1676
        %v1975 = vpack.c.b16 %v1681, %v1679
        %v1976 = vpack.c.b16 %v1682, %v1680
        %v1977 = vpack.c.b16 %v1685, %v1683
        %v1978 = vpack.c.b16 %v1686, %v1684
        %v1979 = vpack.c.b16 %v1689, %v1687
        %v1980 = vpack.c.b16 %v1690, %v1688
        %v1981 = vpack.c.b16 %v1693, %v1691
        %v1982 = vpack.c.b16 %v1694, %v1692
        %v1983 = vpack.c.b16 %v1697, %v1695
        %v1984 = vpack.c.b16 %v1698, %v1696
        %v1985 = vpack.c.b16 %v1701, %v1699
        %v1986 = vpack.c.b16 %v1702, %v1700
        %v1987 = vpack.c.b16 %v1705, %v1703
        %v1988 = vpack.c.b16 %v1706, %v1704
        %v1989 = vpack.c.b16 %v1709, %v1707
        %v1990 = vpack.c.b16 %v1710, %v1708
        %v1991 = vpack.c.b16 %v1713, %v1711
        %v1992 = vpack.c.b16 %v1714, %v1712
        %v1993 = vpack.c.b16 %v1717, %v1715
        %v1994 = vpack.c.b16 %v1718, %v1716
        %v1995 = vpack.c.b16 %v1721, %v1719
        %v1996 = vpack.c.b16 %v1722, %v1720
        %v1997 = vpack.c.b16 %v1725, %v1723
        %v1998 = vpack.c.b16 %v1726, %v1724
        %v1999 = vpack.c.b16 %v1729, %v1727
        %v2000 = vpack.c.b16 %v1730, %v1728
        %v2001 = vpack.c.b16 %v1733, %v1731
        %v2002 = vpack.c.b16 %v1734, %v1732
        %v2003 = vpack.c.b16 %v1737, %v1735
        %v2004 = vpack.c.b16 %v1738, %v1736
        %v2005 = vpack.c.b16 %v1741, %v1739
        %v2006 = vpack.c.b16 %v1742, %v1740
        %v2007 = vpack.c.b16 %v1745, %v1743
        %v2008 = vpack.c.b16 %v1746, %v1744
        %v2009 = vpack.c.b16 %v1749, %v1747
        %v2010 = vpack.c.b16 %v1750, %v1748
        %v2011 = vpack.c.b16 %v1753, %v1751
        %v2012 = vpack.c.b16 %v1754, %v1752
        %v2013 = vpack.c.b16 %v1757, %v1755
        %v2014 = vpack.c.b16 %v1758, %v1756
        %v2015 = vpack.c.b16 %v1761, %v1759
        %v2016 = vpack.c.b16 %v1762, %v1760
        %v2017 = vpack.c.b16 %v1765, %v1763
        %v2018 = vpack.c.b16 %v1766, %v1764
        %v2019 = vpack.c.b16 %v1769, %v1767
        %v2020 = vpack.c.b16 %v1770, %v1768
        %v2021 = vpack.c.b16 %v1773, %v1771
        %v2022 = vpack.c.b16 %v1774, %v1772
        %v2023 = vpack.c.b16 %v1777, %v1775
        %v2024 = vpack.c.b16 %v1778, %v1776
        %v2025 = vpack.c.b16 %v1781, %v1779
        %v2026 = vpack.c.b16 %v1782, %v1780
        %v2027 = vpack.c.b16 %v1785, %v1783
        %v2028 = vpack.c.b16 %v1786, %v1784
        %v2029 = vpack.c.b16 %v1789, %v1787
        %v2030 = vpack.c.b16 %v1790, %v1788
        %v2031 = vpack.c.b16 %v1793, %v1791
        %v2032 = vpack.c.b16 %v1794, %v1792
        %v2033 = vpack.c.b16 %v1797, %v1795
        %v2034 = vpack.c.b16 %v1798, %v1796
        %v2035 = vpack.c.b16 %v1801, %v1799
        %v2036 = vpack.c.b16 %v1802, %v1800
        %v2037 = vpack.c.b16 %v1805, %v1803
        %v2038 = vpack.c.b16 %v1806, %v1804
        %v2039 = vpack.c.b16 %v1809, %v1807
        %v2040 = vpack.c.b16 %v1810, %v1808
        %v2041 = vpack.c.b16 %v1813, %v1811
        %v2042 = vpack.c.b16 %v1814, %v1812
        %v2043 = vpack.c.b16 %v1817, %v1815
        %v2044 = vpack.c.b16 %v1818, %v1816
        %v2045 = vpack.c.b16 %v1821, %v1819
        %v2046 = vpack.c.b16 %v1822, %v1820
        %v2047 = vpack.c.b16 %v1825, %v1823
        %v2048 = vpack.c.b16 %v1826, %v1824
        %v2049 = vpack.c.b16 %v1829, %v1827
        %v2050 = vpack.c.b16 %v1830, %v1828
        %v2051 = vpack.c.b16 %v1833, %v1831
        %v2052 = vpack.c.b16 %v1834, %v1832
        %v2053 = vpack.c.b16 %v1837, %v1835
        %v2054 = vpack.c.b16 %v1838, %v1836
        %v2055 = vpack.c.b16 %v1841, %v1839
        %v2056 = vpack.c.b16 %v1842, %v1840
        %v2057 = vpack.c.b16 %v1845, %v1843
        %v2058 = vpack.c.b16 %v1846, %v1844
        %v2059 = vpack.c.b16 %v1849, %v1847
        %v2060 = vpack.c.b16 %v1850, %v1848
        %v2061 = vpack.c.b16 %v1853, %v1851
        %v2062 = vpack.c.b16 %v1854, %v1852
        %v2063 = vpack.c.b16 %v1857, %v1855
        %v2064 = vpack.c.b16 %v1858, %v1856
        %v2065 = vpack.c.b16 %v1861, %v1859
        %v2066 = vpack.c.b16 %v1862, %v1860
        %v2067 = vpack.c.b16 %v1865, %v1863
        %v2068 = vpack.c.b16 %v1866, %v1864
        %v2069 = vpack.c.b16 %v1869, %v1867
        %v2070 = vpack.c.b16 %v1870, %v1868
        %v2071 = vpack.c.b16 %v1873, %v1871
        %v2072 = vpack.c.b16 %v1874, %v1872
        %v2073 = vpack.c.b16 %v1877, %v1875
        %v2074 = vpack.c.b16 %v1878, %v1876
        %v2075 = vpack.c.b16 %v1881, %v1879
        %v2076 = vpack.c.b16 %v1882, %v1880
        %v2077 = vpack.c.b16 %v1885, %v1883
        %v2078 = vpack.c.b16 %v1886, %v1884
        %2271 = vmatpush.bf16.msra.mxu0 %v1901
        %2272 = vmatpush.bf16.msra.mxu0 %v1899
        %2273 = vmatpush.bf16.msra.mxu0 %v1897
        %2274 = vmatpush.bf16.msra.mxu0 %v1895
        %2275 = vmatpush.bf16.msra.mxu0 %v1893
        %2276 = vmatpush.bf16.msra.mxu0 %v1891
        %2277 = vmatpush.bf16.msra.mxu0 %v1889
        %2278 = vmatpush.bf16.msra.mxu0 %v1887
        %2279 = vmatmul.bf16.gmra.mxu0 %v1287
        %v2280 = vpop.f32.mrf.mxu0
        %v2281 = vadd.f32 0.0, %v2280
        %v2282 = vpop.f32.mrf.mxu0
        %2283 = vdwg.mxu0
        %2284 = vmatpush.bf16.msra.mxu0 %v1917
        %2285 = vmatpush.bf16.msra.mxu0 %v1915
        %2286 = vmatpush.bf16.msra.mxu0 %v1913
        %2287 = vmatpush.bf16.msra.mxu0 %v1911
        %2288 = vmatpush.bf16.msra.mxu0 %v1909
        %2289 = vmatpush.bf16.msra.mxu0 %v1907
        %2290 = vmatpush.bf16.msra.mxu0 %v1905
        %2291 = vmatpush.bf16.msra.mxu0 %v1903
        %2292 = vmatmul.bf16.gmra.mxu0 %v1288
        %v2293 = vpop.f32.mrf.mxu0
        %v2294 = vadd.f32 %v2281, %v2293
        %v2295 = vpop.f32.mrf.mxu0
        %2296 = vdwg.mxu0
        %2297 = vmatpush.bf16.msra.mxu0 %v1933
        %2298 = vmatpush.bf16.msra.mxu0 %v1931
        %2299 = vmatpush.bf16.msra.mxu0 %v1929
        %2300 = vmatpush.bf16.msra.mxu0 %v1927
        %2301 = vmatpush.bf16.msra.mxu0 %v1925
        %2302 = vmatpush.bf16.msra.mxu0 %v1923
        %2303 = vmatpush.bf16.msra.mxu0 %v1921
        %2304 = vmatpush.bf16.msra.mxu0 %v1919
        %2305 = vmatmul.bf16.gmra.mxu0 %v1289
        %v2306 = vpop.f32.mrf.mxu0
        %v2307 = vadd.f32 %v2294, %v2306
        %v2308 = vpop.f32.mrf.mxu0
        %2309 = vdwg.mxu0
        %2310 = vmatpush.bf16.msra.mxu0 %v1949
        %2311 = vmatpush.bf16.msra.mxu0 %v1947
        %2312 = vmatpush.bf16.msra.mxu0 %v1945
        %2313 = vmatpush.bf16.msra.mxu0 %v1943
        %2314 = vmatpush.bf16.msra.mxu0 %v1941
        %2315 = vmatpush.bf16.msra.mxu0 %v1939
        %2316 = vmatpush.bf16.msra.mxu0 %v1937
        %2317 = vmatpush.bf16.msra.mxu0 %v1935
        %2318 = vmatmul.bf16.gmra.mxu0 %v1290
        %v2319 = vpop.f32.mrf.mxu0
        %v2320 = vadd.f32 %v2307, %v2319
        %v2321 = vpop.f32.mrf.mxu0
        %2322 = vdwg.mxu0
        %2323 = vmatpush.bf16.msra.mxu0 %v1965
        %2324 = vmatpush.bf16.msra.mxu0 %v1963
        %2325 = vmatpush.bf16.msra.mxu0 %v1961
        %2326 = vmatpush.bf16.msra.mxu0 %v1959
        %2327 = vmatpush.bf16.msra.mxu0 %v1957
        %2328 = vmatpush.bf16.msra.mxu0 %v1955
        %2329 = vmatpush.bf16.msra.mxu0 %v1953
        %2330 = vmatpush.bf16.msra.mxu0 %v1951
        %2331 = vmatmul.bf16.gmra.mxu0 %v1291
        %v2332 = vpop.f32.mrf.mxu0
        %v2333 = vadd.f32 %v2320, %v2332
        %v2334 = vpop.f32.mrf.mxu0
        %2335 = vdwg.mxu0
        %2336 = vmatpush.bf16.msra.mxu0 %v1981
        %2337 = vmatpush.bf16.msra.mxu0 %v1979
        %2338 = vmatpush.bf16.msra.mxu0 %v1977
        %2339 = vmatpush.bf16.msra.mxu0 %v1975
        %2340 = vmatpush.bf16.msra.mxu0 %v1973
        %2341 = vmatpush.bf16.msra.mxu0 %v1971
        %2342 = vmatpush.bf16.msra.mxu0 %v1969
        %2343 = vmatpush.bf16.msra.mxu0 %v1967
        %2344 = vmatmul.bf16.gmra.mxu0 %v1292
        %v2345 = vpop.f32.mrf.mxu0
        %v2346 = vadd.f32 %v2333, %v2345
        %v2347 = vpop.f32.mrf.mxu0
        %2348 = vdwg.mxu0
        %2349 = vmatpush.bf16.msra.mxu0 %v1997
        %2350 = vmatpush.bf16.msra.mxu0 %v1995
        %2351 = vmatpush.bf16.msra.mxu0 %v1993
        %2352 = vmatpush.bf16.msra.mxu0 %v1991
        %2353 = vmatpush.bf16.msra.mxu0 %v1989
        %2354 = vmatpush.bf16.msra.mxu0 %v1987
        %2355 = vmatpush.bf16.msra.mxu0 %v1985
        %2356 = vmatpush.bf16.msra.mxu0 %v1983
        %2357 = vmatmul.bf16.gmra.mxu0 %v1293
        %v2358 = vpop.f32.mrf.mxu0
        %v2359 = vadd.f32 %v2346, %v2358
        %v2360 = vpop.f32.mrf.mxu0
        %2361 = vdwg.mxu0
        %2362 = vmatpush.bf16.msra.mxu0 %v2013
        %2363 = vmatpush.bf16.msra.mxu0 %v2011
        %2364 = vmatpush.bf16.msra.mxu0 %v2009
        %2365 = vmatpush.bf16.msra.mxu0 %v2007
        %2366 = vmatpush.bf16.msra.mxu0 %v2005
        %2367 = vmatpush.bf16.msra.mxu0 %v2003
        %2368 = vmatpush.bf16.msra.mxu0 %v2001
        %2369 = vmatpush.bf16.msra.mxu0 %v1999
        %2370 = vmatmul.bf16.gmra.mxu0 %v1294
        %v2371 = vpop.f32.mrf.mxu0
        %v2372 = vadd.f32 %v2359, %v2371
        %v2373 = vpop.f32.mrf.mxu0
        %2374 = vdwg.mxu0
        %2375 = vmatpush.bf16.msra.mxu0 %v2029
        %2376 = vmatpush.bf16.msra.mxu0 %v2027
        %2377 = vmatpush.bf16.msra.mxu0 %v2025
        %2378 = vmatpush.bf16.msra.mxu0 %v2023
        %2379 = vmatpush.bf16.msra.mxu0 %v2021
        %2380 = vmatpush.bf16.msra.mxu0 %v2019
        %2381 = vmatpush.bf16.msra.mxu0 %v2017
        %2382 = vmatpush.bf16.msra.mxu0 %v2015
        %2383 = vmatmul.bf16.gmra.mxu0 %v1295
        %v2384 = vpop.f32.mrf.mxu0
        %v2385 = vadd.f32 %v2372, %v2384
        %v2386 = vpop.f32.mrf.mxu0
        %2387 = vdwg.mxu0
        %2388 = vmatpush.bf16.msra.mxu0 %v2045
        %2389 = vmatpush.bf16.msra.mxu0 %v2043
        %2390 = vmatpush.bf16.msra.mxu0 %v2041
        %2391 = vmatpush.bf16.msra.mxu0 %v2039
        %2392 = vmatpush.bf16.msra.mxu0 %v2037
        %2393 = vmatpush.bf16.msra.mxu0 %v2035
        %2394 = vmatpush.bf16.msra.mxu0 %v2033
        %2395 = vmatpush.bf16.msra.mxu0 %v2031
        %2396 = vmatmul.bf16.gmra.mxu0 %v1296
        %v2397 = vpop.f32.mrf.mxu0
        %v2398 = vadd.f32 %v2385, %v2397
        %v2399 = vpop.f32.mrf.mxu0
        %2400 = vdwg.mxu0
        %2401 = vmatpush.bf16.msra.mxu0 %v2061
        %2402 = vmatpush.bf16.msra.mxu0 %v2059
        %2403 = vmatpush.bf16.msra.mxu0 %v2057
        %2404 = vmatpush.bf16.msra.mxu0 %v2055
        %2405 = vmatpush.bf16.msra.mxu0 %v2053
        %2406 = vmatpush.bf16.msra.mxu0 %v2051
        %2407 = vmatpush.bf16.msra.mxu0 %v2049
        %2408 = vmatpush.bf16.msra.mxu0 %v2047
        %2409 = vmatmul.bf16.gmra.mxu0 %v1297
        %v2410 = vpop.f32.mrf.mxu0
        %v2411 = vadd.f32 %v2398, %v2410
        %v2412 = vpop.f32.mrf.mxu0
        %2413 = vdwg.mxu0
        %2414 = vmatpush.bf16.msra.mxu0 %v2077
        %2415 = vmatpush.bf16.msra.mxu0 %v2075
        %2416 = vmatpush.bf16.msra.mxu0 %v2073
        %2417 = vmatpush.bf16.msra.mxu0 %v2071
        %2418 = vmatpush.bf16.msra.mxu0 %v2069
        %2419 = vmatpush.bf16.msra.mxu0 %v2067
        %2420 = vmatpush.bf16.msra.mxu0 %v2065
        %2421 = vmatpush.bf16.msra.mxu0 %v2063
        %2422 = vmatmul.bf16.gmra.mxu0 %v1298
        %v2423 = vpop.f32.mrf.mxu0
        %v2424 = vadd.f32 %v2411, %v2423
        %v2425 = vpop.f32.mrf.mxu0
        %2426 = vdwg.mxu0
        %2427 = vmatpush.bf16.msra.mxu0 %v1902
        %2428 = vmatpush.bf16.msra.mxu0 %v1900
        %2429 = vmatpush.bf16.msra.mxu0 %v1898
        %2430 = vmatpush.bf16.msra.mxu0 %v1896
        %2431 = vmatpush.bf16.msra.mxu0 %v1894
        %2432 = vmatpush.bf16.msra.mxu0 %v1892
        %2433 = vmatpush.bf16.msra.mxu0 %v1890
        %2434 = vmatpush.bf16.msra.mxu0 %v1888
        %2435 = vmatmul.bf16.gmra.mxu0 %v1287
        %v2436 = vpop.f32.mrf.mxu0
        %v2437 = vadd.f32 0.0, %v2436
        %v2438 = vpop.f32.mrf.mxu0
        %2439 = vdwg.mxu0
        %2440 = vmatpush.bf16.msra.mxu0 %v1918
        %2441 = vmatpush.bf16.msra.mxu0 %v1916
        %2442 = vmatpush.bf16.msra.mxu0 %v1914
        %2443 = vmatpush.bf16.msra.mxu0 %v1912
        %2444 = vmatpush.bf16.msra.mxu0 %v1910
        %2445 = vmatpush.bf16.msra.mxu0 %v1908
        %2446 = vmatpush.bf16.msra.mxu0 %v1906
        %2447 = vmatpush.bf16.msra.mxu0 %v1904
        %2448 = vmatmul.bf16.gmra.mxu0 %v1288
        %v2449 = vpop.f32.mrf.mxu0
        %v2450 = vadd.f32 %v2437, %v2449
        %v2451 = vpop.f32.mrf.mxu0
        %2452 = vdwg.mxu0
        %2453 = vmatpush.bf16.msra.mxu0 %v1934
        %2454 = vmatpush.bf16.msra.mxu0 %v1932
        %2455 = vmatpush.bf16.msra.mxu0 %v1930
        %2456 = vmatpush.bf16.msra.mxu0 %v1928
        %2457 = vmatpush.bf16.msra.mxu0 %v1926
        %2458 = vmatpush.bf16.msra.mxu0 %v1924
        %2459 = vmatpush.bf16.msra.mxu0 %v1922
        %2460 = vmatpush.bf16.msra.mxu0 %v1920
        %2461 = vmatmul.bf16.gmra.mxu0 %v1289
        %v2462 = vpop.f32.mrf.mxu0
        %v2463 = vadd.f32 %v2450, %v2462
        %v2464 = vpop.f32.mrf.mxu0
        %2465 = vdwg.mxu0
        %2466 = vmatpush.bf16.msra.mxu0 %v1950
        %2467 = vmatpush.bf16.msra.mxu0 %v1948
        %2468 = vmatpush.bf16.msra.mxu0 %v1946
        %2469 = vmatpush.bf16.msra.mxu0 %v1944
        %2470 = vmatpush.bf16.msra.mxu0 %v1942
        %2471 = vmatpush.bf16.msra.mxu0 %v1940
        %2472 = vmatpush.bf16.msra.mxu0 %v1938
        %2473 = vmatpush.bf16.msra.mxu0 %v1936
        %2474 = vmatmul.bf16.gmra.mxu0 %v1290
        %v2475 = vpop.f32.mrf.mxu0
        %v2476 = vadd.f32 %v2463, %v2475
        %v2477 = vpop.f32.mrf.mxu0
        %2478 = vdwg.mxu0
        %2479 = vmatpush.bf16.msra.mxu0 %v1966
        %2480 = vmatpush.bf16.msra.mxu0 %v1964
        %2481 = vmatpush.bf16.msra.mxu0 %v1962
        %2482 = vmatpush.bf16.msra.mxu0 %v1960
        %2483 = vmatpush.bf16.msra.mxu0 %v1958
        %2484 = vmatpush.bf16.msra.mxu0 %v1956
        %2485 = vmatpush.bf16.msra.mxu0 %v1954
        %2486 = vmatpush.bf16.msra.mxu0 %v1952
        %2487 = vmatmul.bf16.gmra.mxu0 %v1291
        %v2488 = vpop.f32.mrf.mxu0
        %v2489 = vadd.f32 %v2476, %v2488
        %v2490 = vpop.f32.mrf.mxu0
        %2491 = vdwg.mxu0
        %2492 = vmatpush.bf16.msra.mxu0 %v1982
        %2493 = vmatpush.bf16.msra.mxu0 %v1980
        %2494 = vmatpush.bf16.msra.mxu0 %v1978
        %2495 = vmatpush.bf16.msra.mxu0 %v1976
        %2496 = vmatpush.bf16.msra.mxu0 %v1974
        %2497 = vmatpush.bf16.msra.mxu0 %v1972
        %2498 = vmatpush.bf16.msra.mxu0 %v1970
        %2499 = vmatpush.bf16.msra.mxu0 %v1968
        %2500 = vmatmul.bf16.gmra.mxu0 %v1292
        %v2501 = vpop.f32.mrf.mxu0
        %v2502 = vadd.f32 %v2489, %v2501
        %v2503 = vpop.f32.mrf.mxu0
        %2504 = vdwg.mxu0
        %2505 = vmatpush.bf16.msra.mxu0 %v1998
        %2506 = vmatpush.bf16.msra.mxu0 %v1996
        %2507 = vmatpush.bf16.msra.mxu0 %v1994
        %2508 = vmatpush.bf16.msra.mxu0 %v1992
        %2509 = vmatpush.bf16.msra.mxu0 %v1990
        %2510 = vmatpush.bf16.msra.mxu0 %v1988
        %2511 = vmatpush.bf16.msra.mxu0 %v1986
        %2512 = vmatpush.bf16.msra.mxu0 %v1984
        %2513 = vmatmul.bf16.gmra.mxu0 %v1293
        %v2514 = vpop.f32.mrf.mxu0
        %v2515 = vadd.f32 %v2502, %v2514
        %v2516 = vpop.f32.mrf.mxu0
        %2517 = vdwg.mxu0
        %2518 = vmatpush.bf16.msra.mxu0 %v2014
        %2519 = vmatpush.bf16.msra.mxu0 %v2012
        %2520 = vmatpush.bf16.msra.mxu0 %v2010
        %2521 = vmatpush.bf16.msra.mxu0 %v2008
        %2522 = vmatpush.bf16.msra.mxu0 %v2006
        %2523 = vmatpush.bf16.msra.mxu0 %v2004
        %2524 = vmatpush.bf16.msra.mxu0 %v2002
        %2525 = vmatpush.bf16.msra.mxu0 %v2000
        %2526 = vmatmul.bf16.gmra.mxu0 %v1294
        %v2527 = vpop.f32.mrf.mxu0
        %v2528 = vadd.f32 %v2515, %v2527
        %v2529 = vpop.f32.mrf.mxu0
        %2530 = vdwg.mxu0
        %2531 = vmatpush.bf16.msra.mxu0 %v2030
        %2532 = vmatpush.bf16.msra.mxu0 %v2028
        %2533 = vmatpush.bf16.msra.mxu0 %v2026
        %2534 = vmatpush.bf16.msra.mxu0 %v2024
        %2535 = vmatpush.bf16.msra.mxu0 %v2022
        %2536 = vmatpush.bf16.msra.mxu0 %v2020
        %2537 = vmatpush.bf16.msra.mxu0 %v2018
        %2538 = vmatpush.bf16.msra.mxu0 %v2016
        %2539 = vmatmul.bf16.gmra.mxu0 %v1295
        %v2540 = vpop.f32.mrf.mxu0
        %v2541 = vadd.f32 %v2528, %v2540
        %v2542 = vpop.f32.mrf.mxu0
        %2543 = vdwg.mxu0
        %2544 = vmatpush.bf16.msra.mxu0 %v2046
        %2545 = vmatpush.bf16.msra.mxu0 %v2044
        %2546 = vmatpush.bf16.msra.mxu0 %v2042
        %2547 = vmatpush.bf16.msra.mxu0 %v2040
        %2548 = vmatpush.bf16.msra.mxu0 %v2038
        %2549 = vmatpush.bf16.msra.mxu0 %v2036
        %2550 = vmatpush.bf16.msra.mxu0 %v2034
        %2551 = vmatpush.bf16.msra.mxu0 %v2032
        %2552 = vmatmul.bf16.gmra.mxu0 %v1296
        %v2553 = vpop.f32.mrf.mxu0
        %v2554 = vadd.f32 %v2541, %v2553
        %v2555 = vpop.f32.mrf.mxu0
        %2556 = vdwg.mxu0
        %2557 = vmatpush.bf16.msra.mxu0 %v2062
        %2558 = vmatpush.bf16.msra.mxu0 %v2060
        %2559 = vmatpush.bf16.msra.mxu0 %v2058
        %2560 = vmatpush.bf16.msra.mxu0 %v2056
        %2561 = vmatpush.bf16.msra.mxu0 %v2054
        %2562 = vmatpush.bf16.msra.mxu0 %v2052
        %2563 = vmatpush.bf16.msra.mxu0 %v2050
        %2564 = vmatpush.bf16.msra.mxu0 %v2048
        %2565 = vmatmul.bf16.gmra.mxu0 %v1297
        %v2566 = vpop.f32.mrf.mxu0
        %v2567 = vadd.f32 %v2554, %v2566
        %v2568 = vpop.f32.mrf.mxu0
        %2569 = vdwg.mxu0
        %2570 = vmatpush.bf16.msra.mxu0 %v2078
        %2571 = vmatpush.bf16.msra.mxu0 %v2076
        %2572 = vmatpush.bf16.msra.mxu0 %v2074
        %2573 = vmatpush.bf16.msra.mxu0 %v2072
        %2574 = vmatpush.bf16.msra.mxu0 %v2070
        %2575 = vmatpush.bf16.msra.mxu0 %v2068
        %2576 = vmatpush.bf16.msra.mxu0 %v2066
        %2577 = vmatpush.bf16.msra.mxu0 %v2064
        %2578 = vmatmul.bf16.gmra.mxu0 %v1298
        %v2579 = vpop.f32.mrf.mxu0
        %v2580 = vadd.f32 %v2567, %v2579
        %v2581 = vpop.f32.mrf.mxu0
        %2582 = vdwg.mxu0
        %v2583 = vadd.f32 %v1069, %v2424
        %v2584 = vadd.f32 %v1070, %v2580
        %2585 = vst [vmem:[#allocation2] sm:$0xff] %v2583
        %2586 = vst [vmem:[#allocation2 + $0x8] sm:$0xff] %v2584
        %p2587 = scmp.eq.s32.totalorder %s21, 2
        // Predicated region
        $region75: #{flownet_encoder_forward.10} parent=65 // pred_check
          %p2588 = pneg %p2587
        $region76: #{flownet_encoder_forward.10} parent=65 // pred_check_branch
          %2590 = sbr.rel (%p2588) target = $region78
        $region77: #{flownet_encoder_forward.10} parent=65 // pred_region
          %v2591 = vld [vmem:[#allocation2] sm:$0xff]
          %v2592 = vld [vmem:[#allocation2 + $0x8] sm:$0xff]
          %v2593 = vld [vmem:[%s1051] sm:$0x3]
          %v2595 = vperm.slane %v2593, 0
          %v2596 = vperm.slane %v2593, 1
          %v2599 = vadd.f32 %v2591, %v2595
          %v2600 = vadd.f32 %v2592, %v2596
          %vm2601 = vcmp.gt.f32.partialorder %v2599, 0.0
          %vm2602 = vcmp.gt.f32.partialorder %v2600, 0.0
          %v2603 = vmul.f32 %v2599, 0.01
          %v2604 = vmul.f32 %v2600, 0.01
          %v2605 = vsel %vm2601, %v2599, %v2603
          %v2606 = vsel %vm2602, %v2600, %v2604
          %2607 = vst [vmem:[%s1061] sm:$0xff] %v2605
          %2608 = vst [vmem:[%s1061 + $0x8] sm:$0xff] %v2606
        $region78: #{flownet_encoder_forward.10} parent=65 // pred_fallthru
          _
        %s2609 = smul.u32 2, %s20
        %p2610 = scmp.lt.s32.totalorder %s19, 0
        %s2611 = scalar_select %p2610, %s19, 0
        %p2612 = scmp.lt.s32.totalorder %s2609, 3
        %s2613 = scalar_select %p2612, %s2609, 3
        %s2614 = smul.addr %s2611, 4
        %s2615 = sadd.s32 %s2613, %s2614
        %s2616 = smul.addr %s2615, 8
        %s2617 = scalar_lea.vmem %s3, %s2616
        // Predicated region
        $region79: #{flownet_encoder_forward.10} parent=65 // pred_check
          %p2618 = pneg %p135
        $region80: #{flownet_encoder_forward.10} parent=65 // pred_check_branch
          %2620 = sbr.rel (%p2618) target = $region82
        $region81: #{flownet_encoder_forward.10} parent=65 // pred_region
          %s2621 = smul.u32 2, %s20
        $region82: #{flownet_encoder_forward.10} parent=65 // pred_fallthru
          _
      $region66: #{flownet_encoder_forward.10} parent=5 // pred_fallthru
        _
      %p2622 = scmp.le.s32.totalorder 2, %s9
      // Predicated region
      $region83: #{flownet_encoder_forward.10} parent=5 // pred_check
        %p2623 = pneg %p2622
      $region84: #{flownet_encoder_forward.10} parent=5 // pred_check_branch
        %2625 = sbr.rel (%p2623) target = $region86
      $region85: #{flownet_encoder_forward.10} parent=5 // pred_region
        %s2626 = ssub.s32 %s9, 2
        // Predicated region
        $region87: #{flownet_encoder_forward.10} parent=85 // pred_check
          %p2627 = pneg %p141
        $region88: #{flownet_encoder_forward.10} parent=85 // pred_check_branch
          %2629 = sbr.rel (%p2627) target = $region90
        $region89: #{flownet_encoder_forward.10} parent=85 // pred_region
          %s2630 = smul.u32 2, %s23
          %p2631 = scmp.lt.s32.totalorder %s22, 0
          %s2632 = scalar_select %p2631, %s22, 0
          %p2633 = scmp.lt.s32.totalorder %s2630, 3
          %s2634 = scalar_select %p2633, %s2630, 3
          %s2635 = smul.addr %s2632, 4
          %s2636 = sadd.s32 %s2634, %s2635
          %s2637 = smul.addr %s2636, 8
          %s2638 = scalar_lea.vmem %s3, %s2637
        $region90: #{flownet_encoder_forward.10} parent=85 // pred_fallthru
          _
      $region86: #{flownet_encoder_forward.10} parent=5 // pred_fallthru
        _
    $region6: #{flownet_encoder_forward.10} parent=1 // loop_footer
      %s13 = sadd.s32 1, %s9
    $region7: #{flownet_encoder_forward.10} parent=1 // loop_footer_branch
      %8 = sbr.rel target = $region3
    $region8: #{flownet_encoder_forward.10} parent=1 // loop_exit
      _

// kernel: flownet_encoder_forward.11
$region0: #{flownet_encoder_forward.11}
  #allocation0 [shape = 'u32[]', space=smem, size = 0x4, offset = 0x4, fixed_abs, tag = 'smem constant byte address 0x4 - core index']
  #allocation1 [shape = 'u32[72,128]{1,0:T(1,128)}', space=vmem, size = 0x9000, scoped, tag = 'internal scratch']
  #allocation2 [shape = 'f32[8,128]{1,0:T(8,128)}', space=vmem, size = 0x1000, scoped, tag = 'scratch operand']
  %s0 = inlined_call_operand.vmem [shape: bf16[8,4608], index: 0, kind: input, shape index: {}]
  %s1 = inlined_call_operand.vmem [shape: bf16[4608,128], index: 1, kind: input, shape index: {}]
  %s2 = inlined_call_operand.vmem [shape: f32[1,128], index: 2, kind: input, shape index: {}]
  %s3 = inlined_call_operand.vmem [shape: f32[8,128], index: 3, kind: output, shape index: {}]
  %s4 = sld [smem:[#allocation0]]
  $region53: #{flownet_encoder_forward.11} parent=0
    _
  %s6 = ssub.s32 1, %s4
  %s7 = scalar_select 0, %s6, %s4
  loop: start=0, step=1, limit=5
  $region2: #{flownet_encoder_forward.11} parent=0 // loop_pre_header
    _
  $region3: #{flownet_encoder_forward.11} parent=0 // loop_header
    %s9 = sphi 0, %s13
    %p10 = scmp.ge.s32.totalorder %s9, 5
    %s16 = sphi 0, %s35
    %s17 = sphi 0, %s31
    %s18 = sphi 0, %s27
    %s19 = sphi 0, %s16
    %s20 = sphi 0, %s17
    %s21 = sphi 0, %s18
    %s22 = sphi 0, %s19
    %s23 = sphi 0, %s20
    %s24 = sphi 0, %s21
    %s40 = sphi 0, %s42
    %s43 = sphi 0, %s40
    %s44 = sphi 0, %s43
    %s60 = sphi 0, %s44
    %s68 = sphi 0, %s70
    %s71 = sphi 0, %s68
    %s72 = sphi 0, %s71
    %s88 = sphi 0, %s72
    %s94 = sphi 0, %s96
    %s97 = sphi 0, %s94
    %s98 = sphi 0, %s97
    %s114 = sphi 0, %s98
    %s122 = sphi 0, %s124
    %s125 = sphi 0, %s122
    %s126 = sphi 0, %s125
    %s142 = sphi 0, %s126
  $region4: #{flownet_encoder_forward.11} parent=0 // loop_header_branch
    %12 = sbr.rel (%p10) target = $region8
  $region5: #{flownet_encoder_forward.11} parent=0 // loop_body
    %s14 = ssub.s32 %s9, 1
    %s15 = ssub.s32 %s9, 2
    %s25 = sadd.s32 1, %s18
    %p26 = scmp.ge.s32.totalorder %s25, 3
    %s27 = scalar_select %p26, 0, %s25
    %s28 = sadd.s32 1, %s17
    %s29 = scalar_select %p26, %s28, %s17
    %p30 = scmp.ge.s32.totalorder %s29, 1
    %s31 = scalar_select %p30, 0, %s29
    %s32 = sadd.s32 1, %s16
    %s33 = scalar_select %p30, %s32, %s16
    %p34 = scmp.ge.s32.totalorder %s33, 1
    %s35 = scalar_select %p34, 0, %s33
    %s36 = ssub.s32 %s16, %s35
    %s37 = ssub.s32 %s18, %s27
    %s38 = sor.u32 %s36, %s37
    %p39 = scmp.eq.s32.totalorder %s38, 0
    %s41 = sadd.s32 %s40, 1
    %s42 = scalar_select %p39, %s40, %s41
    %p45 = pneg %p39
    %p46 = scmp.eq.s32.totalorder %s9, 2
    %p47 = por %p45, %p46
    %p48 = scmp.ne.s32.totalorder %s40, %s43
    %p49 = scmp.eq.s32.totalorder %s9, 0
    %p50 = por %p48, %p49
    %p51 = scmp.ne.s32.totalorder %s40, %s43
    %p52 = scmp.eq.s32.totalorder %s14, 2
    %p53 = por %p51, %p52
    %p54 = scmp.ne.s32.totalorder %s43, %s44
    %p55 = scmp.eq.s32.totalorder %s14, 0
    %p56 = por %p54, %p55
    %p57 = scmp.ne.s32.totalorder %s43, %s44
    %p58 = scmp.eq.s32.totalorder %s15, 2
    %p59 = por %p57, %p58
    %p61 = scmp.ne.s32.totalorder %s44, %s60
    %p62 = scmp.eq.s32.totalorder %s15, 0
    %p63 = por %p61, %p62
    %s64 = ssub.s32 %s18, %s27
    %s65 = ssub.s32 %s17, %s31
    %s66 = sor.u32 %s64, %s65
    %p67 = scmp.eq.s32.totalorder %s66, 0
    %s69 = sadd.s32 %s68, 1
    %s70 = scalar_select %p67, %s68, %s69
    %p73 = pneg %p67
    %p74 = scmp.eq.s32.totalorder %s9, 2
    %p75 = por %p73, %p74
    %p76 = scmp.ne.s32.totalorder %s68, %s71
    %p77 = scmp.eq.s32.totalorder %s9, 0
    %p78 = por %p76, %p77
    %p79 = scmp.ne.s32.totalorder %s68, %s71
    %p80 = scmp.eq.s32.totalorder %s14, 2
    %p81 = por %p79, %p80
    %p82 = scmp.ne.s32.totalorder %s71, %s72
    %p83 = scmp.eq.s32.totalorder %s14, 0
    %p84 = por %p82, %p83
    %p85 = scmp.ne.s32.totalorder %s71, %s72
    %p86 = scmp.eq.s32.totalorder %s15, 2
    %p87 = por %p85, %p86
    %p89 = scmp.ne.s32.totalorder %s72, %s88
    %p90 = scmp.eq.s32.totalorder %s15, 0
    %p91 = por %p89, %p90
    %s92 = ssub.s32 %s17, %s31
    %p93 = scmp.eq.s32.totalorder %s92, 0
    %s95 = sadd.s32 %s94, 1
    %s96 = scalar_select %p93, %s94, %s95
    %p99 = pneg %p93
    %p100 = scmp.eq.s32.totalorder %s9, 2
    %p101 = por %p99, %p100
    %p102 = scmp.ne.s32.totalorder %s94, %s97
    %p103 = scmp.eq.s32.totalorder %s9, 0
    %p104 = por %p102, %p103
    %p105 = scmp.ne.s32.totalorder %s94, %s97
    %p106 = scmp.eq.s32.totalorder %s14, 2
    %p107 = por %p105, %p106
    %p108 = scmp.ne.s32.totalorder %s97, %s98
    %p109 = scmp.eq.s32.totalorder %s14, 0
    %p110 = por %p108, %p109
    %p111 = scmp.ne.s32.totalorder %s97, %s98
    %p112 = scmp.eq.s32.totalorder %s15, 2
    %p113 = por %p111, %p112
    %p115 = scmp.ne.s32.totalorder %s98, %s114
    %p116 = scmp.eq.s32.totalorder %s15, 0
    %p117 = por %p115, %p116
    %s118 = ssub.s32 %s16, %s35
    %s119 = ssub.s32 %s17, %s31
    %s120 = sor.u32 %s118, %s119
    %p121 = scmp.eq.s32.totalorder %s120, 0
    %s123 = sadd.s32 %s122, 1
    %s124 = scalar_select %p121, %s122, %s123
    %p127 = pneg %p121
    %p128 = scmp.eq.s32.totalorder %s9, 2
    %p129 = por %p127, %p128
    %p130 = scmp.ne.s32.totalorder %s122, %s125
    %p131 = scmp.eq.s32.totalorder %s9, 0
    %p132 = por %p130, %p131
    %p133 = scmp.ne.s32.totalorder %s122, %s125
    %p134 = scmp.eq.s32.totalorder %s14, 2
    %p135 = por %p133, %p134
    %p136 = scmp.ne.s32.totalorder %s125, %s126
    %p137 = scmp.eq.s32.totalorder %s14, 0
    %p138 = por %p136, %p137
    %p139 = scmp.ne.s32.totalorder %s125, %s126
    %p140 = scmp.eq.s32.totalorder %s15, 2
    %p141 = por %p139, %p140
    %p143 = scmp.ne.s32.totalorder %s126, %s142
    %p144 = scmp.eq.s32.totalorder %s15, 0
    %p145 = por %p143, %p144
    %p146 = scmp.le.s32.totalorder 1, %s9
    %p147 = scmp.lt.s32.totalorder %s9, 4
    %p148 = pnand %p146, %p147
    %p149 = pneg %p148
    // Predicated region
    $region9: #{flownet_encoder_forward.11} parent=5 // pred_check
      _
    $region10: #{flownet_encoder_forward.11} parent=5 // pred_check_branch
      %151 = sbr.rel (%p148) target = $region12
    $region11: #{flownet_encoder_forward.11} parent=5 // pred_region
      %s152 = ssub.s32 %s9, 1
      // Predicated region
      $region13: #{flownet_encoder_forward.11} parent=11 // pred_check
        %p153 = pneg %p110
      $region14: #{flownet_encoder_forward.11} parent=11 // pred_check_branch
        %155 = sbr.rel (%p153) target = $region16
      $region15: #{flownet_encoder_forward.11} parent=11 // pred_region
        %p156 = scmp.lt.s32.totalorder %s20, 0
        %s157 = scalar_select %p156, %s20, 0
        %s158 = scalar_lea.vmem %s2, %s157
      $region16: #{flownet_encoder_forward.11} parent=11 // pred_fallthru
        _
    $region12: #{flownet_encoder_forward.11} parent=5 // pred_fallthru
      _
    %p159 = scmp.lt.s32.totalorder %s9, 3
    // Predicated region
    $region17: #{flownet_encoder_forward.11} parent=5 // pred_check
      %p160 = pneg %p159
    $region18: #{flownet_encoder_forward.11} parent=5 // pred_check_branch
      %162 = sbr.rel (%p160) target = $region20
    $region19: #{flownet_encoder_forward.11} parent=5 // pred_region
      // Predicated region
      $region21: #{flownet_encoder_forward.11} parent=19 // pred_check
        %p163 = pneg %p50
      $region22: #{flownet_encoder_forward.11} parent=19 // pred_check_branch
        %165 = sbr.rel (%p163) target = $region24
      $region23: #{flownet_encoder_forward.11} parent=19 // pred_region
        %s166 = smul.u32 12, %s18
        %p167 = scmp.lt.s32.totalorder %s16, 0
        %s168 = scalar_select %p167, %s16, 0
        %p169 = scmp.lt.s32.totalorder %s166, 35
        %s170 = scalar_select %p169, %s166, 35
        %s171 = smul.addr %s168, 36
        %s172 = sadd.s32 %s170, %s171
        %s173 = smul.addr %s172, 4
        %s174 = scalar_lea.vmem %s0, %s173
        %s175 = smul.u32 12, %s18
      $region24: #{flownet_encoder_forward.11} parent=19 // pred_fallthru
        _
      // Predicated region
      $region25: #{flownet_encoder_forward.11} parent=19 // pred_check
        %p176 = pneg %p78
      $region26: #{flownet_encoder_forward.11} parent=19 // pred_check_branch
        %178 = sbr.rel (%p176) target = $region28
      $region27: #{flownet_encoder_forward.11} parent=19 // pred_region
        %s179 = smul.u32 192, %s18
        %p180 = scmp.lt.s32.totalorder %s179, 575
        %s181 = scalar_select %p180, %s179, 575
        %p182 = scmp.lt.s32.totalorder %s17, 0
        %s183 = scalar_select %p182, %s17, 0
        %s184 = sadd.s32 %s183, %s181
        %s185 = smul.addr %s184, 4
        %s186 = scalar_lea.vmem %s1, %s185
        %s187 = smul.u32 192, %s18
      $region28: #{flownet_encoder_forward.11} parent=19 // pred_fallthru
        _
    $region20: #{flownet_encoder_forward.11} parent=5 // pred_fallthru
      _
    %p188 = scmp.le.s32.totalorder 1, %s9
    %p189 = scmp.lt.s32.totalorder %s9, 4
    %p190 = pnand %p188, %p189
    %p191 = pneg %p190
    // Predicated region
    $region29: #{flownet_encoder_forward.11} parent=5 // pred_check
      _
    $region30: #{flownet_encoder_forward.11} parent=5 // pred_check_branch
      %193 = sbr.rel (%p190) target = $region32
    $region31: #{flownet_encoder_forward.11} parent=5 // pred_region
      %s194 = ssub.s32 %s9, 1
      %s195 = smul.u32 12, %s21
      %p196 = scmp.lt.s32.totalorder %s19, 0
      %s197 = scalar_select %p196, %s19, 0
      %p198 = scmp.lt.s32.totalorder %s195, 35
      %s199 = scalar_select %p198, %s195, 35
      %s200 = smul.addr %s197, 36
      %s201 = sadd.s32 %s199, %s200
      %s202 = smul.addr %s201, 4
      %s203 = scalar_lea.vmem %s0, %s202
      %p204 = pneg %p56
      %p205 = pneg %p53
      %s206 = smul.u32 192, %s21
      %p207 = scmp.lt.s32.totalorder %s206, 575
      %s208 = scalar_select %p207, %s206, 575
      %p209 = scmp.lt.s32.totalorder %s20, 0
      %s210 = scalar_select %p209, %s20, 0
      %s211 = sadd.s32 %s210, %s208
      %s212 = smul.addr %s211, 4
      %s213 = scalar_lea.vmem %s1, %s212
      %p214 = pneg %p84
      %p215 = pneg %p81
      %p216 = scmp.lt.s32.totalorder %s20, 0
      %s217 = scalar_select %p216, %s20, 0
      %s218 = scalar_lea.vmem %s2, %s217
      %p219 = pneg %p110
      %p220 = pneg %p107
      %p221 = pneg %p138
      %p222 = pneg %p135
      %p223 = scmp.lt.s32.totalorder %s19, 0
      %s224 = scalar_select %p223, %s19, 0
      %p225 = scmp.lt.s32.totalorder %s20, 0
      %s226 = scalar_select %p225, %s20, 0
      %s227 = sadd.s32 %s226, %s224
      %s228 = smul.addr %s227, 8
      %s229 = scalar_lea.vmem %s3, %s228
      %s230 = smul.u32 12, %s21
      %p231 = scmp.lt.s32.totalorder %s19, 0
      %s232 = scalar_select %p231, %s19, 0
      %p233 = scmp.lt.s32.totalorder %s230, 35
      %s234 = scalar_select %p233, %s230, 35
      %s235 = smul.addr %s232, 36
      %s236 = sadd.s32 %s234, %s235
      %s237 = smul.addr %s236, 4
      %s238 = scalar_lea.vmem %s0, %s237
      %s239 = smul.u32 12, %s21
      %s240 = smul.u32 192, %s21
      %p241 = scmp.lt.s32.totalorder %s240, 575
      %s242 = scalar_select %p241, %s240, 575
      %p243 = scmp.lt.s32.totalorder %s20, 0
      %s244 = scalar_select %p243, %s20, 0
      %s245 = sadd.s32 %s244, %s242
      %s246 = smul.addr %s245, 4
      %s247 = scalar_lea.vmem %s1, %s246
      %s248 = smul.u32 192, %s21
      %p249 = scmp.lt.s32.totalorder %s20, 0
      %s250 = scalar_select %p249, %s20, 0
      %s251 = scalar_lea.vmem %s2, %s250
      %p252 = scmp.lt.s32.totalorder %s19, 0
      %s253 = scalar_select %p252, %s19, 0
      %p254 = scmp.lt.s32.totalorder %s20, 0
      %s255 = scalar_select %p254, %s20, 0
      %s256 = sadd.s32 %s255, %s253
      %s257 = smul.addr %s256, 8
      %s258 = scalar_lea.vmem %s3, %s257
      %p259 = scmp.eq.s32.totalorder %s21, 0
      // Predicated region
      $region33: #{flownet_encoder_forward.11} parent=31 // pred_check
        %p260 = pneg %p259
      $region34: #{flownet_encoder_forward.11} parent=31 // pred_check_branch
        %262 = sbr.rel (%p260) target = $region36
      $region35: #{flownet_encoder_forward.11} parent=31 // pred_region
        %263 = vst [vmem:[#allocation2] sm:$0xff] 0.0
      $region36: #{flownet_encoder_forward.11} parent=31 // pred_fallthru
        _
      %v264 = vld [vmem:[#allocation2] sm:$0xff]
      %v265 = vld [vmem:[%s238] sm:$0xff]
      %v266 = vld [vmem:[%s238 + $0x8] sm:$0xff]
      %v267 = vld [vmem:[%s238 + $0x10] sm:$0xff]
      %v268 = vld [vmem:[%s238 + $0x18] sm:$0xff]
      %v269 = vld [vmem:[%s238 + $0x20] sm:$0xff]
      %v270 = vld [vmem:[%s238 + $0x28] sm:$0xff]
      %v271 = vld [vmem:[%s247] sm:$0xf]
      %v272 = vld [vmem:[%s247 + $0x4] sm:$0xf]
      %v273 = vld [vmem:[%s247 + $0x8] sm:$0xf]
      %v274 = vld [vmem:[%s247 + $0xc] sm:$0xf]
      %v275 = vld [vmem:[%s247 + $0x10] sm:$0xf]
      %v276 = vld [vmem:[%s247 + $0x14] sm:$0xf]
      %v277 = vld [vmem:[%s247 + $0x18] sm:$0xf]
      %v278 = vld [vmem:[%s247 + $0x1c] sm:$0xf]
      %v279 = vld [vmem:[%s247 + $0x20] sm:$0xf]
      %v280 = vld [vmem:[%s247 + $0x24] sm:$0xf]
      %v281 = vld [vmem:[%s247 + $0x28] sm:$0xf]
      %v282 = vld [vmem:[%s247 + $0x2c] sm:$0xf]
      %v283 = vld [vmem:[%s247 + $0x30] sm:$0xf]
      %v284 = vld [vmem:[%s247 + $0x34] sm:$0xf]
      %v285 = vld [vmem:[%s247 + $0x38] sm:$0xf]
      %v286 = vld [vmem:[%s247 + $0x3c] sm:$0xf]
      %v287 = vld [vmem:[%s247 + $0x40] sm:$0xf]
      %v288 = vld [vmem:[%s247 + $0x44] sm:$0xf]
      %v289 = vld [vmem:[%s247 + $0x48] sm:$0xf]
      %v290 = vld [vmem:[%s247 + $0x4c] sm:$0xf]
      %v291 = vld [vmem:[%s247 + $0x50] sm:$0xf]
      %v292 = vld [vmem:[%s247 + $0x54] sm:$0xf]
      %v293 = vld [vmem:[%s247 + $0x58] sm:$0xf]
      %v294 = vld [vmem:[%s247 + $0x5c] sm:$0xf]
      %v295 = vld [vmem:[%s247 + $0x60] sm:$0xf]
      %v296 = vld [vmem:[%s247 + $0x64] sm:$0xf]
      %v297 = vld [vmem:[%s247 + $0x68] sm:$0xf]
      %v298 = vld [vmem:[%s247 + $0x6c] sm:$0xf]
      %v299 = vld [vmem:[%s247 + $0x70] sm:$0xf]
      %v300 = vld [vmem:[%s247 + $0x74] sm:$0xf]
      %v301 = vld [vmem:[%s247 + $0x78] sm:$0xf]
      %v302 = vld [vmem:[%s247 + $0x7c] sm:$0xf]
      %v303 = vld [vmem:[%s247 + $0x80] sm:$0xf]
      %v304 = vld [vmem:[%s247 + $0x84] sm:$0xf]
      %v305 = vld [vmem:[%s247 + $0x88] sm:$0xf]
      %v306 = vld [vmem:[%s247 + $0x8c] sm:$0xf]
      %v307 = vld [vmem:[%s247 + $0x90] sm:$0xf]
      %v308 = vld [vmem:[%s247 + $0x94] sm:$0xf]
      %v309 = vld [vmem:[%s247 + $0x98] sm:$0xf]
      %v310 = vld [vmem:[%s247 + $0x9c] sm:$0xf]
      %v311 = vld [vmem:[%s247 + $0xa0] sm:$0xf]
      %v312 = vld [vmem:[%s247 + $0xa4] sm:$0xf]
      %v313 = vld [vmem:[%s247 + $0xa8] sm:$0xf]
      %v314 = vld [vmem:[%s247 + $0xac] sm:$0xf]
      %v315 = vld [vmem:[%s247 + $0xb0] sm:$0xf]
      %v316 = vld [vmem:[%s247 + $0xb4] sm:$0xf]
      %v317 = vld [vmem:[%s247 + $0xb8] sm:$0xf]
      %v318 = vld [vmem:[%s247 + $0xbc] sm:$0xf]
      %v319 = vld [vmem:[%s247 + $0xc0] sm:$0xf]
      %v320 = vld [vmem:[%s247 + $0xc4] sm:$0xf]
      %v321 = vld [vmem:[%s247 + $0xc8] sm:$0xf]
      %v322 = vld [vmem:[%s247 + $0xcc] sm:$0xf]
      %v323 = vld [vmem:[%s247 + $0xd0] sm:$0xf]
      %v324 = vld [vmem:[%s247 + $0xd4] sm:$0xf]
      %v325 = vld [vmem:[%s247 + $0xd8] sm:$0xf]
      %v326 = vld [vmem:[%s247 + $0xdc] sm:$0xf]
      %v327 = vld [vmem:[%s247 + $0xe0] sm:$0xf]
      %v328 = vld [vmem:[%s247 + $0xe4] sm:$0xf]
      %v329 = vld [vmem:[%s247 + $0xe8] sm:$0xf]
      %v330 = vld [vmem:[%s247 + $0xec] sm:$0xf]
      %v331 = vld [vmem:[%s247 + $0xf0] sm:$0xf]
      %v332 = vld [vmem:[%s247 + $0xf4] sm:$0xf]
      %v333 = vld [vmem:[%s247 + $0xf8] sm:$0xf]
      %v334 = vld [vmem:[%s247 + $0xfc] sm:$0xf]
      %v335 = vld [vmem:[%s247 + $0x100] sm:$0xf]
      %v336 = vld [vmem:[%s247 + $0x104] sm:$0xf]
      %v337 = vld [vmem:[%s247 + $0x108] sm:$0xf]
      %v338 = vld [vmem:[%s247 + $0x10c] sm:$0xf]
      %v339 = vld [vmem:[%s247 + $0x110] sm:$0xf]
      %v340 = vld [vmem:[%s247 + $0x114] sm:$0xf]
      %v341 = vld [vmem:[%s247 + $0x118] sm:$0xf]
      %v342 = vld [vmem:[%s247 + $0x11c] sm:$0xf]
      %v343 = vld [vmem:[%s247 + $0x120] sm:$0xf]
      %v344 = vld [vmem:[%s247 + $0x124] sm:$0xf]
      %v345 = vld [vmem:[%s247 + $0x128] sm:$0xf]
      %v346 = vld [vmem:[%s247 + $0x12c] sm:$0xf]
      %v347 = vld [vmem:[%s247 + $0x130] sm:$0xf]
      %v348 = vld [vmem:[%s247 + $0x134] sm:$0xf]
      %v349 = vld [vmem:[%s247 + $0x138] sm:$0xf]
      %v350 = vld [vmem:[%s247 + $0x13c] sm:$0xf]
      %v351 = vld [vmem:[%s247 + $0x140] sm:$0xf]
      %v352 = vld [vmem:[%s247 + $0x144] sm:$0xf]
      %v353 = vld [vmem:[%s247 + $0x148] sm:$0xf]
      %v354 = vld [vmem:[%s247 + $0x14c] sm:$0xf]
      %v355 = vld [vmem:[%s247 + $0x150] sm:$0xf]
      %v356 = vld [vmem:[%s247 + $0x154] sm:$0xf]
      %v357 = vld [vmem:[%s247 + $0x158] sm:$0xf]
      %v358 = vld [vmem:[%s247 + $0x15c] sm:$0xf]
      %v359 = vld [vmem:[%s247 + $0x160] sm:$0xf]
      %v360 = vld [vmem:[%s247 + $0x164] sm:$0xf]
      %v361 = vld [vmem:[%s247 + $0x168] sm:$0xf]
      %v362 = vld [vmem:[%s247 + $0x16c] sm:$0xf]
      %v363 = vld [vmem:[%s247 + $0x170] sm:$0xf]
      %v364 = vld [vmem:[%s247 + $0x174] sm:$0xf]
      %v365 = vld [vmem:[%s247 + $0x178] sm:$0xf]
      %v366 = vld [vmem:[%s247 + $0x17c] sm:$0xf]
      %v367 = vld [vmem:[%s247 + $0x180] sm:$0xf]
      %v368 = vld [vmem:[%s247 + $0x184] sm:$0xf]
      %v369 = vld [vmem:[%s247 + $0x188] sm:$0xf]
      %v370 = vld [vmem:[%s247 + $0x18c] sm:$0xf]
      %v371 = vld [vmem:[%s247 + $0x190] sm:$0xf]
      %v372 = vld [vmem:[%s247 + $0x194] sm:$0xf]
      %v373 = vld [vmem:[%s247 + $0x198] sm:$0xf]
      %v374 = vld [vmem:[%s247 + $0x19c] sm:$0xf]
      %v375 = vld [vmem:[%s247 + $0x1a0] sm:$0xf]
      %v376 = vld [vmem:[%s247 + $0x1a4] sm:$0xf]
      %v377 = vld [vmem:[%s247 + $0x1a8] sm:$0xf]
      %v378 = vld [vmem:[%s247 + $0x1ac] sm:$0xf]
      %v379 = vld [vmem:[%s247 + $0x1b0] sm:$0xf]
      %v380 = vld [vmem:[%s247 + $0x1b4] sm:$0xf]
      %v381 = vld [vmem:[%s247 + $0x1b8] sm:$0xf]
      %v382 = vld [vmem:[%s247 + $0x1bc] sm:$0xf]
      %v383 = vld [vmem:[%s247 + $0x1c0] sm:$0xf]
      %v384 = vld [vmem:[%s247 + $0x1c4] sm:$0xf]
      %v385 = vld [vmem:[%s247 + $0x1c8] sm:$0xf]
      %v386 = vld [vmem:[%s247 + $0x1cc] sm:$0xf]
      %v387 = vld [vmem:[%s247 + $0x1d0] sm:$0xf]
      %v388 = vld [vmem:[%s247 + $0x1d4] sm:$0xf]
      %v389 = vld [vmem:[%s247 + $0x1d8] sm:$0xf]
      %v390 = vld [vmem:[%s247 + $0x1dc] sm:$0xf]
      %v391 = vld [vmem:[%s247 + $0x1e0] sm:$0xf]
      %v392 = vld [vmem:[%s247 + $0x1e4] sm:$0xf]
      %v393 = vld [vmem:[%s247 + $0x1e8] sm:$0xf]
      %v394 = vld [vmem:[%s247 + $0x1ec] sm:$0xf]
      %v395 = vld [vmem:[%s247 + $0x1f0] sm:$0xf]
      %v396 = vld [vmem:[%s247 + $0x1f4] sm:$0xf]
      %v397 = vld [vmem:[%s247 + $0x1f8] sm:$0xf]
      %v398 = vld [vmem:[%s247 + $0x1fc] sm:$0xf]
      %v399 = vld [vmem:[%s247 + $0x200] sm:$0xf]
      %v400 = vld [vmem:[%s247 + $0x204] sm:$0xf]
      %v401 = vld [vmem:[%s247 + $0x208] sm:$0xf]
      %v402 = vld [vmem:[%s247 + $0x20c] sm:$0xf]
      %v403 = vld [vmem:[%s247 + $0x210] sm:$0xf]
      %v404 = vld [vmem:[%s247 + $0x214] sm:$0xf]
      %v405 = vld [vmem:[%s247 + $0x218] sm:$0xf]
      %v406 = vld [vmem:[%s247 + $0x21c] sm:$0xf]
      %v407 = vld [vmem:[%s247 + $0x220] sm:$0xf]
      %v408 = vld [vmem:[%s247 + $0x224] sm:$0xf]
      %v409 = vld [vmem:[%s247 + $0x228] sm:$0xf]
      %v410 = vld [vmem:[%s247 + $0x22c] sm:$0xf]
      %v411 = vld [vmem:[%s247 + $0x230] sm:$0xf]
      %v412 = vld [vmem:[%s247 + $0x234] sm:$0xf]
      %v413 = vld [vmem:[%s247 + $0x238] sm:$0xf]
      %v414 = vld [vmem:[%s247 + $0x23c] sm:$0xf]
      %v415 = vld [vmem:[%s247 + $0x240] sm:$0xf]
      %v416 = vld [vmem:[%s247 + $0x244] sm:$0xf]
      %v417 = vld [vmem:[%s247 + $0x248] sm:$0xf]
      %v418 = vld [vmem:[%s247 + $0x24c] sm:$0xf]
      %v419 = vld [vmem:[%s247 + $0x250] sm:$0xf]
      %v420 = vld [vmem:[%s247 + $0x254] sm:$0xf]
      %v421 = vld [vmem:[%s247 + $0x258] sm:$0xf]
      %v422 = vld [vmem:[%s247 + $0x25c] sm:$0xf]
      %v423 = vld [vmem:[%s247 + $0x260] sm:$0xf]
      %v424 = vld [vmem:[%s247 + $0x264] sm:$0xf]
      %v425 = vld [vmem:[%s247 + $0x268] sm:$0xf]
      %v426 = vld [vmem:[%s247 + $0x26c] sm:$0xf]
      %v427 = vld [vmem:[%s247 + $0x270] sm:$0xf]
      %v428 = vld [vmem:[%s247 + $0x274] sm:$0xf]
      %v429 = vld [vmem:[%s247 + $0x278] sm:$0xf]
      %v430 = vld [vmem:[%s247 + $0x27c] sm:$0xf]
      %v431 = vld [vmem:[%s247 + $0x280] sm:$0xf]
      %v432 = vld [vmem:[%s247 + $0x284] sm:$0xf]
      %v433 = vld [vmem:[%s247 + $0x288] sm:$0xf]
      %v434 = vld [vmem:[%s247 + $0x28c] sm:$0xf]
      %v435 = vld [vmem:[%s247 + $0x290] sm:$0xf]
      %v436 = vld [vmem:[%s247 + $0x294] sm:$0xf]
      %v437 = vld [vmem:[%s247 + $0x298] sm:$0xf]
      %v438 = vld [vmem:[%s247 + $0x29c] sm:$0xf]
      %v439 = vld [vmem:[%s247 + $0x2a0] sm:$0xf]
      %v440 = vld [vmem:[%s247 + $0x2a4] sm:$0xf]
      %v441 = vld [vmem:[%s247 + $0x2a8] sm:$0xf]
      %v442 = vld [vmem:[%s247 + $0x2ac] sm:$0xf]
      %v443 = vld [vmem:[%s247 + $0x2b0] sm:$0xf]
      %v444 = vld [vmem:[%s247 + $0x2b4] sm:$0xf]
      %v445 = vld [vmem:[%s247 + $0x2b8] sm:$0xf]
      %v446 = vld [vmem:[%s247 + $0x2bc] sm:$0xf]
      %v447 = vld [vmem:[%s247 + $0x2c0] sm:$0xf]
      %v448 = vld [vmem:[%s247 + $0x2c4] sm:$0xf]
      %v449 = vld [vmem:[%s247 + $0x2c8] sm:$0xf]
      %v450 = vld [vmem:[%s247 + $0x2cc] sm:$0xf]
      %v451 = vld [vmem:[%s247 + $0x2d0] sm:$0xf]
      %v452 = vld [vmem:[%s247 + $0x2d4] sm:$0xf]
      %v453 = vld [vmem:[%s247 + $0x2d8] sm:$0xf]
      %v454 = vld [vmem:[%s247 + $0x2dc] sm:$0xf]
      %v455 = vld [vmem:[%s247 + $0x2e0] sm:$0xf]
      %v456 = vld [vmem:[%s247 + $0x2e4] sm:$0xf]
      %v457 = vld [vmem:[%s247 + $0x2e8] sm:$0xf]
      %v458 = vld [vmem:[%s247 + $0x2ec] sm:$0xf]
      %v459 = vld [vmem:[%s247 + $0x2f0] sm:$0xf]
      %v460 = vld [vmem:[%s247 + $0x2f4] sm:$0xf]
      %v461 = vld [vmem:[%s247 + $0x2f8] sm:$0xf]
      %v462 = vld [vmem:[%s247 + $0x2fc] sm:$0xf]
      %v469 = vunpack.c.l.b16 %v265
      %v470 = vunpack.c.h.b16 %v265
      %v471 = vunpack.c.l.b16 %v266
      %v472 = vunpack.c.h.b16 %v266
      %v473 = vunpack.c.l.b16 %v267
      %v474 = vunpack.c.h.b16 %v267
      %v475 = vunpack.c.l.b16 %v268
      %v476 = vunpack.c.h.b16 %v268
      %v477 = vunpack.c.l.b16 %v269
      %v478 = vunpack.c.h.b16 %v269
      %v479 = vunpack.c.l.b16 %v270
      %v480 = vunpack.c.h.b16 %v270
      %v481 = vpack.c.b16 %v469, %v469
      %v482 = vpack.c.b16 %v470, %v470
      %v483 = vpack.c.b16 %v471, %v471
      %v484 = vpack.c.b16 %v472, %v472
      %v485 = vpack.c.b16 %v473, %v473
      %v486 = vpack.c.b16 %v474, %v474
      %v487 = vpack.c.b16 %v475, %v475
      %v488 = vpack.c.b16 %v476, %v476
      %v489 = vpack.c.b16 %v477, %v477
      %v490 = vpack.c.b16 %v478, %v478
      %v491 = vpack.c.b16 %v479, %v479
      %v492 = vpack.c.b16 %v480, %v480
      %v697 = vunpack.c.l.b16 %v271
      %v698 = vunpack.c.l.b16 %v272
      %v699 = vunpack.c.l.b16 %v273
      %v700 = vunpack.c.l.b16 %v274
      %v701 = vunpack.c.l.b16 %v275
      %v702 = vunpack.c.l.b16 %v276
      %v703 = vunpack.c.l.b16 %v277
      %v704 = vunpack.c.l.b16 %v278
      %v705 = vunpack.c.l.b16 %v279
      %v706 = vunpack.c.l.b16 %v280
      %v707 = vunpack.c.l.b16 %v281
      %v708 = vunpack.c.l.b16 %v282
      %v709 = vunpack.c.l.b16 %v283
      %v710 = vunpack.c.l.b16 %v284
      %v711 = vunpack.c.l.b16 %v285
      %v712 = vunpack.c.l.b16 %v286
      %v713 = vunpack.c.l.b16 %v287
      %v714 = vunpack.c.l.b16 %v288
      %v715 = vunpack.c.l.b16 %v289
      %v716 = vunpack.c.l.b16 %v290
      %v717 = vunpack.c.l.b16 %v291
      %v718 = vunpack.c.l.b16 %v292
      %v719 = vunpack.c.l.b16 %v293
      %v720 = vunpack.c.l.b16 %v294
      %v721 = vunpack.c.l.b16 %v295
      %v722 = vunpack.c.l.b16 %v296
      %v723 = vunpack.c.l.b16 %v297
      %v724 = vunpack.c.l.b16 %v298
      %v725 = vunpack.c.l.b16 %v299
      %v726 = vunpack.c.l.b16 %v300
      %v727 = vunpack.c.l.b16 %v301
      %v728 = vunpack.c.l.b16 %v302
      %v729 = vunpack.c.l.b16 %v303
      %v730 = vunpack.c.l.b16 %v304
      %v731 = vunpack.c.l.b16 %v305
      %v732 = vunpack.c.l.b16 %v306
      %v733 = vunpack.c.l.b16 %v307
      %v734 = vunpack.c.l.b16 %v308
      %v735 = vunpack.c.l.b16 %v309
      %v736 = vunpack.c.l.b16 %v310
      %v737 = vunpack.c.l.b16 %v311
      %v738 = vunpack.c.l.b16 %v312
      %v739 = vunpack.c.l.b16 %v313
      %v740 = vunpack.c.l.b16 %v314
      %v741 = vunpack.c.l.b16 %v315
      %v742 = vunpack.c.l.b16 %v316
      %v743 = vunpack.c.l.b16 %v317
      %v744 = vunpack.c.l.b16 %v318
      %v745 = vunpack.c.l.b16 %v319
      %v746 = vunpack.c.l.b16 %v320
      %v747 = vunpack.c.l.b16 %v321
      %v748 = vunpack.c.l.b16 %v322
      %v749 = vunpack.c.l.b16 %v323
      %v750 = vunpack.c.l.b16 %v324
      %v751 = vunpack.c.l.b16 %v325
      %v752 = vunpack.c.l.b16 %v326
      %v753 = vunpack.c.l.b16 %v327
      %v754 = vunpack.c.l.b16 %v328
      %v755 = vunpack.c.l.b16 %v329
      %v756 = vunpack.c.l.b16 %v330
      %v757 = vunpack.c.l.b16 %v331
      %v758 = vunpack.c.l.b16 %v332
      %v759 = vunpack.c.l.b16 %v333
      %v760 = vunpack.c.l.b16 %v334
      %v761 = vunpack.c.l.b16 %v335
      %v762 = vunpack.c.l.b16 %v336
      %v763 = vunpack.c.l.b16 %v337
      %v764 = vunpack.c.l.b16 %v338
      %v765 = vunpack.c.l.b16 %v339
      %v766 = vunpack.c.l.b16 %v340
      %v767 = vunpack.c.l.b16 %v341
      %v768 = vunpack.c.l.b16 %v342
      %v769 = vunpack.c.l.b16 %v343
      %v770 = vunpack.c.l.b16 %v344
      %v771 = vunpack.c.l.b16 %v345
      %v772 = vunpack.c.l.b16 %v346
      %v773 = vunpack.c.l.b16 %v347
      %v774 = vunpack.c.l.b16 %v348
      %v775 = vunpack.c.l.b16 %v349
      %v776 = vunpack.c.l.b16 %v350
      %v777 = vunpack.c.l.b16 %v351
      %v778 = vunpack.c.l.b16 %v352
      %v779 = vunpack.c.l.b16 %v353
      %v780 = vunpack.c.l.b16 %v354
      %v781 = vunpack.c.l.b16 %v355
      %v782 = vunpack.c.l.b16 %v356
      %v783 = vunpack.c.l.b16 %v357
      %v784 = vunpack.c.l.b16 %v358
      %v785 = vunpack.c.l.b16 %v359
      %v786 = vunpack.c.l.b16 %v360
      %v787 = vunpack.c.l.b16 %v361
      %v788 = vunpack.c.l.b16 %v362
      %v789 = vunpack.c.l.b16 %v363
      %v790 = vunpack.c.l.b16 %v364
      %v791 = vunpack.c.l.b16 %v365
      %v792 = vunpack.c.l.b16 %v366
      %v793 = vunpack.c.l.b16 %v367
      %v794 = vunpack.c.l.b16 %v368
      %v795 = vunpack.c.l.b16 %v369
      %v796 = vunpack.c.l.b16 %v370
      %v797 = vunpack.c.l.b16 %v371
      %v798 = vunpack.c.l.b16 %v372
      %v799 = vunpack.c.l.b16 %v373
      %v800 = vunpack.c.l.b16 %v374
      %v801 = vunpack.c.l.b16 %v375
      %v802 = vunpack.c.l.b16 %v376
      %v803 = vunpack.c.l.b16 %v377
      %v804 = vunpack.c.l.b16 %v378
      %v805 = vunpack.c.l.b16 %v379
      %v806 = vunpack.c.l.b16 %v380
      %v807 = vunpack.c.l.b16 %v381
      %v808 = vunpack.c.l.b16 %v382
      %v809 = vunpack.c.l.b16 %v383
      %v810 = vunpack.c.l.b16 %v384
      %v811 = vunpack.c.l.b16 %v385
      %v812 = vunpack.c.l.b16 %v386
      %v813 = vunpack.c.l.b16 %v387
      %v814 = vunpack.c.l.b16 %v388
      %v815 = vunpack.c.l.b16 %v389
      %v816 = vunpack.c.l.b16 %v390
      %v817 = vunpack.c.l.b16 %v391
      %v818 = vunpack.c.l.b16 %v392
      %v819 = vunpack.c.l.b16 %v393
      %v820 = vunpack.c.l.b16 %v394
      %v821 = vunpack.c.l.b16 %v395
      %v822 = vunpack.c.l.b16 %v396
      %v823 = vunpack.c.l.b16 %v397
      %v824 = vunpack.c.l.b16 %v398
      %v825 = vunpack.c.l.b16 %v399
      %v826 = vunpack.c.l.b16 %v400
      %v827 = vunpack.c.l.b16 %v401
      %v828 = vunpack.c.l.b16 %v402
      %v829 = vunpack.c.l.b16 %v403
      %v830 = vunpack.c.l.b16 %v404
      %v831 = vunpack.c.l.b16 %v405
      %v832 = vunpack.c.l.b16 %v406
      %v833 = vunpack.c.l.b16 %v407
      %v834 = vunpack.c.l.b16 %v408
      %v835 = vunpack.c.l.b16 %v409
      %v836 = vunpack.c.l.b16 %v410
      %v837 = vunpack.c.l.b16 %v411
      %v838 = vunpack.c.l.b16 %v412
      %v839 = vunpack.c.l.b16 %v413
      %v840 = vunpack.c.l.b16 %v414
      %v841 = vunpack.c.l.b16 %v415
      %v842 = vunpack.c.l.b16 %v416
      %v843 = vunpack.c.l.b16 %v417
      %v844 = vunpack.c.l.b16 %v418
      %v845 = vunpack.c.l.b16 %v419
      %v846 = vunpack.c.l.b16 %v420
      %v847 = vunpack.c.l.b16 %v421
      %v848 = vunpack.c.l.b16 %v422
      %v849 = vunpack.c.l.b16 %v423
      %v850 = vunpack.c.l.b16 %v424
      %v851 = vunpack.c.l.b16 %v425
      %v852 = vunpack.c.l.b16 %v426
      %v853 = vunpack.c.l.b16 %v427
      %v854 = vunpack.c.l.b16 %v428
      %v855 = vunpack.c.l.b16 %v429
      %v856 = vunpack.c.l.b16 %v430
      %v857 = vunpack.c.l.b16 %v431
      %v858 = vunpack.c.l.b16 %v432
      %v859 = vunpack.c.l.b16 %v433
      %v860 = vunpack.c.l.b16 %v434
      %v861 = vunpack.c.l.b16 %v435
      %v862 = vunpack.c.l.b16 %v436
      %v863 = vunpack.c.l.b16 %v437
      %v864 = vunpack.c.l.b16 %v438
      %v865 = vunpack.c.l.b16 %v439
      %v866 = vunpack.c.l.b16 %v440
      %v867 = vunpack.c.l.b16 %v441
      %v868 = vunpack.c.l.b16 %v442
      %v869 = vunpack.c.l.b16 %v443
      %v870 = vunpack.c.l.b16 %v444
      %v871 = vunpack.c.l.b16 %v445
      %v872 = vunpack.c.l.b16 %v446
      %v873 = vunpack.c.l.b16 %v447
      %v874 = vunpack.c.l.b16 %v448
      %v875 = vunpack.c.l.b16 %v449
      %v876 = vunpack.c.l.b16 %v450
      %v877 = vunpack.c.l.b16 %v451
      %v878 = vunpack.c.l.b16 %v452
      %v879 = vunpack.c.l.b16 %v453
      %v880 = vunpack.c.l.b16 %v454
      %v881 = vunpack.c.l.b16 %v455
      %v882 = vunpack.c.l.b16 %v456
      %v883 = vunpack.c.l.b16 %v457
      %v884 = vunpack.c.l.b16 %v458
      %v885 = vunpack.c.l.b16 %v459
      %v886 = vunpack.c.l.b16 %v460
      %v887 = vunpack.c.l.b16 %v461
      %v888 = vunpack.c.l.b16 %v462
      %v889 = vpack.c.b16 %v698, %v697
      %v890 = vpack.c.b16 %v700, %v699
      %v891 = vpack.c.b16 %v702, %v701
      %v892 = vpack.c.b16 %v704, %v703
      %v893 = vpack.c.b16 %v706, %v705
      %v894 = vpack.c.b16 %v708, %v707
      %v895 = vpack.c.b16 %v710, %v709
      %v896 = vpack.c.b16 %v712, %v711
      %v897 = vpack.c.b16 %v714, %v713
      %v898 = vpack.c.b16 %v716, %v715
      %v899 = vpack.c.b16 %v718, %v717
      %v900 = vpack.c.b16 %v720, %v719
      %v901 = vpack.c.b16 %v722, %v721
      %v902 = vpack.c.b16 %v724, %v723
      %v903 = vpack.c.b16 %v726, %v725
      %v904 = vpack.c.b16 %v728, %v727
      %v905 = vpack.c.b16 %v730, %v729
      %v906 = vpack.c.b16 %v732, %v731
      %v907 = vpack.c.b16 %v734, %v733
      %v908 = vpack.c.b16 %v736, %v735
      %v909 = vpack.c.b16 %v738, %v737
      %v910 = vpack.c.b16 %v740, %v739
      %v911 = vpack.c.b16 %v742, %v741
      %v912 = vpack.c.b16 %v744, %v743
      %v913 = vpack.c.b16 %v746, %v745
      %v914 = vpack.c.b16 %v748, %v747
      %v915 = vpack.c.b16 %v750, %v749
      %v916 = vpack.c.b16 %v752, %v751
      %v917 = vpack.c.b16 %v754, %v753
      %v918 = vpack.c.b16 %v756, %v755
      %v919 = vpack.c.b16 %v758, %v757
      %v920 = vpack.c.b16 %v760, %v759
      %v921 = vpack.c.b16 %v762, %v761
      %v922 = vpack.c.b16 %v764, %v763
      %v923 = vpack.c.b16 %v766, %v765
      %v924 = vpack.c.b16 %v768, %v767
      %v925 = vpack.c.b16 %v770, %v769
      %v926 = vpack.c.b16 %v772, %v771
      %v927 = vpack.c.b16 %v774, %v773
      %v928 = vpack.c.b16 %v776, %v775
      %v929 = vpack.c.b16 %v778, %v777
      %v930 = vpack.c.b16 %v780, %v779
      %v931 = vpack.c.b16 %v782, %v781
      %v932 = vpack.c.b16 %v784, %v783
      %v933 = vpack.c.b16 %v786, %v785
      %v934 = vpack.c.b16 %v788, %v787
      %v935 = vpack.c.b16 %v790, %v789
      %v936 = vpack.c.b16 %v792, %v791
      %v937 = vpack.c.b16 %v794, %v793
      %v938 = vpack.c.b16 %v796, %v795
      %v939 = vpack.c.b16 %v798, %v797
      %v940 = vpack.c.b16 %v800, %v799
      %v941 = vpack.c.b16 %v802, %v801
      %v942 = vpack.c.b16 %v804, %v803
      %v943 = vpack.c.b16 %v806, %v805
      %v944 = vpack.c.b16 %v808, %v807
      %v945 = vpack.c.b16 %v810, %v809
      %v946 = vpack.c.b16 %v812, %v811
      %v947 = vpack.c.b16 %v814, %v813
      %v948 = vpack.c.b16 %v816, %v815
      %v949 = vpack.c.b16 %v818, %v817
      %v950 = vpack.c.b16 %v820, %v819
      %v951 = vpack.c.b16 %v822, %v821
      %v952 = vpack.c.b16 %v824, %v823
      %v953 = vpack.c.b16 %v826, %v825
      %v954 = vpack.c.b16 %v828, %v827
      %v955 = vpack.c.b16 %v830, %v829
      %v956 = vpack.c.b16 %v832, %v831
      %v957 = vpack.c.b16 %v834, %v833
      %v958 = vpack.c.b16 %v836, %v835
      %v959 = vpack.c.b16 %v838, %v837
      %v960 = vpack.c.b16 %v840, %v839
      %v961 = vpack.c.b16 %v842, %v841
      %v962 = vpack.c.b16 %v844, %v843
      %v963 = vpack.c.b16 %v846, %v845
      %v964 = vpack.c.b16 %v848, %v847
      %v965 = vpack.c.b16 %v850, %v849
      %v966 = vpack.c.b16 %v852, %v851
      %v967 = vpack.c.b16 %v854, %v853
      %v968 = vpack.c.b16 %v856, %v855
      %v969 = vpack.c.b16 %v858, %v857
      %v970 = vpack.c.b16 %v860, %v859
      %v971 = vpack.c.b16 %v862, %v861
      %v972 = vpack.c.b16 %v864, %v863
      %v973 = vpack.c.b16 %v866, %v865
      %v974 = vpack.c.b16 %v868, %v867
      %v975 = vpack.c.b16 %v870, %v869
      %v976 = vpack.c.b16 %v872, %v871
      %v977 = vpack.c.b16 %v874, %v873
      %v978 = vpack.c.b16 %v876, %v875
      %v979 = vpack.c.b16 %v878, %v877
      %v980 = vpack.c.b16 %v880, %v879
      %v981 = vpack.c.b16 %v882, %v881
      %v982 = vpack.c.b16 %v884, %v883
      %v983 = vpack.c.b16 %v886, %v885
      %v984 = vpack.c.b16 %v888, %v887
      %1081 = vmatpush.bf16.msra.mxu0 %v896
      %1082 = vmatpush.bf16.msra.mxu0 %v895
      %1083 = vmatpush.bf16.msra.mxu0 %v894
      %1084 = vmatpush.bf16.msra.mxu0 %v893
      %1085 = vmatpush.bf16.msra.mxu0 %v892
      %1086 = vmatpush.bf16.msra.mxu0 %v891
      %1087 = vmatpush.bf16.msra.mxu0 %v890
      %1088 = vmatpush.bf16.msra.mxu0 %v889
      %1089 = vmatmul.bf16.gmra.mxu0 %v481
      %v1090 = vpop.f32.mrf.mxu0
      %v1091 = vadd.f32 0.0, %v1090
      %v1092 = vpop.f32.mrf.mxu0
      %1093 = vdwg.mxu0
      %1094 = vmatpush.bf16.msra.mxu0 %v904
      %1095 = vmatpush.bf16.msra.mxu0 %v903
      %1096 = vmatpush.bf16.msra.mxu0 %v902
      %1097 = vmatpush.bf16.msra.mxu0 %v901
      %1098 = vmatpush.bf16.msra.mxu0 %v900
      %1099 = vmatpush.bf16.msra.mxu0 %v899
      %1100 = vmatpush.bf16.msra.mxu0 %v898
      %1101 = vmatpush.bf16.msra.mxu0 %v897
      %1102 = vmatmul.bf16.gmra.mxu0 %v482
      %v1103 = vpop.f32.mrf.mxu0
      %v1104 = vadd.f32 %v1091, %v1103
      %v1105 = vpop.f32.mrf.mxu0
      %1106 = vdwg.mxu0
      %1107 = vmatpush.bf16.msra.mxu0 %v912
      %1108 = vmatpush.bf16.msra.mxu0 %v911
      %1109 = vmatpush.bf16.msra.mxu0 %v910
      %1110 = vmatpush.bf16.msra.mxu0 %v909
      %1111 = vmatpush.bf16.msra.mxu0 %v908
      %1112 = vmatpush.bf16.msra.mxu0 %v907
      %1113 = vmatpush.bf16.msra.mxu0 %v906
      %1114 = vmatpush.bf16.msra.mxu0 %v905
      %1115 = vmatmul.bf16.gmra.mxu0 %v483
      %v1116 = vpop.f32.mrf.mxu0
      %v1117 = vadd.f32 %v1104, %v1116
      %v1118 = vpop.f32.mrf.mxu0
      %1119 = vdwg.mxu0
      %1120 = vmatpush.bf16.msra.mxu0 %v920
      %1121 = vmatpush.bf16.msra.mxu0 %v919
      %1122 = vmatpush.bf16.msra.mxu0 %v918
      %1123 = vmatpush.bf16.msra.mxu0 %v917
      %1124 = vmatpush.bf16.msra.mxu0 %v916
      %1125 = vmatpush.bf16.msra.mxu0 %v915
      %1126 = vmatpush.bf16.msra.mxu0 %v914
      %1127 = vmatpush.bf16.msra.mxu0 %v913
      %1128 = vmatmul.bf16.gmra.mxu0 %v484
      %v1129 = vpop.f32.mrf.mxu0
      %v1130 = vadd.f32 %v1117, %v1129
      %v1131 = vpop.f32.mrf.mxu0
      %1132 = vdwg.mxu0
      %1133 = vmatpush.bf16.msra.mxu0 %v928
      %1134 = vmatpush.bf16.msra.mxu0 %v927
      %1135 = vmatpush.bf16.msra.mxu0 %v926
      %1136 = vmatpush.bf16.msra.mxu0 %v925
      %1137 = vmatpush.bf16.msra.mxu0 %v924
      %1138 = vmatpush.bf16.msra.mxu0 %v923
      %1139 = vmatpush.bf16.msra.mxu0 %v922
      %1140 = vmatpush.bf16.msra.mxu0 %v921
      %1141 = vmatmul.bf16.gmra.mxu0 %v485
      %v1142 = vpop.f32.mrf.mxu0
      %v1143 = vadd.f32 %v1130, %v1142
      %v1144 = vpop.f32.mrf.mxu0
      %1145 = vdwg.mxu0
      %1146 = vmatpush.bf16.msra.mxu0 %v936
      %1147 = vmatpush.bf16.msra.mxu0 %v935
      %1148 = vmatpush.bf16.msra.mxu0 %v934
      %1149 = vmatpush.bf16.msra.mxu0 %v933
      %1150 = vmatpush.bf16.msra.mxu0 %v932
      %1151 = vmatpush.bf16.msra.mxu0 %v931
      %1152 = vmatpush.bf16.msra.mxu0 %v930
      %1153 = vmatpush.bf16.msra.mxu0 %v929
      %1154 = vmatmul.bf16.gmra.mxu0 %v486
      %v1155 = vpop.f32.mrf.mxu0
      %v1156 = vadd.f32 %v1143, %v1155
      %v1157 = vpop.f32.mrf.mxu0
      %1158 = vdwg.mxu0
      %1159 = vmatpush.bf16.msra.mxu0 %v944
      %1160 = vmatpush.bf16.msra.mxu0 %v943
      %1161 = vmatpush.bf16.msra.mxu0 %v942
      %1162 = vmatpush.bf16.msra.mxu0 %v941
      %1163 = vmatpush.bf16.msra.mxu0 %v940
      %1164 = vmatpush.bf16.msra.mxu0 %v939
      %1165 = vmatpush.bf16.msra.mxu0 %v938
      %1166 = vmatpush.bf16.msra.mxu0 %v937
      %1167 = vmatmul.bf16.gmra.mxu0 %v487
      %v1168 = vpop.f32.mrf.mxu0
      %v1169 = vadd.f32 %v1156, %v1168
      %v1170 = vpop.f32.mrf.mxu0
      %1171 = vdwg.mxu0
      %1172 = vmatpush.bf16.msra.mxu0 %v952
      %1173 = vmatpush.bf16.msra.mxu0 %v951
      %1174 = vmatpush.bf16.msra.mxu0 %v950
      %1175 = vmatpush.bf16.msra.mxu0 %v949
      %1176 = vmatpush.bf16.msra.mxu0 %v948
      %1177 = vmatpush.bf16.msra.mxu0 %v947
      %1178 = vmatpush.bf16.msra.mxu0 %v946
      %1179 = vmatpush.bf16.msra.mxu0 %v945
      %1180 = vmatmul.bf16.gmra.mxu0 %v488
      %v1181 = vpop.f32.mrf.mxu0
      %v1182 = vadd.f32 %v1169, %v1181
      %v1183 = vpop.f32.mrf.mxu0
      %1184 = vdwg.mxu0
      %1185 = vmatpush.bf16.msra.mxu0 %v960
      %1186 = vmatpush.bf16.msra.mxu0 %v959
      %1187 = vmatpush.bf16.msra.mxu0 %v958
      %1188 = vmatpush.bf16.msra.mxu0 %v957
      %1189 = vmatpush.bf16.msra.mxu0 %v956
      %1190 = vmatpush.bf16.msra.mxu0 %v955
      %1191 = vmatpush.bf16.msra.mxu0 %v954
      %1192 = vmatpush.bf16.msra.mxu0 %v953
      %1193 = vmatmul.bf16.gmra.mxu0 %v489
      %v1194 = vpop.f32.mrf.mxu0
      %v1195 = vadd.f32 %v1182, %v1194
      %v1196 = vpop.f32.mrf.mxu0
      %1197 = vdwg.mxu0
      %1198 = vmatpush.bf16.msra.mxu0 %v968
      %1199 = vmatpush.bf16.msra.mxu0 %v967
      %1200 = vmatpush.bf16.msra.mxu0 %v966
      %1201 = vmatpush.bf16.msra.mxu0 %v965
      %1202 = vmatpush.bf16.msra.mxu0 %v964
      %1203 = vmatpush.bf16.msra.mxu0 %v963
      %1204 = vmatpush.bf16.msra.mxu0 %v962
      %1205 = vmatpush.bf16.msra.mxu0 %v961
      %1206 = vmatmul.bf16.gmra.mxu0 %v490
      %v1207 = vpop.f32.mrf.mxu0
      %v1208 = vadd.f32 %v1195, %v1207
      %v1209 = vpop.f32.mrf.mxu0
      %1210 = vdwg.mxu0
      %1211 = vmatpush.bf16.msra.mxu0 %v976
      %1212 = vmatpush.bf16.msra.mxu0 %v975
      %1213 = vmatpush.bf16.msra.mxu0 %v974
      %1214 = vmatpush.bf16.msra.mxu0 %v973
      %1215 = vmatpush.bf16.msra.mxu0 %v972
      %1216 = vmatpush.bf16.msra.mxu0 %v971
      %1217 = vmatpush.bf16.msra.mxu0 %v970
      %1218 = vmatpush.bf16.msra.mxu0 %v969
      %1219 = vmatmul.bf16.gmra.mxu0 %v491
      %v1220 = vpop.f32.mrf.mxu0
      %v1221 = vadd.f32 %v1208, %v1220
      %v1222 = vpop.f32.mrf.mxu0
      %1223 = vdwg.mxu0
      %1224 = vmatpush.bf16.msra.mxu0 %v984
      %1225 = vmatpush.bf16.msra.mxu0 %v983
      %1226 = vmatpush.bf16.msra.mxu0 %v982
      %1227 = vmatpush.bf16.msra.mxu0 %v981
      %1228 = vmatpush.bf16.msra.mxu0 %v980
      %1229 = vmatpush.bf16.msra.mxu0 %v979
      %1230 = vmatpush.bf16.msra.mxu0 %v978
      %1231 = vmatpush.bf16.msra.mxu0 %v977
      %1232 = vmatmul.bf16.gmra.mxu0 %v492
      %v1233 = vpop.f32.mrf.mxu0
      %v1234 = vadd.f32 %v1221, %v1233
      %v1235 = vpop.f32.mrf.mxu0
      %1236 = vdwg.mxu0
      %v1237 = vadd.f32 %v264, %v1234
      %1238 = vst [vmem:[#allocation2] sm:$0xff] %v1237
      %p1239 = scmp.eq.s32.totalorder %s21, 2
      // Predicated region
      $region37: #{flownet_encoder_forward.11} parent=31 // pred_check
        %p1240 = pneg %p1239
      $region38: #{flownet_encoder_forward.11} parent=31 // pred_check_branch
        %1242 = sbr.rel (%p1240) target = $region40
      $region39: #{flownet_encoder_forward.11} parent=31 // pred_region
        %v1243 = vld [vmem:[#allocation2] sm:$0xff]
        %v1244 = vld [vmem:[%s251] sm:$0x1]
        %v1246 = vperm.slane %v1244, 0
        %v1248 = vadd.f32 %v1243, %v1246
        %1249 = vst [vmem:[%s258] sm:$0xff] %v1248
      $region40: #{flownet_encoder_forward.11} parent=31 // pred_fallthru
        _
      %p1250 = scmp.lt.s32.totalorder %s19, 0
      %s1251 = scalar_select %p1250, %s19, 0
      %p1252 = scmp.lt.s32.totalorder %s20, 0
      %s1253 = scalar_select %p1252, %s20, 0
      %s1254 = sadd.s32 %s1253, %s1251
      %s1255 = smul.addr %s1254, 8
      %s1256 = scalar_lea.vmem %s3, %s1255
      // Predicated region
      $region41: #{flownet_encoder_forward.11} parent=31 // pred_check
        %p1257 = pneg %p135
      $region42: #{flownet_encoder_forward.11} parent=31 // pred_check_branch
        %1259 = sbr.rel (%p1257) target = $region44
      $region43: #{flownet_encoder_forward.11} parent=31 // pred_region
        _
      $region44: #{flownet_encoder_forward.11} parent=31 // pred_fallthru
        _
      // Predicated region
      $region45: #{flownet_encoder_forward.11} parent=31 // pred_check
        %p1260 = pneg %p135
      $region46: #{flownet_encoder_forward.11} parent=31 // pred_check_branch
        %1262 = sbr.rel (%p1260) target = $region48
      $region47: #{flownet_encoder_forward.11} parent=31 // pred_region
        %p1263 = scmp.lt.s32.totalorder %s19, 0
        %s1264 = scalar_select %p1263, %s19, 0
        %p1265 = scmp.lt.s32.totalorder %s20, 0
        %s1266 = scalar_select %p1265, %s20, 0
        %s1267 = sadd.s32 %s1266, %s1264
        %s1268 = smul.addr %s1267, 8
        %s1269 = scalar_lea.vmem %s3, %s1268
      $region48: #{flownet_encoder_forward.11} parent=31 // pred_fallthru
        _
    $region32: #{flownet_encoder_forward.11} parent=5 // pred_fallthru
      _
    %p1270 = scmp.le.s32.totalorder 2, %s9
    // Predicated region
    $region49: #{flownet_encoder_forward.11} parent=5 // pred_check
      %p1271 = pneg %p1270
    $region50: #{flownet_encoder_forward.11} parent=5 // pred_check_branch
      %1273 = sbr.rel (%p1271) target = $region52
    $region51: #{flownet_encoder_forward.11} parent=5 // pred_region
      %s1274 = ssub.s32 %s9, 2
    $region52: #{flownet_encoder_forward.11} parent=5 // pred_fallthru
      _
  $region6: #{flownet_encoder_forward.11} parent=0 // loop_footer
    %s13 = sadd.s32 1, %s9
  $region7: #{flownet_encoder_forward.11} parent=0 // loop_footer_branch
    %8 = sbr.rel target = $region3
  $region8: #{flownet_encoder_forward.11} parent=0 // loop_exit
    _

</llo_original>
